<compile_context>
chip_gen: v6e
topology: v6e:2x2x1
jax: 0.10.0
libtpu: 0.0.40
codegen_flags: <defaults>
</compile_context>

<pallas_src>
import functools
import math

import jax
import jax.numpy as jnp
from jax.experimental import pallas as pl
from jax.experimental.pallas import tpu as pltpu

_BN_EPS = 1e-5
_LANE = 128     # padding quantum for K and N (lane-dense outputs)
_TM = 128       # rows (M) per grid step


def _round_up(n, m):
    return ((n + m - 1) // m) * m


def _pad2d(a, rows, cols):
    r, c = a.shape
    if r == rows and c == cols:
        return a
    return jnp.pad(a, ((0, rows - r), (0, cols - c)))


def _im2col(x, k, s, p):
    """x: [B, H, W, C] (NHWC) -> patches [B*Ho*Wo, k*k*C], (di, dj, c) channel order."""
    b, h, w, c = x.shape
    xp = jnp.pad(x, ((0, 0), (p, p), (p, p), (0, 0)))
    ho = (h + 2 * p - k) // s + 1
    wo = (w + 2 * p - k) // s + 1
    cols = []
    for di in range(k):
        for dj in range(k):
            cols.append(xp[:, di:di + s * ho:s, dj:dj + s * wo:s, :])
    patches = jnp.concatenate(cols, axis=-1)
    return patches.reshape(b * ho * wo, k * k * c), ho, wo


# ------------------------------- Pallas kernel --------------------------------

def _fused_matmul_kernel(*refs, relu_in, relu_out, has_residual):
    if has_residual:
        x_ref, w_ref, scale_ref, bias_ref, res_ref, o_ref = refs
    else:
        x_ref, w_ref, scale_ref, bias_ref, o_ref = refs
        res_ref = None
    x = x_ref[...]
    if relu_in:
        x = jnp.maximum(x, 0.0)
    acc = jnp.dot(x, w_ref[...],
                  preferred_element_type=jnp.float32,
                  precision=jax.lax.Precision.HIGHEST)
    acc = acc * scale_ref[...] + bias_ref[...]
    if relu_out:
        acc = jnp.maximum(acc, 0.0)
    if has_residual:
        acc = acc + res_ref[...]
    o_ref[...] = acc.astype(o_ref.dtype)


def _fused_matmul(x, fused, *, relu_in, relu_out, residual=None):
    """Returns padded output [M_pad, N_pad] of the fused conv-as-matmul layer."""
    w, scale, bias = fused['w'], fused['scale'], fused['bias']
    k_pad, n_pad = w.shape
    m = x.shape[0]
    m_pad = _round_up(m, _TM)
    x_p = _pad2d(x, m_pad, k_pad)

    args = [x_p, w, scale, bias]
    in_specs = [
        pl.BlockSpec((_TM, k_pad), lambda i: (i, 0)),
        pl.BlockSpec((k_pad, n_pad), lambda i: (0, 0)),
        pl.BlockSpec((1, n_pad), lambda i: (0, 0)),
        pl.BlockSpec((1, n_pad), lambda i: (0, 0)),
    ]
    has_res = residual is not None
    if has_res:
        args.append(_pad2d(residual, m_pad, n_pad))
        in_specs.append(pl.BlockSpec((_TM, n_pad), lambda i: (i, 0)))

    kernel = functools.partial(_fused_matmul_kernel, relu_in=relu_in,
                               relu_out=relu_out, has_residual=has_res)
    return pl.pallas_call(
        kernel,
        out_shape=jax.ShapeDtypeStruct((m_pad, n_pad), jnp.float32),
        grid=(m_pad // _TM,),
        in_specs=in_specs,
        out_specs=pl.BlockSpec((_TM, n_pad), lambda i: (i, 0)),
        compiler_params=pltpu.CompilerParams(dimension_semantics=("parallel",)),
    )(*args)


# ------------------------- parameter fusing helpers ----------------------------

def _fuse_conv_bn(conv, bn):
    kh, kw, cin, cout = conv['w'].shape
    w2d = conv['w'].reshape(kh * kw * cin, cout)
    if bn is not None:
        s = bn['gamma'] / jnp.sqrt(bn['var'] + _BN_EPS)
        scale = s
        bias = (conv['b'] - bn['mean']) * s + bn['beta']
    else:
        scale = jnp.ones((cout,), jnp.float32)
        bias = conv['b']
    k_pad = _round_up(kh * kw * cin, _LANE)
    n_pad = _round_up(cout, _LANE)
    return {
        'w': _pad2d(w2d, k_pad, n_pad),
        'scale': _pad2d(scale.reshape(1, cout), 1, n_pad),
        'bias': _pad2d(bias.reshape(1, cout), 1, n_pad),
        'cout': cout,
    }


def _fuse_block(blk):
    return {'conv3': _fuse_conv_bn(blk['conv3'], blk['bn_a']),
            'conv1': _fuse_conv_bn(blk['conv1'], blk['bn_b'])}


# --------------------------------- the model ----------------------------------

class EncoderVqResnet28Pallas:
    """Pallas-TPU forward-pass equivalent of sqvae's EncoderVqResnet28."""

    def __init__(self, dim_z, num_rb, flg_bn=True, flg_var_q=False, key=None):
        assert dim_z % 2 == 0
        self.dim_z = dim_z
        self.num_rb = num_rb
        self.flg_bn = flg_bn
        self.flg_var_q = flg_var_q
        self._key = jax.random.PRNGKey(0) if key is None else key

        def nk():
            self._key, sub = jax.random.split(self._key)
            return sub

        def conv_p(k, cin, cout):
            fan_in = k * k * cin
            w = jax.random.normal(nk(), (k, k, cin, cout), jnp.float32) * math.sqrt(2.0 / fan_in)
            b = 0.01 * jax.random.normal(nk(), (cout,), jnp.float32)
            return {'w': w, 'b': b}

        def bn_p(c):
            return {'gamma': 1.0 + 0.1 * jax.random.normal(nk(), (c,), jnp.float32),
                    'beta': 0.1 * jax.random.normal(nk(), (c,), jnp.float32),
                    'mean': 0.1 * jax.random.normal(nk(), (c,), jnp.float32),
                    'var': jax.random.uniform(nk(), (c,), jnp.float32, minval=0.5, maxval=1.5)}

        def block_p():
            return {'conv3': conv_p(3, dim_z, dim_z), 'bn_a': bn_p(dim_z),
                    'conv1': conv_p(1, dim_z, dim_z), 'bn_b': bn_p(dim_z)}

        dz2 = dim_z // 2
        raw = {
            'stem1': conv_p(4, 1, dz2),
            'bn1': bn_p(dz2) if flg_bn else None,
            'stem2': conv_p(4, dz2, dim_z),
            'blocks': [block_p() for _ in range(num_rb - 1)],   # self.res
            'block_m': block_p(),                               # self.res_m
        }
        if flg_var_q:
            raw['block_v'] = block_p()                          # self.res_v
        self.raw = raw

        self.fused = {
            'stem1': _fuse_conv_bn(raw['stem1'], raw['bn1']),
            'stem2': _fuse_conv_bn(raw['stem2'], None),
            'blocks': [_fuse_block(b) for b in raw['blocks']],
            'block_m': _fuse_block(raw['block_m']),
        }
        if flg_var_q:
            self.fused['block_v'] = _fuse_block(raw['block_v'])

        self._forward = jax.jit(self._pallas_forward)

    # ---------------------------- Pallas forward ------------------------------

    def _conv_layer(self, x_nhwc, fused, k, s, p, relu_out):
        b = x_nhwc.shape[0]
        patches, ho, wo = _im2col(x_nhwc, k, s, p)
        m = patches.shape[0]
        out = _fused_matmul(patches, fused, relu_in=False, relu_out=relu_out)
        return out[:m, :fused['cout']].reshape(b, ho, wo, fused['cout'])

    def _resblock(self, x_nhwc, blk):
        b, h, w, c = x_nhwc.shape
        m = b * h * w
        patches, _, _ = _im2col(x_nhwc, 3, 1, 1)
        # ReLU(x) -> conv3x3 -> BN -> ReLU   (leading ReLU fused into kernel input)
        hid = _fused_matmul(patches, blk['conv3'], relu_in=True, relu_out=True)
        # conv1x1 -> BN -> (+ x)             (`hid` is already tile-padded; reuse it)
        out = _fused_matmul(hid, blk['conv1'], relu_in=False, relu_out=False,
                            residual=x_nhwc.reshape(m, c))
        return out[:m, :c].reshape(b, h, w, c)

    def _pallas_forward(self, x_nchw):
        x = jnp.transpose(jnp.asarray(x_nchw, jnp.float32), (0, 2, 3, 1))      # NHWC
        h = self._conv_layer(x, self.fused['stem1'], 4, 2, 1, relu_out=True)   # conv+BN+ReLU
        h = self._conv_layer(h, self.fused['stem2'], 4, 2, 1, relu_out=False)  # conv
        for blk in self.fused['blocks']:
            h = self._resblock(h, blk)
        mu = jnp.transpose(self._resblock(h, self.fused['block_m']), (0, 3, 1, 2))
        if self.flg_var_q:
            log_var = jnp.transpose(self._resblock(h, self.fused['block_v']), (0, 3, 1, 2))
            return mu, log_var
        return mu

    def __call__(self, x_nchw):
        return self._forward(x_nchw)

    # ----------------------- pure-JAX reference (checking) --------------------

    def reference(self, x_nchw):
        def conv(x, p, s, pad):
            y = jax.lax.conv_general_dilated(
                x, p['w'], window_strides=(s, s), padding=[(pad, pad), (pad, pad)],
                dimension_numbers=('NHWC', 'HWIO', 'NHWC'),
                precision=jax.lax.Precision.HIGHEST)
            return y + p['b']

        def bn(x, p):
            s = p['gamma'] / jnp.sqrt(p['var'] + _BN_EPS)
            return (x - p['mean']) * s + p['beta']

        def resblock(x, blk):
            h = jax.nn.relu(x)
            h = bn(conv(h, blk['conv3'], 1, 1), blk['bn_a'])
            h = jax.nn.relu(h)
            h = bn(conv(h, blk['conv1'], 1, 0), blk['bn_b'])
            return x + h

        x = jnp.transpose(jnp.asarray(x_nchw, jnp.float32), (0, 2, 3, 1))
        h = conv(x, self.raw['stem1'], 2, 1)
        if self.flg_bn:
            h = bn(h, self.raw['bn1'])
        h = jax.nn.relu(h)
        h = conv(h, self.raw['stem2'], 2, 1)
        for blk in self.raw['blocks']:
            h = resblock(h, blk)
        mu = jnp.transpose(resblock(h, self.raw['block_m']), (0, 3, 1, 2))
        if self.flg_var_q:
            lv = jnp.transpose(resblock(h, self.raw['block_v']), (0, 3, 1, 2))
            return mu, lv
        return mu


if __name__ == "__main__":
    key = jax.random.PRNGKey(0)
    k_param, k_x = jax.random.split(key)

    B, dim_z, num_rb = 2, 32, 2
    model = EncoderVqResnet28Pallas(dim_z, num_rb, flg_bn=True, flg_var_q=False, key=k_param)

    # 28x28 single-channel input (NCHW), as the "Resnet28" encoder expects.
    x = jax.random.normal(k_x, (B, 1, 28, 28), jnp.float32)

    mu = model(x)
    jax.block_until_ready(mu)
    assert mu.shape == (B, dim_z, 7, 7), mu.shape

    ref = model.reference(x)
    jax.block_until_ready(ref)
    max_err = float(jnp.max(jnp.abs(mu - ref)))
    assert jnp.allclose(mu, ref, rtol=1e-2, atol=1e-2), f"mismatch vs reference, max abs err {max_err}"

    print("KERNEL_OK")
</pallas_src>

<mosaic_0001>
module attributes {stable_mosaic.version = 11 : i64} {
  func.func @_fused_matmul_kernel(%arg0: i32, %arg1: memref<128x128xf32, #tpu.memory_space<vmem>>, %arg2: memref<128x128xf32, #tpu.memory_space<vmem>>, %arg3: memref<1x128xf32, #tpu.memory_space<vmem>>, %arg4: memref<1x128xf32, #tpu.memory_space<vmem>>, %arg5: memref<128x128xf32, #tpu.memory_space<vmem>>) attributes {dimension_semantics = [#tpu.dimension_semantics<parallel>], iteration_bounds = array<i64: 4>, scalar_prefetch = 0 : i64, scratch_operands = 0 : i64, tpu.core_type = #tpu.core_type<tc>, window_params = [{transform_indices = @transform_0, window_bounds = array<i64: 128, 128>}, {pipeline_mode = #tpu.pipeline_mode<synchronous>, transform_indices = @transform_1, window_bounds = array<i64: 128, 128>}, {pipeline_mode = #tpu.pipeline_mode<synchronous>, transform_indices = @transform_2, window_bounds = array<i64: 1, 128>}, {pipeline_mode = #tpu.pipeline_mode<synchronous>, transform_indices = @transform_3, window_bounds = array<i64: 1, 128>}, {transform_indices = @transform_4, window_bounds = array<i64: 128, 128>}]} {
    %c0 = arith.constant 0 : index
    %c0_0 = arith.constant 0 : index
    %0 = vector.load %arg1[%c0, %c0_0] : memref<128x128xf32, #tpu.memory_space<vmem>>, vector<128x128xf32>
    %c0_1 = arith.constant 0 : index
    %c0_2 = arith.constant 0 : index
    %1 = vector.load %arg2[%c0_1, %c0_2] : memref<128x128xf32, #tpu.memory_space<vmem>>, vector<128x128xf32>
    %cst = arith.constant dense<0.000000e+00> : vector<128x128xf32>
    %2 = tpu.matmul %0, %1, %cst {dimension_numbers = #tpu.dot_dimension_numbers<[1], [0], [0], [1], [0, 0, 1, 1], [], []>, precision = #tpu.contract_precision<fp32>} : vector<128x128xf32>, vector<128x128xf32>, vector<128x128xf32> -> vector<128x128xf32>
    %c0_3 = arith.constant 0 : index
    %c0_4 = arith.constant 0 : index
    %3 = vector.load %arg3[%c0_3, %c0_4] : memref<1x128xf32, #tpu.memory_space<vmem>>, vector<1x128xf32>
    %4 = vector.broadcast %3 : vector<1x128xf32> to vector<128x128xf32>
    %5 = arith.mulf %2, %4 : vector<128x128xf32>
    %c0_5 = arith.constant 0 : index
    %c0_6 = arith.constant 0 : index
    %6 = vector.load %arg4[%c0_5, %c0_6] : memref<1x128xf32, #tpu.memory_space<vmem>>, vector<1x128xf32>
    %7 = vector.broadcast %6 : vector<1x128xf32> to vector<128x128xf32>
    %8 = arith.addf %5, %7 : vector<128x128xf32>
    %cst_7 = arith.constant 0.000000e+00 : f32
    %9 = vector.broadcast %cst_7 : f32 to vector<128x128xf32>
    %10 = arith.maximumf %8, %9 : vector<128x128xf32>
    %c0_8 = arith.constant 0 : index
    %c0_9 = arith.constant 0 : index
    %11 = vector.load %arg5[%c0_8, %c0_9] : memref<128x128xf32, #tpu.memory_space<vmem>>, vector<128x128xf32>
    tpu.vector_store %arg5[%c0_8, %c0_9], %10 {strides = array<i32>} : memref<128x128xf32, #tpu.memory_space<vmem>>, vector<128x128xf32>,
    return
  }
  func.func @transform_0(%arg0: i32) -> (i32, i32) {
    %c0_i32 = arith.constant 0 : i32
    %c0_i32_0 = arith.constant 0 : i32
    return %arg0, %c0_i32 : i32, i32
  }
  func.func @transform_1(%arg0: i32) -> (i32, i32) {
    %c0_i32 = arith.constant 0 : i32
    %c0_i32_0 = arith.constant 0 : i32
    %c0_i32_1 = arith.constant 0 : i32
    return %c0_i32, %c0_i32_0 : i32, i32
  }
  func.func @transform_2(%arg0: i32) -> (i32, i32) {
    %c0_i32 = arith.constant 0 : i32
    %c0_i32_0 = arith.constant 0 : i32
    %c0_i32_1 = arith.constant 0 : i32
    return %c0_i32, %c0_i32_0 : i32, i32
  }
  func.func @transform_3(%arg0: i32) -> (i32, i32) {
    %c0_i32 = arith.constant 0 : i32
    %c0_i32_0 = arith.constant 0 : i32
    %c0_i32_1 = arith.constant 0 : i32
    return %c0_i32, %c0_i32_0 : i32, i32
  }
  func.func @transform_4(%arg0: i32) -> (i32, i32) {
    %c0_i32 = arith.constant 0 : i32
    %c0_i32_0 = arith.constant 0 : i32
    return %arg0, %c0_i32 : i32, i32
  }
}

module attributes {stable_mosaic.version = 11 : i64} {
  func.func @_fused_matmul_kernel(%arg0: i32, %arg1: memref<128x256xf32, #tpu.memory_space<vmem>>, %arg2: memref<256x128xf32, #tpu.memory_space<vmem>>, %arg3: memref<1x128xf32, #tpu.memory_space<vmem>>, %arg4: memref<1x128xf32, #tpu.memory_space<vmem>>, %arg5: memref<128x128xf32, #tpu.memory_space<vmem>>) attributes {dimension_semantics = [#tpu.dimension_semantics<parallel>], iteration_bounds = array<i64: 1>, scalar_prefetch = 0 : i64, scratch_operands = 0 : i64, tpu.core_type = #tpu.core_type<tc>, window_params = [{transform_indices = @transform_0, window_bounds = array<i64: 128, 256>}, {pipeline_mode = #tpu.pipeline_mode<synchronous>, transform_indices = @transform_1, window_bounds = array<i64: 256, 128>}, {pipeline_mode = #tpu.pipeline_mode<synchronous>, transform_indices = @transform_2, window_bounds = array<i64: 1, 128>}, {pipeline_mode = #tpu.pipeline_mode<synchronous>, transform_indices = @transform_3, window_bounds = array<i64: 1, 128>}, {transform_indices = @transform_4, window_bounds = array<i64: 128, 128>}]} {
    %c0 = arith.constant 0 : index
    %c0_0 = arith.constant 0 : index
    %0 = vector.load %arg1[%c0, %c0_0] : memref<128x256xf32, #tpu.memory_space<vmem>>, vector<128x256xf32>
    %c0_1 = arith.constant 0 : index
    %c0_2 = arith.constant 0 : index
    %1 = vector.load %arg2[%c0_1, %c0_2] : memref<256x128xf32, #tpu.memory_space<vmem>>, vector<256x128xf32>
    %cst = arith.constant dense<0.000000e+00> : vector<128x128xf32>
    %2 = tpu.matmul %0, %1, %cst {dimension_numbers = #tpu.dot_dimension_numbers<[1], [0], [0], [1], [0, 0, 1, 1], [], []>, precision = #tpu.contract_precision<fp32>} : vector<128x256xf32>, vector<256x128xf32>, vector<128x128xf32> -> vector<128x128xf32>
    %c0_3 = arith.constant 0 : index
    %c0_4 = arith.constant 0 : index
    %3 = vector.load %arg3[%c0_3, %c0_4] : memref<1x128xf32, #tpu.memory_space<vmem>>, vector<1x128xf32>
    %4 = vector.broadcast %3 : vector<1x128xf32> to vector<128x128xf32>
    %5 = arith.mulf %2, %4 : vector<128x128xf32>
    %c0_5 = arith.constant 0 : index
    %c0_6 = arith.constant 0 : index
    %6 = vector.load %arg4[%c0_5, %c0_6] : memref<1x128xf32, #tpu.memory_space<vmem>>, vector<1x128xf32>
    %7 = vector.broadcast %6 : vector<1x128xf32> to vector<128x128xf32>
    %8 = arith.addf %5, %7 : vector<128x128xf32>
    %c0_7 = arith.constant 0 : index
    %c0_8 = arith.constant 0 : index
    %9 = vector.load %arg5[%c0_7, %c0_8] : memref<128x128xf32, #tpu.memory_space<vmem>>, vector<128x128xf32>
    tpu.vector_store %arg5[%c0_7, %c0_8], %8 {strides = array<i32>} : memref<128x128xf32, #tpu.memory_space<vmem>>, vector<128x128xf32>,
    return
  }
  func.func @transform_0(%arg0: i32) -> (i32, i32) {
    %c0_i32 = arith.constant 0 : i32
    %c0_i32_0 = arith.constant 0 : i32
    return %arg0, %c0_i32 : i32, i32
  }
  func.func @transform_1(%arg0: i32) -> (i32, i32) {
    %c0_i32 = arith.constant 0 : i32
    %c0_i32_0 = arith.constant 0 : i32
    %c0_i32_1 = arith.constant 0 : i32
    return %c0_i32, %c0_i32_0 : i32, i32
  }
  func.func @transform_2(%arg0: i32) -> (i32, i32) {
    %c0_i32 = arith.constant 0 : i32
    %c0_i32_0 = arith.constant 0 : i32
    %c0_i32_1 = arith.constant 0 : i32
    return %c0_i32, %c0_i32_0 : i32, i32
  }
  func.func @transform_3(%arg0: i32) -> (i32, i32) {
    %c0_i32 = arith.constant 0 : i32
    %c0_i32_0 = arith.constant 0 : i32
    %c0_i32_1 = arith.constant 0 : i32
    return %c0_i32, %c0_i32_0 : i32, i32
  }
  func.func @transform_4(%arg0: i32) -> (i32, i32) {
    %c0_i32 = arith.constant 0 : i32
    %c0_i32_0 = arith.constant 0 : i32
    return %arg0, %c0_i32 : i32, i32
  }
}

module attributes {stable_mosaic.version = 11 : i64} {
  func.func @_fused_matmul_kernel(%arg0: i32, %arg1: memref<128x384xf32, #tpu.memory_space<vmem>>, %arg2: memref<384x128xf32, #tpu.memory_space<vmem>>, %arg3: memref<1x128xf32, #tpu.memory_space<vmem>>, %arg4: memref<1x128xf32, #tpu.memory_space<vmem>>, %arg5: memref<128x128xf32, #tpu.memory_space<vmem>>) attributes {dimension_semantics = [#tpu.dimension_semantics<parallel>], iteration_bounds = array<i64: 1>, scalar_prefetch = 0 : i64, scratch_operands = 0 : i64, tpu.core_type = #tpu.core_type<tc>, window_params = [{transform_indices = @transform_0, window_bounds = array<i64: 128, 384>}, {pipeline_mode = #tpu.pipeline_mode<synchronous>, transform_indices = @transform_1, window_bounds = array<i64: 384, 128>}, {pipeline_mode = #tpu.pipeline_mode<synchronous>, transform_indices = @transform_2, window_bounds = array<i64: 1, 128>}, {pipeline_mode = #tpu.pipeline_mode<synchronous>, transform_indices = @transform_3, window_bounds = array<i64: 1, 128>}, {transform_indices = @transform_4, window_bounds = array<i64: 128, 128>}]} {
    %c0 = arith.constant 0 : index
    %c0_0 = arith.constant 0 : index
    %0 = vector.load %arg1[%c0, %c0_0] : memref<128x384xf32, #tpu.memory_space<vmem>>, vector<128x384xf32>
    %cst = arith.constant 0.000000e+00 : f32
    %1 = vector.broadcast %cst : f32 to vector<128x384xf32>
    %2 = arith.maximumf %0, %1 : vector<128x384xf32>
    %c0_1 = arith.constant 0 : index
    %c0_2 = arith.constant 0 : index
    %3 = vector.load %arg2[%c0_1, %c0_2] : memref<384x128xf32, #tpu.memory_space<vmem>>, vector<384x128xf32>
    %cst_3 = arith.constant dense<0.000000e+00> : vector<128x128xf32>
    %4 = tpu.matmul %2, %3, %cst_3 {dimension_numbers = #tpu.dot_dimension_numbers<[1], [0], [0], [1], [0, 0, 1, 1], [], []>, precision = #tpu.contract_precision<fp32>} : vector<128x384xf32>, vector<384x128xf32>, vector<128x128xf32> -> vector<128x128xf32>
    %c0_4 = arith.constant 0 : index
    %c0_5 = arith.constant 0 : index
    %5 = vector.load %arg3[%c0_4, %c0_5] : memref<1x128xf32, #tpu.memory_space<vmem>>, vector<1x128xf32>
    %6 = vector.broadcast %5 : vector<1x128xf32> to vector<128x128xf32>
    %7 = arith.mulf %4, %6 : vector<128x128xf32>
    %c0_6 = arith.constant 0 : index
    %c0_7 = arith.constant 0 : index
    %8 = vector.load %arg4[%c0_6, %c0_7] : memref<1x128xf32, #tpu.memory_space<vmem>>, vector<1x128xf32>
    %9 = vector.broadcast %8 : vector<1x128xf32> to vector<128x128xf32>
    %10 = arith.addf %7, %9 : vector<128x128xf32>
    %cst_8 = arith.constant 0.000000e+00 : f32
    %11 = vector.broadcast %cst_8 : f32 to vector<128x128xf32>
    %12 = arith.maximumf %10, %11 : vector<128x128xf32>
    %c0_9 = arith.constant 0 : index
    %c0_10 = arith.constant 0 : index
    %13 = vector.load %arg5[%c0_9, %c0_10] : memref<128x128xf32, #tpu.memory_space<vmem>>, vector<128x128xf32>
    tpu.vector_store %arg5[%c0_9, %c0_10], %12 {strides = array<i32>} : memref<128x128xf32, #tpu.memory_space<vmem>>, vector<128x128xf32>,
    return
  }
  func.func @transform_0(%arg0: i32) -> (i32, i32) {
    %c0_i32 = arith.constant 0 : i32
    %c0_i32_0 = arith.constant 0 : i32
    return %arg0, %c0_i32 : i32, i32
  }
  func.func @transform_1(%arg0: i32) -> (i32, i32) {
    %c0_i32 = arith.constant 0 : i32
    %c0_i32_0 = arith.constant 0 : i32
    %c0_i32_1 = arith.constant 0 : i32
    return %c0_i32, %c0_i32_0 : i32, i32
  }
  func.func @transform_2(%arg0: i32) -> (i32, i32) {
    %c0_i32 = arith.constant 0 : i32
    %c0_i32_0 = arith.constant 0 : i32
    %c0_i32_1 = arith.constant 0 : i32
    return %c0_i32, %c0_i32_0 : i32, i32
  }
  func.func @transform_3(%arg0: i32) -> (i32, i32) {
    %c0_i32 = arith.constant 0 : i32
    %c0_i32_0 = arith.constant 0 : i32
    %c0_i32_1 = arith.constant 0 : i32
    return %c0_i32, %c0_i32_0 : i32, i32
  }
  func.func @transform_4(%arg0: i32) -> (i32, i32) {
    %c0_i32 = arith.constant 0 : i32
    %c0_i32_0 = arith.constant 0 : i32
    return %arg0, %c0_i32 : i32, i32
  }
}

module attributes {stable_mosaic.version = 11 : i64} {
  func.func @_fused_matmul_kernel(%arg0: i32, %arg1: memref<128x128xf32, #tpu.memory_space<vmem>>, %arg2: memref<128x128xf32, #tpu.memory_space<vmem>>, %arg3: memref<1x128xf32, #tpu.memory_space<vmem>>, %arg4: memref<1x128xf32, #tpu.memory_space<vmem>>, %arg5: memref<128x128xf32, #tpu.memory_space<vmem>>, %arg6: memref<128x128xf32, #tpu.memory_space<vmem>>) attributes {dimension_semantics = [#tpu.dimension_semantics<parallel>], iteration_bounds = array<i64: 1>, scalar_prefetch = 0 : i64, scratch_operands = 0 : i64, tpu.core_type = #tpu.core_type<tc>, window_params = [{transform_indices = @transform_0, window_bounds = array<i64: 128, 128>}, {pipeline_mode = #tpu.pipeline_mode<synchronous>, transform_indices = @transform_1, window_bounds = array<i64: 128, 128>}, {pipeline_mode = #tpu.pipeline_mode<synchronous>, transform_indices = @transform_2, window_bounds = array<i64: 1, 128>}, {pipeline_mode = #tpu.pipeline_mode<synchronous>, transform_indices = @transform_3, window_bounds = array<i64: 1, 128>}, {transform_indices = @transform_4, window_bounds = array<i64: 128, 128>}, {transform_indices = @transform_5, window_bounds = array<i64: 128, 128>}]} {
    %c0 = arith.constant 0 : index
    %c0_0 = arith.constant 0 : index
    %0 = vector.load %arg1[%c0, %c0_0] : memref<128x128xf32, #tpu.memory_space<vmem>>, vector<128x128xf32>
    %c0_1 = arith.constant 0 : index
    %c0_2 = arith.constant 0 : index
    %1 = vector.load %arg2[%c0_1, %c0_2] : memref<128x128xf32, #tpu.memory_space<vmem>>, vector<128x128xf32>
    %cst = arith.constant dense<0.000000e+00> : vector<128x128xf32>
    %2 = tpu.matmul %0, %1, %cst {dimension_numbers = #tpu.dot_dimension_numbers<[1], [0], [0], [1], [0, 0, 1, 1], [], []>, precision = #tpu.contract_precision<fp32>} : vector<128x128xf32>, vector<128x128xf32>, vector<128x128xf32> -> vector<128x128xf32>
    %c0_3 = arith.constant 0 : index
    %c0_4 = arith.constant 0 : index
    %3 = vector.load %arg3[%c0_3, %c0_4] : memref<1x128xf32, #tpu.memory_space<vmem>>, vector<1x128xf32>
    %4 = vector.broadcast %3 : vector<1x128xf32> to vector<128x128xf32>
    %5 = arith.mulf %2, %4 : vector<128x128xf32>
    %c0_5 = arith.constant 0 : index
    %c0_6 = arith.constant 0 : index
    %6 = vector.load %arg4[%c0_5, %c0_6] : memref<1x128xf32, #tpu.memory_space<vmem>>, vector<1x128xf32>
    %7 = vector.broadcast %6 : vector<1x128xf32> to vector<128x128xf32>
    %8 = arith.addf %5, %7 : vector<128x128xf32>
    %c0_7 = arith.constant 0 : index
    %c0_8 = arith.constant 0 : index
    %9 = vector.load %arg5[%c0_7, %c0_8] : memref<128x128xf32, #tpu.memory_space<vmem>>, vector<128x128xf32>
    %10 = arith.addf %8, %9 : vector<128x128xf32>
    %c0_9 = arith.constant 0 : index
    %c0_10 = arith.constant 0 : index
    %11 = vector.load %arg6[%c0_9, %c0_10] : memref<128x128xf32, #tpu.memory_space<vmem>>, vector<128x128xf32>
    tpu.vector_store %arg6[%c0_9, %c0_10], %10 {strides = array<i32>} : memref<128x128xf32, #tpu.memory_space<vmem>>, vector<128x128xf32>,
    return
  }
  func.func @transform_0(%arg0: i32) -> (i32, i32) {
    %c0_i32 = arith.constant 0 : i32
    %c0_i32_0 = arith.constant 0 : i32
    return %arg0, %c0_i32 : i32, i32
  }
  func.func @transform_1(%arg0: i32) -> (i32, i32) {
    %c0_i32 = arith.constant 0 : i32
    %c0_i32_0 = arith.constant 0 : i32
    %c0_i32_1 = arith.constant 0 : i32
    return %c0_i32, %c0_i32_0 : i32, i32
  }
  func.func @transform_2(%arg0: i32) -> (i32, i32) {
    %c0_i32 = arith.constant 0 : i32
    %c0_i32_0 = arith.constant 0 : i32
    %c0_i32_1 = arith.constant 0 : i32
    return %c0_i32, %c0_i32_0 : i32, i32
  }
  func.func @transform_3(%arg0: i32) -> (i32, i32) {
    %c0_i32 = arith.constant 0 : i32
    %c0_i32_0 = arith.constant 0 : i32
    %c0_i32_1 = arith.constant 0 : i32
    return %c0_i32, %c0_i32_0 : i32, i32
  }
  func.func @transform_4(%arg0: i32) -> (i32, i32) {
    %c0_i32 = arith.constant 0 : i32
    %c0_i32_0 = arith.constant 0 : i32
    return %arg0, %c0_i32 : i32, i32
  }
  func.func @transform_5(%arg0: i32) -> (i32, i32) {
    %c0_i32 = arith.constant 0 : i32
    %c0_i32_0 = arith.constant 0 : i32
    return %arg0, %c0_i32 : i32, i32
  }
}

</mosaic_0001>

<llo_original>
// kernel: _pallas_forward.6
$region0: #{_pallas_forward.6}
  #allocation0 [shape = 'u32[]', space=smem, size = 0x4, offset = 0x4, fixed_abs, tag = 'smem constant byte address 0x4 - core index']
  #allocation1 [shape = 'u32[144,128]{1,0:T(1,128)}', space=vmem, size = 0x12000, scoped, tag = 'internal scratch']
  %s0 = inlined_call_operand.vmem [shape: f32[512,128], index: 0, kind: input, shape index: {}]
  %s1 = inlined_call_operand.vmem [shape: f32[128,128], index: 1, kind: input, shape index: {}]
  %s2 = inlined_call_operand.vmem [shape: f32[1,128], index: 2, kind: input, shape index: {}]
  %s3 = inlined_call_operand.vmem [shape: f32[1,128], index: 3, kind: input, shape index: {}]
  %s4 = inlined_call_operand.vmem [shape: f32[512,128], index: 4, kind: output, shape index: {}]
  %s5 = sld [smem:[#allocation0]]
  $region49: #{_pallas_forward.6} parent=0
    _
  %s7 = ssub.s32 1, %s5
  %s8 = scalar_select 0, %s7, %s5
  loop: start=0, step=1, limit=6
  $region2: #{_pallas_forward.6} parent=0 // loop_pre_header
    _
  $region3: #{_pallas_forward.6} parent=0 // loop_header
    %s10 = sphi 0, %s14
    %p11 = scmp.ge.s32.totalorder %s10, 6
    %s20 = sphi 0, %s22
    %s23 = sphi 0, %s20
    %s24 = sphi 0, %s23
    %s40 = sphi 0, %s24
    %s44 = sphi 0, %s44
    %s46 = sphi 0, %s44
    %s47 = sphi 0, %s46
    %s61 = sphi 0, %s47
    %s65 = sphi 0, %s65
    %s67 = sphi 0, %s65
    %s68 = sphi 0, %s67
    %s82 = sphi 0, %s68
    %s86 = sphi 0, %s86
    %s88 = sphi 0, %s86
    %s89 = sphi 0, %s88
    %s103 = sphi 0, %s89
    %s109 = sphi 0, %s111
    %s112 = sphi 0, %s109
    %s113 = sphi 0, %s112
    %s129 = sphi 0, %s113
  $region4: #{_pallas_forward.6} parent=0 // loop_header_branch
    %13 = sbr.rel (%p11) target = $region8
  $region5: #{_pallas_forward.6} parent=0 // loop_body
    %s15 = ssub.s32 %s10, 1
    %s16 = ssub.s32 %s10, 2
    %s17 = sadd.s32 %s10, 1
    %s18 = ssub.s32 %s10, %s17
    %p19 = scmp.eq.s32.totalorder %s18, 0
    %s21 = sadd.s32 %s20, 1
    %s22 = scalar_select %p19, %s20, %s21
    %p25 = pneg %p19
    %p26 = scmp.eq.s32.totalorder %s10, 3
    %p27 = por %p25, %p26
    %p28 = scmp.ne.s32.totalorder %s20, %s23
    %p29 = scmp.eq.s32.totalorder %s10, 0
    %p30 = por %p28, %p29
    %p31 = scmp.ne.s32.totalorder %s20, %s23
    %p32 = scmp.eq.s32.totalorder %s15, 3
    %p33 = por %p31, %p32
    %p34 = scmp.ne.s32.totalorder %s23, %s24
    %p35 = scmp.eq.s32.totalorder %s15, 0
    %p36 = por %p34, %p35
    %p37 = scmp.ne.s32.totalorder %s23, %s24
    %p38 = scmp.eq.s32.totalorder %s16, 3
    %p39 = por %p37, %p38
    %p41 = scmp.ne.s32.totalorder %s24, %s40
    %p42 = scmp.eq.s32.totalorder %s16, 0
    %p43 = por %p41, %p42
    %s45 = sadd.s32 %s44, 1
    %p48 = scmp.eq.s32.totalorder %s10, 3
    %p49 = scmp.ne.s32.totalorder %s44, %s46
    %p50 = scmp.eq.s32.totalorder %s10, 0
    %p51 = por %p49, %p50
    %p52 = scmp.ne.s32.totalorder %s44, %s46
    %p53 = scmp.eq.s32.totalorder %s15, 3
    %p54 = por %p52, %p53
    %p55 = scmp.ne.s32.totalorder %s46, %s47
    %p56 = scmp.eq.s32.totalorder %s15, 0
    %p57 = por %p55, %p56
    %p58 = scmp.ne.s32.totalorder %s46, %s47
    %p59 = scmp.eq.s32.totalorder %s16, 3
    %p60 = por %p58, %p59
    %p62 = scmp.ne.s32.totalorder %s47, %s61
    %p63 = scmp.eq.s32.totalorder %s16, 0
    %p64 = por %p62, %p63
    %s66 = sadd.s32 %s65, 1
    %p69 = scmp.eq.s32.totalorder %s10, 3
    %p70 = scmp.ne.s32.totalorder %s65, %s67
    %p71 = scmp.eq.s32.totalorder %s10, 0
    %p72 = por %p70, %p71
    %p73 = scmp.ne.s32.totalorder %s65, %s67
    %p74 = scmp.eq.s32.totalorder %s15, 3
    %p75 = por %p73, %p74
    %p76 = scmp.ne.s32.totalorder %s67, %s68
    %p77 = scmp.eq.s32.totalorder %s15, 0
    %p78 = por %p76, %p77
    %p79 = scmp.ne.s32.totalorder %s67, %s68
    %p80 = scmp.eq.s32.totalorder %s16, 3
    %p81 = por %p79, %p80
    %p83 = scmp.ne.s32.totalorder %s68, %s82
    %p84 = scmp.eq.s32.totalorder %s16, 0
    %p85 = por %p83, %p84
    %s87 = sadd.s32 %s86, 1
    %p90 = scmp.eq.s32.totalorder %s10, 3
    %p91 = scmp.ne.s32.totalorder %s86, %s88
    %p92 = scmp.eq.s32.totalorder %s10, 0
    %p93 = por %p91, %p92
    %p94 = scmp.ne.s32.totalorder %s86, %s88
    %p95 = scmp.eq.s32.totalorder %s15, 3
    %p96 = por %p94, %p95
    %p97 = scmp.ne.s32.totalorder %s88, %s89
    %p98 = scmp.eq.s32.totalorder %s15, 0
    %p99 = por %p97, %p98
    %p100 = scmp.ne.s32.totalorder %s88, %s89
    %p101 = scmp.eq.s32.totalorder %s16, 3
    %p102 = por %p100, %p101
    %p104 = scmp.ne.s32.totalorder %s89, %s103
    %p105 = scmp.eq.s32.totalorder %s16, 0
    %p106 = por %p104, %p105
    %s107 = ssub.s32 %s10, %s17
    %p108 = scmp.eq.s32.totalorder %s107, 0
    %s110 = sadd.s32 %s109, 1
    %s111 = scalar_select %p108, %s109, %s110
    %p114 = pneg %p108
    %p115 = scmp.eq.s32.totalorder %s10, 3
    %p116 = por %p114, %p115
    %p117 = scmp.ne.s32.totalorder %s109, %s112
    %p118 = scmp.eq.s32.totalorder %s10, 0
    %p119 = por %p117, %p118
    %p120 = scmp.ne.s32.totalorder %s109, %s112
    %p121 = scmp.eq.s32.totalorder %s15, 3
    %p122 = por %p120, %p121
    %p123 = scmp.ne.s32.totalorder %s112, %s113
    %p124 = scmp.eq.s32.totalorder %s15, 0
    %p125 = por %p123, %p124
    %p126 = scmp.ne.s32.totalorder %s112, %s113
    %p127 = scmp.eq.s32.totalorder %s16, 3
    %p128 = por %p126, %p127
    %p130 = scmp.ne.s32.totalorder %s113, %s129
    %p131 = scmp.eq.s32.totalorder %s16, 0
    %p132 = por %p130, %p131
    %p133 = scmp.le.s32.totalorder 1, %s10
    %p134 = scmp.lt.s32.totalorder %s10, 5
    %p135 = pnand %p133, %p134
    %p136 = pneg %p135
    // Predicated region
    $region9: #{_pallas_forward.6} parent=5 // pred_check
      _
    $region10: #{_pallas_forward.6} parent=5 // pred_check_branch
      %138 = sbr.rel (%p135) target = $region12
    $region11: #{_pallas_forward.6} parent=5 // pred_region
      %s139 = ssub.s32 %s10, 1
      // Predicated region
      $region13: #{_pallas_forward.6} parent=11 // pred_check
        %p140 = pneg %p57
      $region14: #{_pallas_forward.6} parent=11 // pred_check_branch
        %142 = sbr.rel (%p140) target = $region16
      $region15: #{_pallas_forward.6} parent=11 // pred_region
        _
      $region16: #{_pallas_forward.6} parent=11 // pred_fallthru
        _
      // Predicated region
      $region17: #{_pallas_forward.6} parent=11 // pred_check
        %p143 = pneg %p78
      $region18: #{_pallas_forward.6} parent=11 // pred_check_branch
        %145 = sbr.rel (%p143) target = $region20
      $region19: #{_pallas_forward.6} parent=11 // pred_region
        _
      $region20: #{_pallas_forward.6} parent=11 // pred_fallthru
        _
      // Predicated region
      $region21: #{_pallas_forward.6} parent=11 // pred_check
        %p146 = pneg %p99
      $region22: #{_pallas_forward.6} parent=11 // pred_check_branch
        %148 = sbr.rel (%p146) target = $region24
      $region23: #{_pallas_forward.6} parent=11 // pred_region
        _
      $region24: #{_pallas_forward.6} parent=11 // pred_fallthru
        _
    $region12: #{_pallas_forward.6} parent=5 // pred_fallthru
      _
    %p149 = scmp.lt.s32.totalorder %s10, 4
    // Predicated region
    $region25: #{_pallas_forward.6} parent=5 // pred_check
      %p150 = pneg %p149
    $region26: #{_pallas_forward.6} parent=5 // pred_check_branch
      %152 = sbr.rel (%p150) target = $region28
    $region27: #{_pallas_forward.6} parent=5 // pred_region
      // Predicated region
      $region29: #{_pallas_forward.6} parent=27 // pred_check
        %p153 = pneg %p30
      $region30: #{_pallas_forward.6} parent=27 // pred_check_branch
        %155 = sbr.rel (%p153) target = $region32
      $region31: #{_pallas_forward.6} parent=27 // pred_region
        %s156 = smul.u32 16, %s10
        %p157 = scmp.lt.s32.totalorder %s156, 63
        %s158 = scalar_select %p157, %s156, 63
        %s159 = smul.addr %s158, 8
        %s160 = scalar_lea.vmem %s0, %s159
        %s161 = smul.u32 16, %s10
      $region32: #{_pallas_forward.6} parent=27 // pred_fallthru
        _
    $region28: #{_pallas_forward.6} parent=5 // pred_fallthru
      _
    %p162 = scmp.le.s32.totalorder 1, %s10
    %p163 = scmp.lt.s32.totalorder %s10, 5
    %p164 = pnand %p162, %p163
    %p165 = pneg %p164
    // Predicated region
    $region33: #{_pallas_forward.6} parent=5 // pred_check
      _
    $region34: #{_pallas_forward.6} parent=5 // pred_check_branch
      %167 = sbr.rel (%p164) target = $region36
    $region35: #{_pallas_forward.6} parent=5 // pred_region
      %s168 = ssub.s32 %s10, 1
      %s169 = smul.u32 16, %s15
      %p170 = scmp.lt.s32.totalorder %s169, 63
      %s171 = scalar_select %p170, %s169, 63
      %s172 = smul.addr %s171, 8
      %s173 = scalar_lea.vmem %s0, %s172
      %p174 = pneg %p36
      %p175 = pneg %p33
      %p176 = pneg %p57
      %p177 = pneg %p54
      %p178 = pneg %p78
      %p179 = pneg %p75
      %p180 = pneg %p99
      %p181 = pneg %p96
      %p182 = pneg %p125
      %p183 = pneg %p122
      %s184 = smul.u32 16, %s15
      %p185 = scmp.lt.s32.totalorder %s184, 63
      %s186 = scalar_select %p185, %s184, 63
      %s187 = smul.addr %s186, 8
      %s188 = scalar_lea.vmem %s4, %s187
      %s189 = smul.u32 16, %s15
      %p190 = scmp.lt.s32.totalorder %s189, 63
      %s191 = scalar_select %p190, %s189, 63
      %s192 = smul.addr %s191, 8
      %s193 = scalar_lea.vmem %s0, %s192
      %s194 = smul.u32 16, %s15
      %s195 = smul.u32 16, %s15
      %p196 = scmp.lt.s32.totalorder %s195, 63
      %s197 = scalar_select %p196, %s195, 63
      %s198 = smul.addr %s197, 8
      %s199 = scalar_lea.vmem %s4, %s198
      %s200 = smul.u32 16, %s15
      %v201 = vld [vmem:[%s193] sm:$0xff]
      %v202 = vld [vmem:[%s193 + $0x8] sm:$0xff]
      %v203 = vld [vmem:[%s193 + $0x10] sm:$0xff]
      %v204 = vld [vmem:[%s193 + $0x18] sm:$0xff]
      %v205 = vld [vmem:[%s193 + $0x20] sm:$0xff]
      %v206 = vld [vmem:[%s193 + $0x28] sm:$0xff]
      %v207 = vld [vmem:[%s193 + $0x30] sm:$0xff]
      %v208 = vld [vmem:[%s193 + $0x38] sm:$0xff]
      %v209 = vld [vmem:[%s193 + $0x40] sm:$0xff]
      %v210 = vld [vmem:[%s193 + $0x48] sm:$0xff]
      %v211 = vld [vmem:[%s193 + $0x50] sm:$0xff]
      %v212 = vld [vmem:[%s193 + $0x58] sm:$0xff]
      %v213 = vld [vmem:[%s193 + $0x60] sm:$0xff]
      %v214 = vld [vmem:[%s193 + $0x68] sm:$0xff]
      %v215 = vld [vmem:[%s193 + $0x70] sm:$0xff]
      %v216 = vld [vmem:[%s193 + $0x78] sm:$0xff]
      %v217 = vld [vmem:[%s1] sm:$0xff]
      %v218 = vld [vmem:[%s1 + $0x8] sm:$0xff]
      %v219 = vld [vmem:[%s1 + $0x10] sm:$0xff]
      %v220 = vld [vmem:[%s1 + $0x18] sm:$0xff]
      %v221 = vld [vmem:[%s1 + $0x20] sm:$0xff]
      %v222 = vld [vmem:[%s1 + $0x28] sm:$0xff]
      %v223 = vld [vmem:[%s1 + $0x30] sm:$0xff]
      %v224 = vld [vmem:[%s1 + $0x38] sm:$0xff]
      %v225 = vld [vmem:[%s1 + $0x40] sm:$0xff]
      %v226 = vld [vmem:[%s1 + $0x48] sm:$0xff]
      %v227 = vld [vmem:[%s1 + $0x50] sm:$0xff]
      %v228 = vld [vmem:[%s1 + $0x58] sm:$0xff]
      %v229 = vld [vmem:[%s1 + $0x60] sm:$0xff]
      %v230 = vld [vmem:[%s1 + $0x68] sm:$0xff]
      %v231 = vld [vmem:[%s1 + $0x70] sm:$0xff]
      %v232 = vld [vmem:[%s1 + $0x78] sm:$0xff]
      %233 = vmatprep.subr.mxu0 0.0
      %v234 = vand.u32 %v232, 4294901760
      %235 = vmatpush1.msra.mxu0 %v234
      %236 = vmatprep.subr.mxu0 0.0
      %v237 = vand.u32 %v231, 4294901760
      %238 = vmatpush1.msra.mxu0 %v237
      %239 = vmatprep.subr.mxu0 0.0
      %v240 = vand.u32 %v230, 4294901760
      %241 = vmatpush1.msra.mxu0 %v240
      %242 = vmatprep.subr.mxu0 0.0
      %v243 = vand.u32 %v229, 4294901760
      %244 = vmatpush1.msra.mxu0 %v243
      %245 = vmatprep.subr.mxu0 0.0
      %v246 = vand.u32 %v228, 4294901760
      %247 = vmatpush1.msra.mxu0 %v246
      %248 = vmatprep.subr.mxu0 0.0
      %v249 = vand.u32 %v227, 4294901760
      %250 = vmatpush1.msra.mxu0 %v249
      %251 = vmatprep.subr.mxu0 0.0
      %v252 = vand.u32 %v226, 4294901760
      %253 = vmatpush1.msra.mxu0 %v252
      %254 = vmatprep.subr.mxu0 0.0
      %v255 = vand.u32 %v225, 4294901760
      %256 = vmatpush1.msra.mxu0 %v255
      %257 = vmatprep.subr.mxu0 0.0
      %v258 = vand.u32 %v224, 4294901760
      %259 = vmatpush1.msra.mxu0 %v258
      %260 = vmatprep.subr.mxu0 0.0
      %v261 = vand.u32 %v223, 4294901760
      %262 = vmatpush1.msra.mxu0 %v261
      %263 = vmatprep.subr.mxu0 0.0
      %v264 = vand.u32 %v222, 4294901760
      %265 = vmatpush1.msra.mxu0 %v264
      %266 = vmatprep.subr.mxu0 0.0
      %v267 = vand.u32 %v221, 4294901760
      %268 = vmatpush1.msra.mxu0 %v267
      %269 = vmatprep.subr.mxu0 0.0
      %v270 = vand.u32 %v220, 4294901760
      %271 = vmatpush1.msra.mxu0 %v270
      %272 = vmatprep.subr.mxu0 0.0
      %v273 = vand.u32 %v219, 4294901760
      %274 = vmatpush1.msra.mxu0 %v273
      %275 = vmatprep.subr.mxu0 0.0
      %v276 = vand.u32 %v218, 4294901760
      %277 = vmatpush1.msra.mxu0 %v276
      %278 = vmatprep.subr.mxu0 0.0
      %v279 = vand.u32 %v217, 4294901760
      %280 = vmatpush1.msra.mxu0 %v279
      %281 = vmatprep.subr.mxu0 0.0
      %282 = vmatpush2.msra.mxu0 0.0
      %283 = vmatprep.subr.mxu0 0.0
      %284 = vmatpush2.msra.mxu0 0.0
      %285 = vmatprep.subr.mxu0 0.0
      %286 = vmatpush2.msra.mxu0 0.0
      %287 = vmatprep.subr.mxu0 0.0
      %288 = vmatpush2.msra.mxu0 0.0
      %289 = vmatprep.subr.mxu0 0.0
      %290 = vmatpush2.msra.mxu0 0.0
      %291 = vmatprep.subr.mxu0 0.0
      %292 = vmatpush2.msra.mxu0 0.0
      %293 = vmatprep.subr.mxu0 0.0
      %294 = vmatpush2.msra.mxu0 0.0
      %295 = vmatprep.subr.mxu0 0.0
      %296 = vmatpush2.msra.mxu0 0.0
      %297 = vmatprep.subr.mxu0 0.0
      %298 = vmatpush2.msra.mxu0 0.0
      %299 = vmatprep.subr.mxu0 0.0
      %300 = vmatpush2.msra.mxu0 0.0
      %301 = vmatprep.subr.mxu0 0.0
      %302 = vmatpush2.msra.mxu0 0.0
      %303 = vmatprep.subr.mxu0 0.0
      %304 = vmatpush2.msra.mxu0 0.0
      %305 = vmatprep.subr.mxu0 0.0
      %306 = vmatpush2.msra.mxu0 0.0
      %307 = vmatprep.subr.mxu0 0.0
      %308 = vmatpush2.msra.mxu0 0.0
      %309 = vmatprep.subr.mxu0 0.0
      %310 = vmatpush2.msra.mxu0 0.0
      %311 = vmatprep.subr.mxu0 0.0
      %312 = vmatpush2.msra.mxu0 0.0
      %313 = vmatprep.mubr.f32.mxu0 0.0
      %v314 = vand.u32 %v201, 4294901760
      %v315 = vsub.f32 %v201, %v314
      %v316 = vand.u32 %v315, 4294901760
      %v317 = vsub.f32 %v315, %v316
      %v318 = vand.u32 %v317, 4294901760
      %319 = vmatmul.mubr.f32.gmra.mxu0 %v318
      %v320 = vpop.f32.mrf.mxu0
      %v321 = vadd.f32 0.0, %v320
      %v322 = vpop.f32.mrf.mxu0
      %323 = vmatprep.mubr.f32.mxu0 0.0
      %v324 = vand.u32 %v202, 4294901760
      %v325 = vsub.f32 %v202, %v324
      %v326 = vand.u32 %v325, 4294901760
      %v327 = vsub.f32 %v325, %v326
      %v328 = vand.u32 %v327, 4294901760
      %329 = vmatmul.mubr.f32.gmra.mxu0 %v328
      %v330 = vpop.f32.mrf.mxu0
      %v331 = vadd.f32 0.0, %v330
      %v332 = vpop.f32.mrf.mxu0
      %333 = vmatprep.mubr.f32.mxu0 0.0
      %v334 = vand.u32 %v203, 4294901760
      %v335 = vsub.f32 %v203, %v334
      %v336 = vand.u32 %v335, 4294901760
      %v337 = vsub.f32 %v335, %v336
      %v338 = vand.u32 %v337, 4294901760
      %339 = vmatmul.mubr.f32.gmra.mxu0 %v338
      %v340 = vpop.f32.mrf.mxu0
      %v341 = vadd.f32 0.0, %v340
      %v342 = vpop.f32.mrf.mxu0
      %343 = vmatprep.mubr.f32.mxu0 0.0
      %v344 = vand.u32 %v204, 4294901760
      %v345 = vsub.f32 %v204, %v344
      %v346 = vand.u32 %v345, 4294901760
      %v347 = vsub.f32 %v345, %v346
      %v348 = vand.u32 %v347, 4294901760
      %349 = vmatmul.mubr.f32.gmra.mxu0 %v348
      %v350 = vpop.f32.mrf.mxu0
      %v351 = vadd.f32 0.0, %v350
      %v352 = vpop.f32.mrf.mxu0
      %353 = vmatprep.mubr.f32.mxu0 0.0
      %v354 = vand.u32 %v205, 4294901760
      %v355 = vsub.f32 %v205, %v354
      %v356 = vand.u32 %v355, 4294901760
      %v357 = vsub.f32 %v355, %v356
      %v358 = vand.u32 %v357, 4294901760
      %359 = vmatmul.mubr.f32.gmra.mxu0 %v358
      %v360 = vpop.f32.mrf.mxu0
      %v361 = vadd.f32 0.0, %v360
      %v362 = vpop.f32.mrf.mxu0
      %363 = vmatprep.mubr.f32.mxu0 0.0
      %v364 = vand.u32 %v206, 4294901760
      %v365 = vsub.f32 %v206, %v364
      %v366 = vand.u32 %v365, 4294901760
      %v367 = vsub.f32 %v365, %v366
      %v368 = vand.u32 %v367, 4294901760
      %369 = vmatmul.mubr.f32.gmra.mxu0 %v368
      %v370 = vpop.f32.mrf.mxu0
      %v371 = vadd.f32 0.0, %v370
      %v372 = vpop.f32.mrf.mxu0
      %373 = vmatprep.mubr.f32.mxu0 0.0
      %v374 = vand.u32 %v207, 4294901760
      %v375 = vsub.f32 %v207, %v374
      %v376 = vand.u32 %v375, 4294901760
      %v377 = vsub.f32 %v375, %v376
      %v378 = vand.u32 %v377, 4294901760
      %379 = vmatmul.mubr.f32.gmra.mxu0 %v378
      %v380 = vpop.f32.mrf.mxu0
      %v381 = vadd.f32 0.0, %v380
      %v382 = vpop.f32.mrf.mxu0
      %383 = vmatprep.mubr.f32.mxu0 0.0
      %v384 = vand.u32 %v208, 4294901760
      %v385 = vsub.f32 %v208, %v384
      %v386 = vand.u32 %v385, 4294901760
      %v387 = vsub.f32 %v385, %v386
      %v388 = vand.u32 %v387, 4294901760
      %389 = vmatmul.mubr.f32.gmra.mxu0 %v388
      %v390 = vpop.f32.mrf.mxu0
      %v391 = vadd.f32 0.0, %v390
      %v392 = vpop.f32.mrf.mxu0
      %393 = vmatprep.mubr.f32.mxu0 0.0
      %v394 = vand.u32 %v209, 4294901760
      %v395 = vsub.f32 %v209, %v394
      %v396 = vand.u32 %v395, 4294901760
      %v397 = vsub.f32 %v395, %v396
      %v398 = vand.u32 %v397, 4294901760
      %399 = vmatmul.mubr.f32.gmra.mxu0 %v398
      %v400 = vpop.f32.mrf.mxu0
      %v401 = vadd.f32 0.0, %v400
      %v402 = vpop.f32.mrf.mxu0
      %403 = vmatprep.mubr.f32.mxu0 0.0
      %v404 = vand.u32 %v210, 4294901760
      %v405 = vsub.f32 %v210, %v404
      %v406 = vand.u32 %v405, 4294901760
      %v407 = vsub.f32 %v405, %v406
      %v408 = vand.u32 %v407, 4294901760
      %409 = vmatmul.mubr.f32.gmra.mxu0 %v408
      %v410 = vpop.f32.mrf.mxu0
      %v411 = vadd.f32 0.0, %v410
      %v412 = vpop.f32.mrf.mxu0
      %413 = vmatprep.mubr.f32.mxu0 0.0
      %v414 = vand.u32 %v211, 4294901760
      %v415 = vsub.f32 %v211, %v414
      %v416 = vand.u32 %v415, 4294901760
      %v417 = vsub.f32 %v415, %v416
      %v418 = vand.u32 %v417, 4294901760
      %419 = vmatmul.mubr.f32.gmra.mxu0 %v418
      %v420 = vpop.f32.mrf.mxu0
      %v421 = vadd.f32 0.0, %v420
      %v422 = vpop.f32.mrf.mxu0
      %423 = vmatprep.mubr.f32.mxu0 0.0
      %v424 = vand.u32 %v212, 4294901760
      %v425 = vsub.f32 %v212, %v424
      %v426 = vand.u32 %v425, 4294901760
      %v427 = vsub.f32 %v425, %v426
      %v428 = vand.u32 %v427, 4294901760
      %429 = vmatmul.mubr.f32.gmra.mxu0 %v428
      %v430 = vpop.f32.mrf.mxu0
      %v431 = vadd.f32 0.0, %v430
      %v432 = vpop.f32.mrf.mxu0
      %433 = vmatprep.mubr.f32.mxu0 0.0
      %v434 = vand.u32 %v213, 4294901760
      %v435 = vsub.f32 %v213, %v434
      %v436 = vand.u32 %v435, 4294901760
      %v437 = vsub.f32 %v435, %v436
      %v438 = vand.u32 %v437, 4294901760
      %439 = vmatmul.mubr.f32.gmra.mxu0 %v438
      %v440 = vpop.f32.mrf.mxu0
      %v441 = vadd.f32 0.0, %v440
      %v442 = vpop.f32.mrf.mxu0
      %443 = vmatprep.mubr.f32.mxu0 0.0
      %v444 = vand.u32 %v214, 4294901760
      %v445 = vsub.f32 %v214, %v444
      %v446 = vand.u32 %v445, 4294901760
      %v447 = vsub.f32 %v445, %v446
      %v448 = vand.u32 %v447, 4294901760
      %449 = vmatmul.mubr.f32.gmra.mxu0 %v448
      %v450 = vpop.f32.mrf.mxu0
      %v451 = vadd.f32 0.0, %v450
      %v452 = vpop.f32.mrf.mxu0
      %453 = vmatprep.mubr.f32.mxu0 0.0
      %v454 = vand.u32 %v215, 4294901760
      %v455 = vsub.f32 %v215, %v454
      %v456 = vand.u32 %v455, 4294901760
      %v457 = vsub.f32 %v455, %v456
      %v458 = vand.u32 %v457, 4294901760
      %459 = vmatmul.mubr.f32.gmra.mxu0 %v458
      %v460 = vpop.f32.mrf.mxu0
      %v461 = vadd.f32 0.0, %v460
      %v462 = vpop.f32.mrf.mxu0
      %463 = vmatprep.mubr.f32.mxu0 0.0
      %v464 = vand.u32 %v216, 4294901760
      %v465 = vsub.f32 %v216, %v464
      %v466 = vand.u32 %v465, 4294901760
      %v467 = vsub.f32 %v465, %v466
      %v468 = vand.u32 %v467, 4294901760
      %469 = vmatmul.mubr.f32.gmra.mxu0 %v468
      %v470 = vpop.f32.mrf.mxu0
      %v471 = vadd.f32 0.0, %v470
      %v472 = vpop.f32.mrf.mxu0
      %473 = vdwg.mxu0
      %474 = vmatprep.subr.mxu0 0.0
      %v475 = vand.u32 %v232, 4294901760
      %v476 = vsub.f32 %v232, %v475
      %v477 = vand.u32 %v476, 4294901760
      %v478 = vsub.f32 %v476, %v477
      %v479 = vand.u32 %v478, 4294901760
      %480 = vmatpush1.msra.mxu0 %v479
      %481 = vmatprep.subr.mxu0 0.0
      %v482 = vand.u32 %v231, 4294901760
      %v483 = vsub.f32 %v231, %v482
      %v484 = vand.u32 %v483, 4294901760
      %v485 = vsub.f32 %v483, %v484
      %v486 = vand.u32 %v485, 4294901760
      %487 = vmatpush1.msra.mxu0 %v486
      %488 = vmatprep.subr.mxu0 0.0
      %v489 = vand.u32 %v230, 4294901760
      %v490 = vsub.f32 %v230, %v489
      %v491 = vand.u32 %v490, 4294901760
      %v492 = vsub.f32 %v490, %v491
      %v493 = vand.u32 %v492, 4294901760
      %494 = vmatpush1.msra.mxu0 %v493
      %495 = vmatprep.subr.mxu0 0.0
      %v496 = vand.u32 %v229, 4294901760
      %v497 = vsub.f32 %v229, %v496
      %v498 = vand.u32 %v497, 4294901760
      %v499 = vsub.f32 %v497, %v498
      %v500 = vand.u32 %v499, 4294901760
      %501 = vmatpush1.msra.mxu0 %v500
      %502 = vmatprep.subr.mxu0 0.0
      %v503 = vand.u32 %v228, 4294901760
      %v504 = vsub.f32 %v228, %v503
      %v505 = vand.u32 %v504, 4294901760
      %v506 = vsub.f32 %v504, %v505
      %v507 = vand.u32 %v506, 4294901760
      %508 = vmatpush1.msra.mxu0 %v507
      %509 = vmatprep.subr.mxu0 0.0
      %v510 = vand.u32 %v227, 4294901760
      %v511 = vsub.f32 %v227, %v510
      %v512 = vand.u32 %v511, 4294901760
      %v513 = vsub.f32 %v511, %v512
      %v514 = vand.u32 %v513, 4294901760
      %515 = vmatpush1.msra.mxu0 %v514
      %516 = vmatprep.subr.mxu0 0.0
      %v517 = vand.u32 %v226, 4294901760
      %v518 = vsub.f32 %v226, %v517
      %v519 = vand.u32 %v518, 4294901760
      %v520 = vsub.f32 %v518, %v519
      %v521 = vand.u32 %v520, 4294901760
      %522 = vmatpush1.msra.mxu0 %v521
      %523 = vmatprep.subr.mxu0 0.0
      %v524 = vand.u32 %v225, 4294901760
      %v525 = vsub.f32 %v225, %v524
      %v526 = vand.u32 %v525, 4294901760
      %v527 = vsub.f32 %v525, %v526
      %v528 = vand.u32 %v527, 4294901760
      %529 = vmatpush1.msra.mxu0 %v528
      %530 = vmatprep.subr.mxu0 0.0
      %v531 = vand.u32 %v224, 4294901760
      %v532 = vsub.f32 %v224, %v531
      %v533 = vand.u32 %v532, 4294901760
      %v534 = vsub.f32 %v532, %v533
      %v535 = vand.u32 %v534, 4294901760
      %536 = vmatpush1.msra.mxu0 %v535
      %537 = vmatprep.subr.mxu0 0.0
      %v538 = vand.u32 %v223, 4294901760
      %v539 = vsub.f32 %v223, %v538
      %v540 = vand.u32 %v539, 4294901760
      %v541 = vsub.f32 %v539, %v540
      %v542 = vand.u32 %v541, 4294901760
      %543 = vmatpush1.msra.mxu0 %v542
      %544 = vmatprep.subr.mxu0 0.0
      %v545 = vand.u32 %v222, 4294901760
      %v546 = vsub.f32 %v222, %v545
      %v547 = vand.u32 %v546, 4294901760
      %v548 = vsub.f32 %v546, %v547
      %v549 = vand.u32 %v548, 4294901760
      %550 = vmatpush1.msra.mxu0 %v549
      %551 = vmatprep.subr.mxu0 0.0
      %v552 = vand.u32 %v221, 4294901760
      %v553 = vsub.f32 %v221, %v552
      %v554 = vand.u32 %v553, 4294901760
      %v555 = vsub.f32 %v553, %v554
      %v556 = vand.u32 %v555, 4294901760
      %557 = vmatpush1.msra.mxu0 %v556
      %558 = vmatprep.subr.mxu0 0.0
      %v559 = vand.u32 %v220, 4294901760
      %v560 = vsub.f32 %v220, %v559
      %v561 = vand.u32 %v560, 4294901760
      %v562 = vsub.f32 %v560, %v561
      %v563 = vand.u32 %v562, 4294901760
      %564 = vmatpush1.msra.mxu0 %v563
      %565 = vmatprep.subr.mxu0 0.0
      %v566 = vand.u32 %v219, 4294901760
      %v567 = vsub.f32 %v219, %v566
      %v568 = vand.u32 %v567, 4294901760
      %v569 = vsub.f32 %v567, %v568
      %v570 = vand.u32 %v569, 4294901760
      %571 = vmatpush1.msra.mxu0 %v570
      %572 = vmatprep.subr.mxu0 0.0
      %v573 = vand.u32 %v218, 4294901760
      %v574 = vsub.f32 %v218, %v573
      %v575 = vand.u32 %v574, 4294901760
      %v576 = vsub.f32 %v574, %v575
      %v577 = vand.u32 %v576, 4294901760
      %578 = vmatpush1.msra.mxu0 %v577
      %579 = vmatprep.subr.mxu0 0.0
      %v580 = vand.u32 %v217, 4294901760
      %v581 = vsub.f32 %v217, %v580
      %v582 = vand.u32 %v581, 4294901760
      %v583 = vsub.f32 %v581, %v582
      %v584 = vand.u32 %v583, 4294901760
      %585 = vmatpush1.msra.mxu0 %v584
      %586 = vmatprep.subr.mxu0 0.0
      %587 = vmatpush2.msra.mxu0 0.0
      %588 = vmatprep.subr.mxu0 0.0
      %589 = vmatpush2.msra.mxu0 0.0
      %590 = vmatprep.subr.mxu0 0.0
      %591 = vmatpush2.msra.mxu0 0.0
      %592 = vmatprep.subr.mxu0 0.0
      %593 = vmatpush2.msra.mxu0 0.0
      %594 = vmatprep.subr.mxu0 0.0
      %595 = vmatpush2.msra.mxu0 0.0
      %596 = vmatprep.subr.mxu0 0.0
      %597 = vmatpush2.msra.mxu0 0.0
      %598 = vmatprep.subr.mxu0 0.0
      %599 = vmatpush2.msra.mxu0 0.0
      %600 = vmatprep.subr.mxu0 0.0
      %601 = vmatpush2.msra.mxu0 0.0
      %602 = vmatprep.subr.mxu0 0.0
      %603 = vmatpush2.msra.mxu0 0.0
      %604 = vmatprep.subr.mxu0 0.0
      %605 = vmatpush2.msra.mxu0 0.0
      %606 = vmatprep.subr.mxu0 0.0
      %607 = vmatpush2.msra.mxu0 0.0
      %608 = vmatprep.subr.mxu0 0.0
      %609 = vmatpush2.msra.mxu0 0.0
      %610 = vmatprep.subr.mxu0 0.0
      %611 = vmatpush2.msra.mxu0 0.0
      %612 = vmatprep.subr.mxu0 0.0
      %613 = vmatpush2.msra.mxu0 0.0
      %614 = vmatprep.subr.mxu0 0.0
      %615 = vmatpush2.msra.mxu0 0.0
      %616 = vmatprep.subr.mxu0 0.0
      %617 = vmatpush2.msra.mxu0 0.0
      %618 = vmatprep.mubr.f32.mxu0 0.0
      %v619 = vand.u32 %v201, 4294901760
      %620 = vmatmul.mubr.f32.gmra.mxu0 %v619
      %v621 = vpop.f32.mrf.mxu0
      %v622 = vadd.f32 %v321, %v621
      %v623 = vpop.f32.mrf.mxu0
      %624 = vmatprep.mubr.f32.mxu0 0.0
      %v625 = vand.u32 %v202, 4294901760
      %626 = vmatmul.mubr.f32.gmra.mxu0 %v625
      %v627 = vpop.f32.mrf.mxu0
      %v628 = vadd.f32 %v331, %v627
      %v629 = vpop.f32.mrf.mxu0
      %630 = vmatprep.mubr.f32.mxu0 0.0
      %v631 = vand.u32 %v203, 4294901760
      %632 = vmatmul.mubr.f32.gmra.mxu0 %v631
      %v633 = vpop.f32.mrf.mxu0
      %v634 = vadd.f32 %v341, %v633
      %v635 = vpop.f32.mrf.mxu0
      %636 = vmatprep.mubr.f32.mxu0 0.0
      %v637 = vand.u32 %v204, 4294901760
      %638 = vmatmul.mubr.f32.gmra.mxu0 %v637
      %v639 = vpop.f32.mrf.mxu0
      %v640 = vadd.f32 %v351, %v639
      %v641 = vpop.f32.mrf.mxu0
      %642 = vmatprep.mubr.f32.mxu0 0.0
      %v643 = vand.u32 %v205, 4294901760
      %644 = vmatmul.mubr.f32.gmra.mxu0 %v643
      %v645 = vpop.f32.mrf.mxu0
      %v646 = vadd.f32 %v361, %v645
      %v647 = vpop.f32.mrf.mxu0
      %648 = vmatprep.mubr.f32.mxu0 0.0
      %v649 = vand.u32 %v206, 4294901760
      %650 = vmatmul.mubr.f32.gmra.mxu0 %v649
      %v651 = vpop.f32.mrf.mxu0
      %v652 = vadd.f32 %v371, %v651
      %v653 = vpop.f32.mrf.mxu0
      %654 = vmatprep.mubr.f32.mxu0 0.0
      %v655 = vand.u32 %v207, 4294901760
      %656 = vmatmul.mubr.f32.gmra.mxu0 %v655
      %v657 = vpop.f32.mrf.mxu0
      %v658 = vadd.f32 %v381, %v657
      %v659 = vpop.f32.mrf.mxu0
      %660 = vmatprep.mubr.f32.mxu0 0.0
      %v661 = vand.u32 %v208, 4294901760
      %662 = vmatmul.mubr.f32.gmra.mxu0 %v661
      %v663 = vpop.f32.mrf.mxu0
      %v664 = vadd.f32 %v391, %v663
      %v665 = vpop.f32.mrf.mxu0
      %666 = vmatprep.mubr.f32.mxu0 0.0
      %v667 = vand.u32 %v209, 4294901760
      %668 = vmatmul.mubr.f32.gmra.mxu0 %v667
      %v669 = vpop.f32.mrf.mxu0
      %v670 = vadd.f32 %v401, %v669
      %v671 = vpop.f32.mrf.mxu0
      %672 = vmatprep.mubr.f32.mxu0 0.0
      %v673 = vand.u32 %v210, 4294901760
      %674 = vmatmul.mubr.f32.gmra.mxu0 %v673
      %v675 = vpop.f32.mrf.mxu0
      %v676 = vadd.f32 %v411, %v675
      %v677 = vpop.f32.mrf.mxu0
      %678 = vmatprep.mubr.f32.mxu0 0.0
      %v679 = vand.u32 %v211, 4294901760
      %680 = vmatmul.mubr.f32.gmra.mxu0 %v679
      %v681 = vpop.f32.mrf.mxu0
      %v682 = vadd.f32 %v421, %v681
      %v683 = vpop.f32.mrf.mxu0
      %684 = vmatprep.mubr.f32.mxu0 0.0
      %v685 = vand.u32 %v212, 4294901760
      %686 = vmatmul.mubr.f32.gmra.mxu0 %v685
      %v687 = vpop.f32.mrf.mxu0
      %v688 = vadd.f32 %v431, %v687
      %v689 = vpop.f32.mrf.mxu0
      %690 = vmatprep.mubr.f32.mxu0 0.0
      %v691 = vand.u32 %v213, 4294901760
      %692 = vmatmul.mubr.f32.gmra.mxu0 %v691
      %v693 = vpop.f32.mrf.mxu0
      %v694 = vadd.f32 %v441, %v693
      %v695 = vpop.f32.mrf.mxu0
      %696 = vmatprep.mubr.f32.mxu0 0.0
      %v697 = vand.u32 %v214, 4294901760
      %698 = vmatmul.mubr.f32.gmra.mxu0 %v697
      %v699 = vpop.f32.mrf.mxu0
      %v700 = vadd.f32 %v451, %v699
      %v701 = vpop.f32.mrf.mxu0
      %702 = vmatprep.mubr.f32.mxu0 0.0
      %v703 = vand.u32 %v215, 4294901760
      %704 = vmatmul.mubr.f32.gmra.mxu0 %v703
      %v705 = vpop.f32.mrf.mxu0
      %v706 = vadd.f32 %v461, %v705
      %v707 = vpop.f32.mrf.mxu0
      %708 = vmatprep.mubr.f32.mxu0 0.0
      %v709 = vand.u32 %v216, 4294901760
      %710 = vmatmul.mubr.f32.gmra.mxu0 %v709
      %v711 = vpop.f32.mrf.mxu0
      %v712 = vadd.f32 %v471, %v711
      %v713 = vpop.f32.mrf.mxu0
      %714 = vdwg.mxu0
      %715 = vmatprep.subr.mxu0 0.0
      %v716 = vand.u32 %v232, 4294901760
      %v717 = vsub.f32 %v232, %v716
      %718 = vmatpush1.msra.mxu0 %v717
      %719 = vmatprep.subr.mxu0 0.0
      %v720 = vand.u32 %v231, 4294901760
      %v721 = vsub.f32 %v231, %v720
      %722 = vmatpush1.msra.mxu0 %v721
      %723 = vmatprep.subr.mxu0 0.0
      %v724 = vand.u32 %v230, 4294901760
      %v725 = vsub.f32 %v230, %v724
      %726 = vmatpush1.msra.mxu0 %v725
      %727 = vmatprep.subr.mxu0 0.0
      %v728 = vand.u32 %v229, 4294901760
      %v729 = vsub.f32 %v229, %v728
      %730 = vmatpush1.msra.mxu0 %v729
      %731 = vmatprep.subr.mxu0 0.0
      %v732 = vand.u32 %v228, 4294901760
      %v733 = vsub.f32 %v228, %v732
      %734 = vmatpush1.msra.mxu0 %v733
      %735 = vmatprep.subr.mxu0 0.0
      %v736 = vand.u32 %v227, 4294901760
      %v737 = vsub.f32 %v227, %v736
      %738 = vmatpush1.msra.mxu0 %v737
      %739 = vmatprep.subr.mxu0 0.0
      %v740 = vand.u32 %v226, 4294901760
      %v741 = vsub.f32 %v226, %v740
      %742 = vmatpush1.msra.mxu0 %v741
      %743 = vmatprep.subr.mxu0 0.0
      %v744 = vand.u32 %v225, 4294901760
      %v745 = vsub.f32 %v225, %v744
      %746 = vmatpush1.msra.mxu0 %v745
      %747 = vmatprep.subr.mxu0 0.0
      %v748 = vand.u32 %v224, 4294901760
      %v749 = vsub.f32 %v224, %v748
      %750 = vmatpush1.msra.mxu0 %v749
      %751 = vmatprep.subr.mxu0 0.0
      %v752 = vand.u32 %v223, 4294901760
      %v753 = vsub.f32 %v223, %v752
      %754 = vmatpush1.msra.mxu0 %v753
      %755 = vmatprep.subr.mxu0 0.0
      %v756 = vand.u32 %v222, 4294901760
      %v757 = vsub.f32 %v222, %v756
      %758 = vmatpush1.msra.mxu0 %v757
      %759 = vmatprep.subr.mxu0 0.0
      %v760 = vand.u32 %v221, 4294901760
      %v761 = vsub.f32 %v221, %v760
      %762 = vmatpush1.msra.mxu0 %v761
      %763 = vmatprep.subr.mxu0 0.0
      %v764 = vand.u32 %v220, 4294901760
      %v765 = vsub.f32 %v220, %v764
      %766 = vmatpush1.msra.mxu0 %v765
      %767 = vmatprep.subr.mxu0 0.0
      %v768 = vand.u32 %v219, 4294901760
      %v769 = vsub.f32 %v219, %v768
      %770 = vmatpush1.msra.mxu0 %v769
      %771 = vmatprep.subr.mxu0 0.0
      %v772 = vand.u32 %v218, 4294901760
      %v773 = vsub.f32 %v218, %v772
      %774 = vmatpush1.msra.mxu0 %v773
      %775 = vmatprep.subr.mxu0 0.0
      %v776 = vand.u32 %v217, 4294901760
      %v777 = vsub.f32 %v217, %v776
      %778 = vmatpush1.msra.mxu0 %v777
      %779 = vmatprep.subr.mxu0 0.0
      %780 = vmatpush2.msra.mxu0 0.0
      %781 = vmatprep.subr.mxu0 0.0
      %782 = vmatpush2.msra.mxu0 0.0
      %783 = vmatprep.subr.mxu0 0.0
      %784 = vmatpush2.msra.mxu0 0.0
      %785 = vmatprep.subr.mxu0 0.0
      %786 = vmatpush2.msra.mxu0 0.0
      %787 = vmatprep.subr.mxu0 0.0
      %788 = vmatpush2.msra.mxu0 0.0
      %789 = vmatprep.subr.mxu0 0.0
      %790 = vmatpush2.msra.mxu0 0.0
      %791 = vmatprep.subr.mxu0 0.0
      %792 = vmatpush2.msra.mxu0 0.0
      %793 = vmatprep.subr.mxu0 0.0
      %794 = vmatpush2.msra.mxu0 0.0
      %795 = vmatprep.subr.mxu0 0.0
      %796 = vmatpush2.msra.mxu0 0.0
      %797 = vmatprep.subr.mxu0 0.0
      %798 = vmatpush2.msra.mxu0 0.0
      %799 = vmatprep.subr.mxu0 0.0
      %800 = vmatpush2.msra.mxu0 0.0
      %801 = vmatprep.subr.mxu0 0.0
      %802 = vmatpush2.msra.mxu0 0.0
      %803 = vmatprep.subr.mxu0 0.0
      %804 = vmatpush2.msra.mxu0 0.0
      %805 = vmatprep.subr.mxu0 0.0
      %806 = vmatpush2.msra.mxu0 0.0
      %807 = vmatprep.subr.mxu0 0.0
      %808 = vmatpush2.msra.mxu0 0.0
      %809 = vmatprep.subr.mxu0 0.0
      %810 = vmatpush2.msra.mxu0 0.0
      %811 = vmatprep.mubr.f32.mxu0 0.0
      %v812 = vand.u32 %v201, 4294901760
      %v813 = vsub.f32 %v201, %v812
      %814 = vmatmul.mubr.f32.gmra.mxu0 %v813
      %v815 = vpop.f32.mrf.mxu0
      %v816 = vadd.f32 %v622, %v815
      %v817 = vpop.f32.mrf.mxu0
      %818 = vmatprep.mubr.f32.mxu0 0.0
      %v819 = vand.u32 %v202, 4294901760
      %v820 = vsub.f32 %v202, %v819
      %821 = vmatmul.mubr.f32.gmra.mxu0 %v820
      %v822 = vpop.f32.mrf.mxu0
      %v823 = vadd.f32 %v628, %v822
      %v824 = vpop.f32.mrf.mxu0
      %825 = vmatprep.mubr.f32.mxu0 0.0
      %v826 = vand.u32 %v203, 4294901760
      %v827 = vsub.f32 %v203, %v826
      %828 = vmatmul.mubr.f32.gmra.mxu0 %v827
      %v829 = vpop.f32.mrf.mxu0
      %v830 = vadd.f32 %v634, %v829
      %v831 = vpop.f32.mrf.mxu0
      %832 = vmatprep.mubr.f32.mxu0 0.0
      %v833 = vand.u32 %v204, 4294901760
      %v834 = vsub.f32 %v204, %v833
      %835 = vmatmul.mubr.f32.gmra.mxu0 %v834
      %v836 = vpop.f32.mrf.mxu0
      %v837 = vadd.f32 %v640, %v836
      %v838 = vpop.f32.mrf.mxu0
      %839 = vmatprep.mubr.f32.mxu0 0.0
      %v840 = vand.u32 %v205, 4294901760
      %v841 = vsub.f32 %v205, %v840
      %842 = vmatmul.mubr.f32.gmra.mxu0 %v841
      %v843 = vpop.f32.mrf.mxu0
      %v844 = vadd.f32 %v646, %v843
      %v845 = vpop.f32.mrf.mxu0
      %846 = vmatprep.mubr.f32.mxu0 0.0
      %v847 = vand.u32 %v206, 4294901760
      %v848 = vsub.f32 %v206, %v847
      %849 = vmatmul.mubr.f32.gmra.mxu0 %v848
      %v850 = vpop.f32.mrf.mxu0
      %v851 = vadd.f32 %v652, %v850
      %v852 = vpop.f32.mrf.mxu0
      %853 = vmatprep.mubr.f32.mxu0 0.0
      %v854 = vand.u32 %v207, 4294901760
      %v855 = vsub.f32 %v207, %v854
      %856 = vmatmul.mubr.f32.gmra.mxu0 %v855
      %v857 = vpop.f32.mrf.mxu0
      %v858 = vadd.f32 %v658, %v857
      %v859 = vpop.f32.mrf.mxu0
      %860 = vmatprep.mubr.f32.mxu0 0.0
      %v861 = vand.u32 %v208, 4294901760
      %v862 = vsub.f32 %v208, %v861
      %863 = vmatmul.mubr.f32.gmra.mxu0 %v862
      %v864 = vpop.f32.mrf.mxu0
      %v865 = vadd.f32 %v664, %v864
      %v866 = vpop.f32.mrf.mxu0
      %867 = vmatprep.mubr.f32.mxu0 0.0
      %v868 = vand.u32 %v209, 4294901760
      %v869 = vsub.f32 %v209, %v868
      %870 = vmatmul.mubr.f32.gmra.mxu0 %v869
      %v871 = vpop.f32.mrf.mxu0
      %v872 = vadd.f32 %v670, %v871
      %v873 = vpop.f32.mrf.mxu0
      %874 = vmatprep.mubr.f32.mxu0 0.0
      %v875 = vand.u32 %v210, 4294901760
      %v876 = vsub.f32 %v210, %v875
      %877 = vmatmul.mubr.f32.gmra.mxu0 %v876
      %v878 = vpop.f32.mrf.mxu0
      %v879 = vadd.f32 %v676, %v878
      %v880 = vpop.f32.mrf.mxu0
      %881 = vmatprep.mubr.f32.mxu0 0.0
      %v882 = vand.u32 %v211, 4294901760
      %v883 = vsub.f32 %v211, %v882
      %884 = vmatmul.mubr.f32.gmra.mxu0 %v883
      %v885 = vpop.f32.mrf.mxu0
      %v886 = vadd.f32 %v682, %v885
      %v887 = vpop.f32.mrf.mxu0
      %888 = vmatprep.mubr.f32.mxu0 0.0
      %v889 = vand.u32 %v212, 4294901760
      %v890 = vsub.f32 %v212, %v889
      %891 = vmatmul.mubr.f32.gmra.mxu0 %v890
      %v892 = vpop.f32.mrf.mxu0
      %v893 = vadd.f32 %v688, %v892
      %v894 = vpop.f32.mrf.mxu0
      %895 = vmatprep.mubr.f32.mxu0 0.0
      %v896 = vand.u32 %v213, 4294901760
      %v897 = vsub.f32 %v213, %v896
      %898 = vmatmul.mubr.f32.gmra.mxu0 %v897
      %v899 = vpop.f32.mrf.mxu0
      %v900 = vadd.f32 %v694, %v899
      %v901 = vpop.f32.mrf.mxu0
      %902 = vmatprep.mubr.f32.mxu0 0.0
      %v903 = vand.u32 %v214, 4294901760
      %v904 = vsub.f32 %v214, %v903
      %905 = vmatmul.mubr.f32.gmra.mxu0 %v904
      %v906 = vpop.f32.mrf.mxu0
      %v907 = vadd.f32 %v700, %v906
      %v908 = vpop.f32.mrf.mxu0
      %909 = vmatprep.mubr.f32.mxu0 0.0
      %v910 = vand.u32 %v215, 4294901760
      %v911 = vsub.f32 %v215, %v910
      %912 = vmatmul.mubr.f32.gmra.mxu0 %v911
      %v913 = vpop.f32.mrf.mxu0
      %v914 = vadd.f32 %v706, %v913
      %v915 = vpop.f32.mrf.mxu0
      %916 = vmatprep.mubr.f32.mxu0 0.0
      %v917 = vand.u32 %v216, 4294901760
      %v918 = vsub.f32 %v216, %v917
      %919 = vmatmul.mubr.f32.gmra.mxu0 %v918
      %v920 = vpop.f32.mrf.mxu0
      %v921 = vadd.f32 %v712, %v920
      %v922 = vpop.f32.mrf.mxu0
      %923 = vdwg.mxu0
      %924 = vmatprep.subr.mxu0 0.0
      %v925 = vand.u32 %v232, 4294901760
      %926 = vmatpush1.msra.mxu0 %v925
      %927 = vmatprep.subr.mxu0 0.0
      %v928 = vand.u32 %v231, 4294901760
      %929 = vmatpush1.msra.mxu0 %v928
      %930 = vmatprep.subr.mxu0 0.0
      %v931 = vand.u32 %v230, 4294901760
      %932 = vmatpush1.msra.mxu0 %v931
      %933 = vmatprep.subr.mxu0 0.0
      %v934 = vand.u32 %v229, 4294901760
      %935 = vmatpush1.msra.mxu0 %v934
      %936 = vmatprep.subr.mxu0 0.0
      %v937 = vand.u32 %v228, 4294901760
      %938 = vmatpush1.msra.mxu0 %v937
      %939 = vmatprep.subr.mxu0 0.0
      %v940 = vand.u32 %v227, 4294901760
      %941 = vmatpush1.msra.mxu0 %v940
      %942 = vmatprep.subr.mxu0 0.0
      %v943 = vand.u32 %v226, 4294901760
      %944 = vmatpush1.msra.mxu0 %v943
      %945 = vmatprep.subr.mxu0 0.0
      %v946 = vand.u32 %v225, 4294901760
      %947 = vmatpush1.msra.mxu0 %v946
      %948 = vmatprep.subr.mxu0 0.0
      %v949 = vand.u32 %v224, 4294901760
      %950 = vmatpush1.msra.mxu0 %v949
      %951 = vmatprep.subr.mxu0 0.0
      %v952 = vand.u32 %v223, 4294901760
      %953 = vmatpush1.msra.mxu0 %v952
      %954 = vmatprep.subr.mxu0 0.0
      %v955 = vand.u32 %v222, 4294901760
      %956 = vmatpush1.msra.mxu0 %v955
      %957 = vmatprep.subr.mxu0 0.0
      %v958 = vand.u32 %v221, 4294901760
      %959 = vmatpush1.msra.mxu0 %v958
      %960 = vmatprep.subr.mxu0 0.0
      %v961 = vand.u32 %v220, 4294901760
      %962 = vmatpush1.msra.mxu0 %v961
      %963 = vmatprep.subr.mxu0 0.0
      %v964 = vand.u32 %v219, 4294901760
      %965 = vmatpush1.msra.mxu0 %v964
      %966 = vmatprep.subr.mxu0 0.0
      %v967 = vand.u32 %v218, 4294901760
      %968 = vmatpush1.msra.mxu0 %v967
      %969 = vmatprep.subr.mxu0 0.0
      %v970 = vand.u32 %v217, 4294901760
      %971 = vmatpush1.msra.mxu0 %v970
      %972 = vmatprep.subr.mxu0 0.0
      %973 = vmatpush2.msra.mxu0 0.0
      %974 = vmatprep.subr.mxu0 0.0
      %975 = vmatpush2.msra.mxu0 0.0
      %976 = vmatprep.subr.mxu0 0.0
      %977 = vmatpush2.msra.mxu0 0.0
      %978 = vmatprep.subr.mxu0 0.0
      %979 = vmatpush2.msra.mxu0 0.0
      %980 = vmatprep.subr.mxu0 0.0
      %981 = vmatpush2.msra.mxu0 0.0
      %982 = vmatprep.subr.mxu0 0.0
      %983 = vmatpush2.msra.mxu0 0.0
      %984 = vmatprep.subr.mxu0 0.0
      %985 = vmatpush2.msra.mxu0 0.0
      %986 = vmatprep.subr.mxu0 0.0
      %987 = vmatpush2.msra.mxu0 0.0
      %988 = vmatprep.subr.mxu0 0.0
      %989 = vmatpush2.msra.mxu0 0.0
      %990 = vmatprep.subr.mxu0 0.0
      %991 = vmatpush2.msra.mxu0 0.0
      %992 = vmatprep.subr.mxu0 0.0
      %993 = vmatpush2.msra.mxu0 0.0
      %994 = vmatprep.subr.mxu0 0.0
      %995 = vmatpush2.msra.mxu0 0.0
      %996 = vmatprep.subr.mxu0 0.0
      %997 = vmatpush2.msra.mxu0 0.0
      %998 = vmatprep.subr.mxu0 0.0
      %999 = vmatpush2.msra.mxu0 0.0
      %1000 = vmatprep.subr.mxu0 0.0
      %1001 = vmatpush2.msra.mxu0 0.0
      %1002 = vmatprep.subr.mxu0 0.0
      %1003 = vmatpush2.msra.mxu0 0.0
      %1004 = vmatprep.mubr.f32.mxu0 0.0
      %v1005 = vand.u32 %v201, 4294901760
      %v1006 = vsub.f32 %v201, %v1005
      %v1007 = vand.u32 %v1006, 4294901760
      %1008 = vmatmul.mubr.f32.gmra.mxu0 %v1007
      %v1009 = vpop.f32.mrf.mxu0
      %v1010 = vadd.f32 %v816, %v1009
      %v1011 = vpop.f32.mrf.mxu0
      %1012 = vmatprep.mubr.f32.mxu0 0.0
      %v1013 = vand.u32 %v202, 4294901760
      %v1014 = vsub.f32 %v202, %v1013
      %v1015 = vand.u32 %v1014, 4294901760
      %1016 = vmatmul.mubr.f32.gmra.mxu0 %v1015
      %v1017 = vpop.f32.mrf.mxu0
      %v1018 = vadd.f32 %v823, %v1017
      %v1019 = vpop.f32.mrf.mxu0
      %1020 = vmatprep.mubr.f32.mxu0 0.0
      %v1021 = vand.u32 %v203, 4294901760
      %v1022 = vsub.f32 %v203, %v1021
      %v1023 = vand.u32 %v1022, 4294901760
      %1024 = vmatmul.mubr.f32.gmra.mxu0 %v1023
      %v1025 = vpop.f32.mrf.mxu0
      %v1026 = vadd.f32 %v830, %v1025
      %v1027 = vpop.f32.mrf.mxu0
      %1028 = vmatprep.mubr.f32.mxu0 0.0
      %v1029 = vand.u32 %v204, 4294901760
      %v1030 = vsub.f32 %v204, %v1029
      %v1031 = vand.u32 %v1030, 4294901760
      %1032 = vmatmul.mubr.f32.gmra.mxu0 %v1031
      %v1033 = vpop.f32.mrf.mxu0
      %v1034 = vadd.f32 %v837, %v1033
      %v1035 = vpop.f32.mrf.mxu0
      %1036 = vmatprep.mubr.f32.mxu0 0.0
      %v1037 = vand.u32 %v205, 4294901760
      %v1038 = vsub.f32 %v205, %v1037
      %v1039 = vand.u32 %v1038, 4294901760
      %1040 = vmatmul.mubr.f32.gmra.mxu0 %v1039
      %v1041 = vpop.f32.mrf.mxu0
      %v1042 = vadd.f32 %v844, %v1041
      %v1043 = vpop.f32.mrf.mxu0
      %1044 = vmatprep.mubr.f32.mxu0 0.0
      %v1045 = vand.u32 %v206, 4294901760
      %v1046 = vsub.f32 %v206, %v1045
      %v1047 = vand.u32 %v1046, 4294901760
      %1048 = vmatmul.mubr.f32.gmra.mxu0 %v1047
      %v1049 = vpop.f32.mrf.mxu0
      %v1050 = vadd.f32 %v851, %v1049
      %v1051 = vpop.f32.mrf.mxu0
      %1052 = vmatprep.mubr.f32.mxu0 0.0
      %v1053 = vand.u32 %v207, 4294901760
      %v1054 = vsub.f32 %v207, %v1053
      %v1055 = vand.u32 %v1054, 4294901760
      %1056 = vmatmul.mubr.f32.gmra.mxu0 %v1055
      %v1057 = vpop.f32.mrf.mxu0
      %v1058 = vadd.f32 %v858, %v1057
      %v1059 = vpop.f32.mrf.mxu0
      %1060 = vmatprep.mubr.f32.mxu0 0.0
      %v1061 = vand.u32 %v208, 4294901760
      %v1062 = vsub.f32 %v208, %v1061
      %v1063 = vand.u32 %v1062, 4294901760
      %1064 = vmatmul.mubr.f32.gmra.mxu0 %v1063
      %v1065 = vpop.f32.mrf.mxu0
      %v1066 = vadd.f32 %v865, %v1065
      %v1067 = vpop.f32.mrf.mxu0
      %1068 = vmatprep.mubr.f32.mxu0 0.0
      %v1069 = vand.u32 %v209, 4294901760
      %v1070 = vsub.f32 %v209, %v1069
      %v1071 = vand.u32 %v1070, 4294901760
      %1072 = vmatmul.mubr.f32.gmra.mxu0 %v1071
      %v1073 = vpop.f32.mrf.mxu0
      %v1074 = vadd.f32 %v872, %v1073
      %v1075 = vpop.f32.mrf.mxu0
      %1076 = vmatprep.mubr.f32.mxu0 0.0
      %v1077 = vand.u32 %v210, 4294901760
      %v1078 = vsub.f32 %v210, %v1077
      %v1079 = vand.u32 %v1078, 4294901760
      %1080 = vmatmul.mubr.f32.gmra.mxu0 %v1079
      %v1081 = vpop.f32.mrf.mxu0
      %v1082 = vadd.f32 %v879, %v1081
      %v1083 = vpop.f32.mrf.mxu0
      %1084 = vmatprep.mubr.f32.mxu0 0.0
      %v1085 = vand.u32 %v211, 4294901760
      %v1086 = vsub.f32 %v211, %v1085
      %v1087 = vand.u32 %v1086, 4294901760
      %1088 = vmatmul.mubr.f32.gmra.mxu0 %v1087
      %v1089 = vpop.f32.mrf.mxu0
      %v1090 = vadd.f32 %v886, %v1089
      %v1091 = vpop.f32.mrf.mxu0
      %1092 = vmatprep.mubr.f32.mxu0 0.0
      %v1093 = vand.u32 %v212, 4294901760
      %v1094 = vsub.f32 %v212, %v1093
      %v1095 = vand.u32 %v1094, 4294901760
      %1096 = vmatmul.mubr.f32.gmra.mxu0 %v1095
      %v1097 = vpop.f32.mrf.mxu0
      %v1098 = vadd.f32 %v893, %v1097
      %v1099 = vpop.f32.mrf.mxu0
      %1100 = vmatprep.mubr.f32.mxu0 0.0
      %v1101 = vand.u32 %v213, 4294901760
      %v1102 = vsub.f32 %v213, %v1101
      %v1103 = vand.u32 %v1102, 4294901760
      %1104 = vmatmul.mubr.f32.gmra.mxu0 %v1103
      %v1105 = vpop.f32.mrf.mxu0
      %v1106 = vadd.f32 %v900, %v1105
      %v1107 = vpop.f32.mrf.mxu0
      %1108 = vmatprep.mubr.f32.mxu0 0.0
      %v1109 = vand.u32 %v214, 4294901760
      %v1110 = vsub.f32 %v214, %v1109
      %v1111 = vand.u32 %v1110, 4294901760
      %1112 = vmatmul.mubr.f32.gmra.mxu0 %v1111
      %v1113 = vpop.f32.mrf.mxu0
      %v1114 = vadd.f32 %v907, %v1113
      %v1115 = vpop.f32.mrf.mxu0
      %1116 = vmatprep.mubr.f32.mxu0 0.0
      %v1117 = vand.u32 %v215, 4294901760
      %v1118 = vsub.f32 %v215, %v1117
      %v1119 = vand.u32 %v1118, 4294901760
      %1120 = vmatmul.mubr.f32.gmra.mxu0 %v1119
      %v1121 = vpop.f32.mrf.mxu0
      %v1122 = vadd.f32 %v914, %v1121
      %v1123 = vpop.f32.mrf.mxu0
      %1124 = vmatprep.mubr.f32.mxu0 0.0
      %v1125 = vand.u32 %v216, 4294901760
      %v1126 = vsub.f32 %v216, %v1125
      %v1127 = vand.u32 %v1126, 4294901760
      %1128 = vmatmul.mubr.f32.gmra.mxu0 %v1127
      %v1129 = vpop.f32.mrf.mxu0
      %v1130 = vadd.f32 %v921, %v1129
      %v1131 = vpop.f32.mrf.mxu0
      %1132 = vdwg.mxu0
      %1133 = vmatprep.subr.mxu0 0.0
      %v1134 = vand.u32 %v232, 4294901760
      %v1135 = vsub.f32 %v232, %v1134
      %v1136 = vand.u32 %v1135, 4294901760
      %1137 = vmatpush1.msra.mxu0 %v1136
      %1138 = vmatprep.subr.mxu0 0.0
      %v1139 = vand.u32 %v231, 4294901760
      %v1140 = vsub.f32 %v231, %v1139
      %v1141 = vand.u32 %v1140, 4294901760
      %1142 = vmatpush1.msra.mxu0 %v1141
      %1143 = vmatprep.subr.mxu0 0.0
      %v1144 = vand.u32 %v230, 4294901760
      %v1145 = vsub.f32 %v230, %v1144
      %v1146 = vand.u32 %v1145, 4294901760
      %1147 = vmatpush1.msra.mxu0 %v1146
      %1148 = vmatprep.subr.mxu0 0.0
      %v1149 = vand.u32 %v229, 4294901760
      %v1150 = vsub.f32 %v229, %v1149
      %v1151 = vand.u32 %v1150, 4294901760
      %1152 = vmatpush1.msra.mxu0 %v1151
      %1153 = vmatprep.subr.mxu0 0.0
      %v1154 = vand.u32 %v228, 4294901760
      %v1155 = vsub.f32 %v228, %v1154
      %v1156 = vand.u32 %v1155, 4294901760
      %1157 = vmatpush1.msra.mxu0 %v1156
      %1158 = vmatprep.subr.mxu0 0.0
      %v1159 = vand.u32 %v227, 4294901760
      %v1160 = vsub.f32 %v227, %v1159
      %v1161 = vand.u32 %v1160, 4294901760
      %1162 = vmatpush1.msra.mxu0 %v1161
      %1163 = vmatprep.subr.mxu0 0.0
      %v1164 = vand.u32 %v226, 4294901760
      %v1165 = vsub.f32 %v226, %v1164
      %v1166 = vand.u32 %v1165, 4294901760
      %1167 = vmatpush1.msra.mxu0 %v1166
      %1168 = vmatprep.subr.mxu0 0.0
      %v1169 = vand.u32 %v225, 4294901760
      %v1170 = vsub.f32 %v225, %v1169
      %v1171 = vand.u32 %v1170, 4294901760
      %1172 = vmatpush1.msra.mxu0 %v1171
      %1173 = vmatprep.subr.mxu0 0.0
      %v1174 = vand.u32 %v224, 4294901760
      %v1175 = vsub.f32 %v224, %v1174
      %v1176 = vand.u32 %v1175, 4294901760
      %1177 = vmatpush1.msra.mxu0 %v1176
      %1178 = vmatprep.subr.mxu0 0.0
      %v1179 = vand.u32 %v223, 4294901760
      %v1180 = vsub.f32 %v223, %v1179
      %v1181 = vand.u32 %v1180, 4294901760
      %1182 = vmatpush1.msra.mxu0 %v1181
      %1183 = vmatprep.subr.mxu0 0.0
      %v1184 = vand.u32 %v222, 4294901760
      %v1185 = vsub.f32 %v222, %v1184
      %v1186 = vand.u32 %v1185, 4294901760
      %1187 = vmatpush1.msra.mxu0 %v1186
      %1188 = vmatprep.subr.mxu0 0.0
      %v1189 = vand.u32 %v221, 4294901760
      %v1190 = vsub.f32 %v221, %v1189
      %v1191 = vand.u32 %v1190, 4294901760
      %1192 = vmatpush1.msra.mxu0 %v1191
      %1193 = vmatprep.subr.mxu0 0.0
      %v1194 = vand.u32 %v220, 4294901760
      %v1195 = vsub.f32 %v220, %v1194
      %v1196 = vand.u32 %v1195, 4294901760
      %1197 = vmatpush1.msra.mxu0 %v1196
      %1198 = vmatprep.subr.mxu0 0.0
      %v1199 = vand.u32 %v219, 4294901760
      %v1200 = vsub.f32 %v219, %v1199
      %v1201 = vand.u32 %v1200, 4294901760
      %1202 = vmatpush1.msra.mxu0 %v1201
      %1203 = vmatprep.subr.mxu0 0.0
      %v1204 = vand.u32 %v218, 4294901760
      %v1205 = vsub.f32 %v218, %v1204
      %v1206 = vand.u32 %v1205, 4294901760
      %1207 = vmatpush1.msra.mxu0 %v1206
      %1208 = vmatprep.subr.mxu0 0.0
      %v1209 = vand.u32 %v217, 4294901760
      %v1210 = vsub.f32 %v217, %v1209
      %v1211 = vand.u32 %v1210, 4294901760
      %1212 = vmatpush1.msra.mxu0 %v1211
      %1213 = vmatprep.subr.mxu0 0.0
      %1214 = vmatpush2.msra.mxu0 0.0
      %1215 = vmatprep.subr.mxu0 0.0
      %1216 = vmatpush2.msra.mxu0 0.0
      %1217 = vmatprep.subr.mxu0 0.0
      %1218 = vmatpush2.msra.mxu0 0.0
      %1219 = vmatprep.subr.mxu0 0.0
      %1220 = vmatpush2.msra.mxu0 0.0
      %1221 = vmatprep.subr.mxu0 0.0
      %1222 = vmatpush2.msra.mxu0 0.0
      %1223 = vmatprep.subr.mxu0 0.0
      %1224 = vmatpush2.msra.mxu0 0.0
      %1225 = vmatprep.subr.mxu0 0.0
      %1226 = vmatpush2.msra.mxu0 0.0
      %1227 = vmatprep.subr.mxu0 0.0
      %1228 = vmatpush2.msra.mxu0 0.0
      %1229 = vmatprep.subr.mxu0 0.0
      %1230 = vmatpush2.msra.mxu0 0.0
      %1231 = vmatprep.subr.mxu0 0.0
      %1232 = vmatpush2.msra.mxu0 0.0
      %1233 = vmatprep.subr.mxu0 0.0
      %1234 = vmatpush2.msra.mxu0 0.0
      %1235 = vmatprep.subr.mxu0 0.0
      %1236 = vmatpush2.msra.mxu0 0.0
      %1237 = vmatprep.subr.mxu0 0.0
      %1238 = vmatpush2.msra.mxu0 0.0
      %1239 = vmatprep.subr.mxu0 0.0
      %1240 = vmatpush2.msra.mxu0 0.0
      %1241 = vmatprep.subr.mxu0 0.0
      %1242 = vmatpush2.msra.mxu0 0.0
      %1243 = vmatprep.subr.mxu0 0.0
      %1244 = vmatpush2.msra.mxu0 0.0
      %1245 = vmatprep.mubr.f32.mxu0 0.0
      %v1246 = vand.u32 %v201, 4294901760
      %1247 = vmatmul.mubr.f32.gmra.mxu0 %v1246
      %v1248 = vpop.f32.mrf.mxu0
      %v1249 = vadd.f32 %v1010, %v1248
      %v1250 = vpop.f32.mrf.mxu0
      %1251 = vmatprep.mubr.f32.mxu0 0.0
      %v1252 = vand.u32 %v202, 4294901760
      %1253 = vmatmul.mubr.f32.gmra.mxu0 %v1252
      %v1254 = vpop.f32.mrf.mxu0
      %v1255 = vadd.f32 %v1018, %v1254
      %v1256 = vpop.f32.mrf.mxu0
      %1257 = vmatprep.mubr.f32.mxu0 0.0
      %v1258 = vand.u32 %v203, 4294901760
      %1259 = vmatmul.mubr.f32.gmra.mxu0 %v1258
      %v1260 = vpop.f32.mrf.mxu0
      %v1261 = vadd.f32 %v1026, %v1260
      %v1262 = vpop.f32.mrf.mxu0
      %1263 = vmatprep.mubr.f32.mxu0 0.0
      %v1264 = vand.u32 %v204, 4294901760
      %1265 = vmatmul.mubr.f32.gmra.mxu0 %v1264
      %v1266 = vpop.f32.mrf.mxu0
      %v1267 = vadd.f32 %v1034, %v1266
      %v1268 = vpop.f32.mrf.mxu0
      %1269 = vmatprep.mubr.f32.mxu0 0.0
      %v1270 = vand.u32 %v205, 4294901760
      %1271 = vmatmul.mubr.f32.gmra.mxu0 %v1270
      %v1272 = vpop.f32.mrf.mxu0
      %v1273 = vadd.f32 %v1042, %v1272
      %v1274 = vpop.f32.mrf.mxu0
      %1275 = vmatprep.mubr.f32.mxu0 0.0
      %v1276 = vand.u32 %v206, 4294901760
      %1277 = vmatmul.mubr.f32.gmra.mxu0 %v1276
      %v1278 = vpop.f32.mrf.mxu0
      %v1279 = vadd.f32 %v1050, %v1278
      %v1280 = vpop.f32.mrf.mxu0
      %1281 = vmatprep.mubr.f32.mxu0 0.0
      %v1282 = vand.u32 %v207, 4294901760
      %1283 = vmatmul.mubr.f32.gmra.mxu0 %v1282
      %v1284 = vpop.f32.mrf.mxu0
      %v1285 = vadd.f32 %v1058, %v1284
      %v1286 = vpop.f32.mrf.mxu0
      %1287 = vmatprep.mubr.f32.mxu0 0.0
      %v1288 = vand.u32 %v208, 4294901760
      %1289 = vmatmul.mubr.f32.gmra.mxu0 %v1288
      %v1290 = vpop.f32.mrf.mxu0
      %v1291 = vadd.f32 %v1066, %v1290
      %v1292 = vpop.f32.mrf.mxu0
      %1293 = vmatprep.mubr.f32.mxu0 0.0
      %v1294 = vand.u32 %v209, 4294901760
      %1295 = vmatmul.mubr.f32.gmra.mxu0 %v1294
      %v1296 = vpop.f32.mrf.mxu0
      %v1297 = vadd.f32 %v1074, %v1296
      %v1298 = vpop.f32.mrf.mxu0
      %1299 = vmatprep.mubr.f32.mxu0 0.0
      %v1300 = vand.u32 %v210, 4294901760
      %1301 = vmatmul.mubr.f32.gmra.mxu0 %v1300
      %v1302 = vpop.f32.mrf.mxu0
      %v1303 = vadd.f32 %v1082, %v1302
      %v1304 = vpop.f32.mrf.mxu0
      %1305 = vmatprep.mubr.f32.mxu0 0.0
      %v1306 = vand.u32 %v211, 4294901760
      %1307 = vmatmul.mubr.f32.gmra.mxu0 %v1306
      %v1308 = vpop.f32.mrf.mxu0
      %v1309 = vadd.f32 %v1090, %v1308
      %v1310 = vpop.f32.mrf.mxu0
      %1311 = vmatprep.mubr.f32.mxu0 0.0
      %v1312 = vand.u32 %v212, 4294901760
      %1313 = vmatmul.mubr.f32.gmra.mxu0 %v1312
      %v1314 = vpop.f32.mrf.mxu0
      %v1315 = vadd.f32 %v1098, %v1314
      %v1316 = vpop.f32.mrf.mxu0
      %1317 = vmatprep.mubr.f32.mxu0 0.0
      %v1318 = vand.u32 %v213, 4294901760
      %1319 = vmatmul.mubr.f32.gmra.mxu0 %v1318
      %v1320 = vpop.f32.mrf.mxu0
      %v1321 = vadd.f32 %v1106, %v1320
      %v1322 = vpop.f32.mrf.mxu0
      %1323 = vmatprep.mubr.f32.mxu0 0.0
      %v1324 = vand.u32 %v214, 4294901760
      %1325 = vmatmul.mubr.f32.gmra.mxu0 %v1324
      %v1326 = vpop.f32.mrf.mxu0
      %v1327 = vadd.f32 %v1114, %v1326
      %v1328 = vpop.f32.mrf.mxu0
      %1329 = vmatprep.mubr.f32.mxu0 0.0
      %v1330 = vand.u32 %v215, 4294901760
      %1331 = vmatmul.mubr.f32.gmra.mxu0 %v1330
      %v1332 = vpop.f32.mrf.mxu0
      %v1333 = vadd.f32 %v1122, %v1332
      %v1334 = vpop.f32.mrf.mxu0
      %1335 = vmatprep.mubr.f32.mxu0 0.0
      %v1336 = vand.u32 %v216, 4294901760
      %1337 = vmatmul.mubr.f32.gmra.mxu0 %v1336
      %v1338 = vpop.f32.mrf.mxu0
      %v1339 = vadd.f32 %v1130, %v1338
      %v1340 = vpop.f32.mrf.mxu0
      %1341 = vdwg.mxu0
      %1342 = vmatprep.subr.mxu0 0.0
      %v1343 = vand.u32 %v232, 4294901760
      %1344 = vmatpush1.msra.mxu0 %v1343
      %1345 = vmatprep.subr.mxu0 0.0
      %v1346 = vand.u32 %v231, 4294901760
      %1347 = vmatpush1.msra.mxu0 %v1346
      %1348 = vmatprep.subr.mxu0 0.0
      %v1349 = vand.u32 %v230, 4294901760
      %1350 = vmatpush1.msra.mxu0 %v1349
      %1351 = vmatprep.subr.mxu0 0.0
      %v1352 = vand.u32 %v229, 4294901760
      %1353 = vmatpush1.msra.mxu0 %v1352
      %1354 = vmatprep.subr.mxu0 0.0
      %v1355 = vand.u32 %v228, 4294901760
      %1356 = vmatpush1.msra.mxu0 %v1355
      %1357 = vmatprep.subr.mxu0 0.0
      %v1358 = vand.u32 %v227, 4294901760
      %1359 = vmatpush1.msra.mxu0 %v1358
      %1360 = vmatprep.subr.mxu0 0.0
      %v1361 = vand.u32 %v226, 4294901760
      %1362 = vmatpush1.msra.mxu0 %v1361
      %1363 = vmatprep.subr.mxu0 0.0
      %v1364 = vand.u32 %v225, 4294901760
      %1365 = vmatpush1.msra.mxu0 %v1364
      %1366 = vmatprep.subr.mxu0 0.0
      %v1367 = vand.u32 %v224, 4294901760
      %1368 = vmatpush1.msra.mxu0 %v1367
      %1369 = vmatprep.subr.mxu0 0.0
      %v1370 = vand.u32 %v223, 4294901760
      %1371 = vmatpush1.msra.mxu0 %v1370
      %1372 = vmatprep.subr.mxu0 0.0
      %v1373 = vand.u32 %v222, 4294901760
      %1374 = vmatpush1.msra.mxu0 %v1373
      %1375 = vmatprep.subr.mxu0 0.0
      %v1376 = vand.u32 %v221, 4294901760
      %1377 = vmatpush1.msra.mxu0 %v1376
      %1378 = vmatprep.subr.mxu0 0.0
      %v1379 = vand.u32 %v220, 4294901760
      %1380 = vmatpush1.msra.mxu0 %v1379
      %1381 = vmatprep.subr.mxu0 0.0
      %v1382 = vand.u32 %v219, 4294901760
      %1383 = vmatpush1.msra.mxu0 %v1382
      %1384 = vmatprep.subr.mxu0 0.0
      %v1385 = vand.u32 %v218, 4294901760
      %1386 = vmatpush1.msra.mxu0 %v1385
      %1387 = vmatprep.subr.mxu0 0.0
      %v1388 = vand.u32 %v217, 4294901760
      %1389 = vmatpush1.msra.mxu0 %v1388
      %1390 = vmatprep.subr.mxu0 0.0
      %1391 = vmatpush2.msra.mxu0 0.0
      %1392 = vmatprep.subr.mxu0 0.0
      %1393 = vmatpush2.msra.mxu0 0.0
      %1394 = vmatprep.subr.mxu0 0.0
      %1395 = vmatpush2.msra.mxu0 0.0
      %1396 = vmatprep.subr.mxu0 0.0
      %1397 = vmatpush2.msra.mxu0 0.0
      %1398 = vmatprep.subr.mxu0 0.0
      %1399 = vmatpush2.msra.mxu0 0.0
      %1400 = vmatprep.subr.mxu0 0.0
      %1401 = vmatpush2.msra.mxu0 0.0
      %1402 = vmatprep.subr.mxu0 0.0
      %1403 = vmatpush2.msra.mxu0 0.0
      %1404 = vmatprep.subr.mxu0 0.0
      %1405 = vmatpush2.msra.mxu0 0.0
      %1406 = vmatprep.subr.mxu0 0.0
      %1407 = vmatpush2.msra.mxu0 0.0
      %1408 = vmatprep.subr.mxu0 0.0
      %1409 = vmatpush2.msra.mxu0 0.0
      %1410 = vmatprep.subr.mxu0 0.0
      %1411 = vmatpush2.msra.mxu0 0.0
      %1412 = vmatprep.subr.mxu0 0.0
      %1413 = vmatpush2.msra.mxu0 0.0
      %1414 = vmatprep.subr.mxu0 0.0
      %1415 = vmatpush2.msra.mxu0 0.0
      %1416 = vmatprep.subr.mxu0 0.0
      %1417 = vmatpush2.msra.mxu0 0.0
      %1418 = vmatprep.subr.mxu0 0.0
      %1419 = vmatpush2.msra.mxu0 0.0
      %1420 = vmatprep.subr.mxu0 0.0
      %1421 = vmatpush2.msra.mxu0 0.0
      %1422 = vmatprep.mubr.f32.mxu0 0.0
      %v1423 = vand.u32 %v201, 4294901760
      %1424 = vmatmul.mubr.f32.gmra.mxu0 %v1423
      %v1425 = vpop.f32.mrf.mxu0
      %v1426 = vadd.f32 %v1249, %v1425
      %v1427 = vpop.f32.mrf.mxu0
      %1428 = vmatprep.mubr.f32.mxu0 0.0
      %v1429 = vand.u32 %v202, 4294901760
      %1430 = vmatmul.mubr.f32.gmra.mxu0 %v1429
      %v1431 = vpop.f32.mrf.mxu0
      %v1432 = vadd.f32 %v1255, %v1431
      %v1433 = vpop.f32.mrf.mxu0
      %1434 = vmatprep.mubr.f32.mxu0 0.0
      %v1435 = vand.u32 %v203, 4294901760
      %1436 = vmatmul.mubr.f32.gmra.mxu0 %v1435
      %v1437 = vpop.f32.mrf.mxu0
      %v1438 = vadd.f32 %v1261, %v1437
      %v1439 = vpop.f32.mrf.mxu0
      %1440 = vmatprep.mubr.f32.mxu0 0.0
      %v1441 = vand.u32 %v204, 4294901760
      %1442 = vmatmul.mubr.f32.gmra.mxu0 %v1441
      %v1443 = vpop.f32.mrf.mxu0
      %v1444 = vadd.f32 %v1267, %v1443
      %v1445 = vpop.f32.mrf.mxu0
      %1446 = vmatprep.mubr.f32.mxu0 0.0
      %v1447 = vand.u32 %v205, 4294901760
      %1448 = vmatmul.mubr.f32.gmra.mxu0 %v1447
      %v1449 = vpop.f32.mrf.mxu0
      %v1450 = vadd.f32 %v1273, %v1449
      %v1451 = vpop.f32.mrf.mxu0
      %1452 = vmatprep.mubr.f32.mxu0 0.0
      %v1453 = vand.u32 %v206, 4294901760
      %1454 = vmatmul.mubr.f32.gmra.mxu0 %v1453
      %v1455 = vpop.f32.mrf.mxu0
      %v1456 = vadd.f32 %v1279, %v1455
      %v1457 = vpop.f32.mrf.mxu0
      %1458 = vmatprep.mubr.f32.mxu0 0.0
      %v1459 = vand.u32 %v207, 4294901760
      %1460 = vmatmul.mubr.f32.gmra.mxu0 %v1459
      %v1461 = vpop.f32.mrf.mxu0
      %v1462 = vadd.f32 %v1285, %v1461
      %v1463 = vpop.f32.mrf.mxu0
      %1464 = vmatprep.mubr.f32.mxu0 0.0
      %v1465 = vand.u32 %v208, 4294901760
      %1466 = vmatmul.mubr.f32.gmra.mxu0 %v1465
      %v1467 = vpop.f32.mrf.mxu0
      %v1468 = vadd.f32 %v1291, %v1467
      %v1469 = vpop.f32.mrf.mxu0
      %1470 = vmatprep.mubr.f32.mxu0 0.0
      %v1471 = vand.u32 %v209, 4294901760
      %1472 = vmatmul.mubr.f32.gmra.mxu0 %v1471
      %v1473 = vpop.f32.mrf.mxu0
      %v1474 = vadd.f32 %v1297, %v1473
      %v1475 = vpop.f32.mrf.mxu0
      %1476 = vmatprep.mubr.f32.mxu0 0.0
      %v1477 = vand.u32 %v210, 4294901760
      %1478 = vmatmul.mubr.f32.gmra.mxu0 %v1477
      %v1479 = vpop.f32.mrf.mxu0
      %v1480 = vadd.f32 %v1303, %v1479
      %v1481 = vpop.f32.mrf.mxu0
      %1482 = vmatprep.mubr.f32.mxu0 0.0
      %v1483 = vand.u32 %v211, 4294901760
      %1484 = vmatmul.mubr.f32.gmra.mxu0 %v1483
      %v1485 = vpop.f32.mrf.mxu0
      %v1486 = vadd.f32 %v1309, %v1485
      %v1487 = vpop.f32.mrf.mxu0
      %1488 = vmatprep.mubr.f32.mxu0 0.0
      %v1489 = vand.u32 %v212, 4294901760
      %1490 = vmatmul.mubr.f32.gmra.mxu0 %v1489
      %v1491 = vpop.f32.mrf.mxu0
      %v1492 = vadd.f32 %v1315, %v1491
      %v1493 = vpop.f32.mrf.mxu0
      %1494 = vmatprep.mubr.f32.mxu0 0.0
      %v1495 = vand.u32 %v213, 4294901760
      %1496 = vmatmul.mubr.f32.gmra.mxu0 %v1495
      %v1497 = vpop.f32.mrf.mxu0
      %v1498 = vadd.f32 %v1321, %v1497
      %v1499 = vpop.f32.mrf.mxu0
      %1500 = vmatprep.mubr.f32.mxu0 0.0
      %v1501 = vand.u32 %v214, 4294901760
      %1502 = vmatmul.mubr.f32.gmra.mxu0 %v1501
      %v1503 = vpop.f32.mrf.mxu0
      %v1504 = vadd.f32 %v1327, %v1503
      %v1505 = vpop.f32.mrf.mxu0
      %1506 = vmatprep.mubr.f32.mxu0 0.0
      %v1507 = vand.u32 %v215, 4294901760
      %1508 = vmatmul.mubr.f32.gmra.mxu0 %v1507
      %v1509 = vpop.f32.mrf.mxu0
      %v1510 = vadd.f32 %v1333, %v1509
      %v1511 = vpop.f32.mrf.mxu0
      %1512 = vmatprep.mubr.f32.mxu0 0.0
      %v1513 = vand.u32 %v216, 4294901760
      %1514 = vmatmul.mubr.f32.gmra.mxu0 %v1513
      %v1515 = vpop.f32.mrf.mxu0
      %v1516 = vadd.f32 %v1339, %v1515
      %v1517 = vpop.f32.mrf.mxu0
      %1518 = vdwg.mxu0
      %v1519 = vld [vmem:[%s2] sm:$0x1]
      %v1521 = vlaneseq
      %v1522 = vshrl.u32 %v1521, 7
      %v1523 = vsub.s32 0, %v1522
      %v1524 = vrot.slane %v1519, %v1523
      %v1526 = vmul.f32 %v1426, %v1524
      %v1527 = vmul.f32 %v1432, %v1524
      %v1528 = vmul.f32 %v1438, %v1524
      %v1529 = vmul.f32 %v1444, %v1524
      %v1530 = vmul.f32 %v1450, %v1524
      %v1531 = vmul.f32 %v1456, %v1524
      %v1532 = vmul.f32 %v1462, %v1524
      %v1533 = vmul.f32 %v1468, %v1524
      %v1534 = vmul.f32 %v1474, %v1524
      %v1535 = vmul.f32 %v1480, %v1524
      %v1536 = vmul.f32 %v1486, %v1524
      %v1537 = vmul.f32 %v1492, %v1524
      %v1538 = vmul.f32 %v1498, %v1524
      %v1539 = vmul.f32 %v1504, %v1524
      %v1540 = vmul.f32 %v1510, %v1524
      %v1541 = vmul.f32 %v1516, %v1524
      %v1542 = vld [vmem:[%s3] sm:$0x1]
      %v1544 = vlaneseq
      %v1545 = vshrl.u32 %v1544, 7
      %v1546 = vsub.s32 0, %v1545
      %v1547 = vrot.slane %v1542, %v1546
      %v1549 = vadd.f32 %v1526, %v1547
      %v1550 = vadd.f32 %v1527, %v1547
      %v1551 = vadd.f32 %v1528, %v1547
      %v1552 = vadd.f32 %v1529, %v1547
      %v1553 = vadd.f32 %v1530, %v1547
      %v1554 = vadd.f32 %v1531, %v1547
      %v1555 = vadd.f32 %v1532, %v1547
      %v1556 = vadd.f32 %v1533, %v1547
      %v1557 = vadd.f32 %v1534, %v1547
      %v1558 = vadd.f32 %v1535, %v1547
      %v1559 = vadd.f32 %v1536, %v1547
      %v1560 = vadd.f32 %v1537, %v1547
      %v1561 = vadd.f32 %v1538, %v1547
      %v1562 = vadd.f32 %v1539, %v1547
      %v1563 = vadd.f32 %v1540, %v1547
      %v1564 = vadd.f32 %v1541, %v1547
      %v1565 = vmax.f32 %v1549, 0.0
      %v1566 = vmax.f32 %v1550, 0.0
      %v1567 = vmax.f32 %v1551, 0.0
      %v1568 = vmax.f32 %v1552, 0.0
      %v1569 = vmax.f32 %v1553, 0.0
      %v1570 = vmax.f32 %v1554, 0.0
      %v1571 = vmax.f32 %v1555, 0.0
      %v1572 = vmax.f32 %v1556, 0.0
      %v1573 = vmax.f32 %v1557, 0.0
      %v1574 = vmax.f32 %v1558, 0.0
      %v1575 = vmax.f32 %v1559, 0.0
      %v1576 = vmax.f32 %v1560, 0.0
      %v1577 = vmax.f32 %v1561, 0.0
      %v1578 = vmax.f32 %v1562, 0.0
      %v1579 = vmax.f32 %v1563, 0.0
      %v1580 = vmax.f32 %v1564, 0.0
      %1581 = vst [vmem:[%s199] sm:$0xff] %v1565
      %1582 = vst [vmem:[%s199 + $0x8] sm:$0xff] %v1566
      %1583 = vst [vmem:[%s199 + $0x10] sm:$0xff] %v1567
      %1584 = vst [vmem:[%s199 + $0x18] sm:$0xff] %v1568
      %1585 = vst [vmem:[%s199 + $0x20] sm:$0xff] %v1569
      %1586 = vst [vmem:[%s199 + $0x28] sm:$0xff] %v1570
      %1587 = vst [vmem:[%s199 + $0x30] sm:$0xff] %v1571
      %1588 = vst [vmem:[%s199 + $0x38] sm:$0xff] %v1572
      %1589 = vst [vmem:[%s199 + $0x40] sm:$0xff] %v1573
      %1590 = vst [vmem:[%s199 + $0x48] sm:$0xff] %v1574
      %1591 = vst [vmem:[%s199 + $0x50] sm:$0xff] %v1575
      %1592 = vst [vmem:[%s199 + $0x58] sm:$0xff] %v1576
      %1593 = vst [vmem:[%s199 + $0x60] sm:$0xff] %v1577
      %1594 = vst [vmem:[%s199 + $0x68] sm:$0xff] %v1578
      %1595 = vst [vmem:[%s199 + $0x70] sm:$0xff] %v1579
      %1596 = vst [vmem:[%s199 + $0x78] sm:$0xff] %v1580
      %s1597 = smul.u32 16, %s15
      %p1598 = scmp.lt.s32.totalorder %s1597, 63
      %s1599 = scalar_select %p1598, %s1597, 63
      %s1600 = smul.addr %s1599, 8
      %s1601 = scalar_lea.vmem %s4, %s1600
      // Predicated region
      $region37: #{_pallas_forward.6} parent=35 // pred_check
        %p1602 = pneg %p122
      $region38: #{_pallas_forward.6} parent=35 // pred_check_branch
        %1604 = sbr.rel (%p1602) target = $region40
      $region39: #{_pallas_forward.6} parent=35 // pred_region
        %s1605 = smul.u32 16, %s15
      $region40: #{_pallas_forward.6} parent=35 // pred_fallthru
        _
    $region36: #{_pallas_forward.6} parent=5 // pred_fallthru
      _
    %p1606 = scmp.le.s32.totalorder 2, %s10
    // Predicated region
    $region41: #{_pallas_forward.6} parent=5 // pred_check
      %p1607 = pneg %p1606
    $region42: #{_pallas_forward.6} parent=5 // pred_check_branch
      %1609 = sbr.rel (%p1607) target = $region44
    $region43: #{_pallas_forward.6} parent=5 // pred_region
      %s1610 = ssub.s32 %s10, 2
      // Predicated region
      $region45: #{_pallas_forward.6} parent=43 // pred_check
        %p1611 = pneg %p128
      $region46: #{_pallas_forward.6} parent=43 // pred_check_branch
        %1613 = sbr.rel (%p1611) target = $region48
      $region47: #{_pallas_forward.6} parent=43 // pred_region
        %s1614 = smul.u32 16, %s16
        %p1615 = scmp.lt.s32.totalorder %s1614, 63
        %s1616 = scalar_select %p1615, %s1614, 63
        %s1617 = smul.addr %s1616, 8
        %s1618 = scalar_lea.vmem %s4, %s1617
      $region48: #{_pallas_forward.6} parent=43 // pred_fallthru
        _
    $region44: #{_pallas_forward.6} parent=5 // pred_fallthru
      _
  $region6: #{_pallas_forward.6} parent=0 // loop_footer
    %s14 = sadd.s32 1, %s10
  $region7: #{_pallas_forward.6} parent=0 // loop_footer_branch
    %9 = sbr.rel target = $region3
  $region8: #{_pallas_forward.6} parent=0 // loop_exit
    _

// kernel: _pallas_forward.7
$region0: #{_pallas_forward.7}
  #allocation0 [shape = 'u32[]', space=smem, size = 0x4, offset = 0x4, fixed_abs, tag = 'smem constant byte address 0x4 - core index']
  #allocation1 [shape = 'u32[144,128]{1,0:T(1,128)}', space=vmem, size = 0x12000, scoped, tag = 'internal scratch']
  %s0 = inlined_call_operand.vmem [shape: f32[128,256], index: 0, kind: input, shape index: {}]
  %s1 = inlined_call_operand.vmem [shape: f32[256,128], index: 1, kind: input, shape index: {}]
  %s2 = inlined_call_operand.vmem [shape: f32[1,128], index: 2, kind: input, shape index: {}]
  %s3 = inlined_call_operand.vmem [shape: f32[1,128], index: 3, kind: input, shape index: {}]
  %s4 = inlined_call_operand.vmem [shape: f32[128,128], index: 4, kind: output, shape index: {}]
  %s5 = sld [smem:[#allocation0]]
  $region26: #{_pallas_forward.7} parent=0
    _
  %s7 = ssub.s32 1, %s5
  %s8 = scalar_select 0, %s7, %s5
  // Predicated region
  $region2: #{_pallas_forward.7} parent=0 // pred_check
    _
  $region3: #{_pallas_forward.7} parent=0 // pred_check_branch
    %10 = sbr.rel (0) target = $region5
  $region4: #{_pallas_forward.7} parent=0 // pred_region
    _
  $region5: #{_pallas_forward.7} parent=0 // pred_fallthru
    _
  // Predicated region
  $region6: #{_pallas_forward.7} parent=0 // pred_check
    _
  $region7: #{_pallas_forward.7} parent=0 // pred_check_branch
    %12 = sbr.rel (0) target = $region9
  $region8: #{_pallas_forward.7} parent=0 // pred_region
    _
  $region9: #{_pallas_forward.7} parent=0 // pred_fallthru
    _
  // Predicated region
  $region10: #{_pallas_forward.7} parent=0 // pred_check
    _
  $region11: #{_pallas_forward.7} parent=0 // pred_check_branch
    %14 = sbr.rel (0) target = $region13
  $region12: #{_pallas_forward.7} parent=0 // pred_region
    _
  $region13: #{_pallas_forward.7} parent=0 // pred_fallthru
    _
  // Predicated region
  $region14: #{_pallas_forward.7} parent=0 // pred_check
    _
  $region15: #{_pallas_forward.7} parent=0 // pred_check_branch
    %16 = sbr.rel (0) target = $region17
  $region16: #{_pallas_forward.7} parent=0 // pred_region
    _
  $region17: #{_pallas_forward.7} parent=0 // pred_fallthru
    _
  %v17 = vld [vmem:[%s0] sm:$0xff]
  %v18 = vld [vmem:[%s0 + $0x8] sm:$0xff]
  %v19 = vld [vmem:[%s0 + $0x10] sm:$0xff]
  %v20 = vld [vmem:[%s0 + $0x18] sm:$0xff]
  %v21 = vld [vmem:[%s0 + $0x20] sm:$0xff]
  %v22 = vld [vmem:[%s0 + $0x28] sm:$0xff]
  %v23 = vld [vmem:[%s0 + $0x30] sm:$0xff]
  %v24 = vld [vmem:[%s0 + $0x38] sm:$0xff]
  %v25 = vld [vmem:[%s0 + $0x40] sm:$0xff]
  %v26 = vld [vmem:[%s0 + $0x48] sm:$0xff]
  %v27 = vld [vmem:[%s0 + $0x50] sm:$0xff]
  %v28 = vld [vmem:[%s0 + $0x58] sm:$0xff]
  %v29 = vld [vmem:[%s0 + $0x60] sm:$0xff]
  %v30 = vld [vmem:[%s0 + $0x68] sm:$0xff]
  %v31 = vld [vmem:[%s0 + $0x70] sm:$0xff]
  %v32 = vld [vmem:[%s0 + $0x78] sm:$0xff]
  %v33 = vld [vmem:[%s0 + $0x80] sm:$0xff]
  %v34 = vld [vmem:[%s0 + $0x88] sm:$0xff]
  %v35 = vld [vmem:[%s0 + $0x90] sm:$0xff]
  %v36 = vld [vmem:[%s0 + $0x98] sm:$0xff]
  %v37 = vld [vmem:[%s0 + $0xa0] sm:$0xff]
  %v38 = vld [vmem:[%s0 + $0xa8] sm:$0xff]
  %v39 = vld [vmem:[%s0 + $0xb0] sm:$0xff]
  %v40 = vld [vmem:[%s0 + $0xb8] sm:$0xff]
  %v41 = vld [vmem:[%s0 + $0xc0] sm:$0xff]
  %v42 = vld [vmem:[%s0 + $0xc8] sm:$0xff]
  %v43 = vld [vmem:[%s0 + $0xd0] sm:$0xff]
  %v44 = vld [vmem:[%s0 + $0xd8] sm:$0xff]
  %v45 = vld [vmem:[%s0 + $0xe0] sm:$0xff]
  %v46 = vld [vmem:[%s0 + $0xe8] sm:$0xff]
  %v47 = vld [vmem:[%s0 + $0xf0] sm:$0xff]
  %v48 = vld [vmem:[%s0 + $0xf8] sm:$0xff]
  %v49 = vld [vmem:[%s1] sm:$0xff]
  %v50 = vld [vmem:[%s1 + $0x8] sm:$0xff]
  %v51 = vld [vmem:[%s1 + $0x10] sm:$0xff]
  %v52 = vld [vmem:[%s1 + $0x18] sm:$0xff]
  %v53 = vld [vmem:[%s1 + $0x20] sm:$0xff]
  %v54 = vld [vmem:[%s1 + $0x28] sm:$0xff]
  %v55 = vld [vmem:[%s1 + $0x30] sm:$0xff]
  %v56 = vld [vmem:[%s1 + $0x38] sm:$0xff]
  %v57 = vld [vmem:[%s1 + $0x40] sm:$0xff]
  %v58 = vld [vmem:[%s1 + $0x48] sm:$0xff]
  %v59 = vld [vmem:[%s1 + $0x50] sm:$0xff]
  %v60 = vld [vmem:[%s1 + $0x58] sm:$0xff]
  %v61 = vld [vmem:[%s1 + $0x60] sm:$0xff]
  %v62 = vld [vmem:[%s1 + $0x68] sm:$0xff]
  %v63 = vld [vmem:[%s1 + $0x70] sm:$0xff]
  %v64 = vld [vmem:[%s1 + $0x78] sm:$0xff]
  %v65 = vld [vmem:[%s1 + $0x80] sm:$0xff]
  %v66 = vld [vmem:[%s1 + $0x88] sm:$0xff]
  %v67 = vld [vmem:[%s1 + $0x90] sm:$0xff]
  %v68 = vld [vmem:[%s1 + $0x98] sm:$0xff]
  %v69 = vld [vmem:[%s1 + $0xa0] sm:$0xff]
  %v70 = vld [vmem:[%s1 + $0xa8] sm:$0xff]
  %v71 = vld [vmem:[%s1 + $0xb0] sm:$0xff]
  %v72 = vld [vmem:[%s1 + $0xb8] sm:$0xff]
  %v73 = vld [vmem:[%s1 + $0xc0] sm:$0xff]
  %v74 = vld [vmem:[%s1 + $0xc8] sm:$0xff]
  %v75 = vld [vmem:[%s1 + $0xd0] sm:$0xff]
  %v76 = vld [vmem:[%s1 + $0xd8] sm:$0xff]
  %v77 = vld [vmem:[%s1 + $0xe0] sm:$0xff]
  %v78 = vld [vmem:[%s1 + $0xe8] sm:$0xff]
  %v79 = vld [vmem:[%s1 + $0xf0] sm:$0xff]
  %v80 = vld [vmem:[%s1 + $0xf8] sm:$0xff]
  %81 = vmatprep.subr.mxu0 0.0
  %v82 = vand.u32 %v64, 4294901760
  %83 = vmatpush1.msra.mxu0 %v82
  %84 = vmatprep.subr.mxu0 0.0
  %v85 = vand.u32 %v63, 4294901760
  %86 = vmatpush1.msra.mxu0 %v85
  %87 = vmatprep.subr.mxu0 0.0
  %v88 = vand.u32 %v62, 4294901760
  %89 = vmatpush1.msra.mxu0 %v88
  %90 = vmatprep.subr.mxu0 0.0
  %v91 = vand.u32 %v61, 4294901760
  %92 = vmatpush1.msra.mxu0 %v91
  %93 = vmatprep.subr.mxu0 0.0
  %v94 = vand.u32 %v60, 4294901760
  %95 = vmatpush1.msra.mxu0 %v94
  %96 = vmatprep.subr.mxu0 0.0
  %v97 = vand.u32 %v59, 4294901760
  %98 = vmatpush1.msra.mxu0 %v97
  %99 = vmatprep.subr.mxu0 0.0
  %v100 = vand.u32 %v58, 4294901760
  %101 = vmatpush1.msra.mxu0 %v100
  %102 = vmatprep.subr.mxu0 0.0
  %v103 = vand.u32 %v57, 4294901760
  %104 = vmatpush1.msra.mxu0 %v103
  %105 = vmatprep.subr.mxu0 0.0
  %v106 = vand.u32 %v56, 4294901760
  %107 = vmatpush1.msra.mxu0 %v106
  %108 = vmatprep.subr.mxu0 0.0
  %v109 = vand.u32 %v55, 4294901760
  %110 = vmatpush1.msra.mxu0 %v109
  %111 = vmatprep.subr.mxu0 0.0
  %v112 = vand.u32 %v54, 4294901760
  %113 = vmatpush1.msra.mxu0 %v112
  %114 = vmatprep.subr.mxu0 0.0
  %v115 = vand.u32 %v53, 4294901760
  %116 = vmatpush1.msra.mxu0 %v115
  %117 = vmatprep.subr.mxu0 0.0
  %v118 = vand.u32 %v52, 4294901760
  %119 = vmatpush1.msra.mxu0 %v118
  %120 = vmatprep.subr.mxu0 0.0
  %v121 = vand.u32 %v51, 4294901760
  %122 = vmatpush1.msra.mxu0 %v121
  %123 = vmatprep.subr.mxu0 0.0
  %v124 = vand.u32 %v50, 4294901760
  %125 = vmatpush1.msra.mxu0 %v124
  %126 = vmatprep.subr.mxu0 0.0
  %v127 = vand.u32 %v49, 4294901760
  %128 = vmatpush1.msra.mxu0 %v127
  %129 = vmatprep.subr.mxu0 0.0
  %v130 = vand.u32 %v80, 4294901760
  %131 = vmatpush2.msra.mxu0 %v130
  %132 = vmatprep.subr.mxu0 0.0
  %v133 = vand.u32 %v79, 4294901760
  %134 = vmatpush2.msra.mxu0 %v133
  %135 = vmatprep.subr.mxu0 0.0
  %v136 = vand.u32 %v78, 4294901760
  %137 = vmatpush2.msra.mxu0 %v136
  %138 = vmatprep.subr.mxu0 0.0
  %v139 = vand.u32 %v77, 4294901760
  %140 = vmatpush2.msra.mxu0 %v139
  %141 = vmatprep.subr.mxu0 0.0
  %v142 = vand.u32 %v76, 4294901760
  %143 = vmatpush2.msra.mxu0 %v142
  %144 = vmatprep.subr.mxu0 0.0
  %v145 = vand.u32 %v75, 4294901760
  %146 = vmatpush2.msra.mxu0 %v145
  %147 = vmatprep.subr.mxu0 0.0
  %v148 = vand.u32 %v74, 4294901760
  %149 = vmatpush2.msra.mxu0 %v148
  %150 = vmatprep.subr.mxu0 0.0
  %v151 = vand.u32 %v73, 4294901760
  %152 = vmatpush2.msra.mxu0 %v151
  %153 = vmatprep.subr.mxu0 0.0
  %v154 = vand.u32 %v72, 4294901760
  %155 = vmatpush2.msra.mxu0 %v154
  %156 = vmatprep.subr.mxu0 0.0
  %v157 = vand.u32 %v71, 4294901760
  %158 = vmatpush2.msra.mxu0 %v157
  %159 = vmatprep.subr.mxu0 0.0
  %v160 = vand.u32 %v70, 4294901760
  %161 = vmatpush2.msra.mxu0 %v160
  %162 = vmatprep.subr.mxu0 0.0
  %v163 = vand.u32 %v69, 4294901760
  %164 = vmatpush2.msra.mxu0 %v163
  %165 = vmatprep.subr.mxu0 0.0
  %v166 = vand.u32 %v68, 4294901760
  %167 = vmatpush2.msra.mxu0 %v166
  %168 = vmatprep.subr.mxu0 0.0
  %v169 = vand.u32 %v67, 4294901760
  %170 = vmatpush2.msra.mxu0 %v169
  %171 = vmatprep.subr.mxu0 0.0
  %v172 = vand.u32 %v66, 4294901760
  %173 = vmatpush2.msra.mxu0 %v172
  %174 = vmatprep.subr.mxu0 0.0
  %v175 = vand.u32 %v65, 4294901760
  %176 = vmatpush2.msra.mxu0 %v175
  %v177 = vand.u32 %v18, 4294901760
  %v178 = vsub.f32 %v18, %v177
  %v179 = vand.u32 %v178, 4294901760
  %v180 = vsub.f32 %v178, %v179
  %v181 = vand.u32 %v180, 4294901760
  %182 = vmatprep.mubr.f32.mxu0 %v181
  %v183 = vand.u32 %v17, 4294901760
  %v184 = vsub.f32 %v17, %v183
  %v185 = vand.u32 %v184, 4294901760
  %v186 = vsub.f32 %v184, %v185
  %v187 = vand.u32 %v186, 4294901760
  %188 = vmatmul.mubr.f32.gmra.mxu0 %v187
  %v189 = vpop.f32.mrf.mxu0
  %v190 = vadd.f32 0.0, %v189
  %v191 = vpop.f32.mrf.mxu0
  %v192 = vand.u32 %v20, 4294901760
  %v193 = vsub.f32 %v20, %v192
  %v194 = vand.u32 %v193, 4294901760
  %v195 = vsub.f32 %v193, %v194
  %v196 = vand.u32 %v195, 4294901760
  %197 = vmatprep.mubr.f32.mxu0 %v196
  %v198 = vand.u32 %v19, 4294901760
  %v199 = vsub.f32 %v19, %v198
  %v200 = vand.u32 %v199, 4294901760
  %v201 = vsub.f32 %v199, %v200
  %v202 = vand.u32 %v201, 4294901760
  %203 = vmatmul.mubr.f32.gmra.mxu0 %v202
  %v204 = vpop.f32.mrf.mxu0
  %v205 = vadd.f32 0.0, %v204
  %v206 = vpop.f32.mrf.mxu0
  %v207 = vand.u32 %v22, 4294901760
  %v208 = vsub.f32 %v22, %v207
  %v209 = vand.u32 %v208, 4294901760
  %v210 = vsub.f32 %v208, %v209
  %v211 = vand.u32 %v210, 4294901760
  %212 = vmatprep.mubr.f32.mxu0 %v211
  %v213 = vand.u32 %v21, 4294901760
  %v214 = vsub.f32 %v21, %v213
  %v215 = vand.u32 %v214, 4294901760
  %v216 = vsub.f32 %v214, %v215
  %v217 = vand.u32 %v216, 4294901760
  %218 = vmatmul.mubr.f32.gmra.mxu0 %v217
  %v219 = vpop.f32.mrf.mxu0
  %v220 = vadd.f32 0.0, %v219
  %v221 = vpop.f32.mrf.mxu0
  %v222 = vand.u32 %v24, 4294901760
  %v223 = vsub.f32 %v24, %v222
  %v224 = vand.u32 %v223, 4294901760
  %v225 = vsub.f32 %v223, %v224
  %v226 = vand.u32 %v225, 4294901760
  %227 = vmatprep.mubr.f32.mxu0 %v226
  %v228 = vand.u32 %v23, 4294901760
  %v229 = vsub.f32 %v23, %v228
  %v230 = vand.u32 %v229, 4294901760
  %v231 = vsub.f32 %v229, %v230
  %v232 = vand.u32 %v231, 4294901760
  %233 = vmatmul.mubr.f32.gmra.mxu0 %v232
  %v234 = vpop.f32.mrf.mxu0
  %v235 = vadd.f32 0.0, %v234
  %v236 = vpop.f32.mrf.mxu0
  %v237 = vand.u32 %v26, 4294901760
  %v238 = vsub.f32 %v26, %v237
  %v239 = vand.u32 %v238, 4294901760
  %v240 = vsub.f32 %v238, %v239
  %v241 = vand.u32 %v240, 4294901760
  %242 = vmatprep.mubr.f32.mxu0 %v241
  %v243 = vand.u32 %v25, 4294901760
  %v244 = vsub.f32 %v25, %v243
  %v245 = vand.u32 %v244, 4294901760
  %v246 = vsub.f32 %v244, %v245
  %v247 = vand.u32 %v246, 4294901760
  %248 = vmatmul.mubr.f32.gmra.mxu0 %v247
  %v249 = vpop.f32.mrf.mxu0
  %v250 = vadd.f32 0.0, %v249
  %v251 = vpop.f32.mrf.mxu0
  %v252 = vand.u32 %v28, 4294901760
  %v253 = vsub.f32 %v28, %v252
  %v254 = vand.u32 %v253, 4294901760
  %v255 = vsub.f32 %v253, %v254
  %v256 = vand.u32 %v255, 4294901760
  %257 = vmatprep.mubr.f32.mxu0 %v256
  %v258 = vand.u32 %v27, 4294901760
  %v259 = vsub.f32 %v27, %v258
  %v260 = vand.u32 %v259, 4294901760
  %v261 = vsub.f32 %v259, %v260
  %v262 = vand.u32 %v261, 4294901760
  %263 = vmatmul.mubr.f32.gmra.mxu0 %v262
  %v264 = vpop.f32.mrf.mxu0
  %v265 = vadd.f32 0.0, %v264
  %v266 = vpop.f32.mrf.mxu0
  %v267 = vand.u32 %v30, 4294901760
  %v268 = vsub.f32 %v30, %v267
  %v269 = vand.u32 %v268, 4294901760
  %v270 = vsub.f32 %v268, %v269
  %v271 = vand.u32 %v270, 4294901760
  %272 = vmatprep.mubr.f32.mxu0 %v271
  %v273 = vand.u32 %v29, 4294901760
  %v274 = vsub.f32 %v29, %v273
  %v275 = vand.u32 %v274, 4294901760
  %v276 = vsub.f32 %v274, %v275
  %v277 = vand.u32 %v276, 4294901760
  %278 = vmatmul.mubr.f32.gmra.mxu0 %v277
  %v279 = vpop.f32.mrf.mxu0
  %v280 = vadd.f32 0.0, %v279
  %v281 = vpop.f32.mrf.mxu0
  %v282 = vand.u32 %v32, 4294901760
  %v283 = vsub.f32 %v32, %v282
  %v284 = vand.u32 %v283, 4294901760
  %v285 = vsub.f32 %v283, %v284
  %v286 = vand.u32 %v285, 4294901760
  %287 = vmatprep.mubr.f32.mxu0 %v286
  %v288 = vand.u32 %v31, 4294901760
  %v289 = vsub.f32 %v31, %v288
  %v290 = vand.u32 %v289, 4294901760
  %v291 = vsub.f32 %v289, %v290
  %v292 = vand.u32 %v291, 4294901760
  %293 = vmatmul.mubr.f32.gmra.mxu0 %v292
  %v294 = vpop.f32.mrf.mxu0
  %v295 = vadd.f32 0.0, %v294
  %v296 = vpop.f32.mrf.mxu0
  %v297 = vand.u32 %v34, 4294901760
  %v298 = vsub.f32 %v34, %v297
  %v299 = vand.u32 %v298, 4294901760
  %v300 = vsub.f32 %v298, %v299
  %v301 = vand.u32 %v300, 4294901760
  %302 = vmatprep.mubr.f32.mxu0 %v301
  %v303 = vand.u32 %v33, 4294901760
  %v304 = vsub.f32 %v33, %v303
  %v305 = vand.u32 %v304, 4294901760
  %v306 = vsub.f32 %v304, %v305
  %v307 = vand.u32 %v306, 4294901760
  %308 = vmatmul.mubr.f32.gmra.mxu0 %v307
  %v309 = vpop.f32.mrf.mxu0
  %v310 = vadd.f32 0.0, %v309
  %v311 = vpop.f32.mrf.mxu0
  %v312 = vand.u32 %v36, 4294901760
  %v313 = vsub.f32 %v36, %v312
  %v314 = vand.u32 %v313, 4294901760
  %v315 = vsub.f32 %v313, %v314
  %v316 = vand.u32 %v315, 4294901760
  %317 = vmatprep.mubr.f32.mxu0 %v316
  %v318 = vand.u32 %v35, 4294901760
  %v319 = vsub.f32 %v35, %v318
  %v320 = vand.u32 %v319, 4294901760
  %v321 = vsub.f32 %v319, %v320
  %v322 = vand.u32 %v321, 4294901760
  %323 = vmatmul.mubr.f32.gmra.mxu0 %v322
  %v324 = vpop.f32.mrf.mxu0
  %v325 = vadd.f32 0.0, %v324
  %v326 = vpop.f32.mrf.mxu0
  %v327 = vand.u32 %v38, 4294901760
  %v328 = vsub.f32 %v38, %v327
  %v329 = vand.u32 %v328, 4294901760
  %v330 = vsub.f32 %v328, %v329
  %v331 = vand.u32 %v330, 4294901760
  %332 = vmatprep.mubr.f32.mxu0 %v331
  %v333 = vand.u32 %v37, 4294901760
  %v334 = vsub.f32 %v37, %v333
  %v335 = vand.u32 %v334, 4294901760
  %v336 = vsub.f32 %v334, %v335
  %v337 = vand.u32 %v336, 4294901760
  %338 = vmatmul.mubr.f32.gmra.mxu0 %v337
  %v339 = vpop.f32.mrf.mxu0
  %v340 = vadd.f32 0.0, %v339
  %v341 = vpop.f32.mrf.mxu0
  %v342 = vand.u32 %v40, 4294901760
  %v343 = vsub.f32 %v40, %v342
  %v344 = vand.u32 %v343, 4294901760
  %v345 = vsub.f32 %v343, %v344
  %v346 = vand.u32 %v345, 4294901760
  %347 = vmatprep.mubr.f32.mxu0 %v346
  %v348 = vand.u32 %v39, 4294901760
  %v349 = vsub.f32 %v39, %v348
  %v350 = vand.u32 %v349, 4294901760
  %v351 = vsub.f32 %v349, %v350
  %v352 = vand.u32 %v351, 4294901760
  %353 = vmatmul.mubr.f32.gmra.mxu0 %v352
  %v354 = vpop.f32.mrf.mxu0
  %v355 = vadd.f32 0.0, %v354
  %v356 = vpop.f32.mrf.mxu0
  %v357 = vand.u32 %v42, 4294901760
  %v358 = vsub.f32 %v42, %v357
  %v359 = vand.u32 %v358, 4294901760
  %v360 = vsub.f32 %v358, %v359
  %v361 = vand.u32 %v360, 4294901760
  %362 = vmatprep.mubr.f32.mxu0 %v361
  %v363 = vand.u32 %v41, 4294901760
  %v364 = vsub.f32 %v41, %v363
  %v365 = vand.u32 %v364, 4294901760
  %v366 = vsub.f32 %v364, %v365
  %v367 = vand.u32 %v366, 4294901760
  %368 = vmatmul.mubr.f32.gmra.mxu0 %v367
  %v369 = vpop.f32.mrf.mxu0
  %v370 = vadd.f32 0.0, %v369
  %v371 = vpop.f32.mrf.mxu0
  %v372 = vand.u32 %v44, 4294901760
  %v373 = vsub.f32 %v44, %v372
  %v374 = vand.u32 %v373, 4294901760
  %v375 = vsub.f32 %v373, %v374
  %v376 = vand.u32 %v375, 4294901760
  %377 = vmatprep.mubr.f32.mxu0 %v376
  %v378 = vand.u32 %v43, 4294901760
  %v379 = vsub.f32 %v43, %v378
  %v380 = vand.u32 %v379, 4294901760
  %v381 = vsub.f32 %v379, %v380
  %v382 = vand.u32 %v381, 4294901760
  %383 = vmatmul.mubr.f32.gmra.mxu0 %v382
  %v384 = vpop.f32.mrf.mxu0
  %v385 = vadd.f32 0.0, %v384
  %v386 = vpop.f32.mrf.mxu0
  %v387 = vand.u32 %v46, 4294901760
  %v388 = vsub.f32 %v46, %v387
  %v389 = vand.u32 %v388, 4294901760
  %v390 = vsub.f32 %v388, %v389
  %v391 = vand.u32 %v390, 4294901760
  %392 = vmatprep.mubr.f32.mxu0 %v391
  %v393 = vand.u32 %v45, 4294901760
  %v394 = vsub.f32 %v45, %v393
  %v395 = vand.u32 %v394, 4294901760
  %v396 = vsub.f32 %v394, %v395
  %v397 = vand.u32 %v396, 4294901760
  %398 = vmatmul.mubr.f32.gmra.mxu0 %v397
  %v399 = vpop.f32.mrf.mxu0
  %v400 = vadd.f32 0.0, %v399
  %v401 = vpop.f32.mrf.mxu0
  %v402 = vand.u32 %v48, 4294901760
  %v403 = vsub.f32 %v48, %v402
  %v404 = vand.u32 %v403, 4294901760
  %v405 = vsub.f32 %v403, %v404
  %v406 = vand.u32 %v405, 4294901760
  %407 = vmatprep.mubr.f32.mxu0 %v406
  %v408 = vand.u32 %v47, 4294901760
  %v409 = vsub.f32 %v47, %v408
  %v410 = vand.u32 %v409, 4294901760
  %v411 = vsub.f32 %v409, %v410
  %v412 = vand.u32 %v411, 4294901760
  %413 = vmatmul.mubr.f32.gmra.mxu0 %v412
  %v414 = vpop.f32.mrf.mxu0
  %v415 = vadd.f32 0.0, %v414
  %v416 = vpop.f32.mrf.mxu0
  %417 = vdwg.mxu0
  %418 = vmatprep.subr.mxu0 0.0
  %v419 = vand.u32 %v64, 4294901760
  %v420 = vsub.f32 %v64, %v419
  %v421 = vand.u32 %v420, 4294901760
  %v422 = vsub.f32 %v420, %v421
  %v423 = vand.u32 %v422, 4294901760
  %424 = vmatpush1.msra.mxu0 %v423
  %425 = vmatprep.subr.mxu0 0.0
  %v426 = vand.u32 %v63, 4294901760
  %v427 = vsub.f32 %v63, %v426
  %v428 = vand.u32 %v427, 4294901760
  %v429 = vsub.f32 %v427, %v428
  %v430 = vand.u32 %v429, 4294901760
  %431 = vmatpush1.msra.mxu0 %v430
  %432 = vmatprep.subr.mxu0 0.0
  %v433 = vand.u32 %v62, 4294901760
  %v434 = vsub.f32 %v62, %v433
  %v435 = vand.u32 %v434, 4294901760
  %v436 = vsub.f32 %v434, %v435
  %v437 = vand.u32 %v436, 4294901760
  %438 = vmatpush1.msra.mxu0 %v437
  %439 = vmatprep.subr.mxu0 0.0
  %v440 = vand.u32 %v61, 4294901760
  %v441 = vsub.f32 %v61, %v440
  %v442 = vand.u32 %v441, 4294901760
  %v443 = vsub.f32 %v441, %v442
  %v444 = vand.u32 %v443, 4294901760
  %445 = vmatpush1.msra.mxu0 %v444
  %446 = vmatprep.subr.mxu0 0.0
  %v447 = vand.u32 %v60, 4294901760
  %v448 = vsub.f32 %v60, %v447
  %v449 = vand.u32 %v448, 4294901760
  %v450 = vsub.f32 %v448, %v449
  %v451 = vand.u32 %v450, 4294901760
  %452 = vmatpush1.msra.mxu0 %v451
  %453 = vmatprep.subr.mxu0 0.0
  %v454 = vand.u32 %v59, 4294901760
  %v455 = vsub.f32 %v59, %v454
  %v456 = vand.u32 %v455, 4294901760
  %v457 = vsub.f32 %v455, %v456
  %v458 = vand.u32 %v457, 4294901760
  %459 = vmatpush1.msra.mxu0 %v458
  %460 = vmatprep.subr.mxu0 0.0
  %v461 = vand.u32 %v58, 4294901760
  %v462 = vsub.f32 %v58, %v461
  %v463 = vand.u32 %v462, 4294901760
  %v464 = vsub.f32 %v462, %v463
  %v465 = vand.u32 %v464, 4294901760
  %466 = vmatpush1.msra.mxu0 %v465
  %467 = vmatprep.subr.mxu0 0.0
  %v468 = vand.u32 %v57, 4294901760
  %v469 = vsub.f32 %v57, %v468
  %v470 = vand.u32 %v469, 4294901760
  %v471 = vsub.f32 %v469, %v470
  %v472 = vand.u32 %v471, 4294901760
  %473 = vmatpush1.msra.mxu0 %v472
  %474 = vmatprep.subr.mxu0 0.0
  %v475 = vand.u32 %v56, 4294901760
  %v476 = vsub.f32 %v56, %v475
  %v477 = vand.u32 %v476, 4294901760
  %v478 = vsub.f32 %v476, %v477
  %v479 = vand.u32 %v478, 4294901760
  %480 = vmatpush1.msra.mxu0 %v479
  %481 = vmatprep.subr.mxu0 0.0
  %v482 = vand.u32 %v55, 4294901760
  %v483 = vsub.f32 %v55, %v482
  %v484 = vand.u32 %v483, 4294901760
  %v485 = vsub.f32 %v483, %v484
  %v486 = vand.u32 %v485, 4294901760
  %487 = vmatpush1.msra.mxu0 %v486
  %488 = vmatprep.subr.mxu0 0.0
  %v489 = vand.u32 %v54, 4294901760
  %v490 = vsub.f32 %v54, %v489
  %v491 = vand.u32 %v490, 4294901760
  %v492 = vsub.f32 %v490, %v491
  %v493 = vand.u32 %v492, 4294901760
  %494 = vmatpush1.msra.mxu0 %v493
  %495 = vmatprep.subr.mxu0 0.0
  %v496 = vand.u32 %v53, 4294901760
  %v497 = vsub.f32 %v53, %v496
  %v498 = vand.u32 %v497, 4294901760
  %v499 = vsub.f32 %v497, %v498
  %v500 = vand.u32 %v499, 4294901760
  %501 = vmatpush1.msra.mxu0 %v500
  %502 = vmatprep.subr.mxu0 0.0
  %v503 = vand.u32 %v52, 4294901760
  %v504 = vsub.f32 %v52, %v503
  %v505 = vand.u32 %v504, 4294901760
  %v506 = vsub.f32 %v504, %v505
  %v507 = vand.u32 %v506, 4294901760
  %508 = vmatpush1.msra.mxu0 %v507
  %509 = vmatprep.subr.mxu0 0.0
  %v510 = vand.u32 %v51, 4294901760
  %v511 = vsub.f32 %v51, %v510
  %v512 = vand.u32 %v511, 4294901760
  %v513 = vsub.f32 %v511, %v512
  %v514 = vand.u32 %v513, 4294901760
  %515 = vmatpush1.msra.mxu0 %v514
  %516 = vmatprep.subr.mxu0 0.0
  %v517 = vand.u32 %v50, 4294901760
  %v518 = vsub.f32 %v50, %v517
  %v519 = vand.u32 %v518, 4294901760
  %v520 = vsub.f32 %v518, %v519
  %v521 = vand.u32 %v520, 4294901760
  %522 = vmatpush1.msra.mxu0 %v521
  %523 = vmatprep.subr.mxu0 0.0
  %v524 = vand.u32 %v49, 4294901760
  %v525 = vsub.f32 %v49, %v524
  %v526 = vand.u32 %v525, 4294901760
  %v527 = vsub.f32 %v525, %v526
  %v528 = vand.u32 %v527, 4294901760
  %529 = vmatpush1.msra.mxu0 %v528
  %530 = vmatprep.subr.mxu0 0.0
  %v531 = vand.u32 %v80, 4294901760
  %v532 = vsub.f32 %v80, %v531
  %v533 = vand.u32 %v532, 4294901760
  %v534 = vsub.f32 %v532, %v533
  %v535 = vand.u32 %v534, 4294901760
  %536 = vmatpush2.msra.mxu0 %v535
  %537 = vmatprep.subr.mxu0 0.0
  %v538 = vand.u32 %v79, 4294901760
  %v539 = vsub.f32 %v79, %v538
  %v540 = vand.u32 %v539, 4294901760
  %v541 = vsub.f32 %v539, %v540
  %v542 = vand.u32 %v541, 4294901760
  %543 = vmatpush2.msra.mxu0 %v542
  %544 = vmatprep.subr.mxu0 0.0
  %v545 = vand.u32 %v78, 4294901760
  %v546 = vsub.f32 %v78, %v545
  %v547 = vand.u32 %v546, 4294901760
  %v548 = vsub.f32 %v546, %v547
  %v549 = vand.u32 %v548, 4294901760
  %550 = vmatpush2.msra.mxu0 %v549
  %551 = vmatprep.subr.mxu0 0.0
  %v552 = vand.u32 %v77, 4294901760
  %v553 = vsub.f32 %v77, %v552
  %v554 = vand.u32 %v553, 4294901760
  %v555 = vsub.f32 %v553, %v554
  %v556 = vand.u32 %v555, 4294901760
  %557 = vmatpush2.msra.mxu0 %v556
  %558 = vmatprep.subr.mxu0 0.0
  %v559 = vand.u32 %v76, 4294901760
  %v560 = vsub.f32 %v76, %v559
  %v561 = vand.u32 %v560, 4294901760
  %v562 = vsub.f32 %v560, %v561
  %v563 = vand.u32 %v562, 4294901760
  %564 = vmatpush2.msra.mxu0 %v563
  %565 = vmatprep.subr.mxu0 0.0
  %v566 = vand.u32 %v75, 4294901760
  %v567 = vsub.f32 %v75, %v566
  %v568 = vand.u32 %v567, 4294901760
  %v569 = vsub.f32 %v567, %v568
  %v570 = vand.u32 %v569, 4294901760
  %571 = vmatpush2.msra.mxu0 %v570
  %572 = vmatprep.subr.mxu0 0.0
  %v573 = vand.u32 %v74, 4294901760
  %v574 = vsub.f32 %v74, %v573
  %v575 = vand.u32 %v574, 4294901760
  %v576 = vsub.f32 %v574, %v575
  %v577 = vand.u32 %v576, 4294901760
  %578 = vmatpush2.msra.mxu0 %v577
  %579 = vmatprep.subr.mxu0 0.0
  %v580 = vand.u32 %v73, 4294901760
  %v581 = vsub.f32 %v73, %v580
  %v582 = vand.u32 %v581, 4294901760
  %v583 = vsub.f32 %v581, %v582
  %v584 = vand.u32 %v583, 4294901760
  %585 = vmatpush2.msra.mxu0 %v584
  %586 = vmatprep.subr.mxu0 0.0
  %v587 = vand.u32 %v72, 4294901760
  %v588 = vsub.f32 %v72, %v587
  %v589 = vand.u32 %v588, 4294901760
  %v590 = vsub.f32 %v588, %v589
  %v591 = vand.u32 %v590, 4294901760
  %592 = vmatpush2.msra.mxu0 %v591
  %593 = vmatprep.subr.mxu0 0.0
  %v594 = vand.u32 %v71, 4294901760
  %v595 = vsub.f32 %v71, %v594
  %v596 = vand.u32 %v595, 4294901760
  %v597 = vsub.f32 %v595, %v596
  %v598 = vand.u32 %v597, 4294901760
  %599 = vmatpush2.msra.mxu0 %v598
  %600 = vmatprep.subr.mxu0 0.0
  %v601 = vand.u32 %v70, 4294901760
  %v602 = vsub.f32 %v70, %v601
  %v603 = vand.u32 %v602, 4294901760
  %v604 = vsub.f32 %v602, %v603
  %v605 = vand.u32 %v604, 4294901760
  %606 = vmatpush2.msra.mxu0 %v605
  %607 = vmatprep.subr.mxu0 0.0
  %v608 = vand.u32 %v69, 4294901760
  %v609 = vsub.f32 %v69, %v608
  %v610 = vand.u32 %v609, 4294901760
  %v611 = vsub.f32 %v609, %v610
  %v612 = vand.u32 %v611, 4294901760
  %613 = vmatpush2.msra.mxu0 %v612
  %614 = vmatprep.subr.mxu0 0.0
  %v615 = vand.u32 %v68, 4294901760
  %v616 = vsub.f32 %v68, %v615
  %v617 = vand.u32 %v616, 4294901760
  %v618 = vsub.f32 %v616, %v617
  %v619 = vand.u32 %v618, 4294901760
  %620 = vmatpush2.msra.mxu0 %v619
  %621 = vmatprep.subr.mxu0 0.0
  %v622 = vand.u32 %v67, 4294901760
  %v623 = vsub.f32 %v67, %v622
  %v624 = vand.u32 %v623, 4294901760
  %v625 = vsub.f32 %v623, %v624
  %v626 = vand.u32 %v625, 4294901760
  %627 = vmatpush2.msra.mxu0 %v626
  %628 = vmatprep.subr.mxu0 0.0
  %v629 = vand.u32 %v66, 4294901760
  %v630 = vsub.f32 %v66, %v629
  %v631 = vand.u32 %v630, 4294901760
  %v632 = vsub.f32 %v630, %v631
  %v633 = vand.u32 %v632, 4294901760
  %634 = vmatpush2.msra.mxu0 %v633
  %635 = vmatprep.subr.mxu0 0.0
  %v636 = vand.u32 %v65, 4294901760
  %v637 = vsub.f32 %v65, %v636
  %v638 = vand.u32 %v637, 4294901760
  %v639 = vsub.f32 %v637, %v638
  %v640 = vand.u32 %v639, 4294901760
  %641 = vmatpush2.msra.mxu0 %v640
  %v642 = vand.u32 %v18, 4294901760
  %643 = vmatprep.mubr.f32.mxu0 %v642
  %v644 = vand.u32 %v17, 4294901760
  %645 = vmatmul.mubr.f32.gmra.mxu0 %v644
  %v646 = vpop.f32.mrf.mxu0
  %v647 = vadd.f32 %v190, %v646
  %v648 = vpop.f32.mrf.mxu0
  %v649 = vand.u32 %v20, 4294901760
  %650 = vmatprep.mubr.f32.mxu0 %v649
  %v651 = vand.u32 %v19, 4294901760
  %652 = vmatmul.mubr.f32.gmra.mxu0 %v651
  %v653 = vpop.f32.mrf.mxu0
  %v654 = vadd.f32 %v205, %v653
  %v655 = vpop.f32.mrf.mxu0
  %v656 = vand.u32 %v22, 4294901760
  %657 = vmatprep.mubr.f32.mxu0 %v656
  %v658 = vand.u32 %v21, 4294901760
  %659 = vmatmul.mubr.f32.gmra.mxu0 %v658
  %v660 = vpop.f32.mrf.mxu0
  %v661 = vadd.f32 %v220, %v660
  %v662 = vpop.f32.mrf.mxu0
  %v663 = vand.u32 %v24, 4294901760
  %664 = vmatprep.mubr.f32.mxu0 %v663
  %v665 = vand.u32 %v23, 4294901760
  %666 = vmatmul.mubr.f32.gmra.mxu0 %v665
  %v667 = vpop.f32.mrf.mxu0
  %v668 = vadd.f32 %v235, %v667
  %v669 = vpop.f32.mrf.mxu0
  %v670 = vand.u32 %v26, 4294901760
  %671 = vmatprep.mubr.f32.mxu0 %v670
  %v672 = vand.u32 %v25, 4294901760
  %673 = vmatmul.mubr.f32.gmra.mxu0 %v672
  %v674 = vpop.f32.mrf.mxu0
  %v675 = vadd.f32 %v250, %v674
  %v676 = vpop.f32.mrf.mxu0
  %v677 = vand.u32 %v28, 4294901760
  %678 = vmatprep.mubr.f32.mxu0 %v677
  %v679 = vand.u32 %v27, 4294901760
  %680 = vmatmul.mubr.f32.gmra.mxu0 %v679
  %v681 = vpop.f32.mrf.mxu0
  %v682 = vadd.f32 %v265, %v681
  %v683 = vpop.f32.mrf.mxu0
  %v684 = vand.u32 %v30, 4294901760
  %685 = vmatprep.mubr.f32.mxu0 %v684
  %v686 = vand.u32 %v29, 4294901760
  %687 = vmatmul.mubr.f32.gmra.mxu0 %v686
  %v688 = vpop.f32.mrf.mxu0
  %v689 = vadd.f32 %v280, %v688
  %v690 = vpop.f32.mrf.mxu0
  %v691 = vand.u32 %v32, 4294901760
  %692 = vmatprep.mubr.f32.mxu0 %v691
  %v693 = vand.u32 %v31, 4294901760
  %694 = vmatmul.mubr.f32.gmra.mxu0 %v693
  %v695 = vpop.f32.mrf.mxu0
  %v696 = vadd.f32 %v295, %v695
  %v697 = vpop.f32.mrf.mxu0
  %v698 = vand.u32 %v34, 4294901760
  %699 = vmatprep.mubr.f32.mxu0 %v698
  %v700 = vand.u32 %v33, 4294901760
  %701 = vmatmul.mubr.f32.gmra.mxu0 %v700
  %v702 = vpop.f32.mrf.mxu0
  %v703 = vadd.f32 %v310, %v702
  %v704 = vpop.f32.mrf.mxu0
  %v705 = vand.u32 %v36, 4294901760
  %706 = vmatprep.mubr.f32.mxu0 %v705
  %v707 = vand.u32 %v35, 4294901760
  %708 = vmatmul.mubr.f32.gmra.mxu0 %v707
  %v709 = vpop.f32.mrf.mxu0
  %v710 = vadd.f32 %v325, %v709
  %v711 = vpop.f32.mrf.mxu0
  %v712 = vand.u32 %v38, 4294901760
  %713 = vmatprep.mubr.f32.mxu0 %v712
  %v714 = vand.u32 %v37, 4294901760
  %715 = vmatmul.mubr.f32.gmra.mxu0 %v714
  %v716 = vpop.f32.mrf.mxu0
  %v717 = vadd.f32 %v340, %v716
  %v718 = vpop.f32.mrf.mxu0
  %v719 = vand.u32 %v40, 4294901760
  %720 = vmatprep.mubr.f32.mxu0 %v719
  %v721 = vand.u32 %v39, 4294901760
  %722 = vmatmul.mubr.f32.gmra.mxu0 %v721
  %v723 = vpop.f32.mrf.mxu0
  %v724 = vadd.f32 %v355, %v723
  %v725 = vpop.f32.mrf.mxu0
  %v726 = vand.u32 %v42, 4294901760
  %727 = vmatprep.mubr.f32.mxu0 %v726
  %v728 = vand.u32 %v41, 4294901760
  %729 = vmatmul.mubr.f32.gmra.mxu0 %v728
  %v730 = vpop.f32.mrf.mxu0
  %v731 = vadd.f32 %v370, %v730
  %v732 = vpop.f32.mrf.mxu0
  %v733 = vand.u32 %v44, 4294901760
  %734 = vmatprep.mubr.f32.mxu0 %v733
  %v735 = vand.u32 %v43, 4294901760
  %736 = vmatmul.mubr.f32.gmra.mxu0 %v735
  %v737 = vpop.f32.mrf.mxu0
  %v738 = vadd.f32 %v385, %v737
  %v739 = vpop.f32.mrf.mxu0
  %v740 = vand.u32 %v46, 4294901760
  %741 = vmatprep.mubr.f32.mxu0 %v740
  %v742 = vand.u32 %v45, 4294901760
  %743 = vmatmul.mubr.f32.gmra.mxu0 %v742
  %v744 = vpop.f32.mrf.mxu0
  %v745 = vadd.f32 %v400, %v744
  %v746 = vpop.f32.mrf.mxu0
  %v747 = vand.u32 %v48, 4294901760
  %748 = vmatprep.mubr.f32.mxu0 %v747
  %v749 = vand.u32 %v47, 4294901760
  %750 = vmatmul.mubr.f32.gmra.mxu0 %v749
  %v751 = vpop.f32.mrf.mxu0
  %v752 = vadd.f32 %v415, %v751
  %v753 = vpop.f32.mrf.mxu0
  %754 = vdwg.mxu0
  %755 = vmatprep.subr.mxu0 0.0
  %v756 = vand.u32 %v64, 4294901760
  %v757 = vsub.f32 %v64, %v756
  %758 = vmatpush1.msra.mxu0 %v757
  %759 = vmatprep.subr.mxu0 0.0
  %v760 = vand.u32 %v63, 4294901760
  %v761 = vsub.f32 %v63, %v760
  %762 = vmatpush1.msra.mxu0 %v761
  %763 = vmatprep.subr.mxu0 0.0
  %v764 = vand.u32 %v62, 4294901760
  %v765 = vsub.f32 %v62, %v764
  %766 = vmatpush1.msra.mxu0 %v765
  %767 = vmatprep.subr.mxu0 0.0
  %v768 = vand.u32 %v61, 4294901760
  %v769 = vsub.f32 %v61, %v768
  %770 = vmatpush1.msra.mxu0 %v769
  %771 = vmatprep.subr.mxu0 0.0
  %v772 = vand.u32 %v60, 4294901760
  %v773 = vsub.f32 %v60, %v772
  %774 = vmatpush1.msra.mxu0 %v773
  %775 = vmatprep.subr.mxu0 0.0
  %v776 = vand.u32 %v59, 4294901760
  %v777 = vsub.f32 %v59, %v776
  %778 = vmatpush1.msra.mxu0 %v777
  %779 = vmatprep.subr.mxu0 0.0
  %v780 = vand.u32 %v58, 4294901760
  %v781 = vsub.f32 %v58, %v780
  %782 = vmatpush1.msra.mxu0 %v781
  %783 = vmatprep.subr.mxu0 0.0
  %v784 = vand.u32 %v57, 4294901760
  %v785 = vsub.f32 %v57, %v784
  %786 = vmatpush1.msra.mxu0 %v785
  %787 = vmatprep.subr.mxu0 0.0
  %v788 = vand.u32 %v56, 4294901760
  %v789 = vsub.f32 %v56, %v788
  %790 = vmatpush1.msra.mxu0 %v789
  %791 = vmatprep.subr.mxu0 0.0
  %v792 = vand.u32 %v55, 4294901760
  %v793 = vsub.f32 %v55, %v792
  %794 = vmatpush1.msra.mxu0 %v793
  %795 = vmatprep.subr.mxu0 0.0
  %v796 = vand.u32 %v54, 4294901760
  %v797 = vsub.f32 %v54, %v796
  %798 = vmatpush1.msra.mxu0 %v797
  %799 = vmatprep.subr.mxu0 0.0
  %v800 = vand.u32 %v53, 4294901760
  %v801 = vsub.f32 %v53, %v800
  %802 = vmatpush1.msra.mxu0 %v801
  %803 = vmatprep.subr.mxu0 0.0
  %v804 = vand.u32 %v52, 4294901760
  %v805 = vsub.f32 %v52, %v804
  %806 = vmatpush1.msra.mxu0 %v805
  %807 = vmatprep.subr.mxu0 0.0
  %v808 = vand.u32 %v51, 4294901760
  %v809 = vsub.f32 %v51, %v808
  %810 = vmatpush1.msra.mxu0 %v809
  %811 = vmatprep.subr.mxu0 0.0
  %v812 = vand.u32 %v50, 4294901760
  %v813 = vsub.f32 %v50, %v812
  %814 = vmatpush1.msra.mxu0 %v813
  %815 = vmatprep.subr.mxu0 0.0
  %v816 = vand.u32 %v49, 4294901760
  %v817 = vsub.f32 %v49, %v816
  %818 = vmatpush1.msra.mxu0 %v817
  %819 = vmatprep.subr.mxu0 0.0
  %v820 = vand.u32 %v80, 4294901760
  %v821 = vsub.f32 %v80, %v820
  %822 = vmatpush2.msra.mxu0 %v821
  %823 = vmatprep.subr.mxu0 0.0
  %v824 = vand.u32 %v79, 4294901760
  %v825 = vsub.f32 %v79, %v824
  %826 = vmatpush2.msra.mxu0 %v825
  %827 = vmatprep.subr.mxu0 0.0
  %v828 = vand.u32 %v78, 4294901760
  %v829 = vsub.f32 %v78, %v828
  %830 = vmatpush2.msra.mxu0 %v829
  %831 = vmatprep.subr.mxu0 0.0
  %v832 = vand.u32 %v77, 4294901760
  %v833 = vsub.f32 %v77, %v832
  %834 = vmatpush2.msra.mxu0 %v833
  %835 = vmatprep.subr.mxu0 0.0
  %v836 = vand.u32 %v76, 4294901760
  %v837 = vsub.f32 %v76, %v836
  %838 = vmatpush2.msra.mxu0 %v837
  %839 = vmatprep.subr.mxu0 0.0
  %v840 = vand.u32 %v75, 4294901760
  %v841 = vsub.f32 %v75, %v840
  %842 = vmatpush2.msra.mxu0 %v841
  %843 = vmatprep.subr.mxu0 0.0
  %v844 = vand.u32 %v74, 4294901760
  %v845 = vsub.f32 %v74, %v844
  %846 = vmatpush2.msra.mxu0 %v845
  %847 = vmatprep.subr.mxu0 0.0
  %v848 = vand.u32 %v73, 4294901760
  %v849 = vsub.f32 %v73, %v848
  %850 = vmatpush2.msra.mxu0 %v849
  %851 = vmatprep.subr.mxu0 0.0
  %v852 = vand.u32 %v72, 4294901760
  %v853 = vsub.f32 %v72, %v852
  %854 = vmatpush2.msra.mxu0 %v853
  %855 = vmatprep.subr.mxu0 0.0
  %v856 = vand.u32 %v71, 4294901760
  %v857 = vsub.f32 %v71, %v856
  %858 = vmatpush2.msra.mxu0 %v857
  %859 = vmatprep.subr.mxu0 0.0
  %v860 = vand.u32 %v70, 4294901760
  %v861 = vsub.f32 %v70, %v860
  %862 = vmatpush2.msra.mxu0 %v861
  %863 = vmatprep.subr.mxu0 0.0
  %v864 = vand.u32 %v69, 4294901760
  %v865 = vsub.f32 %v69, %v864
  %866 = vmatpush2.msra.mxu0 %v865
  %867 = vmatprep.subr.mxu0 0.0
  %v868 = vand.u32 %v68, 4294901760
  %v869 = vsub.f32 %v68, %v868
  %870 = vmatpush2.msra.mxu0 %v869
  %871 = vmatprep.subr.mxu0 0.0
  %v872 = vand.u32 %v67, 4294901760
  %v873 = vsub.f32 %v67, %v872
  %874 = vmatpush2.msra.mxu0 %v873
  %875 = vmatprep.subr.mxu0 0.0
  %v876 = vand.u32 %v66, 4294901760
  %v877 = vsub.f32 %v66, %v876
  %878 = vmatpush2.msra.mxu0 %v877
  %879 = vmatprep.subr.mxu0 0.0
  %v880 = vand.u32 %v65, 4294901760
  %v881 = vsub.f32 %v65, %v880
  %882 = vmatpush2.msra.mxu0 %v881
  %v883 = vand.u32 %v18, 4294901760
  %v884 = vsub.f32 %v18, %v883
  %885 = vmatprep.mubr.f32.mxu0 %v884
  %v886 = vand.u32 %v17, 4294901760
  %v887 = vsub.f32 %v17, %v886
  %888 = vmatmul.mubr.f32.gmra.mxu0 %v887
  %v889 = vpop.f32.mrf.mxu0
  %v890 = vadd.f32 %v647, %v889
  %v891 = vpop.f32.mrf.mxu0
  %v892 = vand.u32 %v20, 4294901760
  %v893 = vsub.f32 %v20, %v892
  %894 = vmatprep.mubr.f32.mxu0 %v893
  %v895 = vand.u32 %v19, 4294901760
  %v896 = vsub.f32 %v19, %v895
  %897 = vmatmul.mubr.f32.gmra.mxu0 %v896
  %v898 = vpop.f32.mrf.mxu0
  %v899 = vadd.f32 %v654, %v898
  %v900 = vpop.f32.mrf.mxu0
  %v901 = vand.u32 %v22, 4294901760
  %v902 = vsub.f32 %v22, %v901
  %903 = vmatprep.mubr.f32.mxu0 %v902
  %v904 = vand.u32 %v21, 4294901760
  %v905 = vsub.f32 %v21, %v904
  %906 = vmatmul.mubr.f32.gmra.mxu0 %v905
  %v907 = vpop.f32.mrf.mxu0
  %v908 = vadd.f32 %v661, %v907
  %v909 = vpop.f32.mrf.mxu0
  %v910 = vand.u32 %v24, 4294901760
  %v911 = vsub.f32 %v24, %v910
  %912 = vmatprep.mubr.f32.mxu0 %v911
  %v913 = vand.u32 %v23, 4294901760
  %v914 = vsub.f32 %v23, %v913
  %915 = vmatmul.mubr.f32.gmra.mxu0 %v914
  %v916 = vpop.f32.mrf.mxu0
  %v917 = vadd.f32 %v668, %v916
  %v918 = vpop.f32.mrf.mxu0
  %v919 = vand.u32 %v26, 4294901760
  %v920 = vsub.f32 %v26, %v919
  %921 = vmatprep.mubr.f32.mxu0 %v920
  %v922 = vand.u32 %v25, 4294901760
  %v923 = vsub.f32 %v25, %v922
  %924 = vmatmul.mubr.f32.gmra.mxu0 %v923
  %v925 = vpop.f32.mrf.mxu0
  %v926 = vadd.f32 %v675, %v925
  %v927 = vpop.f32.mrf.mxu0
  %v928 = vand.u32 %v28, 4294901760
  %v929 = vsub.f32 %v28, %v928
  %930 = vmatprep.mubr.f32.mxu0 %v929
  %v931 = vand.u32 %v27, 4294901760
  %v932 = vsub.f32 %v27, %v931
  %933 = vmatmul.mubr.f32.gmra.mxu0 %v932
  %v934 = vpop.f32.mrf.mxu0
  %v935 = vadd.f32 %v682, %v934
  %v936 = vpop.f32.mrf.mxu0
  %v937 = vand.u32 %v30, 4294901760
  %v938 = vsub.f32 %v30, %v937
  %939 = vmatprep.mubr.f32.mxu0 %v938
  %v940 = vand.u32 %v29, 4294901760
  %v941 = vsub.f32 %v29, %v940
  %942 = vmatmul.mubr.f32.gmra.mxu0 %v941
  %v943 = vpop.f32.mrf.mxu0
  %v944 = vadd.f32 %v689, %v943
  %v945 = vpop.f32.mrf.mxu0
  %v946 = vand.u32 %v32, 4294901760
  %v947 = vsub.f32 %v32, %v946
  %948 = vmatprep.mubr.f32.mxu0 %v947
  %v949 = vand.u32 %v31, 4294901760
  %v950 = vsub.f32 %v31, %v949
  %951 = vmatmul.mubr.f32.gmra.mxu0 %v950
  %v952 = vpop.f32.mrf.mxu0
  %v953 = vadd.f32 %v696, %v952
  %v954 = vpop.f32.mrf.mxu0
  %v955 = vand.u32 %v34, 4294901760
  %v956 = vsub.f32 %v34, %v955
  %957 = vmatprep.mubr.f32.mxu0 %v956
  %v958 = vand.u32 %v33, 4294901760
  %v959 = vsub.f32 %v33, %v958
  %960 = vmatmul.mubr.f32.gmra.mxu0 %v959
  %v961 = vpop.f32.mrf.mxu0
  %v962 = vadd.f32 %v703, %v961
  %v963 = vpop.f32.mrf.mxu0
  %v964 = vand.u32 %v36, 4294901760
  %v965 = vsub.f32 %v36, %v964
  %966 = vmatprep.mubr.f32.mxu0 %v965
  %v967 = vand.u32 %v35, 4294901760
  %v968 = vsub.f32 %v35, %v967
  %969 = vmatmul.mubr.f32.gmra.mxu0 %v968
  %v970 = vpop.f32.mrf.mxu0
  %v971 = vadd.f32 %v710, %v970
  %v972 = vpop.f32.mrf.mxu0
  %v973 = vand.u32 %v38, 4294901760
  %v974 = vsub.f32 %v38, %v973
  %975 = vmatprep.mubr.f32.mxu0 %v974
  %v976 = vand.u32 %v37, 4294901760
  %v977 = vsub.f32 %v37, %v976
  %978 = vmatmul.mubr.f32.gmra.mxu0 %v977
  %v979 = vpop.f32.mrf.mxu0
  %v980 = vadd.f32 %v717, %v979
  %v981 = vpop.f32.mrf.mxu0
  %v982 = vand.u32 %v40, 4294901760
  %v983 = vsub.f32 %v40, %v982
  %984 = vmatprep.mubr.f32.mxu0 %v983
  %v985 = vand.u32 %v39, 4294901760
  %v986 = vsub.f32 %v39, %v985
  %987 = vmatmul.mubr.f32.gmra.mxu0 %v986
  %v988 = vpop.f32.mrf.mxu0
  %v989 = vadd.f32 %v724, %v988
  %v990 = vpop.f32.mrf.mxu0
  %v991 = vand.u32 %v42, 4294901760
  %v992 = vsub.f32 %v42, %v991
  %993 = vmatprep.mubr.f32.mxu0 %v992
  %v994 = vand.u32 %v41, 4294901760
  %v995 = vsub.f32 %v41, %v994
  %996 = vmatmul.mubr.f32.gmra.mxu0 %v995
  %v997 = vpop.f32.mrf.mxu0
  %v998 = vadd.f32 %v731, %v997
  %v999 = vpop.f32.mrf.mxu0
  %v1000 = vand.u32 %v44, 4294901760
  %v1001 = vsub.f32 %v44, %v1000
  %1002 = vmatprep.mubr.f32.mxu0 %v1001
  %v1003 = vand.u32 %v43, 4294901760
  %v1004 = vsub.f32 %v43, %v1003
  %1005 = vmatmul.mubr.f32.gmra.mxu0 %v1004
  %v1006 = vpop.f32.mrf.mxu0
  %v1007 = vadd.f32 %v738, %v1006
  %v1008 = vpop.f32.mrf.mxu0
  %v1009 = vand.u32 %v46, 4294901760
  %v1010 = vsub.f32 %v46, %v1009
  %1011 = vmatprep.mubr.f32.mxu0 %v1010
  %v1012 = vand.u32 %v45, 4294901760
  %v1013 = vsub.f32 %v45, %v1012
  %1014 = vmatmul.mubr.f32.gmra.mxu0 %v1013
  %v1015 = vpop.f32.mrf.mxu0
  %v1016 = vadd.f32 %v745, %v1015
  %v1017 = vpop.f32.mrf.mxu0
  %v1018 = vand.u32 %v48, 4294901760
  %v1019 = vsub.f32 %v48, %v1018
  %1020 = vmatprep.mubr.f32.mxu0 %v1019
  %v1021 = vand.u32 %v47, 4294901760
  %v1022 = vsub.f32 %v47, %v1021
  %1023 = vmatmul.mubr.f32.gmra.mxu0 %v1022
  %v1024 = vpop.f32.mrf.mxu0
  %v1025 = vadd.f32 %v752, %v1024
  %v1026 = vpop.f32.mrf.mxu0
  %1027 = vdwg.mxu0
  %1028 = vmatprep.subr.mxu0 0.0
  %v1029 = vand.u32 %v64, 4294901760
  %1030 = vmatpush1.msra.mxu0 %v1029
  %1031 = vmatprep.subr.mxu0 0.0
  %v1032 = vand.u32 %v63, 4294901760
  %1033 = vmatpush1.msra.mxu0 %v1032
  %1034 = vmatprep.subr.mxu0 0.0
  %v1035 = vand.u32 %v62, 4294901760
  %1036 = vmatpush1.msra.mxu0 %v1035
  %1037 = vmatprep.subr.mxu0 0.0
  %v1038 = vand.u32 %v61, 4294901760
  %1039 = vmatpush1.msra.mxu0 %v1038
  %1040 = vmatprep.subr.mxu0 0.0
  %v1041 = vand.u32 %v60, 4294901760
  %1042 = vmatpush1.msra.mxu0 %v1041
  %1043 = vmatprep.subr.mxu0 0.0
  %v1044 = vand.u32 %v59, 4294901760
  %1045 = vmatpush1.msra.mxu0 %v1044
  %1046 = vmatprep.subr.mxu0 0.0
  %v1047 = vand.u32 %v58, 4294901760
  %1048 = vmatpush1.msra.mxu0 %v1047
  %1049 = vmatprep.subr.mxu0 0.0
  %v1050 = vand.u32 %v57, 4294901760
  %1051 = vmatpush1.msra.mxu0 %v1050
  %1052 = vmatprep.subr.mxu0 0.0
  %v1053 = vand.u32 %v56, 4294901760
  %1054 = vmatpush1.msra.mxu0 %v1053
  %1055 = vmatprep.subr.mxu0 0.0
  %v1056 = vand.u32 %v55, 4294901760
  %1057 = vmatpush1.msra.mxu0 %v1056
  %1058 = vmatprep.subr.mxu0 0.0
  %v1059 = vand.u32 %v54, 4294901760
  %1060 = vmatpush1.msra.mxu0 %v1059
  %1061 = vmatprep.subr.mxu0 0.0
  %v1062 = vand.u32 %v53, 4294901760
  %1063 = vmatpush1.msra.mxu0 %v1062
  %1064 = vmatprep.subr.mxu0 0.0
  %v1065 = vand.u32 %v52, 4294901760
  %1066 = vmatpush1.msra.mxu0 %v1065
  %1067 = vmatprep.subr.mxu0 0.0
  %v1068 = vand.u32 %v51, 4294901760
  %1069 = vmatpush1.msra.mxu0 %v1068
  %1070 = vmatprep.subr.mxu0 0.0
  %v1071 = vand.u32 %v50, 4294901760
  %1072 = vmatpush1.msra.mxu0 %v1071
  %1073 = vmatprep.subr.mxu0 0.0
  %v1074 = vand.u32 %v49, 4294901760
  %1075 = vmatpush1.msra.mxu0 %v1074
  %1076 = vmatprep.subr.mxu0 0.0
  %v1077 = vand.u32 %v80, 4294901760
  %1078 = vmatpush2.msra.mxu0 %v1077
  %1079 = vmatprep.subr.mxu0 0.0
  %v1080 = vand.u32 %v79, 4294901760
  %1081 = vmatpush2.msra.mxu0 %v1080
  %1082 = vmatprep.subr.mxu0 0.0
  %v1083 = vand.u32 %v78, 4294901760
  %1084 = vmatpush2.msra.mxu0 %v1083
  %1085 = vmatprep.subr.mxu0 0.0
  %v1086 = vand.u32 %v77, 4294901760
  %1087 = vmatpush2.msra.mxu0 %v1086
  %1088 = vmatprep.subr.mxu0 0.0
  %v1089 = vand.u32 %v76, 4294901760
  %1090 = vmatpush2.msra.mxu0 %v1089
  %1091 = vmatprep.subr.mxu0 0.0
  %v1092 = vand.u32 %v75, 4294901760
  %1093 = vmatpush2.msra.mxu0 %v1092
  %1094 = vmatprep.subr.mxu0 0.0
  %v1095 = vand.u32 %v74, 4294901760
  %1096 = vmatpush2.msra.mxu0 %v1095
  %1097 = vmatprep.subr.mxu0 0.0
  %v1098 = vand.u32 %v73, 4294901760
  %1099 = vmatpush2.msra.mxu0 %v1098
  %1100 = vmatprep.subr.mxu0 0.0
  %v1101 = vand.u32 %v72, 4294901760
  %1102 = vmatpush2.msra.mxu0 %v1101
  %1103 = vmatprep.subr.mxu0 0.0
  %v1104 = vand.u32 %v71, 4294901760
  %1105 = vmatpush2.msra.mxu0 %v1104
  %1106 = vmatprep.subr.mxu0 0.0
  %v1107 = vand.u32 %v70, 4294901760
  %1108 = vmatpush2.msra.mxu0 %v1107
  %1109 = vmatprep.subr.mxu0 0.0
  %v1110 = vand.u32 %v69, 4294901760
  %1111 = vmatpush2.msra.mxu0 %v1110
  %1112 = vmatprep.subr.mxu0 0.0
  %v1113 = vand.u32 %v68, 4294901760
  %1114 = vmatpush2.msra.mxu0 %v1113
  %1115 = vmatprep.subr.mxu0 0.0
  %v1116 = vand.u32 %v67, 4294901760
  %1117 = vmatpush2.msra.mxu0 %v1116
  %1118 = vmatprep.subr.mxu0 0.0
  %v1119 = vand.u32 %v66, 4294901760
  %1120 = vmatpush2.msra.mxu0 %v1119
  %1121 = vmatprep.subr.mxu0 0.0
  %v1122 = vand.u32 %v65, 4294901760
  %1123 = vmatpush2.msra.mxu0 %v1122
  %v1124 = vand.u32 %v18, 4294901760
  %v1125 = vsub.f32 %v18, %v1124
  %v1126 = vand.u32 %v1125, 4294901760
  %1127 = vmatprep.mubr.f32.mxu0 %v1126
  %v1128 = vand.u32 %v17, 4294901760
  %v1129 = vsub.f32 %v17, %v1128
  %v1130 = vand.u32 %v1129, 4294901760
  %1131 = vmatmul.mubr.f32.gmra.mxu0 %v1130
  %v1132 = vpop.f32.mrf.mxu0
  %v1133 = vadd.f32 %v890, %v1132
  %v1134 = vpop.f32.mrf.mxu0
  %v1135 = vand.u32 %v20, 4294901760
  %v1136 = vsub.f32 %v20, %v1135
  %v1137 = vand.u32 %v1136, 4294901760
  %1138 = vmatprep.mubr.f32.mxu0 %v1137
  %v1139 = vand.u32 %v19, 4294901760
  %v1140 = vsub.f32 %v19, %v1139
  %v1141 = vand.u32 %v1140, 4294901760
  %1142 = vmatmul.mubr.f32.gmra.mxu0 %v1141
  %v1143 = vpop.f32.mrf.mxu0
  %v1144 = vadd.f32 %v899, %v1143
  %v1145 = vpop.f32.mrf.mxu0
  %v1146 = vand.u32 %v22, 4294901760
  %v1147 = vsub.f32 %v22, %v1146
  %v1148 = vand.u32 %v1147, 4294901760
  %1149 = vmatprep.mubr.f32.mxu0 %v1148
  %v1150 = vand.u32 %v21, 4294901760
  %v1151 = vsub.f32 %v21, %v1150
  %v1152 = vand.u32 %v1151, 4294901760
  %1153 = vmatmul.mubr.f32.gmra.mxu0 %v1152
  %v1154 = vpop.f32.mrf.mxu0
  %v1155 = vadd.f32 %v908, %v1154
  %v1156 = vpop.f32.mrf.mxu0
  %v1157 = vand.u32 %v24, 4294901760
  %v1158 = vsub.f32 %v24, %v1157
  %v1159 = vand.u32 %v1158, 4294901760
  %1160 = vmatprep.mubr.f32.mxu0 %v1159
  %v1161 = vand.u32 %v23, 4294901760
  %v1162 = vsub.f32 %v23, %v1161
  %v1163 = vand.u32 %v1162, 4294901760
  %1164 = vmatmul.mubr.f32.gmra.mxu0 %v1163
  %v1165 = vpop.f32.mrf.mxu0
  %v1166 = vadd.f32 %v917, %v1165
  %v1167 = vpop.f32.mrf.mxu0
  %v1168 = vand.u32 %v26, 4294901760
  %v1169 = vsub.f32 %v26, %v1168
  %v1170 = vand.u32 %v1169, 4294901760
  %1171 = vmatprep.mubr.f32.mxu0 %v1170
  %v1172 = vand.u32 %v25, 4294901760
  %v1173 = vsub.f32 %v25, %v1172
  %v1174 = vand.u32 %v1173, 4294901760
  %1175 = vmatmul.mubr.f32.gmra.mxu0 %v1174
  %v1176 = vpop.f32.mrf.mxu0
  %v1177 = vadd.f32 %v926, %v1176
  %v1178 = vpop.f32.mrf.mxu0
  %v1179 = vand.u32 %v28, 4294901760
  %v1180 = vsub.f32 %v28, %v1179
  %v1181 = vand.u32 %v1180, 4294901760
  %1182 = vmatprep.mubr.f32.mxu0 %v1181
  %v1183 = vand.u32 %v27, 4294901760
  %v1184 = vsub.f32 %v27, %v1183
  %v1185 = vand.u32 %v1184, 4294901760
  %1186 = vmatmul.mubr.f32.gmra.mxu0 %v1185
  %v1187 = vpop.f32.mrf.mxu0
  %v1188 = vadd.f32 %v935, %v1187
  %v1189 = vpop.f32.mrf.mxu0
  %v1190 = vand.u32 %v30, 4294901760
  %v1191 = vsub.f32 %v30, %v1190
  %v1192 = vand.u32 %v1191, 4294901760
  %1193 = vmatprep.mubr.f32.mxu0 %v1192
  %v1194 = vand.u32 %v29, 4294901760
  %v1195 = vsub.f32 %v29, %v1194
  %v1196 = vand.u32 %v1195, 4294901760
  %1197 = vmatmul.mubr.f32.gmra.mxu0 %v1196
  %v1198 = vpop.f32.mrf.mxu0
  %v1199 = vadd.f32 %v944, %v1198
  %v1200 = vpop.f32.mrf.mxu0
  %v1201 = vand.u32 %v32, 4294901760
  %v1202 = vsub.f32 %v32, %v1201
  %v1203 = vand.u32 %v1202, 4294901760
  %1204 = vmatprep.mubr.f32.mxu0 %v1203
  %v1205 = vand.u32 %v31, 4294901760
  %v1206 = vsub.f32 %v31, %v1205
  %v1207 = vand.u32 %v1206, 4294901760
  %1208 = vmatmul.mubr.f32.gmra.mxu0 %v1207
  %v1209 = vpop.f32.mrf.mxu0
  %v1210 = vadd.f32 %v953, %v1209
  %v1211 = vpop.f32.mrf.mxu0
  %v1212 = vand.u32 %v34, 4294901760
  %v1213 = vsub.f32 %v34, %v1212
  %v1214 = vand.u32 %v1213, 4294901760
  %1215 = vmatprep.mubr.f32.mxu0 %v1214
  %v1216 = vand.u32 %v33, 4294901760
  %v1217 = vsub.f32 %v33, %v1216
  %v1218 = vand.u32 %v1217, 4294901760
  %1219 = vmatmul.mubr.f32.gmra.mxu0 %v1218
  %v1220 = vpop.f32.mrf.mxu0
  %v1221 = vadd.f32 %v962, %v1220
  %v1222 = vpop.f32.mrf.mxu0
  %v1223 = vand.u32 %v36, 4294901760
  %v1224 = vsub.f32 %v36, %v1223
  %v1225 = vand.u32 %v1224, 4294901760
  %1226 = vmatprep.mubr.f32.mxu0 %v1225
  %v1227 = vand.u32 %v35, 4294901760
  %v1228 = vsub.f32 %v35, %v1227
  %v1229 = vand.u32 %v1228, 4294901760
  %1230 = vmatmul.mubr.f32.gmra.mxu0 %v1229
  %v1231 = vpop.f32.mrf.mxu0
  %v1232 = vadd.f32 %v971, %v1231
  %v1233 = vpop.f32.mrf.mxu0
  %v1234 = vand.u32 %v38, 4294901760
  %v1235 = vsub.f32 %v38, %v1234
  %v1236 = vand.u32 %v1235, 4294901760
  %1237 = vmatprep.mubr.f32.mxu0 %v1236
  %v1238 = vand.u32 %v37, 4294901760
  %v1239 = vsub.f32 %v37, %v1238
  %v1240 = vand.u32 %v1239, 4294901760
  %1241 = vmatmul.mubr.f32.gmra.mxu0 %v1240
  %v1242 = vpop.f32.mrf.mxu0
  %v1243 = vadd.f32 %v980, %v1242
  %v1244 = vpop.f32.mrf.mxu0
  %v1245 = vand.u32 %v40, 4294901760
  %v1246 = vsub.f32 %v40, %v1245
  %v1247 = vand.u32 %v1246, 4294901760
  %1248 = vmatprep.mubr.f32.mxu0 %v1247
  %v1249 = vand.u32 %v39, 4294901760
  %v1250 = vsub.f32 %v39, %v1249
  %v1251 = vand.u32 %v1250, 4294901760
  %1252 = vmatmul.mubr.f32.gmra.mxu0 %v1251
  %v1253 = vpop.f32.mrf.mxu0
  %v1254 = vadd.f32 %v989, %v1253
  %v1255 = vpop.f32.mrf.mxu0
  %v1256 = vand.u32 %v42, 4294901760
  %v1257 = vsub.f32 %v42, %v1256
  %v1258 = vand.u32 %v1257, 4294901760
  %1259 = vmatprep.mubr.f32.mxu0 %v1258
  %v1260 = vand.u32 %v41, 4294901760
  %v1261 = vsub.f32 %v41, %v1260
  %v1262 = vand.u32 %v1261, 4294901760
  %1263 = vmatmul.mubr.f32.gmra.mxu0 %v1262
  %v1264 = vpop.f32.mrf.mxu0
  %v1265 = vadd.f32 %v998, %v1264
  %v1266 = vpop.f32.mrf.mxu0
  %v1267 = vand.u32 %v44, 4294901760
  %v1268 = vsub.f32 %v44, %v1267
  %v1269 = vand.u32 %v1268, 4294901760
  %1270 = vmatprep.mubr.f32.mxu0 %v1269
  %v1271 = vand.u32 %v43, 4294901760
  %v1272 = vsub.f32 %v43, %v1271
  %v1273 = vand.u32 %v1272, 4294901760
  %1274 = vmatmul.mubr.f32.gmra.mxu0 %v1273
  %v1275 = vpop.f32.mrf.mxu0
  %v1276 = vadd.f32 %v1007, %v1275
  %v1277 = vpop.f32.mrf.mxu0
  %v1278 = vand.u32 %v46, 4294901760
  %v1279 = vsub.f32 %v46, %v1278
  %v1280 = vand.u32 %v1279, 4294901760
  %1281 = vmatprep.mubr.f32.mxu0 %v1280
  %v1282 = vand.u32 %v45, 4294901760
  %v1283 = vsub.f32 %v45, %v1282
  %v1284 = vand.u32 %v1283, 4294901760
  %1285 = vmatmul.mubr.f32.gmra.mxu0 %v1284
  %v1286 = vpop.f32.mrf.mxu0
  %v1287 = vadd.f32 %v1016, %v1286
  %v1288 = vpop.f32.mrf.mxu0
  %v1289 = vand.u32 %v48, 4294901760
  %v1290 = vsub.f32 %v48, %v1289
  %v1291 = vand.u32 %v1290, 4294901760
  %1292 = vmatprep.mubr.f32.mxu0 %v1291
  %v1293 = vand.u32 %v47, 4294901760
  %v1294 = vsub.f32 %v47, %v1293
  %v1295 = vand.u32 %v1294, 4294901760
  %1296 = vmatmul.mubr.f32.gmra.mxu0 %v1295
  %v1297 = vpop.f32.mrf.mxu0
  %v1298 = vadd.f32 %v1025, %v1297
  %v1299 = vpop.f32.mrf.mxu0
  %1300 = vdwg.mxu0
  %1301 = vmatprep.subr.mxu0 0.0
  %v1302 = vand.u32 %v64, 4294901760
  %v1303 = vsub.f32 %v64, %v1302
  %v1304 = vand.u32 %v1303, 4294901760
  %1305 = vmatpush1.msra.mxu0 %v1304
  %1306 = vmatprep.subr.mxu0 0.0
  %v1307 = vand.u32 %v63, 4294901760
  %v1308 = vsub.f32 %v63, %v1307
  %v1309 = vand.u32 %v1308, 4294901760
  %1310 = vmatpush1.msra.mxu0 %v1309
  %1311 = vmatprep.subr.mxu0 0.0
  %v1312 = vand.u32 %v62, 4294901760
  %v1313 = vsub.f32 %v62, %v1312
  %v1314 = vand.u32 %v1313, 4294901760
  %1315 = vmatpush1.msra.mxu0 %v1314
  %1316 = vmatprep.subr.mxu0 0.0
  %v1317 = vand.u32 %v61, 4294901760
  %v1318 = vsub.f32 %v61, %v1317
  %v1319 = vand.u32 %v1318, 4294901760
  %1320 = vmatpush1.msra.mxu0 %v1319
  %1321 = vmatprep.subr.mxu0 0.0
  %v1322 = vand.u32 %v60, 4294901760
  %v1323 = vsub.f32 %v60, %v1322
  %v1324 = vand.u32 %v1323, 4294901760
  %1325 = vmatpush1.msra.mxu0 %v1324
  %1326 = vmatprep.subr.mxu0 0.0
  %v1327 = vand.u32 %v59, 4294901760
  %v1328 = vsub.f32 %v59, %v1327
  %v1329 = vand.u32 %v1328, 4294901760
  %1330 = vmatpush1.msra.mxu0 %v1329
  %1331 = vmatprep.subr.mxu0 0.0
  %v1332 = vand.u32 %v58, 4294901760
  %v1333 = vsub.f32 %v58, %v1332
  %v1334 = vand.u32 %v1333, 4294901760
  %1335 = vmatpush1.msra.mxu0 %v1334
  %1336 = vmatprep.subr.mxu0 0.0
  %v1337 = vand.u32 %v57, 4294901760
  %v1338 = vsub.f32 %v57, %v1337
  %v1339 = vand.u32 %v1338, 4294901760
  %1340 = vmatpush1.msra.mxu0 %v1339
  %1341 = vmatprep.subr.mxu0 0.0
  %v1342 = vand.u32 %v56, 4294901760
  %v1343 = vsub.f32 %v56, %v1342
  %v1344 = vand.u32 %v1343, 4294901760
  %1345 = vmatpush1.msra.mxu0 %v1344
  %1346 = vmatprep.subr.mxu0 0.0
  %v1347 = vand.u32 %v55, 4294901760
  %v1348 = vsub.f32 %v55, %v1347
  %v1349 = vand.u32 %v1348, 4294901760
  %1350 = vmatpush1.msra.mxu0 %v1349
  %1351 = vmatprep.subr.mxu0 0.0
  %v1352 = vand.u32 %v54, 4294901760
  %v1353 = vsub.f32 %v54, %v1352
  %v1354 = vand.u32 %v1353, 4294901760
  %1355 = vmatpush1.msra.mxu0 %v1354
  %1356 = vmatprep.subr.mxu0 0.0
  %v1357 = vand.u32 %v53, 4294901760
  %v1358 = vsub.f32 %v53, %v1357
  %v1359 = vand.u32 %v1358, 4294901760
  %1360 = vmatpush1.msra.mxu0 %v1359
  %1361 = vmatprep.subr.mxu0 0.0
  %v1362 = vand.u32 %v52, 4294901760
  %v1363 = vsub.f32 %v52, %v1362
  %v1364 = vand.u32 %v1363, 4294901760
  %1365 = vmatpush1.msra.mxu0 %v1364
  %1366 = vmatprep.subr.mxu0 0.0
  %v1367 = vand.u32 %v51, 4294901760
  %v1368 = vsub.f32 %v51, %v1367
  %v1369 = vand.u32 %v1368, 4294901760
  %1370 = vmatpush1.msra.mxu0 %v1369
  %1371 = vmatprep.subr.mxu0 0.0
  %v1372 = vand.u32 %v50, 4294901760
  %v1373 = vsub.f32 %v50, %v1372
  %v1374 = vand.u32 %v1373, 4294901760
  %1375 = vmatpush1.msra.mxu0 %v1374
  %1376 = vmatprep.subr.mxu0 0.0
  %v1377 = vand.u32 %v49, 4294901760
  %v1378 = vsub.f32 %v49, %v1377
  %v1379 = vand.u32 %v1378, 4294901760
  %1380 = vmatpush1.msra.mxu0 %v1379
  %1381 = vmatprep.subr.mxu0 0.0
  %v1382 = vand.u32 %v80, 4294901760
  %v1383 = vsub.f32 %v80, %v1382
  %v1384 = vand.u32 %v1383, 4294901760
  %1385 = vmatpush2.msra.mxu0 %v1384
  %1386 = vmatprep.subr.mxu0 0.0
  %v1387 = vand.u32 %v79, 4294901760
  %v1388 = vsub.f32 %v79, %v1387
  %v1389 = vand.u32 %v1388, 4294901760
  %1390 = vmatpush2.msra.mxu0 %v1389
  %1391 = vmatprep.subr.mxu0 0.0
  %v1392 = vand.u32 %v78, 4294901760
  %v1393 = vsub.f32 %v78, %v1392
  %v1394 = vand.u32 %v1393, 4294901760
  %1395 = vmatpush2.msra.mxu0 %v1394
  %1396 = vmatprep.subr.mxu0 0.0
  %v1397 = vand.u32 %v77, 4294901760
  %v1398 = vsub.f32 %v77, %v1397
  %v1399 = vand.u32 %v1398, 4294901760
  %1400 = vmatpush2.msra.mxu0 %v1399
  %1401 = vmatprep.subr.mxu0 0.0
  %v1402 = vand.u32 %v76, 4294901760
  %v1403 = vsub.f32 %v76, %v1402
  %v1404 = vand.u32 %v1403, 4294901760
  %1405 = vmatpush2.msra.mxu0 %v1404
  %1406 = vmatprep.subr.mxu0 0.0
  %v1407 = vand.u32 %v75, 4294901760
  %v1408 = vsub.f32 %v75, %v1407
  %v1409 = vand.u32 %v1408, 4294901760
  %1410 = vmatpush2.msra.mxu0 %v1409
  %1411 = vmatprep.subr.mxu0 0.0
  %v1412 = vand.u32 %v74, 4294901760
  %v1413 = vsub.f32 %v74, %v1412
  %v1414 = vand.u32 %v1413, 4294901760
  %1415 = vmatpush2.msra.mxu0 %v1414
  %1416 = vmatprep.subr.mxu0 0.0
  %v1417 = vand.u32 %v73, 4294901760
  %v1418 = vsub.f32 %v73, %v1417
  %v1419 = vand.u32 %v1418, 4294901760
  %1420 = vmatpush2.msra.mxu0 %v1419
  %1421 = vmatprep.subr.mxu0 0.0
  %v1422 = vand.u32 %v72, 4294901760
  %v1423 = vsub.f32 %v72, %v1422
  %v1424 = vand.u32 %v1423, 4294901760
  %1425 = vmatpush2.msra.mxu0 %v1424
  %1426 = vmatprep.subr.mxu0 0.0
  %v1427 = vand.u32 %v71, 4294901760
  %v1428 = vsub.f32 %v71, %v1427
  %v1429 = vand.u32 %v1428, 4294901760
  %1430 = vmatpush2.msra.mxu0 %v1429
  %1431 = vmatprep.subr.mxu0 0.0
  %v1432 = vand.u32 %v70, 4294901760
  %v1433 = vsub.f32 %v70, %v1432
  %v1434 = vand.u32 %v1433, 4294901760
  %1435 = vmatpush2.msra.mxu0 %v1434
  %1436 = vmatprep.subr.mxu0 0.0
  %v1437 = vand.u32 %v69, 4294901760
  %v1438 = vsub.f32 %v69, %v1437
  %v1439 = vand.u32 %v1438, 4294901760
  %1440 = vmatpush2.msra.mxu0 %v1439
  %1441 = vmatprep.subr.mxu0 0.0
  %v1442 = vand.u32 %v68, 4294901760
  %v1443 = vsub.f32 %v68, %v1442
  %v1444 = vand.u32 %v1443, 4294901760
  %1445 = vmatpush2.msra.mxu0 %v1444
  %1446 = vmatprep.subr.mxu0 0.0
  %v1447 = vand.u32 %v67, 4294901760
  %v1448 = vsub.f32 %v67, %v1447
  %v1449 = vand.u32 %v1448, 4294901760
  %1450 = vmatpush2.msra.mxu0 %v1449
  %1451 = vmatprep.subr.mxu0 0.0
  %v1452 = vand.u32 %v66, 4294901760
  %v1453 = vsub.f32 %v66, %v1452
  %v1454 = vand.u32 %v1453, 4294901760
  %1455 = vmatpush2.msra.mxu0 %v1454
  %1456 = vmatprep.subr.mxu0 0.0
  %v1457 = vand.u32 %v65, 4294901760
  %v1458 = vsub.f32 %v65, %v1457
  %v1459 = vand.u32 %v1458, 4294901760
  %1460 = vmatpush2.msra.mxu0 %v1459
  %v1461 = vand.u32 %v18, 4294901760
  %1462 = vmatprep.mubr.f32.mxu0 %v1461
  %v1463 = vand.u32 %v17, 4294901760
  %1464 = vmatmul.mubr.f32.gmra.mxu0 %v1463
  %v1465 = vpop.f32.mrf.mxu0
  %v1466 = vadd.f32 %v1133, %v1465
  %v1467 = vpop.f32.mrf.mxu0
  %v1468 = vand.u32 %v20, 4294901760
  %1469 = vmatprep.mubr.f32.mxu0 %v1468
  %v1470 = vand.u32 %v19, 4294901760
  %1471 = vmatmul.mubr.f32.gmra.mxu0 %v1470
  %v1472 = vpop.f32.mrf.mxu0
  %v1473 = vadd.f32 %v1144, %v1472
  %v1474 = vpop.f32.mrf.mxu0
  %v1475 = vand.u32 %v22, 4294901760
  %1476 = vmatprep.mubr.f32.mxu0 %v1475
  %v1477 = vand.u32 %v21, 4294901760
  %1478 = vmatmul.mubr.f32.gmra.mxu0 %v1477
  %v1479 = vpop.f32.mrf.mxu0
  %v1480 = vadd.f32 %v1155, %v1479
  %v1481 = vpop.f32.mrf.mxu0
  %v1482 = vand.u32 %v24, 4294901760
  %1483 = vmatprep.mubr.f32.mxu0 %v1482
  %v1484 = vand.u32 %v23, 4294901760
  %1485 = vmatmul.mubr.f32.gmra.mxu0 %v1484
  %v1486 = vpop.f32.mrf.mxu0
  %v1487 = vadd.f32 %v1166, %v1486
  %v1488 = vpop.f32.mrf.mxu0
  %v1489 = vand.u32 %v26, 4294901760
  %1490 = vmatprep.mubr.f32.mxu0 %v1489
  %v1491 = vand.u32 %v25, 4294901760
  %1492 = vmatmul.mubr.f32.gmra.mxu0 %v1491
  %v1493 = vpop.f32.mrf.mxu0
  %v1494 = vadd.f32 %v1177, %v1493
  %v1495 = vpop.f32.mrf.mxu0
  %v1496 = vand.u32 %v28, 4294901760
  %1497 = vmatprep.mubr.f32.mxu0 %v1496
  %v1498 = vand.u32 %v27, 4294901760
  %1499 = vmatmul.mubr.f32.gmra.mxu0 %v1498
  %v1500 = vpop.f32.mrf.mxu0
  %v1501 = vadd.f32 %v1188, %v1500
  %v1502 = vpop.f32.mrf.mxu0
  %v1503 = vand.u32 %v30, 4294901760
  %1504 = vmatprep.mubr.f32.mxu0 %v1503
  %v1505 = vand.u32 %v29, 4294901760
  %1506 = vmatmul.mubr.f32.gmra.mxu0 %v1505
  %v1507 = vpop.f32.mrf.mxu0
  %v1508 = vadd.f32 %v1199, %v1507
  %v1509 = vpop.f32.mrf.mxu0
  %v1510 = vand.u32 %v32, 4294901760
  %1511 = vmatprep.mubr.f32.mxu0 %v1510
  %v1512 = vand.u32 %v31, 4294901760
  %1513 = vmatmul.mubr.f32.gmra.mxu0 %v1512
  %v1514 = vpop.f32.mrf.mxu0
  %v1515 = vadd.f32 %v1210, %v1514
  %v1516 = vpop.f32.mrf.mxu0
  %v1517 = vand.u32 %v34, 4294901760
  %1518 = vmatprep.mubr.f32.mxu0 %v1517
  %v1519 = vand.u32 %v33, 4294901760
  %1520 = vmatmul.mubr.f32.gmra.mxu0 %v1519
  %v1521 = vpop.f32.mrf.mxu0
  %v1522 = vadd.f32 %v1221, %v1521
  %v1523 = vpop.f32.mrf.mxu0
  %v1524 = vand.u32 %v36, 4294901760
  %1525 = vmatprep.mubr.f32.mxu0 %v1524
  %v1526 = vand.u32 %v35, 4294901760
  %1527 = vmatmul.mubr.f32.gmra.mxu0 %v1526
  %v1528 = vpop.f32.mrf.mxu0
  %v1529 = vadd.f32 %v1232, %v1528
  %v1530 = vpop.f32.mrf.mxu0
  %v1531 = vand.u32 %v38, 4294901760
  %1532 = vmatprep.mubr.f32.mxu0 %v1531
  %v1533 = vand.u32 %v37, 4294901760
  %1534 = vmatmul.mubr.f32.gmra.mxu0 %v1533
  %v1535 = vpop.f32.mrf.mxu0
  %v1536 = vadd.f32 %v1243, %v1535
  %v1537 = vpop.f32.mrf.mxu0
  %v1538 = vand.u32 %v40, 4294901760
  %1539 = vmatprep.mubr.f32.mxu0 %v1538
  %v1540 = vand.u32 %v39, 4294901760
  %1541 = vmatmul.mubr.f32.gmra.mxu0 %v1540
  %v1542 = vpop.f32.mrf.mxu0
  %v1543 = vadd.f32 %v1254, %v1542
  %v1544 = vpop.f32.mrf.mxu0
  %v1545 = vand.u32 %v42, 4294901760
  %1546 = vmatprep.mubr.f32.mxu0 %v1545
  %v1547 = vand.u32 %v41, 4294901760
  %1548 = vmatmul.mubr.f32.gmra.mxu0 %v1547
  %v1549 = vpop.f32.mrf.mxu0
  %v1550 = vadd.f32 %v1265, %v1549
  %v1551 = vpop.f32.mrf.mxu0
  %v1552 = vand.u32 %v44, 4294901760
  %1553 = vmatprep.mubr.f32.mxu0 %v1552
  %v1554 = vand.u32 %v43, 4294901760
  %1555 = vmatmul.mubr.f32.gmra.mxu0 %v1554
  %v1556 = vpop.f32.mrf.mxu0
  %v1557 = vadd.f32 %v1276, %v1556
  %v1558 = vpop.f32.mrf.mxu0
  %v1559 = vand.u32 %v46, 4294901760
  %1560 = vmatprep.mubr.f32.mxu0 %v1559
  %v1561 = vand.u32 %v45, 4294901760
  %1562 = vmatmul.mubr.f32.gmra.mxu0 %v1561
  %v1563 = vpop.f32.mrf.mxu0
  %v1564 = vadd.f32 %v1287, %v1563
  %v1565 = vpop.f32.mrf.mxu0
  %v1566 = vand.u32 %v48, 4294901760
  %1567 = vmatprep.mubr.f32.mxu0 %v1566
  %v1568 = vand.u32 %v47, 4294901760
  %1569 = vmatmul.mubr.f32.gmra.mxu0 %v1568
  %v1570 = vpop.f32.mrf.mxu0
  %v1571 = vadd.f32 %v1298, %v1570
  %v1572 = vpop.f32.mrf.mxu0
  %1573 = vdwg.mxu0
  %1574 = vmatprep.subr.mxu0 0.0
  %v1575 = vand.u32 %v64, 4294901760
  %1576 = vmatpush1.msra.mxu0 %v1575
  %1577 = vmatprep.subr.mxu0 0.0
  %v1578 = vand.u32 %v63, 4294901760
  %1579 = vmatpush1.msra.mxu0 %v1578
  %1580 = vmatprep.subr.mxu0 0.0
  %v1581 = vand.u32 %v62, 4294901760
  %1582 = vmatpush1.msra.mxu0 %v1581
  %1583 = vmatprep.subr.mxu0 0.0
  %v1584 = vand.u32 %v61, 4294901760
  %1585 = vmatpush1.msra.mxu0 %v1584
  %1586 = vmatprep.subr.mxu0 0.0
  %v1587 = vand.u32 %v60, 4294901760
  %1588 = vmatpush1.msra.mxu0 %v1587
  %1589 = vmatprep.subr.mxu0 0.0
  %v1590 = vand.u32 %v59, 4294901760
  %1591 = vmatpush1.msra.mxu0 %v1590
  %1592 = vmatprep.subr.mxu0 0.0
  %v1593 = vand.u32 %v58, 4294901760
  %1594 = vmatpush1.msra.mxu0 %v1593
  %1595 = vmatprep.subr.mxu0 0.0
  %v1596 = vand.u32 %v57, 4294901760
  %1597 = vmatpush1.msra.mxu0 %v1596
  %1598 = vmatprep.subr.mxu0 0.0
  %v1599 = vand.u32 %v56, 4294901760
  %1600 = vmatpush1.msra.mxu0 %v1599
  %1601 = vmatprep.subr.mxu0 0.0
  %v1602 = vand.u32 %v55, 4294901760
  %1603 = vmatpush1.msra.mxu0 %v1602
  %1604 = vmatprep.subr.mxu0 0.0
  %v1605 = vand.u32 %v54, 4294901760
  %1606 = vmatpush1.msra.mxu0 %v1605
  %1607 = vmatprep.subr.mxu0 0.0
  %v1608 = vand.u32 %v53, 4294901760
  %1609 = vmatpush1.msra.mxu0 %v1608
  %1610 = vmatprep.subr.mxu0 0.0
  %v1611 = vand.u32 %v52, 4294901760
  %1612 = vmatpush1.msra.mxu0 %v1611
  %1613 = vmatprep.subr.mxu0 0.0
  %v1614 = vand.u32 %v51, 4294901760
  %1615 = vmatpush1.msra.mxu0 %v1614
  %1616 = vmatprep.subr.mxu0 0.0
  %v1617 = vand.u32 %v50, 4294901760
  %1618 = vmatpush1.msra.mxu0 %v1617
  %1619 = vmatprep.subr.mxu0 0.0
  %v1620 = vand.u32 %v49, 4294901760
  %1621 = vmatpush1.msra.mxu0 %v1620
  %1622 = vmatprep.subr.mxu0 0.0
  %v1623 = vand.u32 %v80, 4294901760
  %1624 = vmatpush2.msra.mxu0 %v1623
  %1625 = vmatprep.subr.mxu0 0.0
  %v1626 = vand.u32 %v79, 4294901760
  %1627 = vmatpush2.msra.mxu0 %v1626
  %1628 = vmatprep.subr.mxu0 0.0
  %v1629 = vand.u32 %v78, 4294901760
  %1630 = vmatpush2.msra.mxu0 %v1629
  %1631 = vmatprep.subr.mxu0 0.0
  %v1632 = vand.u32 %v77, 4294901760
  %1633 = vmatpush2.msra.mxu0 %v1632
  %1634 = vmatprep.subr.mxu0 0.0
  %v1635 = vand.u32 %v76, 4294901760
  %1636 = vmatpush2.msra.mxu0 %v1635
  %1637 = vmatprep.subr.mxu0 0.0
  %v1638 = vand.u32 %v75, 4294901760
  %1639 = vmatpush2.msra.mxu0 %v1638
  %1640 = vmatprep.subr.mxu0 0.0
  %v1641 = vand.u32 %v74, 4294901760
  %1642 = vmatpush2.msra.mxu0 %v1641
  %1643 = vmatprep.subr.mxu0 0.0
  %v1644 = vand.u32 %v73, 4294901760
  %1645 = vmatpush2.msra.mxu0 %v1644
  %1646 = vmatprep.subr.mxu0 0.0
  %v1647 = vand.u32 %v72, 4294901760
  %1648 = vmatpush2.msra.mxu0 %v1647
  %1649 = vmatprep.subr.mxu0 0.0
  %v1650 = vand.u32 %v71, 4294901760
  %1651 = vmatpush2.msra.mxu0 %v1650
  %1652 = vmatprep.subr.mxu0 0.0
  %v1653 = vand.u32 %v70, 4294901760
  %1654 = vmatpush2.msra.mxu0 %v1653
  %1655 = vmatprep.subr.mxu0 0.0
  %v1656 = vand.u32 %v69, 4294901760
  %1657 = vmatpush2.msra.mxu0 %v1656
  %1658 = vmatprep.subr.mxu0 0.0
  %v1659 = vand.u32 %v68, 4294901760
  %1660 = vmatpush2.msra.mxu0 %v1659
  %1661 = vmatprep.subr.mxu0 0.0
  %v1662 = vand.u32 %v67, 4294901760
  %1663 = vmatpush2.msra.mxu0 %v1662
  %1664 = vmatprep.subr.mxu0 0.0
  %v1665 = vand.u32 %v66, 4294901760
  %1666 = vmatpush2.msra.mxu0 %v1665
  %1667 = vmatprep.subr.mxu0 0.0
  %v1668 = vand.u32 %v65, 4294901760
  %1669 = vmatpush2.msra.mxu0 %v1668
  %v1670 = vand.u32 %v18, 4294901760
  %1671 = vmatprep.mubr.f32.mxu0 %v1670
  %v1672 = vand.u32 %v17, 4294901760
  %1673 = vmatmul.mubr.f32.gmra.mxu0 %v1672
  %v1674 = vpop.f32.mrf.mxu0
  %v1675 = vadd.f32 %v1466, %v1674
  %v1676 = vpop.f32.mrf.mxu0
  %v1677 = vand.u32 %v20, 4294901760
  %1678 = vmatprep.mubr.f32.mxu0 %v1677
  %v1679 = vand.u32 %v19, 4294901760
  %1680 = vmatmul.mubr.f32.gmra.mxu0 %v1679
  %v1681 = vpop.f32.mrf.mxu0
  %v1682 = vadd.f32 %v1473, %v1681
  %v1683 = vpop.f32.mrf.mxu0
  %v1684 = vand.u32 %v22, 4294901760
  %1685 = vmatprep.mubr.f32.mxu0 %v1684
  %v1686 = vand.u32 %v21, 4294901760
  %1687 = vmatmul.mubr.f32.gmra.mxu0 %v1686
  %v1688 = vpop.f32.mrf.mxu0
  %v1689 = vadd.f32 %v1480, %v1688
  %v1690 = vpop.f32.mrf.mxu0
  %v1691 = vand.u32 %v24, 4294901760
  %1692 = vmatprep.mubr.f32.mxu0 %v1691
  %v1693 = vand.u32 %v23, 4294901760
  %1694 = vmatmul.mubr.f32.gmra.mxu0 %v1693
  %v1695 = vpop.f32.mrf.mxu0
  %v1696 = vadd.f32 %v1487, %v1695
  %v1697 = vpop.f32.mrf.mxu0
  %v1698 = vand.u32 %v26, 4294901760
  %1699 = vmatprep.mubr.f32.mxu0 %v1698
  %v1700 = vand.u32 %v25, 4294901760
  %1701 = vmatmul.mubr.f32.gmra.mxu0 %v1700
  %v1702 = vpop.f32.mrf.mxu0
  %v1703 = vadd.f32 %v1494, %v1702
  %v1704 = vpop.f32.mrf.mxu0
  %v1705 = vand.u32 %v28, 4294901760
  %1706 = vmatprep.mubr.f32.mxu0 %v1705
  %v1707 = vand.u32 %v27, 4294901760
  %1708 = vmatmul.mubr.f32.gmra.mxu0 %v1707
  %v1709 = vpop.f32.mrf.mxu0
  %v1710 = vadd.f32 %v1501, %v1709
  %v1711 = vpop.f32.mrf.mxu0
  %v1712 = vand.u32 %v30, 4294901760
  %1713 = vmatprep.mubr.f32.mxu0 %v1712
  %v1714 = vand.u32 %v29, 4294901760
  %1715 = vmatmul.mubr.f32.gmra.mxu0 %v1714
  %v1716 = vpop.f32.mrf.mxu0
  %v1717 = vadd.f32 %v1508, %v1716
  %v1718 = vpop.f32.mrf.mxu0
  %v1719 = vand.u32 %v32, 4294901760
  %1720 = vmatprep.mubr.f32.mxu0 %v1719
  %v1721 = vand.u32 %v31, 4294901760
  %1722 = vmatmul.mubr.f32.gmra.mxu0 %v1721
  %v1723 = vpop.f32.mrf.mxu0
  %v1724 = vadd.f32 %v1515, %v1723
  %v1725 = vpop.f32.mrf.mxu0
  %v1726 = vand.u32 %v34, 4294901760
  %1727 = vmatprep.mubr.f32.mxu0 %v1726
  %v1728 = vand.u32 %v33, 4294901760
  %1729 = vmatmul.mubr.f32.gmra.mxu0 %v1728
  %v1730 = vpop.f32.mrf.mxu0
  %v1731 = vadd.f32 %v1522, %v1730
  %v1732 = vpop.f32.mrf.mxu0
  %v1733 = vand.u32 %v36, 4294901760
  %1734 = vmatprep.mubr.f32.mxu0 %v1733
  %v1735 = vand.u32 %v35, 4294901760
  %1736 = vmatmul.mubr.f32.gmra.mxu0 %v1735
  %v1737 = vpop.f32.mrf.mxu0
  %v1738 = vadd.f32 %v1529, %v1737
  %v1739 = vpop.f32.mrf.mxu0
  %v1740 = vand.u32 %v38, 4294901760
  %1741 = vmatprep.mubr.f32.mxu0 %v1740
  %v1742 = vand.u32 %v37, 4294901760
  %1743 = vmatmul.mubr.f32.gmra.mxu0 %v1742
  %v1744 = vpop.f32.mrf.mxu0
  %v1745 = vadd.f32 %v1536, %v1744
  %v1746 = vpop.f32.mrf.mxu0
  %v1747 = vand.u32 %v40, 4294901760
  %1748 = vmatprep.mubr.f32.mxu0 %v1747
  %v1749 = vand.u32 %v39, 4294901760
  %1750 = vmatmul.mubr.f32.gmra.mxu0 %v1749
  %v1751 = vpop.f32.mrf.mxu0
  %v1752 = vadd.f32 %v1543, %v1751
  %v1753 = vpop.f32.mrf.mxu0
  %v1754 = vand.u32 %v42, 4294901760
  %1755 = vmatprep.mubr.f32.mxu0 %v1754
  %v1756 = vand.u32 %v41, 4294901760
  %1757 = vmatmul.mubr.f32.gmra.mxu0 %v1756
  %v1758 = vpop.f32.mrf.mxu0
  %v1759 = vadd.f32 %v1550, %v1758
  %v1760 = vpop.f32.mrf.mxu0
  %v1761 = vand.u32 %v44, 4294901760
  %1762 = vmatprep.mubr.f32.mxu0 %v1761
  %v1763 = vand.u32 %v43, 4294901760
  %1764 = vmatmul.mubr.f32.gmra.mxu0 %v1763
  %v1765 = vpop.f32.mrf.mxu0
  %v1766 = vadd.f32 %v1557, %v1765
  %v1767 = vpop.f32.mrf.mxu0
  %v1768 = vand.u32 %v46, 4294901760
  %1769 = vmatprep.mubr.f32.mxu0 %v1768
  %v1770 = vand.u32 %v45, 4294901760
  %1771 = vmatmul.mubr.f32.gmra.mxu0 %v1770
  %v1772 = vpop.f32.mrf.mxu0
  %v1773 = vadd.f32 %v1564, %v1772
  %v1774 = vpop.f32.mrf.mxu0
  %v1775 = vand.u32 %v48, 4294901760
  %1776 = vmatprep.mubr.f32.mxu0 %v1775
  %v1777 = vand.u32 %v47, 4294901760
  %1778 = vmatmul.mubr.f32.gmra.mxu0 %v1777
  %v1779 = vpop.f32.mrf.mxu0
  %v1780 = vadd.f32 %v1571, %v1779
  %v1781 = vpop.f32.mrf.mxu0
  %1782 = vdwg.mxu0
  %v1783 = vld [vmem:[%s2] sm:$0x1]
  %v1785 = vlaneseq
  %v1786 = vshrl.u32 %v1785, 7
  %v1787 = vsub.s32 0, %v1786
  %v1788 = vrot.slane %v1783, %v1787
  %v1790 = vmul.f32 %v1675, %v1788
  %v1791 = vmul.f32 %v1682, %v1788
  %v1792 = vmul.f32 %v1689, %v1788
  %v1793 = vmul.f32 %v1696, %v1788
  %v1794 = vmul.f32 %v1703, %v1788
  %v1795 = vmul.f32 %v1710, %v1788
  %v1796 = vmul.f32 %v1717, %v1788
  %v1797 = vmul.f32 %v1724, %v1788
  %v1798 = vmul.f32 %v1731, %v1788
  %v1799 = vmul.f32 %v1738, %v1788
  %v1800 = vmul.f32 %v1745, %v1788
  %v1801 = vmul.f32 %v1752, %v1788
  %v1802 = vmul.f32 %v1759, %v1788
  %v1803 = vmul.f32 %v1766, %v1788
  %v1804 = vmul.f32 %v1773, %v1788
  %v1805 = vmul.f32 %v1780, %v1788
  %v1806 = vld [vmem:[%s3] sm:$0x1]
  %v1808 = vlaneseq
  %v1809 = vshrl.u32 %v1808, 7
  %v1810 = vsub.s32 0, %v1809
  %v1811 = vrot.slane %v1806, %v1810
  %v1813 = vadd.f32 %v1790, %v1811
  %v1814 = vadd.f32 %v1791, %v1811
  %v1815 = vadd.f32 %v1792, %v1811
  %v1816 = vadd.f32 %v1793, %v1811
  %v1817 = vadd.f32 %v1794, %v1811
  %v1818 = vadd.f32 %v1795, %v1811
  %v1819 = vadd.f32 %v1796, %v1811
  %v1820 = vadd.f32 %v1797, %v1811
  %v1821 = vadd.f32 %v1798, %v1811
  %v1822 = vadd.f32 %v1799, %v1811
  %v1823 = vadd.f32 %v1800, %v1811
  %v1824 = vadd.f32 %v1801, %v1811
  %v1825 = vadd.f32 %v1802, %v1811
  %v1826 = vadd.f32 %v1803, %v1811
  %v1827 = vadd.f32 %v1804, %v1811
  %v1828 = vadd.f32 %v1805, %v1811
  %1829 = vst [vmem:[%s4] sm:$0xff] %v1813
  %1830 = vst [vmem:[%s4 + $0x8] sm:$0xff] %v1814
  %1831 = vst [vmem:[%s4 + $0x10] sm:$0xff] %v1815
  %1832 = vst [vmem:[%s4 + $0x18] sm:$0xff] %v1816
  %1833 = vst [vmem:[%s4 + $0x20] sm:$0xff] %v1817
  %1834 = vst [vmem:[%s4 + $0x28] sm:$0xff] %v1818
  %1835 = vst [vmem:[%s4 + $0x30] sm:$0xff] %v1819
  %1836 = vst [vmem:[%s4 + $0x38] sm:$0xff] %v1820
  %1837 = vst [vmem:[%s4 + $0x40] sm:$0xff] %v1821
  %1838 = vst [vmem:[%s4 + $0x48] sm:$0xff] %v1822
  %1839 = vst [vmem:[%s4 + $0x50] sm:$0xff] %v1823
  %1840 = vst [vmem:[%s4 + $0x58] sm:$0xff] %v1824
  %1841 = vst [vmem:[%s4 + $0x60] sm:$0xff] %v1825
  %1842 = vst [vmem:[%s4 + $0x68] sm:$0xff] %v1826
  %1843 = vst [vmem:[%s4 + $0x70] sm:$0xff] %v1827
  %1844 = vst [vmem:[%s4 + $0x78] sm:$0xff] %v1828
  // Predicated region
  $region18: #{_pallas_forward.7} parent=0 // pred_check
    _
  $region19: #{_pallas_forward.7} parent=0 // pred_check_branch
    %1846 = sbr.rel (0) target = $region21
  $region20: #{_pallas_forward.7} parent=0 // pred_region
    _
  $region21: #{_pallas_forward.7} parent=0 // pred_fallthru
    _
  // Predicated region
  $region22: #{_pallas_forward.7} parent=0 // pred_check
    _
  $region23: #{_pallas_forward.7} parent=0 // pred_check_branch
    %1848 = sbr.rel (0) target = $region25
  $region24: #{_pallas_forward.7} parent=0 // pred_region
    _
  $region25: #{_pallas_forward.7} parent=0 // pred_fallthru
    _

// kernel: _pallas_forward.9
$region0: #{_pallas_forward.9}
  #allocation0 [shape = 'u32[]', space=smem, size = 0x4, offset = 0x4, fixed_abs, tag = 'smem constant byte address 0x4 - core index']
  #allocation1 [shape = 'u32[144,128]{1,0:T(1,128)}', space=vmem, size = 0x12000, scoped, tag = 'internal scratch']
  %s0 = inlined_call_operand.vmem [shape: f32[128,128], index: 0, kind: input, shape index: {}]
  %s1 = inlined_call_operand.vmem [shape: f32[128,128], index: 1, kind: input, shape index: {}]
  %s2 = inlined_call_operand.vmem [shape: f32[1,128], index: 2, kind: input, shape index: {}]
  %s3 = inlined_call_operand.vmem [shape: f32[1,128], index: 3, kind: input, shape index: {}]
  %s4 = inlined_call_operand.vmem [shape: f32[128,128], index: 4, kind: input, shape index: {}]
  %s5 = inlined_call_operand.vmem [shape: f32[128,128], index: 5, kind: output, shape index: {}]
  %s6 = sld [smem:[#allocation0]]
  $region30: #{_pallas_forward.9} parent=0
    _
  %s8 = ssub.s32 1, %s6
  %s9 = scalar_select 0, %s8, %s6
  // Predicated region
  $region2: #{_pallas_forward.9} parent=0 // pred_check
    _
  $region3: #{_pallas_forward.9} parent=0 // pred_check_branch
    %11 = sbr.rel (0) target = $region5
  $region4: #{_pallas_forward.9} parent=0 // pred_region
    _
  $region5: #{_pallas_forward.9} parent=0 // pred_fallthru
    _
  // Predicated region
  $region6: #{_pallas_forward.9} parent=0 // pred_check
    _
  $region7: #{_pallas_forward.9} parent=0 // pred_check_branch
    %13 = sbr.rel (0) target = $region9
  $region8: #{_pallas_forward.9} parent=0 // pred_region
    _
  $region9: #{_pallas_forward.9} parent=0 // pred_fallthru
    _
  // Predicated region
  $region10: #{_pallas_forward.9} parent=0 // pred_check
    _
  $region11: #{_pallas_forward.9} parent=0 // pred_check_branch
    %15 = sbr.rel (0) target = $region13
  $region12: #{_pallas_forward.9} parent=0 // pred_region
    _
  $region13: #{_pallas_forward.9} parent=0 // pred_fallthru
    _
  // Predicated region
  $region14: #{_pallas_forward.9} parent=0 // pred_check
    _
  $region15: #{_pallas_forward.9} parent=0 // pred_check_branch
    %17 = sbr.rel (0) target = $region17
  $region16: #{_pallas_forward.9} parent=0 // pred_region
    _
  $region17: #{_pallas_forward.9} parent=0 // pred_fallthru
    _
  // Predicated region
  $region18: #{_pallas_forward.9} parent=0 // pred_check
    _
  $region19: #{_pallas_forward.9} parent=0 // pred_check_branch
    %19 = sbr.rel (0) target = $region21
  $region20: #{_pallas_forward.9} parent=0 // pred_region
    _
  $region21: #{_pallas_forward.9} parent=0 // pred_fallthru
    _
  %v20 = vld [vmem:[%s0] sm:$0xff]
  %v21 = vld [vmem:[%s0 + $0x8] sm:$0xff]
  %v22 = vld [vmem:[%s0 + $0x10] sm:$0xff]
  %v23 = vld [vmem:[%s0 + $0x18] sm:$0xff]
  %v24 = vld [vmem:[%s0 + $0x20] sm:$0xff]
  %v25 = vld [vmem:[%s0 + $0x28] sm:$0xff]
  %v26 = vld [vmem:[%s0 + $0x30] sm:$0xff]
  %v27 = vld [vmem:[%s0 + $0x38] sm:$0xff]
  %v28 = vld [vmem:[%s0 + $0x40] sm:$0xff]
  %v29 = vld [vmem:[%s0 + $0x48] sm:$0xff]
  %v30 = vld [vmem:[%s0 + $0x50] sm:$0xff]
  %v31 = vld [vmem:[%s0 + $0x58] sm:$0xff]
  %v32 = vld [vmem:[%s0 + $0x60] sm:$0xff]
  %v33 = vld [vmem:[%s0 + $0x68] sm:$0xff]
  %v34 = vld [vmem:[%s0 + $0x70] sm:$0xff]
  %v35 = vld [vmem:[%s0 + $0x78] sm:$0xff]
  %v36 = vld [vmem:[%s1] sm:$0xff]
  %v37 = vld [vmem:[%s1 + $0x8] sm:$0xff]
  %v38 = vld [vmem:[%s1 + $0x10] sm:$0xff]
  %v39 = vld [vmem:[%s1 + $0x18] sm:$0xff]
  %v40 = vld [vmem:[%s1 + $0x20] sm:$0xff]
  %v41 = vld [vmem:[%s1 + $0x28] sm:$0xff]
  %v42 = vld [vmem:[%s1 + $0x30] sm:$0xff]
  %v43 = vld [vmem:[%s1 + $0x38] sm:$0xff]
  %v44 = vld [vmem:[%s1 + $0x40] sm:$0xff]
  %v45 = vld [vmem:[%s1 + $0x48] sm:$0xff]
  %v46 = vld [vmem:[%s1 + $0x50] sm:$0xff]
  %v47 = vld [vmem:[%s1 + $0x58] sm:$0xff]
  %v48 = vld [vmem:[%s1 + $0x60] sm:$0xff]
  %v49 = vld [vmem:[%s1 + $0x68] sm:$0xff]
  %v50 = vld [vmem:[%s1 + $0x70] sm:$0xff]
  %v51 = vld [vmem:[%s1 + $0x78] sm:$0xff]
  %52 = vmatprep.subr.mxu0 0.0
  %v53 = vand.u32 %v51, 4294901760
  %54 = vmatpush1.msra.mxu0 %v53
  %55 = vmatprep.subr.mxu0 0.0
  %v56 = vand.u32 %v50, 4294901760
  %57 = vmatpush1.msra.mxu0 %v56
  %58 = vmatprep.subr.mxu0 0.0
  %v59 = vand.u32 %v49, 4294901760
  %60 = vmatpush1.msra.mxu0 %v59
  %61 = vmatprep.subr.mxu0 0.0
  %v62 = vand.u32 %v48, 4294901760
  %63 = vmatpush1.msra.mxu0 %v62
  %64 = vmatprep.subr.mxu0 0.0
  %v65 = vand.u32 %v47, 4294901760
  %66 = vmatpush1.msra.mxu0 %v65
  %67 = vmatprep.subr.mxu0 0.0
  %v68 = vand.u32 %v46, 4294901760
  %69 = vmatpush1.msra.mxu0 %v68
  %70 = vmatprep.subr.mxu0 0.0
  %v71 = vand.u32 %v45, 4294901760
  %72 = vmatpush1.msra.mxu0 %v71
  %73 = vmatprep.subr.mxu0 0.0
  %v74 = vand.u32 %v44, 4294901760
  %75 = vmatpush1.msra.mxu0 %v74
  %76 = vmatprep.subr.mxu0 0.0
  %v77 = vand.u32 %v43, 4294901760
  %78 = vmatpush1.msra.mxu0 %v77
  %79 = vmatprep.subr.mxu0 0.0
  %v80 = vand.u32 %v42, 4294901760
  %81 = vmatpush1.msra.mxu0 %v80
  %82 = vmatprep.subr.mxu0 0.0
  %v83 = vand.u32 %v41, 4294901760
  %84 = vmatpush1.msra.mxu0 %v83
  %85 = vmatprep.subr.mxu0 0.0
  %v86 = vand.u32 %v40, 4294901760
  %87 = vmatpush1.msra.mxu0 %v86
  %88 = vmatprep.subr.mxu0 0.0
  %v89 = vand.u32 %v39, 4294901760
  %90 = vmatpush1.msra.mxu0 %v89
  %91 = vmatprep.subr.mxu0 0.0
  %v92 = vand.u32 %v38, 4294901760
  %93 = vmatpush1.msra.mxu0 %v92
  %94 = vmatprep.subr.mxu0 0.0
  %v95 = vand.u32 %v37, 4294901760
  %96 = vmatpush1.msra.mxu0 %v95
  %97 = vmatprep.subr.mxu0 0.0
  %v98 = vand.u32 %v36, 4294901760
  %99 = vmatpush1.msra.mxu0 %v98
  %100 = vmatprep.subr.mxu0 0.0
  %101 = vmatpush2.msra.mxu0 0.0
  %102 = vmatprep.subr.mxu0 0.0
  %103 = vmatpush2.msra.mxu0 0.0
  %104 = vmatprep.subr.mxu0 0.0
  %105 = vmatpush2.msra.mxu0 0.0
  %106 = vmatprep.subr.mxu0 0.0
  %107 = vmatpush2.msra.mxu0 0.0
  %108 = vmatprep.subr.mxu0 0.0
  %109 = vmatpush2.msra.mxu0 0.0
  %110 = vmatprep.subr.mxu0 0.0
  %111 = vmatpush2.msra.mxu0 0.0
  %112 = vmatprep.subr.mxu0 0.0
  %113 = vmatpush2.msra.mxu0 0.0
  %114 = vmatprep.subr.mxu0 0.0
  %115 = vmatpush2.msra.mxu0 0.0
  %116 = vmatprep.subr.mxu0 0.0
  %117 = vmatpush2.msra.mxu0 0.0
  %118 = vmatprep.subr.mxu0 0.0
  %119 = vmatpush2.msra.mxu0 0.0
  %120 = vmatprep.subr.mxu0 0.0
  %121 = vmatpush2.msra.mxu0 0.0
  %122 = vmatprep.subr.mxu0 0.0
  %123 = vmatpush2.msra.mxu0 0.0
  %124 = vmatprep.subr.mxu0 0.0
  %125 = vmatpush2.msra.mxu0 0.0
  %126 = vmatprep.subr.mxu0 0.0
  %127 = vmatpush2.msra.mxu0 0.0
  %128 = vmatprep.subr.mxu0 0.0
  %129 = vmatpush2.msra.mxu0 0.0
  %130 = vmatprep.subr.mxu0 0.0
  %131 = vmatpush2.msra.mxu0 0.0
  %132 = vmatprep.mubr.f32.mxu0 0.0
  %v133 = vand.u32 %v20, 4294901760
  %v134 = vsub.f32 %v20, %v133
  %v135 = vand.u32 %v134, 4294901760
  %v136 = vsub.f32 %v134, %v135
  %v137 = vand.u32 %v136, 4294901760
  %138 = vmatmul.mubr.f32.gmra.mxu0 %v137
  %v139 = vpop.f32.mrf.mxu0
  %v140 = vadd.f32 0.0, %v139
  %v141 = vpop.f32.mrf.mxu0
  %142 = vmatprep.mubr.f32.mxu0 0.0
  %v143 = vand.u32 %v21, 4294901760
  %v144 = vsub.f32 %v21, %v143
  %v145 = vand.u32 %v144, 4294901760
  %v146 = vsub.f32 %v144, %v145
  %v147 = vand.u32 %v146, 4294901760
  %148 = vmatmul.mubr.f32.gmra.mxu0 %v147
  %v149 = vpop.f32.mrf.mxu0
  %v150 = vadd.f32 0.0, %v149
  %v151 = vpop.f32.mrf.mxu0
  %152 = vmatprep.mubr.f32.mxu0 0.0
  %v153 = vand.u32 %v22, 4294901760
  %v154 = vsub.f32 %v22, %v153
  %v155 = vand.u32 %v154, 4294901760
  %v156 = vsub.f32 %v154, %v155
  %v157 = vand.u32 %v156, 4294901760
  %158 = vmatmul.mubr.f32.gmra.mxu0 %v157
  %v159 = vpop.f32.mrf.mxu0
  %v160 = vadd.f32 0.0, %v159
  %v161 = vpop.f32.mrf.mxu0
  %162 = vmatprep.mubr.f32.mxu0 0.0
  %v163 = vand.u32 %v23, 4294901760
  %v164 = vsub.f32 %v23, %v163
  %v165 = vand.u32 %v164, 4294901760
  %v166 = vsub.f32 %v164, %v165
  %v167 = vand.u32 %v166, 4294901760
  %168 = vmatmul.mubr.f32.gmra.mxu0 %v167
  %v169 = vpop.f32.mrf.mxu0
  %v170 = vadd.f32 0.0, %v169
  %v171 = vpop.f32.mrf.mxu0
  %172 = vmatprep.mubr.f32.mxu0 0.0
  %v173 = vand.u32 %v24, 4294901760
  %v174 = vsub.f32 %v24, %v173
  %v175 = vand.u32 %v174, 4294901760
  %v176 = vsub.f32 %v174, %v175
  %v177 = vand.u32 %v176, 4294901760
  %178 = vmatmul.mubr.f32.gmra.mxu0 %v177
  %v179 = vpop.f32.mrf.mxu0
  %v180 = vadd.f32 0.0, %v179
  %v181 = vpop.f32.mrf.mxu0
  %182 = vmatprep.mubr.f32.mxu0 0.0
  %v183 = vand.u32 %v25, 4294901760
  %v184 = vsub.f32 %v25, %v183
  %v185 = vand.u32 %v184, 4294901760
  %v186 = vsub.f32 %v184, %v185
  %v187 = vand.u32 %v186, 4294901760
  %188 = vmatmul.mubr.f32.gmra.mxu0 %v187
  %v189 = vpop.f32.mrf.mxu0
  %v190 = vadd.f32 0.0, %v189
  %v191 = vpop.f32.mrf.mxu0
  %192 = vmatprep.mubr.f32.mxu0 0.0
  %v193 = vand.u32 %v26, 4294901760
  %v194 = vsub.f32 %v26, %v193
  %v195 = vand.u32 %v194, 4294901760
  %v196 = vsub.f32 %v194, %v195
  %v197 = vand.u32 %v196, 4294901760
  %198 = vmatmul.mubr.f32.gmra.mxu0 %v197
  %v199 = vpop.f32.mrf.mxu0
  %v200 = vadd.f32 0.0, %v199
  %v201 = vpop.f32.mrf.mxu0
  %202 = vmatprep.mubr.f32.mxu0 0.0
  %v203 = vand.u32 %v27, 4294901760
  %v204 = vsub.f32 %v27, %v203
  %v205 = vand.u32 %v204, 4294901760
  %v206 = vsub.f32 %v204, %v205
  %v207 = vand.u32 %v206, 4294901760
  %208 = vmatmul.mubr.f32.gmra.mxu0 %v207
  %v209 = vpop.f32.mrf.mxu0
  %v210 = vadd.f32 0.0, %v209
  %v211 = vpop.f32.mrf.mxu0
  %212 = vmatprep.mubr.f32.mxu0 0.0
  %v213 = vand.u32 %v28, 4294901760
  %v214 = vsub.f32 %v28, %v213
  %v215 = vand.u32 %v214, 4294901760
  %v216 = vsub.f32 %v214, %v215
  %v217 = vand.u32 %v216, 4294901760
  %218 = vmatmul.mubr.f32.gmra.mxu0 %v217
  %v219 = vpop.f32.mrf.mxu0
  %v220 = vadd.f32 0.0, %v219
  %v221 = vpop.f32.mrf.mxu0
  %222 = vmatprep.mubr.f32.mxu0 0.0
  %v223 = vand.u32 %v29, 4294901760
  %v224 = vsub.f32 %v29, %v223
  %v225 = vand.u32 %v224, 4294901760
  %v226 = vsub.f32 %v224, %v225
  %v227 = vand.u32 %v226, 4294901760
  %228 = vmatmul.mubr.f32.gmra.mxu0 %v227
  %v229 = vpop.f32.mrf.mxu0
  %v230 = vadd.f32 0.0, %v229
  %v231 = vpop.f32.mrf.mxu0
  %232 = vmatprep.mubr.f32.mxu0 0.0
  %v233 = vand.u32 %v30, 4294901760
  %v234 = vsub.f32 %v30, %v233
  %v235 = vand.u32 %v234, 4294901760
  %v236 = vsub.f32 %v234, %v235
  %v237 = vand.u32 %v236, 4294901760
  %238 = vmatmul.mubr.f32.gmra.mxu0 %v237
  %v239 = vpop.f32.mrf.mxu0
  %v240 = vadd.f32 0.0, %v239
  %v241 = vpop.f32.mrf.mxu0
  %242 = vmatprep.mubr.f32.mxu0 0.0
  %v243 = vand.u32 %v31, 4294901760
  %v244 = vsub.f32 %v31, %v243
  %v245 = vand.u32 %v244, 4294901760
  %v246 = vsub.f32 %v244, %v245
  %v247 = vand.u32 %v246, 4294901760
  %248 = vmatmul.mubr.f32.gmra.mxu0 %v247
  %v249 = vpop.f32.mrf.mxu0
  %v250 = vadd.f32 0.0, %v249
  %v251 = vpop.f32.mrf.mxu0
  %252 = vmatprep.mubr.f32.mxu0 0.0
  %v253 = vand.u32 %v32, 4294901760
  %v254 = vsub.f32 %v32, %v253
  %v255 = vand.u32 %v254, 4294901760
  %v256 = vsub.f32 %v254, %v255
  %v257 = vand.u32 %v256, 4294901760
  %258 = vmatmul.mubr.f32.gmra.mxu0 %v257
  %v259 = vpop.f32.mrf.mxu0
  %v260 = vadd.f32 0.0, %v259
  %v261 = vpop.f32.mrf.mxu0
  %262 = vmatprep.mubr.f32.mxu0 0.0
  %v263 = vand.u32 %v33, 4294901760
  %v264 = vsub.f32 %v33, %v263
  %v265 = vand.u32 %v264, 4294901760
  %v266 = vsub.f32 %v264, %v265
  %v267 = vand.u32 %v266, 4294901760
  %268 = vmatmul.mubr.f32.gmra.mxu0 %v267
  %v269 = vpop.f32.mrf.mxu0
  %v270 = vadd.f32 0.0, %v269
  %v271 = vpop.f32.mrf.mxu0
  %272 = vmatprep.mubr.f32.mxu0 0.0
  %v273 = vand.u32 %v34, 4294901760
  %v274 = vsub.f32 %v34, %v273
  %v275 = vand.u32 %v274, 4294901760
  %v276 = vsub.f32 %v274, %v275
  %v277 = vand.u32 %v276, 4294901760
  %278 = vmatmul.mubr.f32.gmra.mxu0 %v277
  %v279 = vpop.f32.mrf.mxu0
  %v280 = vadd.f32 0.0, %v279
  %v281 = vpop.f32.mrf.mxu0
  %282 = vmatprep.mubr.f32.mxu0 0.0
  %v283 = vand.u32 %v35, 4294901760
  %v284 = vsub.f32 %v35, %v283
  %v285 = vand.u32 %v284, 4294901760
  %v286 = vsub.f32 %v284, %v285
  %v287 = vand.u32 %v286, 4294901760
  %288 = vmatmul.mubr.f32.gmra.mxu0 %v287
  %v289 = vpop.f32.mrf.mxu0
  %v290 = vadd.f32 0.0, %v289
  %v291 = vpop.f32.mrf.mxu0
  %292 = vdwg.mxu0
  %293 = vmatprep.subr.mxu0 0.0
  %v294 = vand.u32 %v51, 4294901760
  %v295 = vsub.f32 %v51, %v294
  %v296 = vand.u32 %v295, 4294901760
  %v297 = vsub.f32 %v295, %v296
  %v298 = vand.u32 %v297, 4294901760
  %299 = vmatpush1.msra.mxu0 %v298
  %300 = vmatprep.subr.mxu0 0.0
  %v301 = vand.u32 %v50, 4294901760
  %v302 = vsub.f32 %v50, %v301
  %v303 = vand.u32 %v302, 4294901760
  %v304 = vsub.f32 %v302, %v303
  %v305 = vand.u32 %v304, 4294901760
  %306 = vmatpush1.msra.mxu0 %v305
  %307 = vmatprep.subr.mxu0 0.0
  %v308 = vand.u32 %v49, 4294901760
  %v309 = vsub.f32 %v49, %v308
  %v310 = vand.u32 %v309, 4294901760
  %v311 = vsub.f32 %v309, %v310
  %v312 = vand.u32 %v311, 4294901760
  %313 = vmatpush1.msra.mxu0 %v312
  %314 = vmatprep.subr.mxu0 0.0
  %v315 = vand.u32 %v48, 4294901760
  %v316 = vsub.f32 %v48, %v315
  %v317 = vand.u32 %v316, 4294901760
  %v318 = vsub.f32 %v316, %v317
  %v319 = vand.u32 %v318, 4294901760
  %320 = vmatpush1.msra.mxu0 %v319
  %321 = vmatprep.subr.mxu0 0.0
  %v322 = vand.u32 %v47, 4294901760
  %v323 = vsub.f32 %v47, %v322
  %v324 = vand.u32 %v323, 4294901760
  %v325 = vsub.f32 %v323, %v324
  %v326 = vand.u32 %v325, 4294901760
  %327 = vmatpush1.msra.mxu0 %v326
  %328 = vmatprep.subr.mxu0 0.0
  %v329 = vand.u32 %v46, 4294901760
  %v330 = vsub.f32 %v46, %v329
  %v331 = vand.u32 %v330, 4294901760
  %v332 = vsub.f32 %v330, %v331
  %v333 = vand.u32 %v332, 4294901760
  %334 = vmatpush1.msra.mxu0 %v333
  %335 = vmatprep.subr.mxu0 0.0
  %v336 = vand.u32 %v45, 4294901760
  %v337 = vsub.f32 %v45, %v336
  %v338 = vand.u32 %v337, 4294901760
  %v339 = vsub.f32 %v337, %v338
  %v340 = vand.u32 %v339, 4294901760
  %341 = vmatpush1.msra.mxu0 %v340
  %342 = vmatprep.subr.mxu0 0.0
  %v343 = vand.u32 %v44, 4294901760
  %v344 = vsub.f32 %v44, %v343
  %v345 = vand.u32 %v344, 4294901760
  %v346 = vsub.f32 %v344, %v345
  %v347 = vand.u32 %v346, 4294901760
  %348 = vmatpush1.msra.mxu0 %v347
  %349 = vmatprep.subr.mxu0 0.0
  %v350 = vand.u32 %v43, 4294901760
  %v351 = vsub.f32 %v43, %v350
  %v352 = vand.u32 %v351, 4294901760
  %v353 = vsub.f32 %v351, %v352
  %v354 = vand.u32 %v353, 4294901760
  %355 = vmatpush1.msra.mxu0 %v354
  %356 = vmatprep.subr.mxu0 0.0
  %v357 = vand.u32 %v42, 4294901760
  %v358 = vsub.f32 %v42, %v357
  %v359 = vand.u32 %v358, 4294901760
  %v360 = vsub.f32 %v358, %v359
  %v361 = vand.u32 %v360, 4294901760
  %362 = vmatpush1.msra.mxu0 %v361
  %363 = vmatprep.subr.mxu0 0.0
  %v364 = vand.u32 %v41, 4294901760
  %v365 = vsub.f32 %v41, %v364
  %v366 = vand.u32 %v365, 4294901760
  %v367 = vsub.f32 %v365, %v366
  %v368 = vand.u32 %v367, 4294901760
  %369 = vmatpush1.msra.mxu0 %v368
  %370 = vmatprep.subr.mxu0 0.0
  %v371 = vand.u32 %v40, 4294901760
  %v372 = vsub.f32 %v40, %v371
  %v373 = vand.u32 %v372, 4294901760
  %v374 = vsub.f32 %v372, %v373
  %v375 = vand.u32 %v374, 4294901760
  %376 = vmatpush1.msra.mxu0 %v375
  %377 = vmatprep.subr.mxu0 0.0
  %v378 = vand.u32 %v39, 4294901760
  %v379 = vsub.f32 %v39, %v378
  %v380 = vand.u32 %v379, 4294901760
  %v381 = vsub.f32 %v379, %v380
  %v382 = vand.u32 %v381, 4294901760
  %383 = vmatpush1.msra.mxu0 %v382
  %384 = vmatprep.subr.mxu0 0.0
  %v385 = vand.u32 %v38, 4294901760
  %v386 = vsub.f32 %v38, %v385
  %v387 = vand.u32 %v386, 4294901760
  %v388 = vsub.f32 %v386, %v387
  %v389 = vand.u32 %v388, 4294901760
  %390 = vmatpush1.msra.mxu0 %v389
  %391 = vmatprep.subr.mxu0 0.0
  %v392 = vand.u32 %v37, 4294901760
  %v393 = vsub.f32 %v37, %v392
  %v394 = vand.u32 %v393, 4294901760
  %v395 = vsub.f32 %v393, %v394
  %v396 = vand.u32 %v395, 4294901760
  %397 = vmatpush1.msra.mxu0 %v396
  %398 = vmatprep.subr.mxu0 0.0
  %v399 = vand.u32 %v36, 4294901760
  %v400 = vsub.f32 %v36, %v399
  %v401 = vand.u32 %v400, 4294901760
  %v402 = vsub.f32 %v400, %v401
  %v403 = vand.u32 %v402, 4294901760
  %404 = vmatpush1.msra.mxu0 %v403
  %405 = vmatprep.subr.mxu0 0.0
  %406 = vmatpush2.msra.mxu0 0.0
  %407 = vmatprep.subr.mxu0 0.0
  %408 = vmatpush2.msra.mxu0 0.0
  %409 = vmatprep.subr.mxu0 0.0
  %410 = vmatpush2.msra.mxu0 0.0
  %411 = vmatprep.subr.mxu0 0.0
  %412 = vmatpush2.msra.mxu0 0.0
  %413 = vmatprep.subr.mxu0 0.0
  %414 = vmatpush2.msra.mxu0 0.0
  %415 = vmatprep.subr.mxu0 0.0
  %416 = vmatpush2.msra.mxu0 0.0
  %417 = vmatprep.subr.mxu0 0.0
  %418 = vmatpush2.msra.mxu0 0.0
  %419 = vmatprep.subr.mxu0 0.0
  %420 = vmatpush2.msra.mxu0 0.0
  %421 = vmatprep.subr.mxu0 0.0
  %422 = vmatpush2.msra.mxu0 0.0
  %423 = vmatprep.subr.mxu0 0.0
  %424 = vmatpush2.msra.mxu0 0.0
  %425 = vmatprep.subr.mxu0 0.0
  %426 = vmatpush2.msra.mxu0 0.0
  %427 = vmatprep.subr.mxu0 0.0
  %428 = vmatpush2.msra.mxu0 0.0
  %429 = vmatprep.subr.mxu0 0.0
  %430 = vmatpush2.msra.mxu0 0.0
  %431 = vmatprep.subr.mxu0 0.0
  %432 = vmatpush2.msra.mxu0 0.0
  %433 = vmatprep.subr.mxu0 0.0
  %434 = vmatpush2.msra.mxu0 0.0
  %435 = vmatprep.subr.mxu0 0.0
  %436 = vmatpush2.msra.mxu0 0.0
  %437 = vmatprep.mubr.f32.mxu0 0.0
  %v438 = vand.u32 %v20, 4294901760
  %439 = vmatmul.mubr.f32.gmra.mxu0 %v438
  %v440 = vpop.f32.mrf.mxu0
  %v441 = vadd.f32 %v140, %v440
  %v442 = vpop.f32.mrf.mxu0
  %443 = vmatprep.mubr.f32.mxu0 0.0
  %v444 = vand.u32 %v21, 4294901760
  %445 = vmatmul.mubr.f32.gmra.mxu0 %v444
  %v446 = vpop.f32.mrf.mxu0
  %v447 = vadd.f32 %v150, %v446
  %v448 = vpop.f32.mrf.mxu0
  %449 = vmatprep.mubr.f32.mxu0 0.0
  %v450 = vand.u32 %v22, 4294901760
  %451 = vmatmul.mubr.f32.gmra.mxu0 %v450
  %v452 = vpop.f32.mrf.mxu0
  %v453 = vadd.f32 %v160, %v452
  %v454 = vpop.f32.mrf.mxu0
  %455 = vmatprep.mubr.f32.mxu0 0.0
  %v456 = vand.u32 %v23, 4294901760
  %457 = vmatmul.mubr.f32.gmra.mxu0 %v456
  %v458 = vpop.f32.mrf.mxu0
  %v459 = vadd.f32 %v170, %v458
  %v460 = vpop.f32.mrf.mxu0
  %461 = vmatprep.mubr.f32.mxu0 0.0
  %v462 = vand.u32 %v24, 4294901760
  %463 = vmatmul.mubr.f32.gmra.mxu0 %v462
  %v464 = vpop.f32.mrf.mxu0
  %v465 = vadd.f32 %v180, %v464
  %v466 = vpop.f32.mrf.mxu0
  %467 = vmatprep.mubr.f32.mxu0 0.0
  %v468 = vand.u32 %v25, 4294901760
  %469 = vmatmul.mubr.f32.gmra.mxu0 %v468
  %v470 = vpop.f32.mrf.mxu0
  %v471 = vadd.f32 %v190, %v470
  %v472 = vpop.f32.mrf.mxu0
  %473 = vmatprep.mubr.f32.mxu0 0.0
  %v474 = vand.u32 %v26, 4294901760
  %475 = vmatmul.mubr.f32.gmra.mxu0 %v474
  %v476 = vpop.f32.mrf.mxu0
  %v477 = vadd.f32 %v200, %v476
  %v478 = vpop.f32.mrf.mxu0
  %479 = vmatprep.mubr.f32.mxu0 0.0
  %v480 = vand.u32 %v27, 4294901760
  %481 = vmatmul.mubr.f32.gmra.mxu0 %v480
  %v482 = vpop.f32.mrf.mxu0
  %v483 = vadd.f32 %v210, %v482
  %v484 = vpop.f32.mrf.mxu0
  %485 = vmatprep.mubr.f32.mxu0 0.0
  %v486 = vand.u32 %v28, 4294901760
  %487 = vmatmul.mubr.f32.gmra.mxu0 %v486
  %v488 = vpop.f32.mrf.mxu0
  %v489 = vadd.f32 %v220, %v488
  %v490 = vpop.f32.mrf.mxu0
  %491 = vmatprep.mubr.f32.mxu0 0.0
  %v492 = vand.u32 %v29, 4294901760
  %493 = vmatmul.mubr.f32.gmra.mxu0 %v492
  %v494 = vpop.f32.mrf.mxu0
  %v495 = vadd.f32 %v230, %v494
  %v496 = vpop.f32.mrf.mxu0
  %497 = vmatprep.mubr.f32.mxu0 0.0
  %v498 = vand.u32 %v30, 4294901760
  %499 = vmatmul.mubr.f32.gmra.mxu0 %v498
  %v500 = vpop.f32.mrf.mxu0
  %v501 = vadd.f32 %v240, %v500
  %v502 = vpop.f32.mrf.mxu0
  %503 = vmatprep.mubr.f32.mxu0 0.0
  %v504 = vand.u32 %v31, 4294901760
  %505 = vmatmul.mubr.f32.gmra.mxu0 %v504
  %v506 = vpop.f32.mrf.mxu0
  %v507 = vadd.f32 %v250, %v506
  %v508 = vpop.f32.mrf.mxu0
  %509 = vmatprep.mubr.f32.mxu0 0.0
  %v510 = vand.u32 %v32, 4294901760
  %511 = vmatmul.mubr.f32.gmra.mxu0 %v510
  %v512 = vpop.f32.mrf.mxu0
  %v513 = vadd.f32 %v260, %v512
  %v514 = vpop.f32.mrf.mxu0
  %515 = vmatprep.mubr.f32.mxu0 0.0
  %v516 = vand.u32 %v33, 4294901760
  %517 = vmatmul.mubr.f32.gmra.mxu0 %v516
  %v518 = vpop.f32.mrf.mxu0
  %v519 = vadd.f32 %v270, %v518
  %v520 = vpop.f32.mrf.mxu0
  %521 = vmatprep.mubr.f32.mxu0 0.0
  %v522 = vand.u32 %v34, 4294901760
  %523 = vmatmul.mubr.f32.gmra.mxu0 %v522
  %v524 = vpop.f32.mrf.mxu0
  %v525 = vadd.f32 %v280, %v524
  %v526 = vpop.f32.mrf.mxu0
  %527 = vmatprep.mubr.f32.mxu0 0.0
  %v528 = vand.u32 %v35, 4294901760
  %529 = vmatmul.mubr.f32.gmra.mxu0 %v528
  %v530 = vpop.f32.mrf.mxu0
  %v531 = vadd.f32 %v290, %v530
  %v532 = vpop.f32.mrf.mxu0
  %533 = vdwg.mxu0
  %534 = vmatprep.subr.mxu0 0.0
  %v535 = vand.u32 %v51, 4294901760
  %v536 = vsub.f32 %v51, %v535
  %537 = vmatpush1.msra.mxu0 %v536
  %538 = vmatprep.subr.mxu0 0.0
  %v539 = vand.u32 %v50, 4294901760
  %v540 = vsub.f32 %v50, %v539
  %541 = vmatpush1.msra.mxu0 %v540
  %542 = vmatprep.subr.mxu0 0.0
  %v543 = vand.u32 %v49, 4294901760
  %v544 = vsub.f32 %v49, %v543
  %545 = vmatpush1.msra.mxu0 %v544
  %546 = vmatprep.subr.mxu0 0.0
  %v547 = vand.u32 %v48, 4294901760
  %v548 = vsub.f32 %v48, %v547
  %549 = vmatpush1.msra.mxu0 %v548
  %550 = vmatprep.subr.mxu0 0.0
  %v551 = vand.u32 %v47, 4294901760
  %v552 = vsub.f32 %v47, %v551
  %553 = vmatpush1.msra.mxu0 %v552
  %554 = vmatprep.subr.mxu0 0.0
  %v555 = vand.u32 %v46, 4294901760
  %v556 = vsub.f32 %v46, %v555
  %557 = vmatpush1.msra.mxu0 %v556
  %558 = vmatprep.subr.mxu0 0.0
  %v559 = vand.u32 %v45, 4294901760
  %v560 = vsub.f32 %v45, %v559
  %561 = vmatpush1.msra.mxu0 %v560
  %562 = vmatprep.subr.mxu0 0.0
  %v563 = vand.u32 %v44, 4294901760
  %v564 = vsub.f32 %v44, %v563
  %565 = vmatpush1.msra.mxu0 %v564
  %566 = vmatprep.subr.mxu0 0.0
  %v567 = vand.u32 %v43, 4294901760
  %v568 = vsub.f32 %v43, %v567
  %569 = vmatpush1.msra.mxu0 %v568
  %570 = vmatprep.subr.mxu0 0.0
  %v571 = vand.u32 %v42, 4294901760
  %v572 = vsub.f32 %v42, %v571
  %573 = vmatpush1.msra.mxu0 %v572
  %574 = vmatprep.subr.mxu0 0.0
  %v575 = vand.u32 %v41, 4294901760
  %v576 = vsub.f32 %v41, %v575
  %577 = vmatpush1.msra.mxu0 %v576
  %578 = vmatprep.subr.mxu0 0.0
  %v579 = vand.u32 %v40, 4294901760
  %v580 = vsub.f32 %v40, %v579
  %581 = vmatpush1.msra.mxu0 %v580
  %582 = vmatprep.subr.mxu0 0.0
  %v583 = vand.u32 %v39, 4294901760
  %v584 = vsub.f32 %v39, %v583
  %585 = vmatpush1.msra.mxu0 %v584
  %586 = vmatprep.subr.mxu0 0.0
  %v587 = vand.u32 %v38, 4294901760
  %v588 = vsub.f32 %v38, %v587
  %589 = vmatpush1.msra.mxu0 %v588
  %590 = vmatprep.subr.mxu0 0.0
  %v591 = vand.u32 %v37, 4294901760
  %v592 = vsub.f32 %v37, %v591
  %593 = vmatpush1.msra.mxu0 %v592
  %594 = vmatprep.subr.mxu0 0.0
  %v595 = vand.u32 %v36, 4294901760
  %v596 = vsub.f32 %v36, %v595
  %597 = vmatpush1.msra.mxu0 %v596
  %598 = vmatprep.subr.mxu0 0.0
  %599 = vmatpush2.msra.mxu0 0.0
  %600 = vmatprep.subr.mxu0 0.0
  %601 = vmatpush2.msra.mxu0 0.0
  %602 = vmatprep.subr.mxu0 0.0
  %603 = vmatpush2.msra.mxu0 0.0
  %604 = vmatprep.subr.mxu0 0.0
  %605 = vmatpush2.msra.mxu0 0.0
  %606 = vmatprep.subr.mxu0 0.0
  %607 = vmatpush2.msra.mxu0 0.0
  %608 = vmatprep.subr.mxu0 0.0
  %609 = vmatpush2.msra.mxu0 0.0
  %610 = vmatprep.subr.mxu0 0.0
  %611 = vmatpush2.msra.mxu0 0.0
  %612 = vmatprep.subr.mxu0 0.0
  %613 = vmatpush2.msra.mxu0 0.0
  %614 = vmatprep.subr.mxu0 0.0
  %615 = vmatpush2.msra.mxu0 0.0
  %616 = vmatprep.subr.mxu0 0.0
  %617 = vmatpush2.msra.mxu0 0.0
  %618 = vmatprep.subr.mxu0 0.0
  %619 = vmatpush2.msra.mxu0 0.0
  %620 = vmatprep.subr.mxu0 0.0
  %621 = vmatpush2.msra.mxu0 0.0
  %622 = vmatprep.subr.mxu0 0.0
  %623 = vmatpush2.msra.mxu0 0.0
  %624 = vmatprep.subr.mxu0 0.0
  %625 = vmatpush2.msra.mxu0 0.0
  %626 = vmatprep.subr.mxu0 0.0
  %627 = vmatpush2.msra.mxu0 0.0
  %628 = vmatprep.subr.mxu0 0.0
  %629 = vmatpush2.msra.mxu0 0.0
  %630 = vmatprep.mubr.f32.mxu0 0.0
  %v631 = vand.u32 %v20, 4294901760
  %v632 = vsub.f32 %v20, %v631
  %633 = vmatmul.mubr.f32.gmra.mxu0 %v632
  %v634 = vpop.f32.mrf.mxu0
  %v635 = vadd.f32 %v441, %v634
  %v636 = vpop.f32.mrf.mxu0
  %637 = vmatprep.mubr.f32.mxu0 0.0
  %v638 = vand.u32 %v21, 4294901760
  %v639 = vsub.f32 %v21, %v638
  %640 = vmatmul.mubr.f32.gmra.mxu0 %v639
  %v641 = vpop.f32.mrf.mxu0
  %v642 = vadd.f32 %v447, %v641
  %v643 = vpop.f32.mrf.mxu0
  %644 = vmatprep.mubr.f32.mxu0 0.0
  %v645 = vand.u32 %v22, 4294901760
  %v646 = vsub.f32 %v22, %v645
  %647 = vmatmul.mubr.f32.gmra.mxu0 %v646
  %v648 = vpop.f32.mrf.mxu0
  %v649 = vadd.f32 %v453, %v648
  %v650 = vpop.f32.mrf.mxu0
  %651 = vmatprep.mubr.f32.mxu0 0.0
  %v652 = vand.u32 %v23, 4294901760
  %v653 = vsub.f32 %v23, %v652
  %654 = vmatmul.mubr.f32.gmra.mxu0 %v653
  %v655 = vpop.f32.mrf.mxu0
  %v656 = vadd.f32 %v459, %v655
  %v657 = vpop.f32.mrf.mxu0
  %658 = vmatprep.mubr.f32.mxu0 0.0
  %v659 = vand.u32 %v24, 4294901760
  %v660 = vsub.f32 %v24, %v659
  %661 = vmatmul.mubr.f32.gmra.mxu0 %v660
  %v662 = vpop.f32.mrf.mxu0
  %v663 = vadd.f32 %v465, %v662
  %v664 = vpop.f32.mrf.mxu0
  %665 = vmatprep.mubr.f32.mxu0 0.0
  %v666 = vand.u32 %v25, 4294901760
  %v667 = vsub.f32 %v25, %v666
  %668 = vmatmul.mubr.f32.gmra.mxu0 %v667
  %v669 = vpop.f32.mrf.mxu0
  %v670 = vadd.f32 %v471, %v669
  %v671 = vpop.f32.mrf.mxu0
  %672 = vmatprep.mubr.f32.mxu0 0.0
  %v673 = vand.u32 %v26, 4294901760
  %v674 = vsub.f32 %v26, %v673
  %675 = vmatmul.mubr.f32.gmra.mxu0 %v674
  %v676 = vpop.f32.mrf.mxu0
  %v677 = vadd.f32 %v477, %v676
  %v678 = vpop.f32.mrf.mxu0
  %679 = vmatprep.mubr.f32.mxu0 0.0
  %v680 = vand.u32 %v27, 4294901760
  %v681 = vsub.f32 %v27, %v680
  %682 = vmatmul.mubr.f32.gmra.mxu0 %v681
  %v683 = vpop.f32.mrf.mxu0
  %v684 = vadd.f32 %v483, %v683
  %v685 = vpop.f32.mrf.mxu0
  %686 = vmatprep.mubr.f32.mxu0 0.0
  %v687 = vand.u32 %v28, 4294901760
  %v688 = vsub.f32 %v28, %v687
  %689 = vmatmul.mubr.f32.gmra.mxu0 %v688
  %v690 = vpop.f32.mrf.mxu0
  %v691 = vadd.f32 %v489, %v690
  %v692 = vpop.f32.mrf.mxu0
  %693 = vmatprep.mubr.f32.mxu0 0.0
  %v694 = vand.u32 %v29, 4294901760
  %v695 = vsub.f32 %v29, %v694
  %696 = vmatmul.mubr.f32.gmra.mxu0 %v695
  %v697 = vpop.f32.mrf.mxu0
  %v698 = vadd.f32 %v495, %v697
  %v699 = vpop.f32.mrf.mxu0
  %700 = vmatprep.mubr.f32.mxu0 0.0
  %v701 = vand.u32 %v30, 4294901760
  %v702 = vsub.f32 %v30, %v701
  %703 = vmatmul.mubr.f32.gmra.mxu0 %v702
  %v704 = vpop.f32.mrf.mxu0
  %v705 = vadd.f32 %v501, %v704
  %v706 = vpop.f32.mrf.mxu0
  %707 = vmatprep.mubr.f32.mxu0 0.0
  %v708 = vand.u32 %v31, 4294901760
  %v709 = vsub.f32 %v31, %v708
  %710 = vmatmul.mubr.f32.gmra.mxu0 %v709
  %v711 = vpop.f32.mrf.mxu0
  %v712 = vadd.f32 %v507, %v711
  %v713 = vpop.f32.mrf.mxu0
  %714 = vmatprep.mubr.f32.mxu0 0.0
  %v715 = vand.u32 %v32, 4294901760
  %v716 = vsub.f32 %v32, %v715
  %717 = vmatmul.mubr.f32.gmra.mxu0 %v716
  %v718 = vpop.f32.mrf.mxu0
  %v719 = vadd.f32 %v513, %v718
  %v720 = vpop.f32.mrf.mxu0
  %721 = vmatprep.mubr.f32.mxu0 0.0
  %v722 = vand.u32 %v33, 4294901760
  %v723 = vsub.f32 %v33, %v722
  %724 = vmatmul.mubr.f32.gmra.mxu0 %v723
  %v725 = vpop.f32.mrf.mxu0
  %v726 = vadd.f32 %v519, %v725
  %v727 = vpop.f32.mrf.mxu0
  %728 = vmatprep.mubr.f32.mxu0 0.0
  %v729 = vand.u32 %v34, 4294901760
  %v730 = vsub.f32 %v34, %v729
  %731 = vmatmul.mubr.f32.gmra.mxu0 %v730
  %v732 = vpop.f32.mrf.mxu0
  %v733 = vadd.f32 %v525, %v732
  %v734 = vpop.f32.mrf.mxu0
  %735 = vmatprep.mubr.f32.mxu0 0.0
  %v736 = vand.u32 %v35, 4294901760
  %v737 = vsub.f32 %v35, %v736
  %738 = vmatmul.mubr.f32.gmra.mxu0 %v737
  %v739 = vpop.f32.mrf.mxu0
  %v740 = vadd.f32 %v531, %v739
  %v741 = vpop.f32.mrf.mxu0
  %742 = vdwg.mxu0
  %743 = vmatprep.subr.mxu0 0.0
  %v744 = vand.u32 %v51, 4294901760
  %745 = vmatpush1.msra.mxu0 %v744
  %746 = vmatprep.subr.mxu0 0.0
  %v747 = vand.u32 %v50, 4294901760
  %748 = vmatpush1.msra.mxu0 %v747
  %749 = vmatprep.subr.mxu0 0.0
  %v750 = vand.u32 %v49, 4294901760
  %751 = vmatpush1.msra.mxu0 %v750
  %752 = vmatprep.subr.mxu0 0.0
  %v753 = vand.u32 %v48, 4294901760
  %754 = vmatpush1.msra.mxu0 %v753
  %755 = vmatprep.subr.mxu0 0.0
  %v756 = vand.u32 %v47, 4294901760
  %757 = vmatpush1.msra.mxu0 %v756
  %758 = vmatprep.subr.mxu0 0.0
  %v759 = vand.u32 %v46, 4294901760
  %760 = vmatpush1.msra.mxu0 %v759
  %761 = vmatprep.subr.mxu0 0.0
  %v762 = vand.u32 %v45, 4294901760
  %763 = vmatpush1.msra.mxu0 %v762
  %764 = vmatprep.subr.mxu0 0.0
  %v765 = vand.u32 %v44, 4294901760
  %766 = vmatpush1.msra.mxu0 %v765
  %767 = vmatprep.subr.mxu0 0.0
  %v768 = vand.u32 %v43, 4294901760
  %769 = vmatpush1.msra.mxu0 %v768
  %770 = vmatprep.subr.mxu0 0.0
  %v771 = vand.u32 %v42, 4294901760
  %772 = vmatpush1.msra.mxu0 %v771
  %773 = vmatprep.subr.mxu0 0.0
  %v774 = vand.u32 %v41, 4294901760
  %775 = vmatpush1.msra.mxu0 %v774
  %776 = vmatprep.subr.mxu0 0.0
  %v777 = vand.u32 %v40, 4294901760
  %778 = vmatpush1.msra.mxu0 %v777
  %779 = vmatprep.subr.mxu0 0.0
  %v780 = vand.u32 %v39, 4294901760
  %781 = vmatpush1.msra.mxu0 %v780
  %782 = vmatprep.subr.mxu0 0.0
  %v783 = vand.u32 %v38, 4294901760
  %784 = vmatpush1.msra.mxu0 %v783
  %785 = vmatprep.subr.mxu0 0.0
  %v786 = vand.u32 %v37, 4294901760
  %787 = vmatpush1.msra.mxu0 %v786
  %788 = vmatprep.subr.mxu0 0.0
  %v789 = vand.u32 %v36, 4294901760
  %790 = vmatpush1.msra.mxu0 %v789
  %791 = vmatprep.subr.mxu0 0.0
  %792 = vmatpush2.msra.mxu0 0.0
  %793 = vmatprep.subr.mxu0 0.0
  %794 = vmatpush2.msra.mxu0 0.0
  %795 = vmatprep.subr.mxu0 0.0
  %796 = vmatpush2.msra.mxu0 0.0
  %797 = vmatprep.subr.mxu0 0.0
  %798 = vmatpush2.msra.mxu0 0.0
  %799 = vmatprep.subr.mxu0 0.0
  %800 = vmatpush2.msra.mxu0 0.0
  %801 = vmatprep.subr.mxu0 0.0
  %802 = vmatpush2.msra.mxu0 0.0
  %803 = vmatprep.subr.mxu0 0.0
  %804 = vmatpush2.msra.mxu0 0.0
  %805 = vmatprep.subr.mxu0 0.0
  %806 = vmatpush2.msra.mxu0 0.0
  %807 = vmatprep.subr.mxu0 0.0
  %808 = vmatpush2.msra.mxu0 0.0
  %809 = vmatprep.subr.mxu0 0.0
  %810 = vmatpush2.msra.mxu0 0.0
  %811 = vmatprep.subr.mxu0 0.0
  %812 = vmatpush2.msra.mxu0 0.0
  %813 = vmatprep.subr.mxu0 0.0
  %814 = vmatpush2.msra.mxu0 0.0
  %815 = vmatprep.subr.mxu0 0.0
  %816 = vmatpush2.msra.mxu0 0.0
  %817 = vmatprep.subr.mxu0 0.0
  %818 = vmatpush2.msra.mxu0 0.0
  %819 = vmatprep.subr.mxu0 0.0
  %820 = vmatpush2.msra.mxu0 0.0
  %821 = vmatprep.subr.mxu0 0.0
  %822 = vmatpush2.msra.mxu0 0.0
  %823 = vmatprep.mubr.f32.mxu0 0.0
  %v824 = vand.u32 %v20, 4294901760
  %v825 = vsub.f32 %v20, %v824
  %v826 = vand.u32 %v825, 4294901760
  %827 = vmatmul.mubr.f32.gmra.mxu0 %v826
  %v828 = vpop.f32.mrf.mxu0
  %v829 = vadd.f32 %v635, %v828
  %v830 = vpop.f32.mrf.mxu0
  %831 = vmatprep.mubr.f32.mxu0 0.0
  %v832 = vand.u32 %v21, 4294901760
  %v833 = vsub.f32 %v21, %v832
  %v834 = vand.u32 %v833, 4294901760
  %835 = vmatmul.mubr.f32.gmra.mxu0 %v834
  %v836 = vpop.f32.mrf.mxu0
  %v837 = vadd.f32 %v642, %v836
  %v838 = vpop.f32.mrf.mxu0
  %839 = vmatprep.mubr.f32.mxu0 0.0
  %v840 = vand.u32 %v22, 4294901760
  %v841 = vsub.f32 %v22, %v840
  %v842 = vand.u32 %v841, 4294901760
  %843 = vmatmul.mubr.f32.gmra.mxu0 %v842
  %v844 = vpop.f32.mrf.mxu0
  %v845 = vadd.f32 %v649, %v844
  %v846 = vpop.f32.mrf.mxu0
  %847 = vmatprep.mubr.f32.mxu0 0.0
  %v848 = vand.u32 %v23, 4294901760
  %v849 = vsub.f32 %v23, %v848
  %v850 = vand.u32 %v849, 4294901760
  %851 = vmatmul.mubr.f32.gmra.mxu0 %v850
  %v852 = vpop.f32.mrf.mxu0
  %v853 = vadd.f32 %v656, %v852
  %v854 = vpop.f32.mrf.mxu0
  %855 = vmatprep.mubr.f32.mxu0 0.0
  %v856 = vand.u32 %v24, 4294901760
  %v857 = vsub.f32 %v24, %v856
  %v858 = vand.u32 %v857, 4294901760
  %859 = vmatmul.mubr.f32.gmra.mxu0 %v858
  %v860 = vpop.f32.mrf.mxu0
  %v861 = vadd.f32 %v663, %v860
  %v862 = vpop.f32.mrf.mxu0
  %863 = vmatprep.mubr.f32.mxu0 0.0
  %v864 = vand.u32 %v25, 4294901760
  %v865 = vsub.f32 %v25, %v864
  %v866 = vand.u32 %v865, 4294901760
  %867 = vmatmul.mubr.f32.gmra.mxu0 %v866
  %v868 = vpop.f32.mrf.mxu0
  %v869 = vadd.f32 %v670, %v868
  %v870 = vpop.f32.mrf.mxu0
  %871 = vmatprep.mubr.f32.mxu0 0.0
  %v872 = vand.u32 %v26, 4294901760
  %v873 = vsub.f32 %v26, %v872
  %v874 = vand.u32 %v873, 4294901760
  %875 = vmatmul.mubr.f32.gmra.mxu0 %v874
  %v876 = vpop.f32.mrf.mxu0
  %v877 = vadd.f32 %v677, %v876
  %v878 = vpop.f32.mrf.mxu0
  %879 = vmatprep.mubr.f32.mxu0 0.0
  %v880 = vand.u32 %v27, 4294901760
  %v881 = vsub.f32 %v27, %v880
  %v882 = vand.u32 %v881, 4294901760
  %883 = vmatmul.mubr.f32.gmra.mxu0 %v882
  %v884 = vpop.f32.mrf.mxu0
  %v885 = vadd.f32 %v684, %v884
  %v886 = vpop.f32.mrf.mxu0
  %887 = vmatprep.mubr.f32.mxu0 0.0
  %v888 = vand.u32 %v28, 4294901760
  %v889 = vsub.f32 %v28, %v888
  %v890 = vand.u32 %v889, 4294901760
  %891 = vmatmul.mubr.f32.gmra.mxu0 %v890
  %v892 = vpop.f32.mrf.mxu0
  %v893 = vadd.f32 %v691, %v892
  %v894 = vpop.f32.mrf.mxu0
  %895 = vmatprep.mubr.f32.mxu0 0.0
  %v896 = vand.u32 %v29, 4294901760
  %v897 = vsub.f32 %v29, %v896
  %v898 = vand.u32 %v897, 4294901760
  %899 = vmatmul.mubr.f32.gmra.mxu0 %v898
  %v900 = vpop.f32.mrf.mxu0
  %v901 = vadd.f32 %v698, %v900
  %v902 = vpop.f32.mrf.mxu0
  %903 = vmatprep.mubr.f32.mxu0 0.0
  %v904 = vand.u32 %v30, 4294901760
  %v905 = vsub.f32 %v30, %v904
  %v906 = vand.u32 %v905, 4294901760
  %907 = vmatmul.mubr.f32.gmra.mxu0 %v906
  %v908 = vpop.f32.mrf.mxu0
  %v909 = vadd.f32 %v705, %v908
  %v910 = vpop.f32.mrf.mxu0
  %911 = vmatprep.mubr.f32.mxu0 0.0
  %v912 = vand.u32 %v31, 4294901760
  %v913 = vsub.f32 %v31, %v912
  %v914 = vand.u32 %v913, 4294901760
  %915 = vmatmul.mubr.f32.gmra.mxu0 %v914
  %v916 = vpop.f32.mrf.mxu0
  %v917 = vadd.f32 %v712, %v916
  %v918 = vpop.f32.mrf.mxu0
  %919 = vmatprep.mubr.f32.mxu0 0.0
  %v920 = vand.u32 %v32, 4294901760
  %v921 = vsub.f32 %v32, %v920
  %v922 = vand.u32 %v921, 4294901760
  %923 = vmatmul.mubr.f32.gmra.mxu0 %v922
  %v924 = vpop.f32.mrf.mxu0
  %v925 = vadd.f32 %v719, %v924
  %v926 = vpop.f32.mrf.mxu0
  %927 = vmatprep.mubr.f32.mxu0 0.0
  %v928 = vand.u32 %v33, 4294901760
  %v929 = vsub.f32 %v33, %v928
  %v930 = vand.u32 %v929, 4294901760
  %931 = vmatmul.mubr.f32.gmra.mxu0 %v930
  %v932 = vpop.f32.mrf.mxu0
  %v933 = vadd.f32 %v726, %v932
  %v934 = vpop.f32.mrf.mxu0
  %935 = vmatprep.mubr.f32.mxu0 0.0
  %v936 = vand.u32 %v34, 4294901760
  %v937 = vsub.f32 %v34, %v936
  %v938 = vand.u32 %v937, 4294901760
  %939 = vmatmul.mubr.f32.gmra.mxu0 %v938
  %v940 = vpop.f32.mrf.mxu0
  %v941 = vadd.f32 %v733, %v940
  %v942 = vpop.f32.mrf.mxu0
  %943 = vmatprep.mubr.f32.mxu0 0.0
  %v944 = vand.u32 %v35, 4294901760
  %v945 = vsub.f32 %v35, %v944
  %v946 = vand.u32 %v945, 4294901760
  %947 = vmatmul.mubr.f32.gmra.mxu0 %v946
  %v948 = vpop.f32.mrf.mxu0
  %v949 = vadd.f32 %v740, %v948
  %v950 = vpop.f32.mrf.mxu0
  %951 = vdwg.mxu0
  %952 = vmatprep.subr.mxu0 0.0
  %v953 = vand.u32 %v51, 4294901760
  %v954 = vsub.f32 %v51, %v953
  %v955 = vand.u32 %v954, 4294901760
  %956 = vmatpush1.msra.mxu0 %v955
  %957 = vmatprep.subr.mxu0 0.0
  %v958 = vand.u32 %v50, 4294901760
  %v959 = vsub.f32 %v50, %v958
  %v960 = vand.u32 %v959, 4294901760
  %961 = vmatpush1.msra.mxu0 %v960
  %962 = vmatprep.subr.mxu0 0.0
  %v963 = vand.u32 %v49, 4294901760
  %v964 = vsub.f32 %v49, %v963
  %v965 = vand.u32 %v964, 4294901760
  %966 = vmatpush1.msra.mxu0 %v965
  %967 = vmatprep.subr.mxu0 0.0
  %v968 = vand.u32 %v48, 4294901760
  %v969 = vsub.f32 %v48, %v968
  %v970 = vand.u32 %v969, 4294901760
  %971 = vmatpush1.msra.mxu0 %v970
  %972 = vmatprep.subr.mxu0 0.0
  %v973 = vand.u32 %v47, 4294901760
  %v974 = vsub.f32 %v47, %v973
  %v975 = vand.u32 %v974, 4294901760
  %976 = vmatpush1.msra.mxu0 %v975
  %977 = vmatprep.subr.mxu0 0.0
  %v978 = vand.u32 %v46, 4294901760
  %v979 = vsub.f32 %v46, %v978
  %v980 = vand.u32 %v979, 4294901760
  %981 = vmatpush1.msra.mxu0 %v980
  %982 = vmatprep.subr.mxu0 0.0
  %v983 = vand.u32 %v45, 4294901760
  %v984 = vsub.f32 %v45, %v983
  %v985 = vand.u32 %v984, 4294901760
  %986 = vmatpush1.msra.mxu0 %v985
  %987 = vmatprep.subr.mxu0 0.0
  %v988 = vand.u32 %v44, 4294901760
  %v989 = vsub.f32 %v44, %v988
  %v990 = vand.u32 %v989, 4294901760
  %991 = vmatpush1.msra.mxu0 %v990
  %992 = vmatprep.subr.mxu0 0.0
  %v993 = vand.u32 %v43, 4294901760
  %v994 = vsub.f32 %v43, %v993
  %v995 = vand.u32 %v994, 4294901760
  %996 = vmatpush1.msra.mxu0 %v995
  %997 = vmatprep.subr.mxu0 0.0
  %v998 = vand.u32 %v42, 4294901760
  %v999 = vsub.f32 %v42, %v998
  %v1000 = vand.u32 %v999, 4294901760
  %1001 = vmatpush1.msra.mxu0 %v1000
  %1002 = vmatprep.subr.mxu0 0.0
  %v1003 = vand.u32 %v41, 4294901760
  %v1004 = vsub.f32 %v41, %v1003
  %v1005 = vand.u32 %v1004, 4294901760
  %1006 = vmatpush1.msra.mxu0 %v1005
  %1007 = vmatprep.subr.mxu0 0.0
  %v1008 = vand.u32 %v40, 4294901760
  %v1009 = vsub.f32 %v40, %v1008
  %v1010 = vand.u32 %v1009, 4294901760
  %1011 = vmatpush1.msra.mxu0 %v1010
  %1012 = vmatprep.subr.mxu0 0.0
  %v1013 = vand.u32 %v39, 4294901760
  %v1014 = vsub.f32 %v39, %v1013
  %v1015 = vand.u32 %v1014, 4294901760
  %1016 = vmatpush1.msra.mxu0 %v1015
  %1017 = vmatprep.subr.mxu0 0.0
  %v1018 = vand.u32 %v38, 4294901760
  %v1019 = vsub.f32 %v38, %v1018
  %v1020 = vand.u32 %v1019, 4294901760
  %1021 = vmatpush1.msra.mxu0 %v1020
  %1022 = vmatprep.subr.mxu0 0.0
  %v1023 = vand.u32 %v37, 4294901760
  %v1024 = vsub.f32 %v37, %v1023
  %v1025 = vand.u32 %v1024, 4294901760
  %1026 = vmatpush1.msra.mxu0 %v1025
  %1027 = vmatprep.subr.mxu0 0.0
  %v1028 = vand.u32 %v36, 4294901760
  %v1029 = vsub.f32 %v36, %v1028
  %v1030 = vand.u32 %v1029, 4294901760
  %1031 = vmatpush1.msra.mxu0 %v1030
  %1032 = vmatprep.subr.mxu0 0.0
  %1033 = vmatpush2.msra.mxu0 0.0
  %1034 = vmatprep.subr.mxu0 0.0
  %1035 = vmatpush2.msra.mxu0 0.0
  %1036 = vmatprep.subr.mxu0 0.0
  %1037 = vmatpush2.msra.mxu0 0.0
  %1038 = vmatprep.subr.mxu0 0.0
  %1039 = vmatpush2.msra.mxu0 0.0
  %1040 = vmatprep.subr.mxu0 0.0
  %1041 = vmatpush2.msra.mxu0 0.0
  %1042 = vmatprep.subr.mxu0 0.0
  %1043 = vmatpush2.msra.mxu0 0.0
  %1044 = vmatprep.subr.mxu0 0.0
  %1045 = vmatpush2.msra.mxu0 0.0
  %1046 = vmatprep.subr.mxu0 0.0
  %1047 = vmatpush2.msra.mxu0 0.0
  %1048 = vmatprep.subr.mxu0 0.0
  %1049 = vmatpush2.msra.mxu0 0.0
  %1050 = vmatprep.subr.mxu0 0.0
  %1051 = vmatpush2.msra.mxu0 0.0
  %1052 = vmatprep.subr.mxu0 0.0
  %1053 = vmatpush2.msra.mxu0 0.0
  %1054 = vmatprep.subr.mxu0 0.0
  %1055 = vmatpush2.msra.mxu0 0.0
  %1056 = vmatprep.subr.mxu0 0.0
  %1057 = vmatpush2.msra.mxu0 0.0
  %1058 = vmatprep.subr.mxu0 0.0
  %1059 = vmatpush2.msra.mxu0 0.0
  %1060 = vmatprep.subr.mxu0 0.0
  %1061 = vmatpush2.msra.mxu0 0.0
  %1062 = vmatprep.subr.mxu0 0.0
  %1063 = vmatpush2.msra.mxu0 0.0
  %1064 = vmatprep.mubr.f32.mxu0 0.0
  %v1065 = vand.u32 %v20, 4294901760
  %1066 = vmatmul.mubr.f32.gmra.mxu0 %v1065
  %v1067 = vpop.f32.mrf.mxu0
  %v1068 = vadd.f32 %v829, %v1067
  %v1069 = vpop.f32.mrf.mxu0
  %1070 = vmatprep.mubr.f32.mxu0 0.0
  %v1071 = vand.u32 %v21, 4294901760
  %1072 = vmatmul.mubr.f32.gmra.mxu0 %v1071
  %v1073 = vpop.f32.mrf.mxu0
  %v1074 = vadd.f32 %v837, %v1073
  %v1075 = vpop.f32.mrf.mxu0
  %1076 = vmatprep.mubr.f32.mxu0 0.0
  %v1077 = vand.u32 %v22, 4294901760
  %1078 = vmatmul.mubr.f32.gmra.mxu0 %v1077
  %v1079 = vpop.f32.mrf.mxu0
  %v1080 = vadd.f32 %v845, %v1079
  %v1081 = vpop.f32.mrf.mxu0
  %1082 = vmatprep.mubr.f32.mxu0 0.0
  %v1083 = vand.u32 %v23, 4294901760
  %1084 = vmatmul.mubr.f32.gmra.mxu0 %v1083
  %v1085 = vpop.f32.mrf.mxu0
  %v1086 = vadd.f32 %v853, %v1085
  %v1087 = vpop.f32.mrf.mxu0
  %1088 = vmatprep.mubr.f32.mxu0 0.0
  %v1089 = vand.u32 %v24, 4294901760
  %1090 = vmatmul.mubr.f32.gmra.mxu0 %v1089
  %v1091 = vpop.f32.mrf.mxu0
  %v1092 = vadd.f32 %v861, %v1091
  %v1093 = vpop.f32.mrf.mxu0
  %1094 = vmatprep.mubr.f32.mxu0 0.0
  %v1095 = vand.u32 %v25, 4294901760
  %1096 = vmatmul.mubr.f32.gmra.mxu0 %v1095
  %v1097 = vpop.f32.mrf.mxu0
  %v1098 = vadd.f32 %v869, %v1097
  %v1099 = vpop.f32.mrf.mxu0
  %1100 = vmatprep.mubr.f32.mxu0 0.0
  %v1101 = vand.u32 %v26, 4294901760
  %1102 = vmatmul.mubr.f32.gmra.mxu0 %v1101
  %v1103 = vpop.f32.mrf.mxu0
  %v1104 = vadd.f32 %v877, %v1103
  %v1105 = vpop.f32.mrf.mxu0
  %1106 = vmatprep.mubr.f32.mxu0 0.0
  %v1107 = vand.u32 %v27, 4294901760
  %1108 = vmatmul.mubr.f32.gmra.mxu0 %v1107
  %v1109 = vpop.f32.mrf.mxu0
  %v1110 = vadd.f32 %v885, %v1109
  %v1111 = vpop.f32.mrf.mxu0
  %1112 = vmatprep.mubr.f32.mxu0 0.0
  %v1113 = vand.u32 %v28, 4294901760
  %1114 = vmatmul.mubr.f32.gmra.mxu0 %v1113
  %v1115 = vpop.f32.mrf.mxu0
  %v1116 = vadd.f32 %v893, %v1115
  %v1117 = vpop.f32.mrf.mxu0
  %1118 = vmatprep.mubr.f32.mxu0 0.0
  %v1119 = vand.u32 %v29, 4294901760
  %1120 = vmatmul.mubr.f32.gmra.mxu0 %v1119
  %v1121 = vpop.f32.mrf.mxu0
  %v1122 = vadd.f32 %v901, %v1121
  %v1123 = vpop.f32.mrf.mxu0
  %1124 = vmatprep.mubr.f32.mxu0 0.0
  %v1125 = vand.u32 %v30, 4294901760
  %1126 = vmatmul.mubr.f32.gmra.mxu0 %v1125
  %v1127 = vpop.f32.mrf.mxu0
  %v1128 = vadd.f32 %v909, %v1127
  %v1129 = vpop.f32.mrf.mxu0
  %1130 = vmatprep.mubr.f32.mxu0 0.0
  %v1131 = vand.u32 %v31, 4294901760
  %1132 = vmatmul.mubr.f32.gmra.mxu0 %v1131
  %v1133 = vpop.f32.mrf.mxu0
  %v1134 = vadd.f32 %v917, %v1133
  %v1135 = vpop.f32.mrf.mxu0
  %1136 = vmatprep.mubr.f32.mxu0 0.0
  %v1137 = vand.u32 %v32, 4294901760
  %1138 = vmatmul.mubr.f32.gmra.mxu0 %v1137
  %v1139 = vpop.f32.mrf.mxu0
  %v1140 = vadd.f32 %v925, %v1139
  %v1141 = vpop.f32.mrf.mxu0
  %1142 = vmatprep.mubr.f32.mxu0 0.0
  %v1143 = vand.u32 %v33, 4294901760
  %1144 = vmatmul.mubr.f32.gmra.mxu0 %v1143
  %v1145 = vpop.f32.mrf.mxu0
  %v1146 = vadd.f32 %v933, %v1145
  %v1147 = vpop.f32.mrf.mxu0
  %1148 = vmatprep.mubr.f32.mxu0 0.0
  %v1149 = vand.u32 %v34, 4294901760
  %1150 = vmatmul.mubr.f32.gmra.mxu0 %v1149
  %v1151 = vpop.f32.mrf.mxu0
  %v1152 = vadd.f32 %v941, %v1151
  %v1153 = vpop.f32.mrf.mxu0
  %1154 = vmatprep.mubr.f32.mxu0 0.0
  %v1155 = vand.u32 %v35, 4294901760
  %1156 = vmatmul.mubr.f32.gmra.mxu0 %v1155
  %v1157 = vpop.f32.mrf.mxu0
  %v1158 = vadd.f32 %v949, %v1157
  %v1159 = vpop.f32.mrf.mxu0
  %1160 = vdwg.mxu0
  %1161 = vmatprep.subr.mxu0 0.0
  %v1162 = vand.u32 %v51, 4294901760
  %1163 = vmatpush1.msra.mxu0 %v1162
  %1164 = vmatprep.subr.mxu0 0.0
  %v1165 = vand.u32 %v50, 4294901760
  %1166 = vmatpush1.msra.mxu0 %v1165
  %1167 = vmatprep.subr.mxu0 0.0
  %v1168 = vand.u32 %v49, 4294901760
  %1169 = vmatpush1.msra.mxu0 %v1168
  %1170 = vmatprep.subr.mxu0 0.0
  %v1171 = vand.u32 %v48, 4294901760
  %1172 = vmatpush1.msra.mxu0 %v1171
  %1173 = vmatprep.subr.mxu0 0.0
  %v1174 = vand.u32 %v47, 4294901760
  %1175 = vmatpush1.msra.mxu0 %v1174
  %1176 = vmatprep.subr.mxu0 0.0
  %v1177 = vand.u32 %v46, 4294901760
  %1178 = vmatpush1.msra.mxu0 %v1177
  %1179 = vmatprep.subr.mxu0 0.0
  %v1180 = vand.u32 %v45, 4294901760
  %1181 = vmatpush1.msra.mxu0 %v1180
  %1182 = vmatprep.subr.mxu0 0.0
  %v1183 = vand.u32 %v44, 4294901760
  %1184 = vmatpush1.msra.mxu0 %v1183
  %1185 = vmatprep.subr.mxu0 0.0
  %v1186 = vand.u32 %v43, 4294901760
  %1187 = vmatpush1.msra.mxu0 %v1186
  %1188 = vmatprep.subr.mxu0 0.0
  %v1189 = vand.u32 %v42, 4294901760
  %1190 = vmatpush1.msra.mxu0 %v1189
  %1191 = vmatprep.subr.mxu0 0.0
  %v1192 = vand.u32 %v41, 4294901760
  %1193 = vmatpush1.msra.mxu0 %v1192
  %1194 = vmatprep.subr.mxu0 0.0
  %v1195 = vand.u32 %v40, 4294901760
  %1196 = vmatpush1.msra.mxu0 %v1195
  %1197 = vmatprep.subr.mxu0 0.0
  %v1198 = vand.u32 %v39, 4294901760
  %1199 = vmatpush1.msra.mxu0 %v1198
  %1200 = vmatprep.subr.mxu0 0.0
  %v1201 = vand.u32 %v38, 4294901760
  %1202 = vmatpush1.msra.mxu0 %v1201
  %1203 = vmatprep.subr.mxu0 0.0
  %v1204 = vand.u32 %v37, 4294901760
  %1205 = vmatpush1.msra.mxu0 %v1204
  %1206 = vmatprep.subr.mxu0 0.0
  %v1207 = vand.u32 %v36, 4294901760
  %1208 = vmatpush1.msra.mxu0 %v1207
  %1209 = vmatprep.subr.mxu0 0.0
  %1210 = vmatpush2.msra.mxu0 0.0
  %1211 = vmatprep.subr.mxu0 0.0
  %1212 = vmatpush2.msra.mxu0 0.0
  %1213 = vmatprep.subr.mxu0 0.0
  %1214 = vmatpush2.msra.mxu0 0.0
  %1215 = vmatprep.subr.mxu0 0.0
  %1216 = vmatpush2.msra.mxu0 0.0
  %1217 = vmatprep.subr.mxu0 0.0
  %1218 = vmatpush2.msra.mxu0 0.0
  %1219 = vmatprep.subr.mxu0 0.0
  %1220 = vmatpush2.msra.mxu0 0.0
  %1221 = vmatprep.subr.mxu0 0.0
  %1222 = vmatpush2.msra.mxu0 0.0
  %1223 = vmatprep.subr.mxu0 0.0
  %1224 = vmatpush2.msra.mxu0 0.0
  %1225 = vmatprep.subr.mxu0 0.0
  %1226 = vmatpush2.msra.mxu0 0.0
  %1227 = vmatprep.subr.mxu0 0.0
  %1228 = vmatpush2.msra.mxu0 0.0
  %1229 = vmatprep.subr.mxu0 0.0
  %1230 = vmatpush2.msra.mxu0 0.0
  %1231 = vmatprep.subr.mxu0 0.0
  %1232 = vmatpush2.msra.mxu0 0.0
  %1233 = vmatprep.subr.mxu0 0.0
  %1234 = vmatpush2.msra.mxu0 0.0
  %1235 = vmatprep.subr.mxu0 0.0
  %1236 = vmatpush2.msra.mxu0 0.0
  %1237 = vmatprep.subr.mxu0 0.0
  %1238 = vmatpush2.msra.mxu0 0.0
  %1239 = vmatprep.subr.mxu0 0.0
  %1240 = vmatpush2.msra.mxu0 0.0
  %1241 = vmatprep.mubr.f32.mxu0 0.0
  %v1242 = vand.u32 %v20, 4294901760
  %1243 = vmatmul.mubr.f32.gmra.mxu0 %v1242
  %v1244 = vpop.f32.mrf.mxu0
  %v1245 = vadd.f32 %v1068, %v1244
  %v1246 = vpop.f32.mrf.mxu0
  %1247 = vmatprep.mubr.f32.mxu0 0.0
  %v1248 = vand.u32 %v21, 4294901760
  %1249 = vmatmul.mubr.f32.gmra.mxu0 %v1248
  %v1250 = vpop.f32.mrf.mxu0
  %v1251 = vadd.f32 %v1074, %v1250
  %v1252 = vpop.f32.mrf.mxu0
  %1253 = vmatprep.mubr.f32.mxu0 0.0
  %v1254 = vand.u32 %v22, 4294901760
  %1255 = vmatmul.mubr.f32.gmra.mxu0 %v1254
  %v1256 = vpop.f32.mrf.mxu0
  %v1257 = vadd.f32 %v1080, %v1256
  %v1258 = vpop.f32.mrf.mxu0
  %1259 = vmatprep.mubr.f32.mxu0 0.0
  %v1260 = vand.u32 %v23, 4294901760
  %1261 = vmatmul.mubr.f32.gmra.mxu0 %v1260
  %v1262 = vpop.f32.mrf.mxu0
  %v1263 = vadd.f32 %v1086, %v1262
  %v1264 = vpop.f32.mrf.mxu0
  %1265 = vmatprep.mubr.f32.mxu0 0.0
  %v1266 = vand.u32 %v24, 4294901760
  %1267 = vmatmul.mubr.f32.gmra.mxu0 %v1266
  %v1268 = vpop.f32.mrf.mxu0
  %v1269 = vadd.f32 %v1092, %v1268
  %v1270 = vpop.f32.mrf.mxu0
  %1271 = vmatprep.mubr.f32.mxu0 0.0
  %v1272 = vand.u32 %v25, 4294901760
  %1273 = vmatmul.mubr.f32.gmra.mxu0 %v1272
  %v1274 = vpop.f32.mrf.mxu0
  %v1275 = vadd.f32 %v1098, %v1274
  %v1276 = vpop.f32.mrf.mxu0
  %1277 = vmatprep.mubr.f32.mxu0 0.0
  %v1278 = vand.u32 %v26, 4294901760
  %1279 = vmatmul.mubr.f32.gmra.mxu0 %v1278
  %v1280 = vpop.f32.mrf.mxu0
  %v1281 = vadd.f32 %v1104, %v1280
  %v1282 = vpop.f32.mrf.mxu0
  %1283 = vmatprep.mubr.f32.mxu0 0.0
  %v1284 = vand.u32 %v27, 4294901760
  %1285 = vmatmul.mubr.f32.gmra.mxu0 %v1284
  %v1286 = vpop.f32.mrf.mxu0
  %v1287 = vadd.f32 %v1110, %v1286
  %v1288 = vpop.f32.mrf.mxu0
  %1289 = vmatprep.mubr.f32.mxu0 0.0
  %v1290 = vand.u32 %v28, 4294901760
  %1291 = vmatmul.mubr.f32.gmra.mxu0 %v1290
  %v1292 = vpop.f32.mrf.mxu0
  %v1293 = vadd.f32 %v1116, %v1292
  %v1294 = vpop.f32.mrf.mxu0
  %1295 = vmatprep.mubr.f32.mxu0 0.0
  %v1296 = vand.u32 %v29, 4294901760
  %1297 = vmatmul.mubr.f32.gmra.mxu0 %v1296
  %v1298 = vpop.f32.mrf.mxu0
  %v1299 = vadd.f32 %v1122, %v1298
  %v1300 = vpop.f32.mrf.mxu0
  %1301 = vmatprep.mubr.f32.mxu0 0.0
  %v1302 = vand.u32 %v30, 4294901760
  %1303 = vmatmul.mubr.f32.gmra.mxu0 %v1302
  %v1304 = vpop.f32.mrf.mxu0
  %v1305 = vadd.f32 %v1128, %v1304
  %v1306 = vpop.f32.mrf.mxu0
  %1307 = vmatprep.mubr.f32.mxu0 0.0
  %v1308 = vand.u32 %v31, 4294901760
  %1309 = vmatmul.mubr.f32.gmra.mxu0 %v1308
  %v1310 = vpop.f32.mrf.mxu0
  %v1311 = vadd.f32 %v1134, %v1310
  %v1312 = vpop.f32.mrf.mxu0
  %1313 = vmatprep.mubr.f32.mxu0 0.0
  %v1314 = vand.u32 %v32, 4294901760
  %1315 = vmatmul.mubr.f32.gmra.mxu0 %v1314
  %v1316 = vpop.f32.mrf.mxu0
  %v1317 = vadd.f32 %v1140, %v1316
  %v1318 = vpop.f32.mrf.mxu0
  %1319 = vmatprep.mubr.f32.mxu0 0.0
  %v1320 = vand.u32 %v33, 4294901760
  %1321 = vmatmul.mubr.f32.gmra.mxu0 %v1320
  %v1322 = vpop.f32.mrf.mxu0
  %v1323 = vadd.f32 %v1146, %v1322
  %v1324 = vpop.f32.mrf.mxu0
  %1325 = vmatprep.mubr.f32.mxu0 0.0
  %v1326 = vand.u32 %v34, 4294901760
  %1327 = vmatmul.mubr.f32.gmra.mxu0 %v1326
  %v1328 = vpop.f32.mrf.mxu0
  %v1329 = vadd.f32 %v1152, %v1328
  %v1330 = vpop.f32.mrf.mxu0
  %1331 = vmatprep.mubr.f32.mxu0 0.0
  %v1332 = vand.u32 %v35, 4294901760
  %1333 = vmatmul.mubr.f32.gmra.mxu0 %v1332
  %v1334 = vpop.f32.mrf.mxu0
  %v1335 = vadd.f32 %v1158, %v1334
  %v1336 = vpop.f32.mrf.mxu0
  %1337 = vdwg.mxu0
  %v1338 = vld [vmem:[%s2] sm:$0x1]
  %v1340 = vlaneseq
  %v1341 = vshrl.u32 %v1340, 7
  %v1342 = vsub.s32 0, %v1341
  %v1343 = vrot.slane %v1338, %v1342
  %v1345 = vmul.f32 %v1245, %v1343
  %v1346 = vmul.f32 %v1251, %v1343
  %v1347 = vmul.f32 %v1257, %v1343
  %v1348 = vmul.f32 %v1263, %v1343
  %v1349 = vmul.f32 %v1269, %v1343
  %v1350 = vmul.f32 %v1275, %v1343
  %v1351 = vmul.f32 %v1281, %v1343
  %v1352 = vmul.f32 %v1287, %v1343
  %v1353 = vmul.f32 %v1293, %v1343
  %v1354 = vmul.f32 %v1299, %v1343
  %v1355 = vmul.f32 %v1305, %v1343
  %v1356 = vmul.f32 %v1311, %v1343
  %v1357 = vmul.f32 %v1317, %v1343
  %v1358 = vmul.f32 %v1323, %v1343
  %v1359 = vmul.f32 %v1329, %v1343
  %v1360 = vmul.f32 %v1335, %v1343
  %v1361 = vld [vmem:[%s3] sm:$0x1]
  %v1363 = vlaneseq
  %v1364 = vshrl.u32 %v1363, 7
  %v1365 = vsub.s32 0, %v1364
  %v1366 = vrot.slane %v1361, %v1365
  %v1368 = vadd.f32 %v1345, %v1366
  %v1369 = vadd.f32 %v1346, %v1366
  %v1370 = vadd.f32 %v1347, %v1366
  %v1371 = vadd.f32 %v1348, %v1366
  %v1372 = vadd.f32 %v1349, %v1366
  %v1373 = vadd.f32 %v1350, %v1366
  %v1374 = vadd.f32 %v1351, %v1366
  %v1375 = vadd.f32 %v1352, %v1366
  %v1376 = vadd.f32 %v1353, %v1366
  %v1377 = vadd.f32 %v1354, %v1366
  %v1378 = vadd.f32 %v1355, %v1366
  %v1379 = vadd.f32 %v1356, %v1366
  %v1380 = vadd.f32 %v1357, %v1366
  %v1381 = vadd.f32 %v1358, %v1366
  %v1382 = vadd.f32 %v1359, %v1366
  %v1383 = vadd.f32 %v1360, %v1366
  %v1384 = vld [vmem:[%s4] sm:$0xff]
  %v1385 = vld [vmem:[%s4 + $0x8] sm:$0xff]
  %v1386 = vld [vmem:[%s4 + $0x10] sm:$0xff]
  %v1387 = vld [vmem:[%s4 + $0x18] sm:$0xff]
  %v1388 = vld [vmem:[%s4 + $0x20] sm:$0xff]
  %v1389 = vld [vmem:[%s4 + $0x28] sm:$0xff]
  %v1390 = vld [vmem:[%s4 + $0x30] sm:$0xff]
  %v1391 = vld [vmem:[%s4 + $0x38] sm:$0xff]
  %v1392 = vld [vmem:[%s4 + $0x40] sm:$0xff]
  %v1393 = vld [vmem:[%s4 + $0x48] sm:$0xff]
  %v1394 = vld [vmem:[%s4 + $0x50] sm:$0xff]
  %v1395 = vld [vmem:[%s4 + $0x58] sm:$0xff]
  %v1396 = vld [vmem:[%s4 + $0x60] sm:$0xff]
  %v1397 = vld [vmem:[%s4 + $0x68] sm:$0xff]
  %v1398 = vld [vmem:[%s4 + $0x70] sm:$0xff]
  %v1399 = vld [vmem:[%s4 + $0x78] sm:$0xff]
  %v1400 = vadd.f32 %v1368, %v1384
  %v1401 = vadd.f32 %v1369, %v1385
  %v1402 = vadd.f32 %v1370, %v1386
  %v1403 = vadd.f32 %v1371, %v1387
  %v1404 = vadd.f32 %v1372, %v1388
  %v1405 = vadd.f32 %v1373, %v1389
  %v1406 = vadd.f32 %v1374, %v1390
  %v1407 = vadd.f32 %v1375, %v1391
  %v1408 = vadd.f32 %v1376, %v1392
  %v1409 = vadd.f32 %v1377, %v1393
  %v1410 = vadd.f32 %v1378, %v1394
  %v1411 = vadd.f32 %v1379, %v1395
  %v1412 = vadd.f32 %v1380, %v1396
  %v1413 = vadd.f32 %v1381, %v1397
  %v1414 = vadd.f32 %v1382, %v1398
  %v1415 = vadd.f32 %v1383, %v1399
  %1416 = vst [vmem:[%s5] sm:$0xff] %v1400
  %1417 = vst [vmem:[%s5 + $0x8] sm:$0xff] %v1401
  %1418 = vst [vmem:[%s5 + $0x10] sm:$0xff] %v1402
  %1419 = vst [vmem:[%s5 + $0x18] sm:$0xff] %v1403
  %1420 = vst [vmem:[%s5 + $0x20] sm:$0xff] %v1404
  %1421 = vst [vmem:[%s5 + $0x28] sm:$0xff] %v1405
  %1422 = vst [vmem:[%s5 + $0x30] sm:$0xff] %v1406
  %1423 = vst [vmem:[%s5 + $0x38] sm:$0xff] %v1407
  %1424 = vst [vmem:[%s5 + $0x40] sm:$0xff] %v1408
  %1425 = vst [vmem:[%s5 + $0x48] sm:$0xff] %v1409
  %1426 = vst [vmem:[%s5 + $0x50] sm:$0xff] %v1410
  %1427 = vst [vmem:[%s5 + $0x58] sm:$0xff] %v1411
  %1428 = vst [vmem:[%s5 + $0x60] sm:$0xff] %v1412
  %1429 = vst [vmem:[%s5 + $0x68] sm:$0xff] %v1413
  %1430 = vst [vmem:[%s5 + $0x70] sm:$0xff] %v1414
  %1431 = vst [vmem:[%s5 + $0x78] sm:$0xff] %v1415
  // Predicated region
  $region22: #{_pallas_forward.9} parent=0 // pred_check
    _
  $region23: #{_pallas_forward.9} parent=0 // pred_check_branch
    %1433 = sbr.rel (0) target = $region25
  $region24: #{_pallas_forward.9} parent=0 // pred_region
    _
  $region25: #{_pallas_forward.9} parent=0 // pred_fallthru
    _
  // Predicated region
  $region26: #{_pallas_forward.9} parent=0 // pred_check
    _
  $region27: #{_pallas_forward.9} parent=0 // pred_check_branch
    %1435 = sbr.rel (0) target = $region29
  $region28: #{_pallas_forward.9} parent=0 // pred_region
    _
  $region29: #{_pallas_forward.9} parent=0 // pred_fallthru
    _

// kernel: _pallas_forward.8
$region0: #{_pallas_forward.8}
  #allocation0 [shape = 'u32[]', space=smem, size = 0x4, offset = 0x4, fixed_abs, tag = 'smem constant byte address 0x4 - core index']
  #allocation1 [shape = 'u32[144,128]{1,0:T(1,128)}', space=vmem, size = 0x12000, scoped, tag = 'internal scratch']
  %s0 = inlined_call_operand.vmem [shape: f32[128,384], index: 0, kind: input, shape index: {}]
  %s1 = inlined_call_operand.vmem [shape: f32[384,128], index: 1, kind: input, shape index: {}]
  %s2 = inlined_call_operand.vmem [shape: f32[1,128], index: 2, kind: input, shape index: {}]
  %s3 = inlined_call_operand.vmem [shape: f32[1,128], index: 3, kind: input, shape index: {}]
  %s4 = inlined_call_operand.vmem [shape: f32[128,128], index: 4, kind: output, shape index: {}]
  %s5 = sld [smem:[#allocation0]]
  $region26: #{_pallas_forward.8} parent=0
    _
  %s7 = ssub.s32 1, %s5
  %s8 = scalar_select 0, %s7, %s5
  // Predicated region
  $region2: #{_pallas_forward.8} parent=0 // pred_check
    _
  $region3: #{_pallas_forward.8} parent=0 // pred_check_branch
    %10 = sbr.rel (0) target = $region5
  $region4: #{_pallas_forward.8} parent=0 // pred_region
    _
  $region5: #{_pallas_forward.8} parent=0 // pred_fallthru
    _
  // Predicated region
  $region6: #{_pallas_forward.8} parent=0 // pred_check
    _
  $region7: #{_pallas_forward.8} parent=0 // pred_check_branch
    %12 = sbr.rel (0) target = $region9
  $region8: #{_pallas_forward.8} parent=0 // pred_region
    _
  $region9: #{_pallas_forward.8} parent=0 // pred_fallthru
    _
  // Predicated region
  $region10: #{_pallas_forward.8} parent=0 // pred_check
    _
  $region11: #{_pallas_forward.8} parent=0 // pred_check_branch
    %14 = sbr.rel (0) target = $region13
  $region12: #{_pallas_forward.8} parent=0 // pred_region
    _
  $region13: #{_pallas_forward.8} parent=0 // pred_fallthru
    _
  // Predicated region
  $region14: #{_pallas_forward.8} parent=0 // pred_check
    _
  $region15: #{_pallas_forward.8} parent=0 // pred_check_branch
    %16 = sbr.rel (0) target = $region17
  $region16: #{_pallas_forward.8} parent=0 // pred_region
    _
  $region17: #{_pallas_forward.8} parent=0 // pred_fallthru
    _
  %v17 = vld [vmem:[%s0] sm:$0xff]
  %v18 = vld [vmem:[%s0 + $0x8] sm:$0xff]
  %v19 = vld [vmem:[%s0 + $0x10] sm:$0xff]
  %v20 = vld [vmem:[%s0 + $0x18] sm:$0xff]
  %v21 = vld [vmem:[%s0 + $0x20] sm:$0xff]
  %v22 = vld [vmem:[%s0 + $0x28] sm:$0xff]
  %v23 = vld [vmem:[%s0 + $0x30] sm:$0xff]
  %v24 = vld [vmem:[%s0 + $0x38] sm:$0xff]
  %v25 = vld [vmem:[%s0 + $0x40] sm:$0xff]
  %v26 = vld [vmem:[%s0 + $0x48] sm:$0xff]
  %v27 = vld [vmem:[%s0 + $0x50] sm:$0xff]
  %v28 = vld [vmem:[%s0 + $0x58] sm:$0xff]
  %v29 = vld [vmem:[%s0 + $0x60] sm:$0xff]
  %v30 = vld [vmem:[%s0 + $0x68] sm:$0xff]
  %v31 = vld [vmem:[%s0 + $0x70] sm:$0xff]
  %v32 = vld [vmem:[%s0 + $0x78] sm:$0xff]
  %v33 = vld [vmem:[%s0 + $0x80] sm:$0xff]
  %v34 = vld [vmem:[%s0 + $0x88] sm:$0xff]
  %v35 = vld [vmem:[%s0 + $0x90] sm:$0xff]
  %v36 = vld [vmem:[%s0 + $0x98] sm:$0xff]
  %v37 = vld [vmem:[%s0 + $0xa0] sm:$0xff]
  %v38 = vld [vmem:[%s0 + $0xa8] sm:$0xff]
  %v39 = vld [vmem:[%s0 + $0xb0] sm:$0xff]
  %v40 = vld [vmem:[%s0 + $0xb8] sm:$0xff]
  %v41 = vld [vmem:[%s0 + $0xc0] sm:$0xff]
  %v42 = vld [vmem:[%s0 + $0xc8] sm:$0xff]
  %v43 = vld [vmem:[%s0 + $0xd0] sm:$0xff]
  %v44 = vld [vmem:[%s0 + $0xd8] sm:$0xff]
  %v45 = vld [vmem:[%s0 + $0xe0] sm:$0xff]
  %v46 = vld [vmem:[%s0 + $0xe8] sm:$0xff]
  %v47 = vld [vmem:[%s0 + $0xf0] sm:$0xff]
  %v48 = vld [vmem:[%s0 + $0xf8] sm:$0xff]
  %v49 = vld [vmem:[%s0 + $0x100] sm:$0xff]
  %v50 = vld [vmem:[%s0 + $0x108] sm:$0xff]
  %v51 = vld [vmem:[%s0 + $0x110] sm:$0xff]
  %v52 = vld [vmem:[%s0 + $0x118] sm:$0xff]
  %v53 = vld [vmem:[%s0 + $0x120] sm:$0xff]
  %v54 = vld [vmem:[%s0 + $0x128] sm:$0xff]
  %v55 = vld [vmem:[%s0 + $0x130] sm:$0xff]
  %v56 = vld [vmem:[%s0 + $0x138] sm:$0xff]
  %v57 = vld [vmem:[%s0 + $0x140] sm:$0xff]
  %v58 = vld [vmem:[%s0 + $0x148] sm:$0xff]
  %v59 = vld [vmem:[%s0 + $0x150] sm:$0xff]
  %v60 = vld [vmem:[%s0 + $0x158] sm:$0xff]
  %v61 = vld [vmem:[%s0 + $0x160] sm:$0xff]
  %v62 = vld [vmem:[%s0 + $0x168] sm:$0xff]
  %v63 = vld [vmem:[%s0 + $0x170] sm:$0xff]
  %v64 = vld [vmem:[%s0 + $0x178] sm:$0xff]
  %v65 = vmax.f32 %v17, 0.0
  %v66 = vmax.f32 %v18, 0.0
  %v67 = vmax.f32 %v19, 0.0
  %v68 = vmax.f32 %v20, 0.0
  %v69 = vmax.f32 %v21, 0.0
  %v70 = vmax.f32 %v22, 0.0
  %v71 = vmax.f32 %v23, 0.0
  %v72 = vmax.f32 %v24, 0.0
  %v73 = vmax.f32 %v25, 0.0
  %v74 = vmax.f32 %v26, 0.0
  %v75 = vmax.f32 %v27, 0.0
  %v76 = vmax.f32 %v28, 0.0
  %v77 = vmax.f32 %v29, 0.0
  %v78 = vmax.f32 %v30, 0.0
  %v79 = vmax.f32 %v31, 0.0
  %v80 = vmax.f32 %v32, 0.0
  %v81 = vmax.f32 %v33, 0.0
  %v82 = vmax.f32 %v34, 0.0
  %v83 = vmax.f32 %v35, 0.0
  %v84 = vmax.f32 %v36, 0.0
  %v85 = vmax.f32 %v37, 0.0
  %v86 = vmax.f32 %v38, 0.0
  %v87 = vmax.f32 %v39, 0.0
  %v88 = vmax.f32 %v40, 0.0
  %v89 = vmax.f32 %v41, 0.0
  %v90 = vmax.f32 %v42, 0.0
  %v91 = vmax.f32 %v43, 0.0
  %v92 = vmax.f32 %v44, 0.0
  %v93 = vmax.f32 %v45, 0.0
  %v94 = vmax.f32 %v46, 0.0
  %v95 = vmax.f32 %v47, 0.0
  %v96 = vmax.f32 %v48, 0.0
  %v97 = vmax.f32 %v49, 0.0
  %v98 = vmax.f32 %v50, 0.0
  %v99 = vmax.f32 %v51, 0.0
  %v100 = vmax.f32 %v52, 0.0
  %v101 = vmax.f32 %v53, 0.0
  %v102 = vmax.f32 %v54, 0.0
  %v103 = vmax.f32 %v55, 0.0
  %v104 = vmax.f32 %v56, 0.0
  %v105 = vmax.f32 %v57, 0.0
  %v106 = vmax.f32 %v58, 0.0
  %v107 = vmax.f32 %v59, 0.0
  %v108 = vmax.f32 %v60, 0.0
  %v109 = vmax.f32 %v61, 0.0
  %v110 = vmax.f32 %v62, 0.0
  %v111 = vmax.f32 %v63, 0.0
  %v112 = vmax.f32 %v64, 0.0
  %v113 = vld [vmem:[%s1] sm:$0xff]
  %v114 = vld [vmem:[%s1 + $0x8] sm:$0xff]
  %v115 = vld [vmem:[%s1 + $0x10] sm:$0xff]
  %v116 = vld [vmem:[%s1 + $0x18] sm:$0xff]
  %v117 = vld [vmem:[%s1 + $0x20] sm:$0xff]
  %v118 = vld [vmem:[%s1 + $0x28] sm:$0xff]
  %v119 = vld [vmem:[%s1 + $0x30] sm:$0xff]
  %v120 = vld [vmem:[%s1 + $0x38] sm:$0xff]
  %v121 = vld [vmem:[%s1 + $0x40] sm:$0xff]
  %v122 = vld [vmem:[%s1 + $0x48] sm:$0xff]
  %v123 = vld [vmem:[%s1 + $0x50] sm:$0xff]
  %v124 = vld [vmem:[%s1 + $0x58] sm:$0xff]
  %v125 = vld [vmem:[%s1 + $0x60] sm:$0xff]
  %v126 = vld [vmem:[%s1 + $0x68] sm:$0xff]
  %v127 = vld [vmem:[%s1 + $0x70] sm:$0xff]
  %v128 = vld [vmem:[%s1 + $0x78] sm:$0xff]
  %v129 = vld [vmem:[%s1 + $0x80] sm:$0xff]
  %v130 = vld [vmem:[%s1 + $0x88] sm:$0xff]
  %v131 = vld [vmem:[%s1 + $0x90] sm:$0xff]
  %v132 = vld [vmem:[%s1 + $0x98] sm:$0xff]
  %v133 = vld [vmem:[%s1 + $0xa0] sm:$0xff]
  %v134 = vld [vmem:[%s1 + $0xa8] sm:$0xff]
  %v135 = vld [vmem:[%s1 + $0xb0] sm:$0xff]
  %v136 = vld [vmem:[%s1 + $0xb8] sm:$0xff]
  %v137 = vld [vmem:[%s1 + $0xc0] sm:$0xff]
  %v138 = vld [vmem:[%s1 + $0xc8] sm:$0xff]
  %v139 = vld [vmem:[%s1 + $0xd0] sm:$0xff]
  %v140 = vld [vmem:[%s1 + $0xd8] sm:$0xff]
  %v141 = vld [vmem:[%s1 + $0xe0] sm:$0xff]
  %v142 = vld [vmem:[%s1 + $0xe8] sm:$0xff]
  %v143 = vld [vmem:[%s1 + $0xf0] sm:$0xff]
  %v144 = vld [vmem:[%s1 + $0xf8] sm:$0xff]
  %v145 = vld [vmem:[%s1 + $0x100] sm:$0xff]
  %v146 = vld [vmem:[%s1 + $0x108] sm:$0xff]
  %v147 = vld [vmem:[%s1 + $0x110] sm:$0xff]
  %v148 = vld [vmem:[%s1 + $0x118] sm:$0xff]
  %v149 = vld [vmem:[%s1 + $0x120] sm:$0xff]
  %v150 = vld [vmem:[%s1 + $0x128] sm:$0xff]
  %v151 = vld [vmem:[%s1 + $0x130] sm:$0xff]
  %v152 = vld [vmem:[%s1 + $0x138] sm:$0xff]
  %v153 = vld [vmem:[%s1 + $0x140] sm:$0xff]
  %v154 = vld [vmem:[%s1 + $0x148] sm:$0xff]
  %v155 = vld [vmem:[%s1 + $0x150] sm:$0xff]
  %v156 = vld [vmem:[%s1 + $0x158] sm:$0xff]
  %v157 = vld [vmem:[%s1 + $0x160] sm:$0xff]
  %v158 = vld [vmem:[%s1 + $0x168] sm:$0xff]
  %v159 = vld [vmem:[%s1 + $0x170] sm:$0xff]
  %v160 = vld [vmem:[%s1 + $0x178] sm:$0xff]
  %161 = vmatprep.subr.mxu0 0.0
  %v162 = vand.u32 %v128, 4294901760
  %163 = vmatpush1.msra.mxu0 %v162
  %164 = vmatprep.subr.mxu0 0.0
  %v165 = vand.u32 %v127, 4294901760
  %166 = vmatpush1.msra.mxu0 %v165
  %167 = vmatprep.subr.mxu0 0.0
  %v168 = vand.u32 %v126, 4294901760
  %169 = vmatpush1.msra.mxu0 %v168
  %170 = vmatprep.subr.mxu0 0.0
  %v171 = vand.u32 %v125, 4294901760
  %172 = vmatpush1.msra.mxu0 %v171
  %173 = vmatprep.subr.mxu0 0.0
  %v174 = vand.u32 %v124, 4294901760
  %175 = vmatpush1.msra.mxu0 %v174
  %176 = vmatprep.subr.mxu0 0.0
  %v177 = vand.u32 %v123, 4294901760
  %178 = vmatpush1.msra.mxu0 %v177
  %179 = vmatprep.subr.mxu0 0.0
  %v180 = vand.u32 %v122, 4294901760
  %181 = vmatpush1.msra.mxu0 %v180
  %182 = vmatprep.subr.mxu0 0.0
  %v183 = vand.u32 %v121, 4294901760
  %184 = vmatpush1.msra.mxu0 %v183
  %185 = vmatprep.subr.mxu0 0.0
  %v186 = vand.u32 %v120, 4294901760
  %187 = vmatpush1.msra.mxu0 %v186
  %188 = vmatprep.subr.mxu0 0.0
  %v189 = vand.u32 %v119, 4294901760
  %190 = vmatpush1.msra.mxu0 %v189
  %191 = vmatprep.subr.mxu0 0.0
  %v192 = vand.u32 %v118, 4294901760
  %193 = vmatpush1.msra.mxu0 %v192
  %194 = vmatprep.subr.mxu0 0.0
  %v195 = vand.u32 %v117, 4294901760
  %196 = vmatpush1.msra.mxu0 %v195
  %197 = vmatprep.subr.mxu0 0.0
  %v198 = vand.u32 %v116, 4294901760
  %199 = vmatpush1.msra.mxu0 %v198
  %200 = vmatprep.subr.mxu0 0.0
  %v201 = vand.u32 %v115, 4294901760
  %202 = vmatpush1.msra.mxu0 %v201
  %203 = vmatprep.subr.mxu0 0.0
  %v204 = vand.u32 %v114, 4294901760
  %205 = vmatpush1.msra.mxu0 %v204
  %206 = vmatprep.subr.mxu0 0.0
  %v207 = vand.u32 %v113, 4294901760
  %208 = vmatpush1.msra.mxu0 %v207
  %209 = vmatprep.subr.mxu0 0.0
  %v210 = vand.u32 %v144, 4294901760
  %211 = vmatpush2.msra.mxu0 %v210
  %212 = vmatprep.subr.mxu0 0.0
  %v213 = vand.u32 %v143, 4294901760
  %214 = vmatpush2.msra.mxu0 %v213
  %215 = vmatprep.subr.mxu0 0.0
  %v216 = vand.u32 %v142, 4294901760
  %217 = vmatpush2.msra.mxu0 %v216
  %218 = vmatprep.subr.mxu0 0.0
  %v219 = vand.u32 %v141, 4294901760
  %220 = vmatpush2.msra.mxu0 %v219
  %221 = vmatprep.subr.mxu0 0.0
  %v222 = vand.u32 %v140, 4294901760
  %223 = vmatpush2.msra.mxu0 %v222
  %224 = vmatprep.subr.mxu0 0.0
  %v225 = vand.u32 %v139, 4294901760
  %226 = vmatpush2.msra.mxu0 %v225
  %227 = vmatprep.subr.mxu0 0.0
  %v228 = vand.u32 %v138, 4294901760
  %229 = vmatpush2.msra.mxu0 %v228
  %230 = vmatprep.subr.mxu0 0.0
  %v231 = vand.u32 %v137, 4294901760
  %232 = vmatpush2.msra.mxu0 %v231
  %233 = vmatprep.subr.mxu0 0.0
  %v234 = vand.u32 %v136, 4294901760
  %235 = vmatpush2.msra.mxu0 %v234
  %236 = vmatprep.subr.mxu0 0.0
  %v237 = vand.u32 %v135, 4294901760
  %238 = vmatpush2.msra.mxu0 %v237
  %239 = vmatprep.subr.mxu0 0.0
  %v240 = vand.u32 %v134, 4294901760
  %241 = vmatpush2.msra.mxu0 %v240
  %242 = vmatprep.subr.mxu0 0.0
  %v243 = vand.u32 %v133, 4294901760
  %244 = vmatpush2.msra.mxu0 %v243
  %245 = vmatprep.subr.mxu0 0.0
  %v246 = vand.u32 %v132, 4294901760
  %247 = vmatpush2.msra.mxu0 %v246
  %248 = vmatprep.subr.mxu0 0.0
  %v249 = vand.u32 %v131, 4294901760
  %250 = vmatpush2.msra.mxu0 %v249
  %251 = vmatprep.subr.mxu0 0.0
  %v252 = vand.u32 %v130, 4294901760
  %253 = vmatpush2.msra.mxu0 %v252
  %254 = vmatprep.subr.mxu0 0.0
  %v255 = vand.u32 %v129, 4294901760
  %256 = vmatpush2.msra.mxu0 %v255
  %v257 = vand.u32 %v66, 4294901760
  %v258 = vsub.f32 %v66, %v257
  %v259 = vand.u32 %v258, 4294901760
  %v260 = vsub.f32 %v258, %v259
  %v261 = vand.u32 %v260, 4294901760
  %262 = vmatprep.mubr.f32.mxu0 %v261
  %v263 = vand.u32 %v65, 4294901760
  %v264 = vsub.f32 %v65, %v263
  %v265 = vand.u32 %v264, 4294901760
  %v266 = vsub.f32 %v264, %v265
  %v267 = vand.u32 %v266, 4294901760
  %268 = vmatmul.mubr.f32.gmra.mxu0 %v267
  %v269 = vpop.f32.mrf.mxu0
  %v270 = vadd.f32 0.0, %v269
  %v271 = vpop.f32.mrf.mxu0
  %v272 = vand.u32 %v69, 4294901760
  %v273 = vsub.f32 %v69, %v272
  %v274 = vand.u32 %v273, 4294901760
  %v275 = vsub.f32 %v273, %v274
  %v276 = vand.u32 %v275, 4294901760
  %277 = vmatprep.mubr.f32.mxu0 %v276
  %v278 = vand.u32 %v68, 4294901760
  %v279 = vsub.f32 %v68, %v278
  %v280 = vand.u32 %v279, 4294901760
  %v281 = vsub.f32 %v279, %v280
  %v282 = vand.u32 %v281, 4294901760
  %283 = vmatmul.mubr.f32.gmra.mxu0 %v282
  %v284 = vpop.f32.mrf.mxu0
  %v285 = vadd.f32 0.0, %v284
  %v286 = vpop.f32.mrf.mxu0
  %v287 = vand.u32 %v72, 4294901760
  %v288 = vsub.f32 %v72, %v287
  %v289 = vand.u32 %v288, 4294901760
  %v290 = vsub.f32 %v288, %v289
  %v291 = vand.u32 %v290, 4294901760
  %292 = vmatprep.mubr.f32.mxu0 %v291
  %v293 = vand.u32 %v71, 4294901760
  %v294 = vsub.f32 %v71, %v293
  %v295 = vand.u32 %v294, 4294901760
  %v296 = vsub.f32 %v294, %v295
  %v297 = vand.u32 %v296, 4294901760
  %298 = vmatmul.mubr.f32.gmra.mxu0 %v297
  %v299 = vpop.f32.mrf.mxu0
  %v300 = vadd.f32 0.0, %v299
  %v301 = vpop.f32.mrf.mxu0
  %v302 = vand.u32 %v75, 4294901760
  %v303 = vsub.f32 %v75, %v302
  %v304 = vand.u32 %v303, 4294901760
  %v305 = vsub.f32 %v303, %v304
  %v306 = vand.u32 %v305, 4294901760
  %307 = vmatprep.mubr.f32.mxu0 %v306
  %v308 = vand.u32 %v74, 4294901760
  %v309 = vsub.f32 %v74, %v308
  %v310 = vand.u32 %v309, 4294901760
  %v311 = vsub.f32 %v309, %v310
  %v312 = vand.u32 %v311, 4294901760
  %313 = vmatmul.mubr.f32.gmra.mxu0 %v312
  %v314 = vpop.f32.mrf.mxu0
  %v315 = vadd.f32 0.0, %v314
  %v316 = vpop.f32.mrf.mxu0
  %v317 = vand.u32 %v78, 4294901760
  %v318 = vsub.f32 %v78, %v317
  %v319 = vand.u32 %v318, 4294901760
  %v320 = vsub.f32 %v318, %v319
  %v321 = vand.u32 %v320, 4294901760
  %322 = vmatprep.mubr.f32.mxu0 %v321
  %v323 = vand.u32 %v77, 4294901760
  %v324 = vsub.f32 %v77, %v323
  %v325 = vand.u32 %v324, 4294901760
  %v326 = vsub.f32 %v324, %v325
  %v327 = vand.u32 %v326, 4294901760
  %328 = vmatmul.mubr.f32.gmra.mxu0 %v327
  %v329 = vpop.f32.mrf.mxu0
  %v330 = vadd.f32 0.0, %v329
  %v331 = vpop.f32.mrf.mxu0
  %v332 = vand.u32 %v81, 4294901760
  %v333 = vsub.f32 %v81, %v332
  %v334 = vand.u32 %v333, 4294901760
  %v335 = vsub.f32 %v333, %v334
  %v336 = vand.u32 %v335, 4294901760
  %337 = vmatprep.mubr.f32.mxu0 %v336
  %v338 = vand.u32 %v80, 4294901760
  %v339 = vsub.f32 %v80, %v338
  %v340 = vand.u32 %v339, 4294901760
  %v341 = vsub.f32 %v339, %v340
  %v342 = vand.u32 %v341, 4294901760
  %343 = vmatmul.mubr.f32.gmra.mxu0 %v342
  %v344 = vpop.f32.mrf.mxu0
  %v345 = vadd.f32 0.0, %v344
  %v346 = vpop.f32.mrf.mxu0
  %v347 = vand.u32 %v84, 4294901760
  %v348 = vsub.f32 %v84, %v347
  %v349 = vand.u32 %v348, 4294901760
  %v350 = vsub.f32 %v348, %v349
  %v351 = vand.u32 %v350, 4294901760
  %352 = vmatprep.mubr.f32.mxu0 %v351
  %v353 = vand.u32 %v83, 4294901760
  %v354 = vsub.f32 %v83, %v353
  %v355 = vand.u32 %v354, 4294901760
  %v356 = vsub.f32 %v354, %v355
  %v357 = vand.u32 %v356, 4294901760
  %358 = vmatmul.mubr.f32.gmra.mxu0 %v357
  %v359 = vpop.f32.mrf.mxu0
  %v360 = vadd.f32 0.0, %v359
  %v361 = vpop.f32.mrf.mxu0
  %v362 = vand.u32 %v87, 4294901760
  %v363 = vsub.f32 %v87, %v362
  %v364 = vand.u32 %v363, 4294901760
  %v365 = vsub.f32 %v363, %v364
  %v366 = vand.u32 %v365, 4294901760
  %367 = vmatprep.mubr.f32.mxu0 %v366
  %v368 = vand.u32 %v86, 4294901760
  %v369 = vsub.f32 %v86, %v368
  %v370 = vand.u32 %v369, 4294901760
  %v371 = vsub.f32 %v369, %v370
  %v372 = vand.u32 %v371, 4294901760
  %373 = vmatmul.mubr.f32.gmra.mxu0 %v372
  %v374 = vpop.f32.mrf.mxu0
  %v375 = vadd.f32 0.0, %v374
  %v376 = vpop.f32.mrf.mxu0
  %v377 = vand.u32 %v90, 4294901760
  %v378 = vsub.f32 %v90, %v377
  %v379 = vand.u32 %v378, 4294901760
  %v380 = vsub.f32 %v378, %v379
  %v381 = vand.u32 %v380, 4294901760
  %382 = vmatprep.mubr.f32.mxu0 %v381
  %v383 = vand.u32 %v89, 4294901760
  %v384 = vsub.f32 %v89, %v383
  %v385 = vand.u32 %v384, 4294901760
  %v386 = vsub.f32 %v384, %v385
  %v387 = vand.u32 %v386, 4294901760
  %388 = vmatmul.mubr.f32.gmra.mxu0 %v387
  %v389 = vpop.f32.mrf.mxu0
  %v390 = vadd.f32 0.0, %v389
  %v391 = vpop.f32.mrf.mxu0
  %v392 = vand.u32 %v93, 4294901760
  %v393 = vsub.f32 %v93, %v392
  %v394 = vand.u32 %v393, 4294901760
  %v395 = vsub.f32 %v393, %v394
  %v396 = vand.u32 %v395, 4294901760
  %397 = vmatprep.mubr.f32.mxu0 %v396
  %v398 = vand.u32 %v92, 4294901760
  %v399 = vsub.f32 %v92, %v398
  %v400 = vand.u32 %v399, 4294901760
  %v401 = vsub.f32 %v399, %v400
  %v402 = vand.u32 %v401, 4294901760
  %403 = vmatmul.mubr.f32.gmra.mxu0 %v402
  %v404 = vpop.f32.mrf.mxu0
  %v405 = vadd.f32 0.0, %v404
  %v406 = vpop.f32.mrf.mxu0
  %v407 = vand.u32 %v96, 4294901760
  %v408 = vsub.f32 %v96, %v407
  %v409 = vand.u32 %v408, 4294901760
  %v410 = vsub.f32 %v408, %v409
  %v411 = vand.u32 %v410, 4294901760
  %412 = vmatprep.mubr.f32.mxu0 %v411
  %v413 = vand.u32 %v95, 4294901760
  %v414 = vsub.f32 %v95, %v413
  %v415 = vand.u32 %v414, 4294901760
  %v416 = vsub.f32 %v414, %v415
  %v417 = vand.u32 %v416, 4294901760
  %418 = vmatmul.mubr.f32.gmra.mxu0 %v417
  %v419 = vpop.f32.mrf.mxu0
  %v420 = vadd.f32 0.0, %v419
  %v421 = vpop.f32.mrf.mxu0
  %v422 = vand.u32 %v99, 4294901760
  %v423 = vsub.f32 %v99, %v422
  %v424 = vand.u32 %v423, 4294901760
  %v425 = vsub.f32 %v423, %v424
  %v426 = vand.u32 %v425, 4294901760
  %427 = vmatprep.mubr.f32.mxu0 %v426
  %v428 = vand.u32 %v98, 4294901760
  %v429 = vsub.f32 %v98, %v428
  %v430 = vand.u32 %v429, 4294901760
  %v431 = vsub.f32 %v429, %v430
  %v432 = vand.u32 %v431, 4294901760
  %433 = vmatmul.mubr.f32.gmra.mxu0 %v432
  %v434 = vpop.f32.mrf.mxu0
  %v435 = vadd.f32 0.0, %v434
  %v436 = vpop.f32.mrf.mxu0
  %v437 = vand.u32 %v102, 4294901760
  %v438 = vsub.f32 %v102, %v437
  %v439 = vand.u32 %v438, 4294901760
  %v440 = vsub.f32 %v438, %v439
  %v441 = vand.u32 %v440, 4294901760
  %442 = vmatprep.mubr.f32.mxu0 %v441
  %v443 = vand.u32 %v101, 4294901760
  %v444 = vsub.f32 %v101, %v443
  %v445 = vand.u32 %v444, 4294901760
  %v446 = vsub.f32 %v444, %v445
  %v447 = vand.u32 %v446, 4294901760
  %448 = vmatmul.mubr.f32.gmra.mxu0 %v447
  %v449 = vpop.f32.mrf.mxu0
  %v450 = vadd.f32 0.0, %v449
  %v451 = vpop.f32.mrf.mxu0
  %v452 = vand.u32 %v105, 4294901760
  %v453 = vsub.f32 %v105, %v452
  %v454 = vand.u32 %v453, 4294901760
  %v455 = vsub.f32 %v453, %v454
  %v456 = vand.u32 %v455, 4294901760
  %457 = vmatprep.mubr.f32.mxu0 %v456
  %v458 = vand.u32 %v104, 4294901760
  %v459 = vsub.f32 %v104, %v458
  %v460 = vand.u32 %v459, 4294901760
  %v461 = vsub.f32 %v459, %v460
  %v462 = vand.u32 %v461, 4294901760
  %463 = vmatmul.mubr.f32.gmra.mxu0 %v462
  %v464 = vpop.f32.mrf.mxu0
  %v465 = vadd.f32 0.0, %v464
  %v466 = vpop.f32.mrf.mxu0
  %v467 = vand.u32 %v108, 4294901760
  %v468 = vsub.f32 %v108, %v467
  %v469 = vand.u32 %v468, 4294901760
  %v470 = vsub.f32 %v468, %v469
  %v471 = vand.u32 %v470, 4294901760
  %472 = vmatprep.mubr.f32.mxu0 %v471
  %v473 = vand.u32 %v107, 4294901760
  %v474 = vsub.f32 %v107, %v473
  %v475 = vand.u32 %v474, 4294901760
  %v476 = vsub.f32 %v474, %v475
  %v477 = vand.u32 %v476, 4294901760
  %478 = vmatmul.mubr.f32.gmra.mxu0 %v477
  %v479 = vpop.f32.mrf.mxu0
  %v480 = vadd.f32 0.0, %v479
  %v481 = vpop.f32.mrf.mxu0
  %v482 = vand.u32 %v111, 4294901760
  %v483 = vsub.f32 %v111, %v482
  %v484 = vand.u32 %v483, 4294901760
  %v485 = vsub.f32 %v483, %v484
  %v486 = vand.u32 %v485, 4294901760
  %487 = vmatprep.mubr.f32.mxu0 %v486
  %v488 = vand.u32 %v110, 4294901760
  %v489 = vsub.f32 %v110, %v488
  %v490 = vand.u32 %v489, 4294901760
  %v491 = vsub.f32 %v489, %v490
  %v492 = vand.u32 %v491, 4294901760
  %493 = vmatmul.mubr.f32.gmra.mxu0 %v492
  %v494 = vpop.f32.mrf.mxu0
  %v495 = vadd.f32 0.0, %v494
  %v496 = vpop.f32.mrf.mxu0
  %497 = vdwg.mxu0
  %498 = vmatprep.subr.mxu0 0.0
  %v499 = vand.u32 %v128, 4294901760
  %v500 = vsub.f32 %v128, %v499
  %v501 = vand.u32 %v500, 4294901760
  %v502 = vsub.f32 %v500, %v501
  %v503 = vand.u32 %v502, 4294901760
  %504 = vmatpush1.msra.mxu0 %v503
  %505 = vmatprep.subr.mxu0 0.0
  %v506 = vand.u32 %v127, 4294901760
  %v507 = vsub.f32 %v127, %v506
  %v508 = vand.u32 %v507, 4294901760
  %v509 = vsub.f32 %v507, %v508
  %v510 = vand.u32 %v509, 4294901760
  %511 = vmatpush1.msra.mxu0 %v510
  %512 = vmatprep.subr.mxu0 0.0
  %v513 = vand.u32 %v126, 4294901760
  %v514 = vsub.f32 %v126, %v513
  %v515 = vand.u32 %v514, 4294901760
  %v516 = vsub.f32 %v514, %v515
  %v517 = vand.u32 %v516, 4294901760
  %518 = vmatpush1.msra.mxu0 %v517
  %519 = vmatprep.subr.mxu0 0.0
  %v520 = vand.u32 %v125, 4294901760
  %v521 = vsub.f32 %v125, %v520
  %v522 = vand.u32 %v521, 4294901760
  %v523 = vsub.f32 %v521, %v522
  %v524 = vand.u32 %v523, 4294901760
  %525 = vmatpush1.msra.mxu0 %v524
  %526 = vmatprep.subr.mxu0 0.0
  %v527 = vand.u32 %v124, 4294901760
  %v528 = vsub.f32 %v124, %v527
  %v529 = vand.u32 %v528, 4294901760
  %v530 = vsub.f32 %v528, %v529
  %v531 = vand.u32 %v530, 4294901760
  %532 = vmatpush1.msra.mxu0 %v531
  %533 = vmatprep.subr.mxu0 0.0
  %v534 = vand.u32 %v123, 4294901760
  %v535 = vsub.f32 %v123, %v534
  %v536 = vand.u32 %v535, 4294901760
  %v537 = vsub.f32 %v535, %v536
  %v538 = vand.u32 %v537, 4294901760
  %539 = vmatpush1.msra.mxu0 %v538
  %540 = vmatprep.subr.mxu0 0.0
  %v541 = vand.u32 %v122, 4294901760
  %v542 = vsub.f32 %v122, %v541
  %v543 = vand.u32 %v542, 4294901760
  %v544 = vsub.f32 %v542, %v543
  %v545 = vand.u32 %v544, 4294901760
  %546 = vmatpush1.msra.mxu0 %v545
  %547 = vmatprep.subr.mxu0 0.0
  %v548 = vand.u32 %v121, 4294901760
  %v549 = vsub.f32 %v121, %v548
  %v550 = vand.u32 %v549, 4294901760
  %v551 = vsub.f32 %v549, %v550
  %v552 = vand.u32 %v551, 4294901760
  %553 = vmatpush1.msra.mxu0 %v552
  %554 = vmatprep.subr.mxu0 0.0
  %v555 = vand.u32 %v120, 4294901760
  %v556 = vsub.f32 %v120, %v555
  %v557 = vand.u32 %v556, 4294901760
  %v558 = vsub.f32 %v556, %v557
  %v559 = vand.u32 %v558, 4294901760
  %560 = vmatpush1.msra.mxu0 %v559
  %561 = vmatprep.subr.mxu0 0.0
  %v562 = vand.u32 %v119, 4294901760
  %v563 = vsub.f32 %v119, %v562
  %v564 = vand.u32 %v563, 4294901760
  %v565 = vsub.f32 %v563, %v564
  %v566 = vand.u32 %v565, 4294901760
  %567 = vmatpush1.msra.mxu0 %v566
  %568 = vmatprep.subr.mxu0 0.0
  %v569 = vand.u32 %v118, 4294901760
  %v570 = vsub.f32 %v118, %v569
  %v571 = vand.u32 %v570, 4294901760
  %v572 = vsub.f32 %v570, %v571
  %v573 = vand.u32 %v572, 4294901760
  %574 = vmatpush1.msra.mxu0 %v573
  %575 = vmatprep.subr.mxu0 0.0
  %v576 = vand.u32 %v117, 4294901760
  %v577 = vsub.f32 %v117, %v576
  %v578 = vand.u32 %v577, 4294901760
  %v579 = vsub.f32 %v577, %v578
  %v580 = vand.u32 %v579, 4294901760
  %581 = vmatpush1.msra.mxu0 %v580
  %582 = vmatprep.subr.mxu0 0.0
  %v583 = vand.u32 %v116, 4294901760
  %v584 = vsub.f32 %v116, %v583
  %v585 = vand.u32 %v584, 4294901760
  %v586 = vsub.f32 %v584, %v585
  %v587 = vand.u32 %v586, 4294901760
  %588 = vmatpush1.msra.mxu0 %v587
  %589 = vmatprep.subr.mxu0 0.0
  %v590 = vand.u32 %v115, 4294901760
  %v591 = vsub.f32 %v115, %v590
  %v592 = vand.u32 %v591, 4294901760
  %v593 = vsub.f32 %v591, %v592
  %v594 = vand.u32 %v593, 4294901760
  %595 = vmatpush1.msra.mxu0 %v594
  %596 = vmatprep.subr.mxu0 0.0
  %v597 = vand.u32 %v114, 4294901760
  %v598 = vsub.f32 %v114, %v597
  %v599 = vand.u32 %v598, 4294901760
  %v600 = vsub.f32 %v598, %v599
  %v601 = vand.u32 %v600, 4294901760
  %602 = vmatpush1.msra.mxu0 %v601
  %603 = vmatprep.subr.mxu0 0.0
  %v604 = vand.u32 %v113, 4294901760
  %v605 = vsub.f32 %v113, %v604
  %v606 = vand.u32 %v605, 4294901760
  %v607 = vsub.f32 %v605, %v606
  %v608 = vand.u32 %v607, 4294901760
  %609 = vmatpush1.msra.mxu0 %v608
  %610 = vmatprep.subr.mxu0 0.0
  %v611 = vand.u32 %v144, 4294901760
  %v612 = vsub.f32 %v144, %v611
  %v613 = vand.u32 %v612, 4294901760
  %v614 = vsub.f32 %v612, %v613
  %v615 = vand.u32 %v614, 4294901760
  %616 = vmatpush2.msra.mxu0 %v615
  %617 = vmatprep.subr.mxu0 0.0
  %v618 = vand.u32 %v143, 4294901760
  %v619 = vsub.f32 %v143, %v618
  %v620 = vand.u32 %v619, 4294901760
  %v621 = vsub.f32 %v619, %v620
  %v622 = vand.u32 %v621, 4294901760
  %623 = vmatpush2.msra.mxu0 %v622
  %624 = vmatprep.subr.mxu0 0.0
  %v625 = vand.u32 %v142, 4294901760
  %v626 = vsub.f32 %v142, %v625
  %v627 = vand.u32 %v626, 4294901760
  %v628 = vsub.f32 %v626, %v627
  %v629 = vand.u32 %v628, 4294901760
  %630 = vmatpush2.msra.mxu0 %v629
  %631 = vmatprep.subr.mxu0 0.0
  %v632 = vand.u32 %v141, 4294901760
  %v633 = vsub.f32 %v141, %v632
  %v634 = vand.u32 %v633, 4294901760
  %v635 = vsub.f32 %v633, %v634
  %v636 = vand.u32 %v635, 4294901760
  %637 = vmatpush2.msra.mxu0 %v636
  %638 = vmatprep.subr.mxu0 0.0
  %v639 = vand.u32 %v140, 4294901760
  %v640 = vsub.f32 %v140, %v639
  %v641 = vand.u32 %v640, 4294901760
  %v642 = vsub.f32 %v640, %v641
  %v643 = vand.u32 %v642, 4294901760
  %644 = vmatpush2.msra.mxu0 %v643
  %645 = vmatprep.subr.mxu0 0.0
  %v646 = vand.u32 %v139, 4294901760
  %v647 = vsub.f32 %v139, %v646
  %v648 = vand.u32 %v647, 4294901760
  %v649 = vsub.f32 %v647, %v648
  %v650 = vand.u32 %v649, 4294901760
  %651 = vmatpush2.msra.mxu0 %v650
  %652 = vmatprep.subr.mxu0 0.0
  %v653 = vand.u32 %v138, 4294901760
  %v654 = vsub.f32 %v138, %v653
  %v655 = vand.u32 %v654, 4294901760
  %v656 = vsub.f32 %v654, %v655
  %v657 = vand.u32 %v656, 4294901760
  %658 = vmatpush2.msra.mxu0 %v657
  %659 = vmatprep.subr.mxu0 0.0
  %v660 = vand.u32 %v137, 4294901760
  %v661 = vsub.f32 %v137, %v660
  %v662 = vand.u32 %v661, 4294901760
  %v663 = vsub.f32 %v661, %v662
  %v664 = vand.u32 %v663, 4294901760
  %665 = vmatpush2.msra.mxu0 %v664
  %666 = vmatprep.subr.mxu0 0.0
  %v667 = vand.u32 %v136, 4294901760
  %v668 = vsub.f32 %v136, %v667
  %v669 = vand.u32 %v668, 4294901760
  %v670 = vsub.f32 %v668, %v669
  %v671 = vand.u32 %v670, 4294901760
  %672 = vmatpush2.msra.mxu0 %v671
  %673 = vmatprep.subr.mxu0 0.0
  %v674 = vand.u32 %v135, 4294901760
  %v675 = vsub.f32 %v135, %v674
  %v676 = vand.u32 %v675, 4294901760
  %v677 = vsub.f32 %v675, %v676
  %v678 = vand.u32 %v677, 4294901760
  %679 = vmatpush2.msra.mxu0 %v678
  %680 = vmatprep.subr.mxu0 0.0
  %v681 = vand.u32 %v134, 4294901760
  %v682 = vsub.f32 %v134, %v681
  %v683 = vand.u32 %v682, 4294901760
  %v684 = vsub.f32 %v682, %v683
  %v685 = vand.u32 %v684, 4294901760
  %686 = vmatpush2.msra.mxu0 %v685
  %687 = vmatprep.subr.mxu0 0.0
  %v688 = vand.u32 %v133, 4294901760
  %v689 = vsub.f32 %v133, %v688
  %v690 = vand.u32 %v689, 4294901760
  %v691 = vsub.f32 %v689, %v690
  %v692 = vand.u32 %v691, 4294901760
  %693 = vmatpush2.msra.mxu0 %v692
  %694 = vmatprep.subr.mxu0 0.0
  %v695 = vand.u32 %v132, 4294901760
  %v696 = vsub.f32 %v132, %v695
  %v697 = vand.u32 %v696, 4294901760
  %v698 = vsub.f32 %v696, %v697
  %v699 = vand.u32 %v698, 4294901760
  %700 = vmatpush2.msra.mxu0 %v699
  %701 = vmatprep.subr.mxu0 0.0
  %v702 = vand.u32 %v131, 4294901760
  %v703 = vsub.f32 %v131, %v702
  %v704 = vand.u32 %v703, 4294901760
  %v705 = vsub.f32 %v703, %v704
  %v706 = vand.u32 %v705, 4294901760
  %707 = vmatpush2.msra.mxu0 %v706
  %708 = vmatprep.subr.mxu0 0.0
  %v709 = vand.u32 %v130, 4294901760
  %v710 = vsub.f32 %v130, %v709
  %v711 = vand.u32 %v710, 4294901760
  %v712 = vsub.f32 %v710, %v711
  %v713 = vand.u32 %v712, 4294901760
  %714 = vmatpush2.msra.mxu0 %v713
  %715 = vmatprep.subr.mxu0 0.0
  %v716 = vand.u32 %v129, 4294901760
  %v717 = vsub.f32 %v129, %v716
  %v718 = vand.u32 %v717, 4294901760
  %v719 = vsub.f32 %v717, %v718
  %v720 = vand.u32 %v719, 4294901760
  %721 = vmatpush2.msra.mxu0 %v720
  %v722 = vand.u32 %v66, 4294901760
  %723 = vmatprep.mubr.f32.mxu0 %v722
  %v724 = vand.u32 %v65, 4294901760
  %725 = vmatmul.mubr.f32.gmra.mxu0 %v724
  %v726 = vpop.f32.mrf.mxu0
  %v727 = vadd.f32 %v270, %v726
  %v728 = vpop.f32.mrf.mxu0
  %v729 = vand.u32 %v69, 4294901760
  %730 = vmatprep.mubr.f32.mxu0 %v729
  %v731 = vand.u32 %v68, 4294901760
  %732 = vmatmul.mubr.f32.gmra.mxu0 %v731
  %v733 = vpop.f32.mrf.mxu0
  %v734 = vadd.f32 %v285, %v733
  %v735 = vpop.f32.mrf.mxu0
  %v736 = vand.u32 %v72, 4294901760
  %737 = vmatprep.mubr.f32.mxu0 %v736
  %v738 = vand.u32 %v71, 4294901760
  %739 = vmatmul.mubr.f32.gmra.mxu0 %v738
  %v740 = vpop.f32.mrf.mxu0
  %v741 = vadd.f32 %v300, %v740
  %v742 = vpop.f32.mrf.mxu0
  %v743 = vand.u32 %v75, 4294901760
  %744 = vmatprep.mubr.f32.mxu0 %v743
  %v745 = vand.u32 %v74, 4294901760
  %746 = vmatmul.mubr.f32.gmra.mxu0 %v745
  %v747 = vpop.f32.mrf.mxu0
  %v748 = vadd.f32 %v315, %v747
  %v749 = vpop.f32.mrf.mxu0
  %v750 = vand.u32 %v78, 4294901760
  %751 = vmatprep.mubr.f32.mxu0 %v750
  %v752 = vand.u32 %v77, 4294901760
  %753 = vmatmul.mubr.f32.gmra.mxu0 %v752
  %v754 = vpop.f32.mrf.mxu0
  %v755 = vadd.f32 %v330, %v754
  %v756 = vpop.f32.mrf.mxu0
  %v757 = vand.u32 %v81, 4294901760
  %758 = vmatprep.mubr.f32.mxu0 %v757
  %v759 = vand.u32 %v80, 4294901760
  %760 = vmatmul.mubr.f32.gmra.mxu0 %v759
  %v761 = vpop.f32.mrf.mxu0
  %v762 = vadd.f32 %v345, %v761
  %v763 = vpop.f32.mrf.mxu0
  %v764 = vand.u32 %v84, 4294901760
  %765 = vmatprep.mubr.f32.mxu0 %v764
  %v766 = vand.u32 %v83, 4294901760
  %767 = vmatmul.mubr.f32.gmra.mxu0 %v766
  %v768 = vpop.f32.mrf.mxu0
  %v769 = vadd.f32 %v360, %v768
  %v770 = vpop.f32.mrf.mxu0
  %v771 = vand.u32 %v87, 4294901760
  %772 = vmatprep.mubr.f32.mxu0 %v771
  %v773 = vand.u32 %v86, 4294901760
  %774 = vmatmul.mubr.f32.gmra.mxu0 %v773
  %v775 = vpop.f32.mrf.mxu0
  %v776 = vadd.f32 %v375, %v775
  %v777 = vpop.f32.mrf.mxu0
  %v778 = vand.u32 %v90, 4294901760
  %779 = vmatprep.mubr.f32.mxu0 %v778
  %v780 = vand.u32 %v89, 4294901760
  %781 = vmatmul.mubr.f32.gmra.mxu0 %v780
  %v782 = vpop.f32.mrf.mxu0
  %v783 = vadd.f32 %v390, %v782
  %v784 = vpop.f32.mrf.mxu0
  %v785 = vand.u32 %v93, 4294901760
  %786 = vmatprep.mubr.f32.mxu0 %v785
  %v787 = vand.u32 %v92, 4294901760
  %788 = vmatmul.mubr.f32.gmra.mxu0 %v787
  %v789 = vpop.f32.mrf.mxu0
  %v790 = vadd.f32 %v405, %v789
  %v791 = vpop.f32.mrf.mxu0
  %v792 = vand.u32 %v96, 4294901760
  %793 = vmatprep.mubr.f32.mxu0 %v792
  %v794 = vand.u32 %v95, 4294901760
  %795 = vmatmul.mubr.f32.gmra.mxu0 %v794
  %v796 = vpop.f32.mrf.mxu0
  %v797 = vadd.f32 %v420, %v796
  %v798 = vpop.f32.mrf.mxu0
  %v799 = vand.u32 %v99, 4294901760
  %800 = vmatprep.mubr.f32.mxu0 %v799
  %v801 = vand.u32 %v98, 4294901760
  %802 = vmatmul.mubr.f32.gmra.mxu0 %v801
  %v803 = vpop.f32.mrf.mxu0
  %v804 = vadd.f32 %v435, %v803
  %v805 = vpop.f32.mrf.mxu0
  %v806 = vand.u32 %v102, 4294901760
  %807 = vmatprep.mubr.f32.mxu0 %v806
  %v808 = vand.u32 %v101, 4294901760
  %809 = vmatmul.mubr.f32.gmra.mxu0 %v808
  %v810 = vpop.f32.mrf.mxu0
  %v811 = vadd.f32 %v450, %v810
  %v812 = vpop.f32.mrf.mxu0
  %v813 = vand.u32 %v105, 4294901760
  %814 = vmatprep.mubr.f32.mxu0 %v813
  %v815 = vand.u32 %v104, 4294901760
  %816 = vmatmul.mubr.f32.gmra.mxu0 %v815
  %v817 = vpop.f32.mrf.mxu0
  %v818 = vadd.f32 %v465, %v817
  %v819 = vpop.f32.mrf.mxu0
  %v820 = vand.u32 %v108, 4294901760
  %821 = vmatprep.mubr.f32.mxu0 %v820
  %v822 = vand.u32 %v107, 4294901760
  %823 = vmatmul.mubr.f32.gmra.mxu0 %v822
  %v824 = vpop.f32.mrf.mxu0
  %v825 = vadd.f32 %v480, %v824
  %v826 = vpop.f32.mrf.mxu0
  %v827 = vand.u32 %v111, 4294901760
  %828 = vmatprep.mubr.f32.mxu0 %v827
  %v829 = vand.u32 %v110, 4294901760
  %830 = vmatmul.mubr.f32.gmra.mxu0 %v829
  %v831 = vpop.f32.mrf.mxu0
  %v832 = vadd.f32 %v495, %v831
  %v833 = vpop.f32.mrf.mxu0
  %834 = vdwg.mxu0
  %835 = vmatprep.subr.mxu0 0.0
  %v836 = vand.u32 %v128, 4294901760
  %v837 = vsub.f32 %v128, %v836
  %838 = vmatpush1.msra.mxu0 %v837
  %839 = vmatprep.subr.mxu0 0.0
  %v840 = vand.u32 %v127, 4294901760
  %v841 = vsub.f32 %v127, %v840
  %842 = vmatpush1.msra.mxu0 %v841
  %843 = vmatprep.subr.mxu0 0.0
  %v844 = vand.u32 %v126, 4294901760
  %v845 = vsub.f32 %v126, %v844
  %846 = vmatpush1.msra.mxu0 %v845
  %847 = vmatprep.subr.mxu0 0.0
  %v848 = vand.u32 %v125, 4294901760
  %v849 = vsub.f32 %v125, %v848
  %850 = vmatpush1.msra.mxu0 %v849
  %851 = vmatprep.subr.mxu0 0.0
  %v852 = vand.u32 %v124, 4294901760
  %v853 = vsub.f32 %v124, %v852
  %854 = vmatpush1.msra.mxu0 %v853
  %855 = vmatprep.subr.mxu0 0.0
  %v856 = vand.u32 %v123, 4294901760
  %v857 = vsub.f32 %v123, %v856
  %858 = vmatpush1.msra.mxu0 %v857
  %859 = vmatprep.subr.mxu0 0.0
  %v860 = vand.u32 %v122, 4294901760
  %v861 = vsub.f32 %v122, %v860
  %862 = vmatpush1.msra.mxu0 %v861
  %863 = vmatprep.subr.mxu0 0.0
  %v864 = vand.u32 %v121, 4294901760
  %v865 = vsub.f32 %v121, %v864
  %866 = vmatpush1.msra.mxu0 %v865
  %867 = vmatprep.subr.mxu0 0.0
  %v868 = vand.u32 %v120, 4294901760
  %v869 = vsub.f32 %v120, %v868
  %870 = vmatpush1.msra.mxu0 %v869
  %871 = vmatprep.subr.mxu0 0.0
  %v872 = vand.u32 %v119, 4294901760
  %v873 = vsub.f32 %v119, %v872
  %874 = vmatpush1.msra.mxu0 %v873
  %875 = vmatprep.subr.mxu0 0.0
  %v876 = vand.u32 %v118, 4294901760
  %v877 = vsub.f32 %v118, %v876
  %878 = vmatpush1.msra.mxu0 %v877
  %879 = vmatprep.subr.mxu0 0.0
  %v880 = vand.u32 %v117, 4294901760
  %v881 = vsub.f32 %v117, %v880
  %882 = vmatpush1.msra.mxu0 %v881
  %883 = vmatprep.subr.mxu0 0.0
  %v884 = vand.u32 %v116, 4294901760
  %v885 = vsub.f32 %v116, %v884
  %886 = vmatpush1.msra.mxu0 %v885
  %887 = vmatprep.subr.mxu0 0.0
  %v888 = vand.u32 %v115, 4294901760
  %v889 = vsub.f32 %v115, %v888
  %890 = vmatpush1.msra.mxu0 %v889
  %891 = vmatprep.subr.mxu0 0.0
  %v892 = vand.u32 %v114, 4294901760
  %v893 = vsub.f32 %v114, %v892
  %894 = vmatpush1.msra.mxu0 %v893
  %895 = vmatprep.subr.mxu0 0.0
  %v896 = vand.u32 %v113, 4294901760
  %v897 = vsub.f32 %v113, %v896
  %898 = vmatpush1.msra.mxu0 %v897
  %899 = vmatprep.subr.mxu0 0.0
  %v900 = vand.u32 %v144, 4294901760
  %v901 = vsub.f32 %v144, %v900
  %902 = vmatpush2.msra.mxu0 %v901
  %903 = vmatprep.subr.mxu0 0.0
  %v904 = vand.u32 %v143, 4294901760
  %v905 = vsub.f32 %v143, %v904
  %906 = vmatpush2.msra.mxu0 %v905
  %907 = vmatprep.subr.mxu0 0.0
  %v908 = vand.u32 %v142, 4294901760
  %v909 = vsub.f32 %v142, %v908
  %910 = vmatpush2.msra.mxu0 %v909
  %911 = vmatprep.subr.mxu0 0.0
  %v912 = vand.u32 %v141, 4294901760
  %v913 = vsub.f32 %v141, %v912
  %914 = vmatpush2.msra.mxu0 %v913
  %915 = vmatprep.subr.mxu0 0.0
  %v916 = vand.u32 %v140, 4294901760
  %v917 = vsub.f32 %v140, %v916
  %918 = vmatpush2.msra.mxu0 %v917
  %919 = vmatprep.subr.mxu0 0.0
  %v920 = vand.u32 %v139, 4294901760
  %v921 = vsub.f32 %v139, %v920
  %922 = vmatpush2.msra.mxu0 %v921
  %923 = vmatprep.subr.mxu0 0.0
  %v924 = vand.u32 %v138, 4294901760
  %v925 = vsub.f32 %v138, %v924
  %926 = vmatpush2.msra.mxu0 %v925
  %927 = vmatprep.subr.mxu0 0.0
  %v928 = vand.u32 %v137, 4294901760
  %v929 = vsub.f32 %v137, %v928
  %930 = vmatpush2.msra.mxu0 %v929
  %931 = vmatprep.subr.mxu0 0.0
  %v932 = vand.u32 %v136, 4294901760
  %v933 = vsub.f32 %v136, %v932
  %934 = vmatpush2.msra.mxu0 %v933
  %935 = vmatprep.subr.mxu0 0.0
  %v936 = vand.u32 %v135, 4294901760
  %v937 = vsub.f32 %v135, %v936
  %938 = vmatpush2.msra.mxu0 %v937
  %939 = vmatprep.subr.mxu0 0.0
  %v940 = vand.u32 %v134, 4294901760
  %v941 = vsub.f32 %v134, %v940
  %942 = vmatpush2.msra.mxu0 %v941
  %943 = vmatprep.subr.mxu0 0.0
  %v944 = vand.u32 %v133, 4294901760
  %v945 = vsub.f32 %v133, %v944
  %946 = vmatpush2.msra.mxu0 %v945
  %947 = vmatprep.subr.mxu0 0.0
  %v948 = vand.u32 %v132, 4294901760
  %v949 = vsub.f32 %v132, %v948
  %950 = vmatpush2.msra.mxu0 %v949
  %951 = vmatprep.subr.mxu0 0.0
  %v952 = vand.u32 %v131, 4294901760
  %v953 = vsub.f32 %v131, %v952
  %954 = vmatpush2.msra.mxu0 %v953
  %955 = vmatprep.subr.mxu0 0.0
  %v956 = vand.u32 %v130, 4294901760
  %v957 = vsub.f32 %v130, %v956
  %958 = vmatpush2.msra.mxu0 %v957
  %959 = vmatprep.subr.mxu0 0.0
  %v960 = vand.u32 %v129, 4294901760
  %v961 = vsub.f32 %v129, %v960
  %962 = vmatpush2.msra.mxu0 %v961
  %v963 = vand.u32 %v66, 4294901760
  %v964 = vsub.f32 %v66, %v963
  %965 = vmatprep.mubr.f32.mxu0 %v964
  %v966 = vand.u32 %v65, 4294901760
  %v967 = vsub.f32 %v65, %v966
  %968 = vmatmul.mubr.f32.gmra.mxu0 %v967
  %v969 = vpop.f32.mrf.mxu0
  %v970 = vadd.f32 %v727, %v969
  %v971 = vpop.f32.mrf.mxu0
  %v972 = vand.u32 %v69, 4294901760
  %v973 = vsub.f32 %v69, %v972
  %974 = vmatprep.mubr.f32.mxu0 %v973
  %v975 = vand.u32 %v68, 4294901760
  %v976 = vsub.f32 %v68, %v975
  %977 = vmatmul.mubr.f32.gmra.mxu0 %v976
  %v978 = vpop.f32.mrf.mxu0
  %v979 = vadd.f32 %v734, %v978
  %v980 = vpop.f32.mrf.mxu0
  %v981 = vand.u32 %v72, 4294901760
  %v982 = vsub.f32 %v72, %v981
  %983 = vmatprep.mubr.f32.mxu0 %v982
  %v984 = vand.u32 %v71, 4294901760
  %v985 = vsub.f32 %v71, %v984
  %986 = vmatmul.mubr.f32.gmra.mxu0 %v985
  %v987 = vpop.f32.mrf.mxu0
  %v988 = vadd.f32 %v741, %v987
  %v989 = vpop.f32.mrf.mxu0
  %v990 = vand.u32 %v75, 4294901760
  %v991 = vsub.f32 %v75, %v990
  %992 = vmatprep.mubr.f32.mxu0 %v991
  %v993 = vand.u32 %v74, 4294901760
  %v994 = vsub.f32 %v74, %v993
  %995 = vmatmul.mubr.f32.gmra.mxu0 %v994
  %v996 = vpop.f32.mrf.mxu0
  %v997 = vadd.f32 %v748, %v996
  %v998 = vpop.f32.mrf.mxu0
  %v999 = vand.u32 %v78, 4294901760
  %v1000 = vsub.f32 %v78, %v999
  %1001 = vmatprep.mubr.f32.mxu0 %v1000
  %v1002 = vand.u32 %v77, 4294901760
  %v1003 = vsub.f32 %v77, %v1002
  %1004 = vmatmul.mubr.f32.gmra.mxu0 %v1003
  %v1005 = vpop.f32.mrf.mxu0
  %v1006 = vadd.f32 %v755, %v1005
  %v1007 = vpop.f32.mrf.mxu0
  %v1008 = vand.u32 %v81, 4294901760
  %v1009 = vsub.f32 %v81, %v1008
  %1010 = vmatprep.mubr.f32.mxu0 %v1009
  %v1011 = vand.u32 %v80, 4294901760
  %v1012 = vsub.f32 %v80, %v1011
  %1013 = vmatmul.mubr.f32.gmra.mxu0 %v1012
  %v1014 = vpop.f32.mrf.mxu0
  %v1015 = vadd.f32 %v762, %v1014
  %v1016 = vpop.f32.mrf.mxu0
  %v1017 = vand.u32 %v84, 4294901760
  %v1018 = vsub.f32 %v84, %v1017
  %1019 = vmatprep.mubr.f32.mxu0 %v1018
  %v1020 = vand.u32 %v83, 4294901760
  %v1021 = vsub.f32 %v83, %v1020
  %1022 = vmatmul.mubr.f32.gmra.mxu0 %v1021
  %v1023 = vpop.f32.mrf.mxu0
  %v1024 = vadd.f32 %v769, %v1023
  %v1025 = vpop.f32.mrf.mxu0
  %v1026 = vand.u32 %v87, 4294901760
  %v1027 = vsub.f32 %v87, %v1026
  %1028 = vmatprep.mubr.f32.mxu0 %v1027
  %v1029 = vand.u32 %v86, 4294901760
  %v1030 = vsub.f32 %v86, %v1029
  %1031 = vmatmul.mubr.f32.gmra.mxu0 %v1030
  %v1032 = vpop.f32.mrf.mxu0
  %v1033 = vadd.f32 %v776, %v1032
  %v1034 = vpop.f32.mrf.mxu0
  %v1035 = vand.u32 %v90, 4294901760
  %v1036 = vsub.f32 %v90, %v1035
  %1037 = vmatprep.mubr.f32.mxu0 %v1036
  %v1038 = vand.u32 %v89, 4294901760
  %v1039 = vsub.f32 %v89, %v1038
  %1040 = vmatmul.mubr.f32.gmra.mxu0 %v1039
  %v1041 = vpop.f32.mrf.mxu0
  %v1042 = vadd.f32 %v783, %v1041
  %v1043 = vpop.f32.mrf.mxu0
  %v1044 = vand.u32 %v93, 4294901760
  %v1045 = vsub.f32 %v93, %v1044
  %1046 = vmatprep.mubr.f32.mxu0 %v1045
  %v1047 = vand.u32 %v92, 4294901760
  %v1048 = vsub.f32 %v92, %v1047
  %1049 = vmatmul.mubr.f32.gmra.mxu0 %v1048
  %v1050 = vpop.f32.mrf.mxu0
  %v1051 = vadd.f32 %v790, %v1050
  %v1052 = vpop.f32.mrf.mxu0
  %v1053 = vand.u32 %v96, 4294901760
  %v1054 = vsub.f32 %v96, %v1053
  %1055 = vmatprep.mubr.f32.mxu0 %v1054
  %v1056 = vand.u32 %v95, 4294901760
  %v1057 = vsub.f32 %v95, %v1056
  %1058 = vmatmul.mubr.f32.gmra.mxu0 %v1057
  %v1059 = vpop.f32.mrf.mxu0
  %v1060 = vadd.f32 %v797, %v1059
  %v1061 = vpop.f32.mrf.mxu0
  %v1062 = vand.u32 %v99, 4294901760
  %v1063 = vsub.f32 %v99, %v1062
  %1064 = vmatprep.mubr.f32.mxu0 %v1063
  %v1065 = vand.u32 %v98, 4294901760
  %v1066 = vsub.f32 %v98, %v1065
  %1067 = vmatmul.mubr.f32.gmra.mxu0 %v1066
  %v1068 = vpop.f32.mrf.mxu0
  %v1069 = vadd.f32 %v804, %v1068
  %v1070 = vpop.f32.mrf.mxu0
  %v1071 = vand.u32 %v102, 4294901760
  %v1072 = vsub.f32 %v102, %v1071
  %1073 = vmatprep.mubr.f32.mxu0 %v1072
  %v1074 = vand.u32 %v101, 4294901760
  %v1075 = vsub.f32 %v101, %v1074
  %1076 = vmatmul.mubr.f32.gmra.mxu0 %v1075
  %v1077 = vpop.f32.mrf.mxu0
  %v1078 = vadd.f32 %v811, %v1077
  %v1079 = vpop.f32.mrf.mxu0
  %v1080 = vand.u32 %v105, 4294901760
  %v1081 = vsub.f32 %v105, %v1080
  %1082 = vmatprep.mubr.f32.mxu0 %v1081
  %v1083 = vand.u32 %v104, 4294901760
  %v1084 = vsub.f32 %v104, %v1083
  %1085 = vmatmul.mubr.f32.gmra.mxu0 %v1084
  %v1086 = vpop.f32.mrf.mxu0
  %v1087 = vadd.f32 %v818, %v1086
  %v1088 = vpop.f32.mrf.mxu0
  %v1089 = vand.u32 %v108, 4294901760
  %v1090 = vsub.f32 %v108, %v1089
  %1091 = vmatprep.mubr.f32.mxu0 %v1090
  %v1092 = vand.u32 %v107, 4294901760
  %v1093 = vsub.f32 %v107, %v1092
  %1094 = vmatmul.mubr.f32.gmra.mxu0 %v1093
  %v1095 = vpop.f32.mrf.mxu0
  %v1096 = vadd.f32 %v825, %v1095
  %v1097 = vpop.f32.mrf.mxu0
  %v1098 = vand.u32 %v111, 4294901760
  %v1099 = vsub.f32 %v111, %v1098
  %1100 = vmatprep.mubr.f32.mxu0 %v1099
  %v1101 = vand.u32 %v110, 4294901760
  %v1102 = vsub.f32 %v110, %v1101
  %1103 = vmatmul.mubr.f32.gmra.mxu0 %v1102
  %v1104 = vpop.f32.mrf.mxu0
  %v1105 = vadd.f32 %v832, %v1104
  %v1106 = vpop.f32.mrf.mxu0
  %1107 = vdwg.mxu0
  %1108 = vmatprep.subr.mxu0 0.0
  %v1109 = vand.u32 %v128, 4294901760
  %1110 = vmatpush1.msra.mxu0 %v1109
  %1111 = vmatprep.subr.mxu0 0.0
  %v1112 = vand.u32 %v127, 4294901760
  %1113 = vmatpush1.msra.mxu0 %v1112
  %1114 = vmatprep.subr.mxu0 0.0
  %v1115 = vand.u32 %v126, 4294901760
  %1116 = vmatpush1.msra.mxu0 %v1115
  %1117 = vmatprep.subr.mxu0 0.0
  %v1118 = vand.u32 %v125, 4294901760
  %1119 = vmatpush1.msra.mxu0 %v1118
  %1120 = vmatprep.subr.mxu0 0.0
  %v1121 = vand.u32 %v124, 4294901760
  %1122 = vmatpush1.msra.mxu0 %v1121
  %1123 = vmatprep.subr.mxu0 0.0
  %v1124 = vand.u32 %v123, 4294901760
  %1125 = vmatpush1.msra.mxu0 %v1124
  %1126 = vmatprep.subr.mxu0 0.0
  %v1127 = vand.u32 %v122, 4294901760
  %1128 = vmatpush1.msra.mxu0 %v1127
  %1129 = vmatprep.subr.mxu0 0.0
  %v1130 = vand.u32 %v121, 4294901760
  %1131 = vmatpush1.msra.mxu0 %v1130
  %1132 = vmatprep.subr.mxu0 0.0
  %v1133 = vand.u32 %v120, 4294901760
  %1134 = vmatpush1.msra.mxu0 %v1133
  %1135 = vmatprep.subr.mxu0 0.0
  %v1136 = vand.u32 %v119, 4294901760
  %1137 = vmatpush1.msra.mxu0 %v1136
  %1138 = vmatprep.subr.mxu0 0.0
  %v1139 = vand.u32 %v118, 4294901760
  %1140 = vmatpush1.msra.mxu0 %v1139
  %1141 = vmatprep.subr.mxu0 0.0
  %v1142 = vand.u32 %v117, 4294901760
  %1143 = vmatpush1.msra.mxu0 %v1142
  %1144 = vmatprep.subr.mxu0 0.0
  %v1145 = vand.u32 %v116, 4294901760
  %1146 = vmatpush1.msra.mxu0 %v1145
  %1147 = vmatprep.subr.mxu0 0.0
  %v1148 = vand.u32 %v115, 4294901760
  %1149 = vmatpush1.msra.mxu0 %v1148
  %1150 = vmatprep.subr.mxu0 0.0
  %v1151 = vand.u32 %v114, 4294901760
  %1152 = vmatpush1.msra.mxu0 %v1151
  %1153 = vmatprep.subr.mxu0 0.0
  %v1154 = vand.u32 %v113, 4294901760
  %1155 = vmatpush1.msra.mxu0 %v1154
  %1156 = vmatprep.subr.mxu0 0.0
  %v1157 = vand.u32 %v144, 4294901760
  %1158 = vmatpush2.msra.mxu0 %v1157
  %1159 = vmatprep.subr.mxu0 0.0
  %v1160 = vand.u32 %v143, 4294901760
  %1161 = vmatpush2.msra.mxu0 %v1160
  %1162 = vmatprep.subr.mxu0 0.0
  %v1163 = vand.u32 %v142, 4294901760
  %1164 = vmatpush2.msra.mxu0 %v1163
  %1165 = vmatprep.subr.mxu0 0.0
  %v1166 = vand.u32 %v141, 4294901760
  %1167 = vmatpush2.msra.mxu0 %v1166
  %1168 = vmatprep.subr.mxu0 0.0
  %v1169 = vand.u32 %v140, 4294901760
  %1170 = vmatpush2.msra.mxu0 %v1169
  %1171 = vmatprep.subr.mxu0 0.0
  %v1172 = vand.u32 %v139, 4294901760
  %1173 = vmatpush2.msra.mxu0 %v1172
  %1174 = vmatprep.subr.mxu0 0.0
  %v1175 = vand.u32 %v138, 4294901760
  %1176 = vmatpush2.msra.mxu0 %v1175
  %1177 = vmatprep.subr.mxu0 0.0
  %v1178 = vand.u32 %v137, 4294901760
  %1179 = vmatpush2.msra.mxu0 %v1178
  %1180 = vmatprep.subr.mxu0 0.0
  %v1181 = vand.u32 %v136, 4294901760
  %1182 = vmatpush2.msra.mxu0 %v1181
  %1183 = vmatprep.subr.mxu0 0.0
  %v1184 = vand.u32 %v135, 4294901760
  %1185 = vmatpush2.msra.mxu0 %v1184
  %1186 = vmatprep.subr.mxu0 0.0
  %v1187 = vand.u32 %v134, 4294901760
  %1188 = vmatpush2.msra.mxu0 %v1187
  %1189 = vmatprep.subr.mxu0 0.0
  %v1190 = vand.u32 %v133, 4294901760
  %1191 = vmatpush2.msra.mxu0 %v1190
  %1192 = vmatprep.subr.mxu0 0.0
  %v1193 = vand.u32 %v132, 4294901760
  %1194 = vmatpush2.msra.mxu0 %v1193
  %1195 = vmatprep.subr.mxu0 0.0
  %v1196 = vand.u32 %v131, 4294901760
  %1197 = vmatpush2.msra.mxu0 %v1196
  %1198 = vmatprep.subr.mxu0 0.0
  %v1199 = vand.u32 %v130, 4294901760
  %1200 = vmatpush2.msra.mxu0 %v1199
  %1201 = vmatprep.subr.mxu0 0.0
  %v1202 = vand.u32 %v129, 4294901760
  %1203 = vmatpush2.msra.mxu0 %v1202
  %v1204 = vand.u32 %v66, 4294901760
  %v1205 = vsub.f32 %v66, %v1204
  %v1206 = vand.u32 %v1205, 4294901760
  %1207 = vmatprep.mubr.f32.mxu0 %v1206
  %v1208 = vand.u32 %v65, 4294901760
  %v1209 = vsub.f32 %v65, %v1208
  %v1210 = vand.u32 %v1209, 4294901760
  %1211 = vmatmul.mubr.f32.gmra.mxu0 %v1210
  %v1212 = vpop.f32.mrf.mxu0
  %v1213 = vadd.f32 %v970, %v1212
  %v1214 = vpop.f32.mrf.mxu0
  %v1215 = vand.u32 %v69, 4294901760
  %v1216 = vsub.f32 %v69, %v1215
  %v1217 = vand.u32 %v1216, 4294901760
  %1218 = vmatprep.mubr.f32.mxu0 %v1217
  %v1219 = vand.u32 %v68, 4294901760
  %v1220 = vsub.f32 %v68, %v1219
  %v1221 = vand.u32 %v1220, 4294901760
  %1222 = vmatmul.mubr.f32.gmra.mxu0 %v1221
  %v1223 = vpop.f32.mrf.mxu0
  %v1224 = vadd.f32 %v979, %v1223
  %v1225 = vpop.f32.mrf.mxu0
  %v1226 = vand.u32 %v72, 4294901760
  %v1227 = vsub.f32 %v72, %v1226
  %v1228 = vand.u32 %v1227, 4294901760
  %1229 = vmatprep.mubr.f32.mxu0 %v1228
  %v1230 = vand.u32 %v71, 4294901760
  %v1231 = vsub.f32 %v71, %v1230
  %v1232 = vand.u32 %v1231, 4294901760
  %1233 = vmatmul.mubr.f32.gmra.mxu0 %v1232
  %v1234 = vpop.f32.mrf.mxu0
  %v1235 = vadd.f32 %v988, %v1234
  %v1236 = vpop.f32.mrf.mxu0
  %v1237 = vand.u32 %v75, 4294901760
  %v1238 = vsub.f32 %v75, %v1237
  %v1239 = vand.u32 %v1238, 4294901760
  %1240 = vmatprep.mubr.f32.mxu0 %v1239
  %v1241 = vand.u32 %v74, 4294901760
  %v1242 = vsub.f32 %v74, %v1241
  %v1243 = vand.u32 %v1242, 4294901760
  %1244 = vmatmul.mubr.f32.gmra.mxu0 %v1243
  %v1245 = vpop.f32.mrf.mxu0
  %v1246 = vadd.f32 %v997, %v1245
  %v1247 = vpop.f32.mrf.mxu0
  %v1248 = vand.u32 %v78, 4294901760
  %v1249 = vsub.f32 %v78, %v1248
  %v1250 = vand.u32 %v1249, 4294901760
  %1251 = vmatprep.mubr.f32.mxu0 %v1250
  %v1252 = vand.u32 %v77, 4294901760
  %v1253 = vsub.f32 %v77, %v1252
  %v1254 = vand.u32 %v1253, 4294901760
  %1255 = vmatmul.mubr.f32.gmra.mxu0 %v1254
  %v1256 = vpop.f32.mrf.mxu0
  %v1257 = vadd.f32 %v1006, %v1256
  %v1258 = vpop.f32.mrf.mxu0
  %v1259 = vand.u32 %v81, 4294901760
  %v1260 = vsub.f32 %v81, %v1259
  %v1261 = vand.u32 %v1260, 4294901760
  %1262 = vmatprep.mubr.f32.mxu0 %v1261
  %v1263 = vand.u32 %v80, 4294901760
  %v1264 = vsub.f32 %v80, %v1263
  %v1265 = vand.u32 %v1264, 4294901760
  %1266 = vmatmul.mubr.f32.gmra.mxu0 %v1265
  %v1267 = vpop.f32.mrf.mxu0
  %v1268 = vadd.f32 %v1015, %v1267
  %v1269 = vpop.f32.mrf.mxu0
  %v1270 = vand.u32 %v84, 4294901760
  %v1271 = vsub.f32 %v84, %v1270
  %v1272 = vand.u32 %v1271, 4294901760
  %1273 = vmatprep.mubr.f32.mxu0 %v1272
  %v1274 = vand.u32 %v83, 4294901760
  %v1275 = vsub.f32 %v83, %v1274
  %v1276 = vand.u32 %v1275, 4294901760
  %1277 = vmatmul.mubr.f32.gmra.mxu0 %v1276
  %v1278 = vpop.f32.mrf.mxu0
  %v1279 = vadd.f32 %v1024, %v1278
  %v1280 = vpop.f32.mrf.mxu0
  %v1281 = vand.u32 %v87, 4294901760
  %v1282 = vsub.f32 %v87, %v1281
  %v1283 = vand.u32 %v1282, 4294901760
  %1284 = vmatprep.mubr.f32.mxu0 %v1283
  %v1285 = vand.u32 %v86, 4294901760
  %v1286 = vsub.f32 %v86, %v1285
  %v1287 = vand.u32 %v1286, 4294901760
  %1288 = vmatmul.mubr.f32.gmra.mxu0 %v1287
  %v1289 = vpop.f32.mrf.mxu0
  %v1290 = vadd.f32 %v1033, %v1289
  %v1291 = vpop.f32.mrf.mxu0
  %v1292 = vand.u32 %v90, 4294901760
  %v1293 = vsub.f32 %v90, %v1292
  %v1294 = vand.u32 %v1293, 4294901760
  %1295 = vmatprep.mubr.f32.mxu0 %v1294
  %v1296 = vand.u32 %v89, 4294901760
  %v1297 = vsub.f32 %v89, %v1296
  %v1298 = vand.u32 %v1297, 4294901760
  %1299 = vmatmul.mubr.f32.gmra.mxu0 %v1298
  %v1300 = vpop.f32.mrf.mxu0
  %v1301 = vadd.f32 %v1042, %v1300
  %v1302 = vpop.f32.mrf.mxu0
  %v1303 = vand.u32 %v93, 4294901760
  %v1304 = vsub.f32 %v93, %v1303
  %v1305 = vand.u32 %v1304, 4294901760
  %1306 = vmatprep.mubr.f32.mxu0 %v1305
  %v1307 = vand.u32 %v92, 4294901760
  %v1308 = vsub.f32 %v92, %v1307
  %v1309 = vand.u32 %v1308, 4294901760
  %1310 = vmatmul.mubr.f32.gmra.mxu0 %v1309
  %v1311 = vpop.f32.mrf.mxu0
  %v1312 = vadd.f32 %v1051, %v1311
  %v1313 = vpop.f32.mrf.mxu0
  %v1314 = vand.u32 %v96, 4294901760
  %v1315 = vsub.f32 %v96, %v1314
  %v1316 = vand.u32 %v1315, 4294901760
  %1317 = vmatprep.mubr.f32.mxu0 %v1316
  %v1318 = vand.u32 %v95, 4294901760
  %v1319 = vsub.f32 %v95, %v1318
  %v1320 = vand.u32 %v1319, 4294901760
  %1321 = vmatmul.mubr.f32.gmra.mxu0 %v1320
  %v1322 = vpop.f32.mrf.mxu0
  %v1323 = vadd.f32 %v1060, %v1322
  %v1324 = vpop.f32.mrf.mxu0
  %v1325 = vand.u32 %v99, 4294901760
  %v1326 = vsub.f32 %v99, %v1325
  %v1327 = vand.u32 %v1326, 4294901760
  %1328 = vmatprep.mubr.f32.mxu0 %v1327
  %v1329 = vand.u32 %v98, 4294901760
  %v1330 = vsub.f32 %v98, %v1329
  %v1331 = vand.u32 %v1330, 4294901760
  %1332 = vmatmul.mubr.f32.gmra.mxu0 %v1331
  %v1333 = vpop.f32.mrf.mxu0
  %v1334 = vadd.f32 %v1069, %v1333
  %v1335 = vpop.f32.mrf.mxu0
  %v1336 = vand.u32 %v102, 4294901760
  %v1337 = vsub.f32 %v102, %v1336
  %v1338 = vand.u32 %v1337, 4294901760
  %1339 = vmatprep.mubr.f32.mxu0 %v1338
  %v1340 = vand.u32 %v101, 4294901760
  %v1341 = vsub.f32 %v101, %v1340
  %v1342 = vand.u32 %v1341, 4294901760
  %1343 = vmatmul.mubr.f32.gmra.mxu0 %v1342
  %v1344 = vpop.f32.mrf.mxu0
  %v1345 = vadd.f32 %v1078, %v1344
  %v1346 = vpop.f32.mrf.mxu0
  %v1347 = vand.u32 %v105, 4294901760
  %v1348 = vsub.f32 %v105, %v1347
  %v1349 = vand.u32 %v1348, 4294901760
  %1350 = vmatprep.mubr.f32.mxu0 %v1349
  %v1351 = vand.u32 %v104, 4294901760
  %v1352 = vsub.f32 %v104, %v1351
  %v1353 = vand.u32 %v1352, 4294901760
  %1354 = vmatmul.mubr.f32.gmra.mxu0 %v1353
  %v1355 = vpop.f32.mrf.mxu0
  %v1356 = vadd.f32 %v1087, %v1355
  %v1357 = vpop.f32.mrf.mxu0
  %v1358 = vand.u32 %v108, 4294901760
  %v1359 = vsub.f32 %v108, %v1358
  %v1360 = vand.u32 %v1359, 4294901760
  %1361 = vmatprep.mubr.f32.mxu0 %v1360
  %v1362 = vand.u32 %v107, 4294901760
  %v1363 = vsub.f32 %v107, %v1362
  %v1364 = vand.u32 %v1363, 4294901760
  %1365 = vmatmul.mubr.f32.gmra.mxu0 %v1364
  %v1366 = vpop.f32.mrf.mxu0
  %v1367 = vadd.f32 %v1096, %v1366
  %v1368 = vpop.f32.mrf.mxu0
  %v1369 = vand.u32 %v111, 4294901760
  %v1370 = vsub.f32 %v111, %v1369
  %v1371 = vand.u32 %v1370, 4294901760
  %1372 = vmatprep.mubr.f32.mxu0 %v1371
  %v1373 = vand.u32 %v110, 4294901760
  %v1374 = vsub.f32 %v110, %v1373
  %v1375 = vand.u32 %v1374, 4294901760
  %1376 = vmatmul.mubr.f32.gmra.mxu0 %v1375
  %v1377 = vpop.f32.mrf.mxu0
  %v1378 = vadd.f32 %v1105, %v1377
  %v1379 = vpop.f32.mrf.mxu0
  %1380 = vdwg.mxu0
  %1381 = vmatprep.subr.mxu0 0.0
  %v1382 = vand.u32 %v128, 4294901760
  %v1383 = vsub.f32 %v128, %v1382
  %v1384 = vand.u32 %v1383, 4294901760
  %1385 = vmatpush1.msra.mxu0 %v1384
  %1386 = vmatprep.subr.mxu0 0.0
  %v1387 = vand.u32 %v127, 4294901760
  %v1388 = vsub.f32 %v127, %v1387
  %v1389 = vand.u32 %v1388, 4294901760
  %1390 = vmatpush1.msra.mxu0 %v1389
  %1391 = vmatprep.subr.mxu0 0.0
  %v1392 = vand.u32 %v126, 4294901760
  %v1393 = vsub.f32 %v126, %v1392
  %v1394 = vand.u32 %v1393, 4294901760
  %1395 = vmatpush1.msra.mxu0 %v1394
  %1396 = vmatprep.subr.mxu0 0.0
  %v1397 = vand.u32 %v125, 4294901760
  %v1398 = vsub.f32 %v125, %v1397
  %v1399 = vand.u32 %v1398, 4294901760
  %1400 = vmatpush1.msra.mxu0 %v1399
  %1401 = vmatprep.subr.mxu0 0.0
  %v1402 = vand.u32 %v124, 4294901760
  %v1403 = vsub.f32 %v124, %v1402
  %v1404 = vand.u32 %v1403, 4294901760
  %1405 = vmatpush1.msra.mxu0 %v1404
  %1406 = vmatprep.subr.mxu0 0.0
  %v1407 = vand.u32 %v123, 4294901760
  %v1408 = vsub.f32 %v123, %v1407
  %v1409 = vand.u32 %v1408, 4294901760
  %1410 = vmatpush1.msra.mxu0 %v1409
  %1411 = vmatprep.subr.mxu0 0.0
  %v1412 = vand.u32 %v122, 4294901760
  %v1413 = vsub.f32 %v122, %v1412
  %v1414 = vand.u32 %v1413, 4294901760
  %1415 = vmatpush1.msra.mxu0 %v1414
  %1416 = vmatprep.subr.mxu0 0.0
  %v1417 = vand.u32 %v121, 4294901760
  %v1418 = vsub.f32 %v121, %v1417
  %v1419 = vand.u32 %v1418, 4294901760
  %1420 = vmatpush1.msra.mxu0 %v1419
  %1421 = vmatprep.subr.mxu0 0.0
  %v1422 = vand.u32 %v120, 4294901760
  %v1423 = vsub.f32 %v120, %v1422
  %v1424 = vand.u32 %v1423, 4294901760
  %1425 = vmatpush1.msra.mxu0 %v1424
  %1426 = vmatprep.subr.mxu0 0.0
  %v1427 = vand.u32 %v119, 4294901760
  %v1428 = vsub.f32 %v119, %v1427
  %v1429 = vand.u32 %v1428, 4294901760
  %1430 = vmatpush1.msra.mxu0 %v1429
  %1431 = vmatprep.subr.mxu0 0.0
  %v1432 = vand.u32 %v118, 4294901760
  %v1433 = vsub.f32 %v118, %v1432
  %v1434 = vand.u32 %v1433, 4294901760
  %1435 = vmatpush1.msra.mxu0 %v1434
  %1436 = vmatprep.subr.mxu0 0.0
  %v1437 = vand.u32 %v117, 4294901760
  %v1438 = vsub.f32 %v117, %v1437
  %v1439 = vand.u32 %v1438, 4294901760
  %1440 = vmatpush1.msra.mxu0 %v1439
  %1441 = vmatprep.subr.mxu0 0.0
  %v1442 = vand.u32 %v116, 4294901760
  %v1443 = vsub.f32 %v116, %v1442
  %v1444 = vand.u32 %v1443, 4294901760
  %1445 = vmatpush1.msra.mxu0 %v1444
  %1446 = vmatprep.subr.mxu0 0.0
  %v1447 = vand.u32 %v115, 4294901760
  %v1448 = vsub.f32 %v115, %v1447
  %v1449 = vand.u32 %v1448, 4294901760
  %1450 = vmatpush1.msra.mxu0 %v1449
  %1451 = vmatprep.subr.mxu0 0.0
  %v1452 = vand.u32 %v114, 4294901760
  %v1453 = vsub.f32 %v114, %v1452
  %v1454 = vand.u32 %v1453, 4294901760
  %1455 = vmatpush1.msra.mxu0 %v1454
  %1456 = vmatprep.subr.mxu0 0.0
  %v1457 = vand.u32 %v113, 4294901760
  %v1458 = vsub.f32 %v113, %v1457
  %v1459 = vand.u32 %v1458, 4294901760
  %1460 = vmatpush1.msra.mxu0 %v1459
  %1461 = vmatprep.subr.mxu0 0.0
  %v1462 = vand.u32 %v144, 4294901760
  %v1463 = vsub.f32 %v144, %v1462
  %v1464 = vand.u32 %v1463, 4294901760
  %1465 = vmatpush2.msra.mxu0 %v1464
  %1466 = vmatprep.subr.mxu0 0.0
  %v1467 = vand.u32 %v143, 4294901760
  %v1468 = vsub.f32 %v143, %v1467
  %v1469 = vand.u32 %v1468, 4294901760
  %1470 = vmatpush2.msra.mxu0 %v1469
  %1471 = vmatprep.subr.mxu0 0.0
  %v1472 = vand.u32 %v142, 4294901760
  %v1473 = vsub.f32 %v142, %v1472
  %v1474 = vand.u32 %v1473, 4294901760
  %1475 = vmatpush2.msra.mxu0 %v1474
  %1476 = vmatprep.subr.mxu0 0.0
  %v1477 = vand.u32 %v141, 4294901760
  %v1478 = vsub.f32 %v141, %v1477
  %v1479 = vand.u32 %v1478, 4294901760
  %1480 = vmatpush2.msra.mxu0 %v1479
  %1481 = vmatprep.subr.mxu0 0.0
  %v1482 = vand.u32 %v140, 4294901760
  %v1483 = vsub.f32 %v140, %v1482
  %v1484 = vand.u32 %v1483, 4294901760
  %1485 = vmatpush2.msra.mxu0 %v1484
  %1486 = vmatprep.subr.mxu0 0.0
  %v1487 = vand.u32 %v139, 4294901760
  %v1488 = vsub.f32 %v139, %v1487
  %v1489 = vand.u32 %v1488, 4294901760
  %1490 = vmatpush2.msra.mxu0 %v1489
  %1491 = vmatprep.subr.mxu0 0.0
  %v1492 = vand.u32 %v138, 4294901760
  %v1493 = vsub.f32 %v138, %v1492
  %v1494 = vand.u32 %v1493, 4294901760
  %1495 = vmatpush2.msra.mxu0 %v1494
  %1496 = vmatprep.subr.mxu0 0.0
  %v1497 = vand.u32 %v137, 4294901760
  %v1498 = vsub.f32 %v137, %v1497
  %v1499 = vand.u32 %v1498, 4294901760
  %1500 = vmatpush2.msra.mxu0 %v1499
  %1501 = vmatprep.subr.mxu0 0.0
  %v1502 = vand.u32 %v136, 4294901760
  %v1503 = vsub.f32 %v136, %v1502
  %v1504 = vand.u32 %v1503, 4294901760
  %1505 = vmatpush2.msra.mxu0 %v1504
  %1506 = vmatprep.subr.mxu0 0.0
  %v1507 = vand.u32 %v135, 4294901760
  %v1508 = vsub.f32 %v135, %v1507
  %v1509 = vand.u32 %v1508, 4294901760
  %1510 = vmatpush2.msra.mxu0 %v1509
  %1511 = vmatprep.subr.mxu0 0.0
  %v1512 = vand.u32 %v134, 4294901760
  %v1513 = vsub.f32 %v134, %v1512
  %v1514 = vand.u32 %v1513, 4294901760
  %1515 = vmatpush2.msra.mxu0 %v1514
  %1516 = vmatprep.subr.mxu0 0.0
  %v1517 = vand.u32 %v133, 4294901760
  %v1518 = vsub.f32 %v133, %v1517
  %v1519 = vand.u32 %v1518, 4294901760
  %1520 = vmatpush2.msra.mxu0 %v1519
  %1521 = vmatprep.subr.mxu0 0.0
  %v1522 = vand.u32 %v132, 4294901760
  %v1523 = vsub.f32 %v132, %v1522
  %v1524 = vand.u32 %v1523, 4294901760
  %1525 = vmatpush2.msra.mxu0 %v1524
  %1526 = vmatprep.subr.mxu0 0.0
  %v1527 = vand.u32 %v131, 4294901760
  %v1528 = vsub.f32 %v131, %v1527
  %v1529 = vand.u32 %v1528, 4294901760
  %1530 = vmatpush2.msra.mxu0 %v1529
  %1531 = vmatprep.subr.mxu0 0.0
  %v1532 = vand.u32 %v130, 4294901760
  %v1533 = vsub.f32 %v130, %v1532
  %v1534 = vand.u32 %v1533, 4294901760
  %1535 = vmatpush2.msra.mxu0 %v1534
  %1536 = vmatprep.subr.mxu0 0.0
  %v1537 = vand.u32 %v129, 4294901760
  %v1538 = vsub.f32 %v129, %v1537
  %v1539 = vand.u32 %v1538, 4294901760
  %1540 = vmatpush2.msra.mxu0 %v1539
  %v1541 = vand.u32 %v66, 4294901760
  %1542 = vmatprep.mubr.f32.mxu0 %v1541
  %v1543 = vand.u32 %v65, 4294901760
  %1544 = vmatmul.mubr.f32.gmra.mxu0 %v1543
  %v1545 = vpop.f32.mrf.mxu0
  %v1546 = vadd.f32 %v1213, %v1545
  %v1547 = vpop.f32.mrf.mxu0
  %v1548 = vand.u32 %v69, 4294901760
  %1549 = vmatprep.mubr.f32.mxu0 %v1548
  %v1550 = vand.u32 %v68, 4294901760
  %1551 = vmatmul.mubr.f32.gmra.mxu0 %v1550
  %v1552 = vpop.f32.mrf.mxu0
  %v1553 = vadd.f32 %v1224, %v1552
  %v1554 = vpop.f32.mrf.mxu0
  %v1555 = vand.u32 %v72, 4294901760
  %1556 = vmatprep.mubr.f32.mxu0 %v1555
  %v1557 = vand.u32 %v71, 4294901760
  %1558 = vmatmul.mubr.f32.gmra.mxu0 %v1557
  %v1559 = vpop.f32.mrf.mxu0
  %v1560 = vadd.f32 %v1235, %v1559
  %v1561 = vpop.f32.mrf.mxu0
  %v1562 = vand.u32 %v75, 4294901760
  %1563 = vmatprep.mubr.f32.mxu0 %v1562
  %v1564 = vand.u32 %v74, 4294901760
  %1565 = vmatmul.mubr.f32.gmra.mxu0 %v1564
  %v1566 = vpop.f32.mrf.mxu0
  %v1567 = vadd.f32 %v1246, %v1566
  %v1568 = vpop.f32.mrf.mxu0
  %v1569 = vand.u32 %v78, 4294901760
  %1570 = vmatprep.mubr.f32.mxu0 %v1569
  %v1571 = vand.u32 %v77, 4294901760
  %1572 = vmatmul.mubr.f32.gmra.mxu0 %v1571
  %v1573 = vpop.f32.mrf.mxu0
  %v1574 = vadd.f32 %v1257, %v1573
  %v1575 = vpop.f32.mrf.mxu0
  %v1576 = vand.u32 %v81, 4294901760
  %1577 = vmatprep.mubr.f32.mxu0 %v1576
  %v1578 = vand.u32 %v80, 4294901760
  %1579 = vmatmul.mubr.f32.gmra.mxu0 %v1578
  %v1580 = vpop.f32.mrf.mxu0
  %v1581 = vadd.f32 %v1268, %v1580
  %v1582 = vpop.f32.mrf.mxu0
  %v1583 = vand.u32 %v84, 4294901760
  %1584 = vmatprep.mubr.f32.mxu0 %v1583
  %v1585 = vand.u32 %v83, 4294901760
  %1586 = vmatmul.mubr.f32.gmra.mxu0 %v1585
  %v1587 = vpop.f32.mrf.mxu0
  %v1588 = vadd.f32 %v1279, %v1587
  %v1589 = vpop.f32.mrf.mxu0
  %v1590 = vand.u32 %v87, 4294901760
  %1591 = vmatprep.mubr.f32.mxu0 %v1590
  %v1592 = vand.u32 %v86, 4294901760
  %1593 = vmatmul.mubr.f32.gmra.mxu0 %v1592
  %v1594 = vpop.f32.mrf.mxu0
  %v1595 = vadd.f32 %v1290, %v1594
  %v1596 = vpop.f32.mrf.mxu0
  %v1597 = vand.u32 %v90, 4294901760
  %1598 = vmatprep.mubr.f32.mxu0 %v1597
  %v1599 = vand.u32 %v89, 4294901760
  %1600 = vmatmul.mubr.f32.gmra.mxu0 %v1599
  %v1601 = vpop.f32.mrf.mxu0
  %v1602 = vadd.f32 %v1301, %v1601
  %v1603 = vpop.f32.mrf.mxu0
  %v1604 = vand.u32 %v93, 4294901760
  %1605 = vmatprep.mubr.f32.mxu0 %v1604
  %v1606 = vand.u32 %v92, 4294901760
  %1607 = vmatmul.mubr.f32.gmra.mxu0 %v1606
  %v1608 = vpop.f32.mrf.mxu0
  %v1609 = vadd.f32 %v1312, %v1608
  %v1610 = vpop.f32.mrf.mxu0
  %v1611 = vand.u32 %v96, 4294901760
  %1612 = vmatprep.mubr.f32.mxu0 %v1611
  %v1613 = vand.u32 %v95, 4294901760
  %1614 = vmatmul.mubr.f32.gmra.mxu0 %v1613
  %v1615 = vpop.f32.mrf.mxu0
  %v1616 = vadd.f32 %v1323, %v1615
  %v1617 = vpop.f32.mrf.mxu0
  %v1618 = vand.u32 %v99, 4294901760
  %1619 = vmatprep.mubr.f32.mxu0 %v1618
  %v1620 = vand.u32 %v98, 4294901760
  %1621 = vmatmul.mubr.f32.gmra.mxu0 %v1620
  %v1622 = vpop.f32.mrf.mxu0
  %v1623 = vadd.f32 %v1334, %v1622
  %v1624 = vpop.f32.mrf.mxu0
  %v1625 = vand.u32 %v102, 4294901760
  %1626 = vmatprep.mubr.f32.mxu0 %v1625
  %v1627 = vand.u32 %v101, 4294901760
  %1628 = vmatmul.mubr.f32.gmra.mxu0 %v1627
  %v1629 = vpop.f32.mrf.mxu0
  %v1630 = vadd.f32 %v1345, %v1629
  %v1631 = vpop.f32.mrf.mxu0
  %v1632 = vand.u32 %v105, 4294901760
  %1633 = vmatprep.mubr.f32.mxu0 %v1632
  %v1634 = vand.u32 %v104, 4294901760
  %1635 = vmatmul.mubr.f32.gmra.mxu0 %v1634
  %v1636 = vpop.f32.mrf.mxu0
  %v1637 = vadd.f32 %v1356, %v1636
  %v1638 = vpop.f32.mrf.mxu0
  %v1639 = vand.u32 %v108, 4294901760
  %1640 = vmatprep.mubr.f32.mxu0 %v1639
  %v1641 = vand.u32 %v107, 4294901760
  %1642 = vmatmul.mubr.f32.gmra.mxu0 %v1641
  %v1643 = vpop.f32.mrf.mxu0
  %v1644 = vadd.f32 %v1367, %v1643
  %v1645 = vpop.f32.mrf.mxu0
  %v1646 = vand.u32 %v111, 4294901760
  %1647 = vmatprep.mubr.f32.mxu0 %v1646
  %v1648 = vand.u32 %v110, 4294901760
  %1649 = vmatmul.mubr.f32.gmra.mxu0 %v1648
  %v1650 = vpop.f32.mrf.mxu0
  %v1651 = vadd.f32 %v1378, %v1650
  %v1652 = vpop.f32.mrf.mxu0
  %1653 = vdwg.mxu0
  %1654 = vmatprep.subr.mxu0 0.0
  %v1655 = vand.u32 %v128, 4294901760
  %1656 = vmatpush1.msra.mxu0 %v1655
  %1657 = vmatprep.subr.mxu0 0.0
  %v1658 = vand.u32 %v127, 4294901760
  %1659 = vmatpush1.msra.mxu0 %v1658
  %1660 = vmatprep.subr.mxu0 0.0
  %v1661 = vand.u32 %v126, 4294901760
  %1662 = vmatpush1.msra.mxu0 %v1661
  %1663 = vmatprep.subr.mxu0 0.0
  %v1664 = vand.u32 %v125, 4294901760
  %1665 = vmatpush1.msra.mxu0 %v1664
  %1666 = vmatprep.subr.mxu0 0.0
  %v1667 = vand.u32 %v124, 4294901760
  %1668 = vmatpush1.msra.mxu0 %v1667
  %1669 = vmatprep.subr.mxu0 0.0
  %v1670 = vand.u32 %v123, 4294901760
  %1671 = vmatpush1.msra.mxu0 %v1670
  %1672 = vmatprep.subr.mxu0 0.0
  %v1673 = vand.u32 %v122, 4294901760
  %1674 = vmatpush1.msra.mxu0 %v1673
  %1675 = vmatprep.subr.mxu0 0.0
  %v1676 = vand.u32 %v121, 4294901760
  %1677 = vmatpush1.msra.mxu0 %v1676
  %1678 = vmatprep.subr.mxu0 0.0
  %v1679 = vand.u32 %v120, 4294901760
  %1680 = vmatpush1.msra.mxu0 %v1679
  %1681 = vmatprep.subr.mxu0 0.0
  %v1682 = vand.u32 %v119, 4294901760
  %1683 = vmatpush1.msra.mxu0 %v1682
  %1684 = vmatprep.subr.mxu0 0.0
  %v1685 = vand.u32 %v118, 4294901760
  %1686 = vmatpush1.msra.mxu0 %v1685
  %1687 = vmatprep.subr.mxu0 0.0
  %v1688 = vand.u32 %v117, 4294901760
  %1689 = vmatpush1.msra.mxu0 %v1688
  %1690 = vmatprep.subr.mxu0 0.0
  %v1691 = vand.u32 %v116, 4294901760
  %1692 = vmatpush1.msra.mxu0 %v1691
  %1693 = vmatprep.subr.mxu0 0.0
  %v1694 = vand.u32 %v115, 4294901760
  %1695 = vmatpush1.msra.mxu0 %v1694
  %1696 = vmatprep.subr.mxu0 0.0
  %v1697 = vand.u32 %v114, 4294901760
  %1698 = vmatpush1.msra.mxu0 %v1697
  %1699 = vmatprep.subr.mxu0 0.0
  %v1700 = vand.u32 %v113, 4294901760
  %1701 = vmatpush1.msra.mxu0 %v1700
  %1702 = vmatprep.subr.mxu0 0.0
  %v1703 = vand.u32 %v144, 4294901760
  %1704 = vmatpush2.msra.mxu0 %v1703
  %1705 = vmatprep.subr.mxu0 0.0
  %v1706 = vand.u32 %v143, 4294901760
  %1707 = vmatpush2.msra.mxu0 %v1706
  %1708 = vmatprep.subr.mxu0 0.0
  %v1709 = vand.u32 %v142, 4294901760
  %1710 = vmatpush2.msra.mxu0 %v1709
  %1711 = vmatprep.subr.mxu0 0.0
  %v1712 = vand.u32 %v141, 4294901760
  %1713 = vmatpush2.msra.mxu0 %v1712
  %1714 = vmatprep.subr.mxu0 0.0
  %v1715 = vand.u32 %v140, 4294901760
  %1716 = vmatpush2.msra.mxu0 %v1715
  %1717 = vmatprep.subr.mxu0 0.0
  %v1718 = vand.u32 %v139, 4294901760
  %1719 = vmatpush2.msra.mxu0 %v1718
  %1720 = vmatprep.subr.mxu0 0.0
  %v1721 = vand.u32 %v138, 4294901760
  %1722 = vmatpush2.msra.mxu0 %v1721
  %1723 = vmatprep.subr.mxu0 0.0
  %v1724 = vand.u32 %v137, 4294901760
  %1725 = vmatpush2.msra.mxu0 %v1724
  %1726 = vmatprep.subr.mxu0 0.0
  %v1727 = vand.u32 %v136, 4294901760
  %1728 = vmatpush2.msra.mxu0 %v1727
  %1729 = vmatprep.subr.mxu0 0.0
  %v1730 = vand.u32 %v135, 4294901760
  %1731 = vmatpush2.msra.mxu0 %v1730
  %1732 = vmatprep.subr.mxu0 0.0
  %v1733 = vand.u32 %v134, 4294901760
  %1734 = vmatpush2.msra.mxu0 %v1733
  %1735 = vmatprep.subr.mxu0 0.0
  %v1736 = vand.u32 %v133, 4294901760
  %1737 = vmatpush2.msra.mxu0 %v1736
  %1738 = vmatprep.subr.mxu0 0.0
  %v1739 = vand.u32 %v132, 4294901760
  %1740 = vmatpush2.msra.mxu0 %v1739
  %1741 = vmatprep.subr.mxu0 0.0
  %v1742 = vand.u32 %v131, 4294901760
  %1743 = vmatpush2.msra.mxu0 %v1742
  %1744 = vmatprep.subr.mxu0 0.0
  %v1745 = vand.u32 %v130, 4294901760
  %1746 = vmatpush2.msra.mxu0 %v1745
  %1747 = vmatprep.subr.mxu0 0.0
  %v1748 = vand.u32 %v129, 4294901760
  %1749 = vmatpush2.msra.mxu0 %v1748
  %v1750 = vand.u32 %v66, 4294901760
  %1751 = vmatprep.mubr.f32.mxu0 %v1750
  %v1752 = vand.u32 %v65, 4294901760
  %1753 = vmatmul.mubr.f32.gmra.mxu0 %v1752
  %v1754 = vpop.f32.mrf.mxu0
  %v1755 = vadd.f32 %v1546, %v1754
  %v1756 = vpop.f32.mrf.mxu0
  %v1757 = vand.u32 %v69, 4294901760
  %1758 = vmatprep.mubr.f32.mxu0 %v1757
  %v1759 = vand.u32 %v68, 4294901760
  %1760 = vmatmul.mubr.f32.gmra.mxu0 %v1759
  %v1761 = vpop.f32.mrf.mxu0
  %v1762 = vadd.f32 %v1553, %v1761
  %v1763 = vpop.f32.mrf.mxu0
  %v1764 = vand.u32 %v72, 4294901760
  %1765 = vmatprep.mubr.f32.mxu0 %v1764
  %v1766 = vand.u32 %v71, 4294901760
  %1767 = vmatmul.mubr.f32.gmra.mxu0 %v1766
  %v1768 = vpop.f32.mrf.mxu0
  %v1769 = vadd.f32 %v1560, %v1768
  %v1770 = vpop.f32.mrf.mxu0
  %v1771 = vand.u32 %v75, 4294901760
  %1772 = vmatprep.mubr.f32.mxu0 %v1771
  %v1773 = vand.u32 %v74, 4294901760
  %1774 = vmatmul.mubr.f32.gmra.mxu0 %v1773
  %v1775 = vpop.f32.mrf.mxu0
  %v1776 = vadd.f32 %v1567, %v1775
  %v1777 = vpop.f32.mrf.mxu0
  %v1778 = vand.u32 %v78, 4294901760
  %1779 = vmatprep.mubr.f32.mxu0 %v1778
  %v1780 = vand.u32 %v77, 4294901760
  %1781 = vmatmul.mubr.f32.gmra.mxu0 %v1780
  %v1782 = vpop.f32.mrf.mxu0
  %v1783 = vadd.f32 %v1574, %v1782
  %v1784 = vpop.f32.mrf.mxu0
  %v1785 = vand.u32 %v81, 4294901760
  %1786 = vmatprep.mubr.f32.mxu0 %v1785
  %v1787 = vand.u32 %v80, 4294901760
  %1788 = vmatmul.mubr.f32.gmra.mxu0 %v1787
  %v1789 = vpop.f32.mrf.mxu0
  %v1790 = vadd.f32 %v1581, %v1789
  %v1791 = vpop.f32.mrf.mxu0
  %v1792 = vand.u32 %v84, 4294901760
  %1793 = vmatprep.mubr.f32.mxu0 %v1792
  %v1794 = vand.u32 %v83, 4294901760
  %1795 = vmatmul.mubr.f32.gmra.mxu0 %v1794
  %v1796 = vpop.f32.mrf.mxu0
  %v1797 = vadd.f32 %v1588, %v1796
  %v1798 = vpop.f32.mrf.mxu0
  %v1799 = vand.u32 %v87, 4294901760
  %1800 = vmatprep.mubr.f32.mxu0 %v1799
  %v1801 = vand.u32 %v86, 4294901760
  %1802 = vmatmul.mubr.f32.gmra.mxu0 %v1801
  %v1803 = vpop.f32.mrf.mxu0
  %v1804 = vadd.f32 %v1595, %v1803
  %v1805 = vpop.f32.mrf.mxu0
  %v1806 = vand.u32 %v90, 4294901760
  %1807 = vmatprep.mubr.f32.mxu0 %v1806
  %v1808 = vand.u32 %v89, 4294901760
  %1809 = vmatmul.mubr.f32.gmra.mxu0 %v1808
  %v1810 = vpop.f32.mrf.mxu0
  %v1811 = vadd.f32 %v1602, %v1810
  %v1812 = vpop.f32.mrf.mxu0
  %v1813 = vand.u32 %v93, 4294901760
  %1814 = vmatprep.mubr.f32.mxu0 %v1813
  %v1815 = vand.u32 %v92, 4294901760
  %1816 = vmatmul.mubr.f32.gmra.mxu0 %v1815
  %v1817 = vpop.f32.mrf.mxu0
  %v1818 = vadd.f32 %v1609, %v1817
  %v1819 = vpop.f32.mrf.mxu0
  %v1820 = vand.u32 %v96, 4294901760
  %1821 = vmatprep.mubr.f32.mxu0 %v1820
  %v1822 = vand.u32 %v95, 4294901760
  %1823 = vmatmul.mubr.f32.gmra.mxu0 %v1822
  %v1824 = vpop.f32.mrf.mxu0
  %v1825 = vadd.f32 %v1616, %v1824
  %v1826 = vpop.f32.mrf.mxu0
  %v1827 = vand.u32 %v99, 4294901760
  %1828 = vmatprep.mubr.f32.mxu0 %v1827
  %v1829 = vand.u32 %v98, 4294901760
  %1830 = vmatmul.mubr.f32.gmra.mxu0 %v1829
  %v1831 = vpop.f32.mrf.mxu0
  %v1832 = vadd.f32 %v1623, %v1831
  %v1833 = vpop.f32.mrf.mxu0
  %v1834 = vand.u32 %v102, 4294901760
  %1835 = vmatprep.mubr.f32.mxu0 %v1834
  %v1836 = vand.u32 %v101, 4294901760
  %1837 = vmatmul.mubr.f32.gmra.mxu0 %v1836
  %v1838 = vpop.f32.mrf.mxu0
  %v1839 = vadd.f32 %v1630, %v1838
  %v1840 = vpop.f32.mrf.mxu0
  %v1841 = vand.u32 %v105, 4294901760
  %1842 = vmatprep.mubr.f32.mxu0 %v1841
  %v1843 = vand.u32 %v104, 4294901760
  %1844 = vmatmul.mubr.f32.gmra.mxu0 %v1843
  %v1845 = vpop.f32.mrf.mxu0
  %v1846 = vadd.f32 %v1637, %v1845
  %v1847 = vpop.f32.mrf.mxu0
  %v1848 = vand.u32 %v108, 4294901760
  %1849 = vmatprep.mubr.f32.mxu0 %v1848
  %v1850 = vand.u32 %v107, 4294901760
  %1851 = vmatmul.mubr.f32.gmra.mxu0 %v1850
  %v1852 = vpop.f32.mrf.mxu0
  %v1853 = vadd.f32 %v1644, %v1852
  %v1854 = vpop.f32.mrf.mxu0
  %v1855 = vand.u32 %v111, 4294901760
  %1856 = vmatprep.mubr.f32.mxu0 %v1855
  %v1857 = vand.u32 %v110, 4294901760
  %1858 = vmatmul.mubr.f32.gmra.mxu0 %v1857
  %v1859 = vpop.f32.mrf.mxu0
  %v1860 = vadd.f32 %v1651, %v1859
  %v1861 = vpop.f32.mrf.mxu0
  %1862 = vdwg.mxu0
  %1863 = vmatprep.subr.mxu0 0.0
  %v1864 = vand.u32 %v160, 4294901760
  %1865 = vmatpush1.msra.mxu0 %v1864
  %1866 = vmatprep.subr.mxu0 0.0
  %v1867 = vand.u32 %v159, 4294901760
  %1868 = vmatpush1.msra.mxu0 %v1867
  %1869 = vmatprep.subr.mxu0 0.0
  %v1870 = vand.u32 %v158, 4294901760
  %1871 = vmatpush1.msra.mxu0 %v1870
  %1872 = vmatprep.subr.mxu0 0.0
  %v1873 = vand.u32 %v157, 4294901760
  %1874 = vmatpush1.msra.mxu0 %v1873
  %1875 = vmatprep.subr.mxu0 0.0
  %v1876 = vand.u32 %v156, 4294901760
  %1877 = vmatpush1.msra.mxu0 %v1876
  %1878 = vmatprep.subr.mxu0 0.0
  %v1879 = vand.u32 %v155, 4294901760
  %1880 = vmatpush1.msra.mxu0 %v1879
  %1881 = vmatprep.subr.mxu0 0.0
  %v1882 = vand.u32 %v154, 4294901760
  %1883 = vmatpush1.msra.mxu0 %v1882
  %1884 = vmatprep.subr.mxu0 0.0
  %v1885 = vand.u32 %v153, 4294901760
  %1886 = vmatpush1.msra.mxu0 %v1885
  %1887 = vmatprep.subr.mxu0 0.0
  %v1888 = vand.u32 %v152, 4294901760
  %1889 = vmatpush1.msra.mxu0 %v1888
  %1890 = vmatprep.subr.mxu0 0.0
  %v1891 = vand.u32 %v151, 4294901760
  %1892 = vmatpush1.msra.mxu0 %v1891
  %1893 = vmatprep.subr.mxu0 0.0
  %v1894 = vand.u32 %v150, 4294901760
  %1895 = vmatpush1.msra.mxu0 %v1894
  %1896 = vmatprep.subr.mxu0 0.0
  %v1897 = vand.u32 %v149, 4294901760
  %1898 = vmatpush1.msra.mxu0 %v1897
  %1899 = vmatprep.subr.mxu0 0.0
  %v1900 = vand.u32 %v148, 4294901760
  %1901 = vmatpush1.msra.mxu0 %v1900
  %1902 = vmatprep.subr.mxu0 0.0
  %v1903 = vand.u32 %v147, 4294901760
  %1904 = vmatpush1.msra.mxu0 %v1903
  %1905 = vmatprep.subr.mxu0 0.0
  %v1906 = vand.u32 %v146, 4294901760
  %1907 = vmatpush1.msra.mxu0 %v1906
  %1908 = vmatprep.subr.mxu0 0.0
  %v1909 = vand.u32 %v145, 4294901760
  %1910 = vmatpush1.msra.mxu0 %v1909
  %1911 = vmatprep.subr.mxu0 0.0
  %1912 = vmatpush2.msra.mxu0 0.0
  %1913 = vmatprep.subr.mxu0 0.0
  %1914 = vmatpush2.msra.mxu0 0.0
  %1915 = vmatprep.subr.mxu0 0.0
  %1916 = vmatpush2.msra.mxu0 0.0
  %1917 = vmatprep.subr.mxu0 0.0
  %1918 = vmatpush2.msra.mxu0 0.0
  %1919 = vmatprep.subr.mxu0 0.0
  %1920 = vmatpush2.msra.mxu0 0.0
  %1921 = vmatprep.subr.mxu0 0.0
  %1922 = vmatpush2.msra.mxu0 0.0
  %1923 = vmatprep.subr.mxu0 0.0
  %1924 = vmatpush2.msra.mxu0 0.0
  %1925 = vmatprep.subr.mxu0 0.0
  %1926 = vmatpush2.msra.mxu0 0.0
  %1927 = vmatprep.subr.mxu0 0.0
  %1928 = vmatpush2.msra.mxu0 0.0
  %1929 = vmatprep.subr.mxu0 0.0
  %1930 = vmatpush2.msra.mxu0 0.0
  %1931 = vmatprep.subr.mxu0 0.0
  %1932 = vmatpush2.msra.mxu0 0.0
  %1933 = vmatprep.subr.mxu0 0.0
  %1934 = vmatpush2.msra.mxu0 0.0
  %1935 = vmatprep.subr.mxu0 0.0
  %1936 = vmatpush2.msra.mxu0 0.0
  %1937 = vmatprep.subr.mxu0 0.0
  %1938 = vmatpush2.msra.mxu0 0.0
  %1939 = vmatprep.subr.mxu0 0.0
  %1940 = vmatpush2.msra.mxu0 0.0
  %1941 = vmatprep.subr.mxu0 0.0
  %1942 = vmatpush2.msra.mxu0 0.0
  %1943 = vmatprep.mubr.f32.mxu0 0.0
  %v1944 = vand.u32 %v67, 4294901760
  %v1945 = vsub.f32 %v67, %v1944
  %v1946 = vand.u32 %v1945, 4294901760
  %v1947 = vsub.f32 %v1945, %v1946
  %v1948 = vand.u32 %v1947, 4294901760
  %1949 = vmatmul.mubr.f32.gmra.mxu0 %v1948
  %v1950 = vpop.f32.mrf.mxu0
  %v1951 = vadd.f32 %v1755, %v1950
  %v1952 = vpop.f32.mrf.mxu0
  %1953 = vmatprep.mubr.f32.mxu0 0.0
  %v1954 = vand.u32 %v70, 4294901760
  %v1955 = vsub.f32 %v70, %v1954
  %v1956 = vand.u32 %v1955, 4294901760
  %v1957 = vsub.f32 %v1955, %v1956
  %v1958 = vand.u32 %v1957, 4294901760
  %1959 = vmatmul.mubr.f32.gmra.mxu0 %v1958
  %v1960 = vpop.f32.mrf.mxu0
  %v1961 = vadd.f32 %v1762, %v1960
  %v1962 = vpop.f32.mrf.mxu0
  %1963 = vmatprep.mubr.f32.mxu0 0.0
  %v1964 = vand.u32 %v73, 4294901760
  %v1965 = vsub.f32 %v73, %v1964
  %v1966 = vand.u32 %v1965, 4294901760
  %v1967 = vsub.f32 %v1965, %v1966
  %v1968 = vand.u32 %v1967, 4294901760
  %1969 = vmatmul.mubr.f32.gmra.mxu0 %v1968
  %v1970 = vpop.f32.mrf.mxu0
  %v1971 = vadd.f32 %v1769, %v1970
  %v1972 = vpop.f32.mrf.mxu0
  %1973 = vmatprep.mubr.f32.mxu0 0.0
  %v1974 = vand.u32 %v76, 4294901760
  %v1975 = vsub.f32 %v76, %v1974
  %v1976 = vand.u32 %v1975, 4294901760
  %v1977 = vsub.f32 %v1975, %v1976
  %v1978 = vand.u32 %v1977, 4294901760
  %1979 = vmatmul.mubr.f32.gmra.mxu0 %v1978
  %v1980 = vpop.f32.mrf.mxu0
  %v1981 = vadd.f32 %v1776, %v1980
  %v1982 = vpop.f32.mrf.mxu0
  %1983 = vmatprep.mubr.f32.mxu0 0.0
  %v1984 = vand.u32 %v79, 4294901760
  %v1985 = vsub.f32 %v79, %v1984
  %v1986 = vand.u32 %v1985, 4294901760
  %v1987 = vsub.f32 %v1985, %v1986
  %v1988 = vand.u32 %v1987, 4294901760
  %1989 = vmatmul.mubr.f32.gmra.mxu0 %v1988
  %v1990 = vpop.f32.mrf.mxu0
  %v1991 = vadd.f32 %v1783, %v1990
  %v1992 = vpop.f32.mrf.mxu0
  %1993 = vmatprep.mubr.f32.mxu0 0.0
  %v1994 = vand.u32 %v82, 4294901760
  %v1995 = vsub.f32 %v82, %v1994
  %v1996 = vand.u32 %v1995, 4294901760
  %v1997 = vsub.f32 %v1995, %v1996
  %v1998 = vand.u32 %v1997, 4294901760
  %1999 = vmatmul.mubr.f32.gmra.mxu0 %v1998
  %v2000 = vpop.f32.mrf.mxu0
  %v2001 = vadd.f32 %v1790, %v2000
  %v2002 = vpop.f32.mrf.mxu0
  %2003 = vmatprep.mubr.f32.mxu0 0.0
  %v2004 = vand.u32 %v85, 4294901760
  %v2005 = vsub.f32 %v85, %v2004
  %v2006 = vand.u32 %v2005, 4294901760
  %v2007 = vsub.f32 %v2005, %v2006
  %v2008 = vand.u32 %v2007, 4294901760
  %2009 = vmatmul.mubr.f32.gmra.mxu0 %v2008
  %v2010 = vpop.f32.mrf.mxu0
  %v2011 = vadd.f32 %v1797, %v2010
  %v2012 = vpop.f32.mrf.mxu0
  %2013 = vmatprep.mubr.f32.mxu0 0.0
  %v2014 = vand.u32 %v88, 4294901760
  %v2015 = vsub.f32 %v88, %v2014
  %v2016 = vand.u32 %v2015, 4294901760
  %v2017 = vsub.f32 %v2015, %v2016
  %v2018 = vand.u32 %v2017, 4294901760
  %2019 = vmatmul.mubr.f32.gmra.mxu0 %v2018
  %v2020 = vpop.f32.mrf.mxu0
  %v2021 = vadd.f32 %v1804, %v2020
  %v2022 = vpop.f32.mrf.mxu0
  %2023 = vmatprep.mubr.f32.mxu0 0.0
  %v2024 = vand.u32 %v91, 4294901760
  %v2025 = vsub.f32 %v91, %v2024
  %v2026 = vand.u32 %v2025, 4294901760
  %v2027 = vsub.f32 %v2025, %v2026
  %v2028 = vand.u32 %v2027, 4294901760
  %2029 = vmatmul.mubr.f32.gmra.mxu0 %v2028
  %v2030 = vpop.f32.mrf.mxu0
  %v2031 = vadd.f32 %v1811, %v2030
  %v2032 = vpop.f32.mrf.mxu0
  %2033 = vmatprep.mubr.f32.mxu0 0.0
  %v2034 = vand.u32 %v94, 4294901760
  %v2035 = vsub.f32 %v94, %v2034
  %v2036 = vand.u32 %v2035, 4294901760
  %v2037 = vsub.f32 %v2035, %v2036
  %v2038 = vand.u32 %v2037, 4294901760
  %2039 = vmatmul.mubr.f32.gmra.mxu0 %v2038
  %v2040 = vpop.f32.mrf.mxu0
  %v2041 = vadd.f32 %v1818, %v2040
  %v2042 = vpop.f32.mrf.mxu0
  %2043 = vmatprep.mubr.f32.mxu0 0.0
  %v2044 = vand.u32 %v97, 4294901760
  %v2045 = vsub.f32 %v97, %v2044
  %v2046 = vand.u32 %v2045, 4294901760
  %v2047 = vsub.f32 %v2045, %v2046
  %v2048 = vand.u32 %v2047, 4294901760
  %2049 = vmatmul.mubr.f32.gmra.mxu0 %v2048
  %v2050 = vpop.f32.mrf.mxu0
  %v2051 = vadd.f32 %v1825, %v2050
  %v2052 = vpop.f32.mrf.mxu0
  %2053 = vmatprep.mubr.f32.mxu0 0.0
  %v2054 = vand.u32 %v100, 4294901760
  %v2055 = vsub.f32 %v100, %v2054
  %v2056 = vand.u32 %v2055, 4294901760
  %v2057 = vsub.f32 %v2055, %v2056
  %v2058 = vand.u32 %v2057, 4294901760
  %2059 = vmatmul.mubr.f32.gmra.mxu0 %v2058
  %v2060 = vpop.f32.mrf.mxu0
  %v2061 = vadd.f32 %v1832, %v2060
  %v2062 = vpop.f32.mrf.mxu0
  %2063 = vmatprep.mubr.f32.mxu0 0.0
  %v2064 = vand.u32 %v103, 4294901760
  %v2065 = vsub.f32 %v103, %v2064
  %v2066 = vand.u32 %v2065, 4294901760
  %v2067 = vsub.f32 %v2065, %v2066
  %v2068 = vand.u32 %v2067, 4294901760
  %2069 = vmatmul.mubr.f32.gmra.mxu0 %v2068
  %v2070 = vpop.f32.mrf.mxu0
  %v2071 = vadd.f32 %v1839, %v2070
  %v2072 = vpop.f32.mrf.mxu0
  %2073 = vmatprep.mubr.f32.mxu0 0.0
  %v2074 = vand.u32 %v106, 4294901760
  %v2075 = vsub.f32 %v106, %v2074
  %v2076 = vand.u32 %v2075, 4294901760
  %v2077 = vsub.f32 %v2075, %v2076
  %v2078 = vand.u32 %v2077, 4294901760
  %2079 = vmatmul.mubr.f32.gmra.mxu0 %v2078
  %v2080 = vpop.f32.mrf.mxu0
  %v2081 = vadd.f32 %v1846, %v2080
  %v2082 = vpop.f32.mrf.mxu0
  %2083 = vmatprep.mubr.f32.mxu0 0.0
  %v2084 = vand.u32 %v109, 4294901760
  %v2085 = vsub.f32 %v109, %v2084
  %v2086 = vand.u32 %v2085, 4294901760
  %v2087 = vsub.f32 %v2085, %v2086
  %v2088 = vand.u32 %v2087, 4294901760
  %2089 = vmatmul.mubr.f32.gmra.mxu0 %v2088
  %v2090 = vpop.f32.mrf.mxu0
  %v2091 = vadd.f32 %v1853, %v2090
  %v2092 = vpop.f32.mrf.mxu0
  %2093 = vmatprep.mubr.f32.mxu0 0.0
  %v2094 = vand.u32 %v112, 4294901760
  %v2095 = vsub.f32 %v112, %v2094
  %v2096 = vand.u32 %v2095, 4294901760
  %v2097 = vsub.f32 %v2095, %v2096
  %v2098 = vand.u32 %v2097, 4294901760
  %2099 = vmatmul.mubr.f32.gmra.mxu0 %v2098
  %v2100 = vpop.f32.mrf.mxu0
  %v2101 = vadd.f32 %v1860, %v2100
  %v2102 = vpop.f32.mrf.mxu0
  %2103 = vdwg.mxu0
  %2104 = vmatprep.subr.mxu0 0.0
  %v2105 = vand.u32 %v160, 4294901760
  %v2106 = vsub.f32 %v160, %v2105
  %v2107 = vand.u32 %v2106, 4294901760
  %v2108 = vsub.f32 %v2106, %v2107
  %v2109 = vand.u32 %v2108, 4294901760
  %2110 = vmatpush1.msra.mxu0 %v2109
  %2111 = vmatprep.subr.mxu0 0.0
  %v2112 = vand.u32 %v159, 4294901760
  %v2113 = vsub.f32 %v159, %v2112
  %v2114 = vand.u32 %v2113, 4294901760
  %v2115 = vsub.f32 %v2113, %v2114
  %v2116 = vand.u32 %v2115, 4294901760
  %2117 = vmatpush1.msra.mxu0 %v2116
  %2118 = vmatprep.subr.mxu0 0.0
  %v2119 = vand.u32 %v158, 4294901760
  %v2120 = vsub.f32 %v158, %v2119
  %v2121 = vand.u32 %v2120, 4294901760
  %v2122 = vsub.f32 %v2120, %v2121
  %v2123 = vand.u32 %v2122, 4294901760
  %2124 = vmatpush1.msra.mxu0 %v2123
  %2125 = vmatprep.subr.mxu0 0.0
  %v2126 = vand.u32 %v157, 4294901760
  %v2127 = vsub.f32 %v157, %v2126
  %v2128 = vand.u32 %v2127, 4294901760
  %v2129 = vsub.f32 %v2127, %v2128
  %v2130 = vand.u32 %v2129, 4294901760
  %2131 = vmatpush1.msra.mxu0 %v2130
  %2132 = vmatprep.subr.mxu0 0.0
  %v2133 = vand.u32 %v156, 4294901760
  %v2134 = vsub.f32 %v156, %v2133
  %v2135 = vand.u32 %v2134, 4294901760
  %v2136 = vsub.f32 %v2134, %v2135
  %v2137 = vand.u32 %v2136, 4294901760
  %2138 = vmatpush1.msra.mxu0 %v2137
  %2139 = vmatprep.subr.mxu0 0.0
  %v2140 = vand.u32 %v155, 4294901760
  %v2141 = vsub.f32 %v155, %v2140
  %v2142 = vand.u32 %v2141, 4294901760
  %v2143 = vsub.f32 %v2141, %v2142
  %v2144 = vand.u32 %v2143, 4294901760
  %2145 = vmatpush1.msra.mxu0 %v2144
  %2146 = vmatprep.subr.mxu0 0.0
  %v2147 = vand.u32 %v154, 4294901760
  %v2148 = vsub.f32 %v154, %v2147
  %v2149 = vand.u32 %v2148, 4294901760
  %v2150 = vsub.f32 %v2148, %v2149
  %v2151 = vand.u32 %v2150, 4294901760
  %2152 = vmatpush1.msra.mxu0 %v2151
  %2153 = vmatprep.subr.mxu0 0.0
  %v2154 = vand.u32 %v153, 4294901760
  %v2155 = vsub.f32 %v153, %v2154
  %v2156 = vand.u32 %v2155, 4294901760
  %v2157 = vsub.f32 %v2155, %v2156
  %v2158 = vand.u32 %v2157, 4294901760
  %2159 = vmatpush1.msra.mxu0 %v2158
  %2160 = vmatprep.subr.mxu0 0.0
  %v2161 = vand.u32 %v152, 4294901760
  %v2162 = vsub.f32 %v152, %v2161
  %v2163 = vand.u32 %v2162, 4294901760
  %v2164 = vsub.f32 %v2162, %v2163
  %v2165 = vand.u32 %v2164, 4294901760
  %2166 = vmatpush1.msra.mxu0 %v2165
  %2167 = vmatprep.subr.mxu0 0.0
  %v2168 = vand.u32 %v151, 4294901760
  %v2169 = vsub.f32 %v151, %v2168
  %v2170 = vand.u32 %v2169, 4294901760
  %v2171 = vsub.f32 %v2169, %v2170
  %v2172 = vand.u32 %v2171, 4294901760
  %2173 = vmatpush1.msra.mxu0 %v2172
  %2174 = vmatprep.subr.mxu0 0.0
  %v2175 = vand.u32 %v150, 4294901760
  %v2176 = vsub.f32 %v150, %v2175
  %v2177 = vand.u32 %v2176, 4294901760
  %v2178 = vsub.f32 %v2176, %v2177
  %v2179 = vand.u32 %v2178, 4294901760
  %2180 = vmatpush1.msra.mxu0 %v2179
  %2181 = vmatprep.subr.mxu0 0.0
  %v2182 = vand.u32 %v149, 4294901760
  %v2183 = vsub.f32 %v149, %v2182
  %v2184 = vand.u32 %v2183, 4294901760
  %v2185 = vsub.f32 %v2183, %v2184
  %v2186 = vand.u32 %v2185, 4294901760
  %2187 = vmatpush1.msra.mxu0 %v2186
  %2188 = vmatprep.subr.mxu0 0.0
  %v2189 = vand.u32 %v148, 4294901760
  %v2190 = vsub.f32 %v148, %v2189
  %v2191 = vand.u32 %v2190, 4294901760
  %v2192 = vsub.f32 %v2190, %v2191
  %v2193 = vand.u32 %v2192, 4294901760
  %2194 = vmatpush1.msra.mxu0 %v2193
  %2195 = vmatprep.subr.mxu0 0.0
  %v2196 = vand.u32 %v147, 4294901760
  %v2197 = vsub.f32 %v147, %v2196
  %v2198 = vand.u32 %v2197, 4294901760
  %v2199 = vsub.f32 %v2197, %v2198
  %v2200 = vand.u32 %v2199, 4294901760
  %2201 = vmatpush1.msra.mxu0 %v2200
  %2202 = vmatprep.subr.mxu0 0.0
  %v2203 = vand.u32 %v146, 4294901760
  %v2204 = vsub.f32 %v146, %v2203
  %v2205 = vand.u32 %v2204, 4294901760
  %v2206 = vsub.f32 %v2204, %v2205
  %v2207 = vand.u32 %v2206, 4294901760
  %2208 = vmatpush1.msra.mxu0 %v2207
  %2209 = vmatprep.subr.mxu0 0.0
  %v2210 = vand.u32 %v145, 4294901760
  %v2211 = vsub.f32 %v145, %v2210
  %v2212 = vand.u32 %v2211, 4294901760
  %v2213 = vsub.f32 %v2211, %v2212
  %v2214 = vand.u32 %v2213, 4294901760
  %2215 = vmatpush1.msra.mxu0 %v2214
  %2216 = vmatprep.subr.mxu0 0.0
  %2217 = vmatpush2.msra.mxu0 0.0
  %2218 = vmatprep.subr.mxu0 0.0
  %2219 = vmatpush2.msra.mxu0 0.0
  %2220 = vmatprep.subr.mxu0 0.0
  %2221 = vmatpush2.msra.mxu0 0.0
  %2222 = vmatprep.subr.mxu0 0.0
  %2223 = vmatpush2.msra.mxu0 0.0
  %2224 = vmatprep.subr.mxu0 0.0
  %2225 = vmatpush2.msra.mxu0 0.0
  %2226 = vmatprep.subr.mxu0 0.0
  %2227 = vmatpush2.msra.mxu0 0.0
  %2228 = vmatprep.subr.mxu0 0.0
  %2229 = vmatpush2.msra.mxu0 0.0
  %2230 = vmatprep.subr.mxu0 0.0
  %2231 = vmatpush2.msra.mxu0 0.0
  %2232 = vmatprep.subr.mxu0 0.0
  %2233 = vmatpush2.msra.mxu0 0.0
  %2234 = vmatprep.subr.mxu0 0.0
  %2235 = vmatpush2.msra.mxu0 0.0
  %2236 = vmatprep.subr.mxu0 0.0
  %2237 = vmatpush2.msra.mxu0 0.0
  %2238 = vmatprep.subr.mxu0 0.0
  %2239 = vmatpush2.msra.mxu0 0.0
  %2240 = vmatprep.subr.mxu0 0.0
  %2241 = vmatpush2.msra.mxu0 0.0
  %2242 = vmatprep.subr.mxu0 0.0
  %2243 = vmatpush2.msra.mxu0 0.0
  %2244 = vmatprep.subr.mxu0 0.0
  %2245 = vmatpush2.msra.mxu0 0.0
  %2246 = vmatprep.subr.mxu0 0.0
  %2247 = vmatpush2.msra.mxu0 0.0
  %2248 = vmatprep.mubr.f32.mxu0 0.0
  %v2249 = vand.u32 %v67, 4294901760
  %2250 = vmatmul.mubr.f32.gmra.mxu0 %v2249
  %v2251 = vpop.f32.mrf.mxu0
  %v2252 = vadd.f32 %v1951, %v2251
  %v2253 = vpop.f32.mrf.mxu0
  %2254 = vmatprep.mubr.f32.mxu0 0.0
  %v2255 = vand.u32 %v70, 4294901760
  %2256 = vmatmul.mubr.f32.gmra.mxu0 %v2255
  %v2257 = vpop.f32.mrf.mxu0
  %v2258 = vadd.f32 %v1961, %v2257
  %v2259 = vpop.f32.mrf.mxu0
  %2260 = vmatprep.mubr.f32.mxu0 0.0
  %v2261 = vand.u32 %v73, 4294901760
  %2262 = vmatmul.mubr.f32.gmra.mxu0 %v2261
  %v2263 = vpop.f32.mrf.mxu0
  %v2264 = vadd.f32 %v1971, %v2263
  %v2265 = vpop.f32.mrf.mxu0
  %2266 = vmatprep.mubr.f32.mxu0 0.0
  %v2267 = vand.u32 %v76, 4294901760
  %2268 = vmatmul.mubr.f32.gmra.mxu0 %v2267
  %v2269 = vpop.f32.mrf.mxu0
  %v2270 = vadd.f32 %v1981, %v2269
  %v2271 = vpop.f32.mrf.mxu0
  %2272 = vmatprep.mubr.f32.mxu0 0.0
  %v2273 = vand.u32 %v79, 4294901760
  %2274 = vmatmul.mubr.f32.gmra.mxu0 %v2273
  %v2275 = vpop.f32.mrf.mxu0
  %v2276 = vadd.f32 %v1991, %v2275
  %v2277 = vpop.f32.mrf.mxu0
  %2278 = vmatprep.mubr.f32.mxu0 0.0
  %v2279 = vand.u32 %v82, 4294901760
  %2280 = vmatmul.mubr.f32.gmra.mxu0 %v2279
  %v2281 = vpop.f32.mrf.mxu0
  %v2282 = vadd.f32 %v2001, %v2281
  %v2283 = vpop.f32.mrf.mxu0
  %2284 = vmatprep.mubr.f32.mxu0 0.0
  %v2285 = vand.u32 %v85, 4294901760
  %2286 = vmatmul.mubr.f32.gmra.mxu0 %v2285
  %v2287 = vpop.f32.mrf.mxu0
  %v2288 = vadd.f32 %v2011, %v2287
  %v2289 = vpop.f32.mrf.mxu0
  %2290 = vmatprep.mubr.f32.mxu0 0.0
  %v2291 = vand.u32 %v88, 4294901760
  %2292 = vmatmul.mubr.f32.gmra.mxu0 %v2291
  %v2293 = vpop.f32.mrf.mxu0
  %v2294 = vadd.f32 %v2021, %v2293
  %v2295 = vpop.f32.mrf.mxu0
  %2296 = vmatprep.mubr.f32.mxu0 0.0
  %v2297 = vand.u32 %v91, 4294901760
  %2298 = vmatmul.mubr.f32.gmra.mxu0 %v2297
  %v2299 = vpop.f32.mrf.mxu0
  %v2300 = vadd.f32 %v2031, %v2299
  %v2301 = vpop.f32.mrf.mxu0
  %2302 = vmatprep.mubr.f32.mxu0 0.0
  %v2303 = vand.u32 %v94, 4294901760
  %2304 = vmatmul.mubr.f32.gmra.mxu0 %v2303
  %v2305 = vpop.f32.mrf.mxu0
  %v2306 = vadd.f32 %v2041, %v2305
  %v2307 = vpop.f32.mrf.mxu0
  %2308 = vmatprep.mubr.f32.mxu0 0.0
  %v2309 = vand.u32 %v97, 4294901760
  %2310 = vmatmul.mubr.f32.gmra.mxu0 %v2309
  %v2311 = vpop.f32.mrf.mxu0
  %v2312 = vadd.f32 %v2051, %v2311
  %v2313 = vpop.f32.mrf.mxu0
  %2314 = vmatprep.mubr.f32.mxu0 0.0
  %v2315 = vand.u32 %v100, 4294901760
  %2316 = vmatmul.mubr.f32.gmra.mxu0 %v2315
  %v2317 = vpop.f32.mrf.mxu0
  %v2318 = vadd.f32 %v2061, %v2317
  %v2319 = vpop.f32.mrf.mxu0
  %2320 = vmatprep.mubr.f32.mxu0 0.0
  %v2321 = vand.u32 %v103, 4294901760
  %2322 = vmatmul.mubr.f32.gmra.mxu0 %v2321
  %v2323 = vpop.f32.mrf.mxu0
  %v2324 = vadd.f32 %v2071, %v2323
  %v2325 = vpop.f32.mrf.mxu0
  %2326 = vmatprep.mubr.f32.mxu0 0.0
  %v2327 = vand.u32 %v106, 4294901760
  %2328 = vmatmul.mubr.f32.gmra.mxu0 %v2327
  %v2329 = vpop.f32.mrf.mxu0
  %v2330 = vadd.f32 %v2081, %v2329
  %v2331 = vpop.f32.mrf.mxu0
  %2332 = vmatprep.mubr.f32.mxu0 0.0
  %v2333 = vand.u32 %v109, 4294901760
  %2334 = vmatmul.mubr.f32.gmra.mxu0 %v2333
  %v2335 = vpop.f32.mrf.mxu0
  %v2336 = vadd.f32 %v2091, %v2335
  %v2337 = vpop.f32.mrf.mxu0
  %2338 = vmatprep.mubr.f32.mxu0 0.0
  %v2339 = vand.u32 %v112, 4294901760
  %2340 = vmatmul.mubr.f32.gmra.mxu0 %v2339
  %v2341 = vpop.f32.mrf.mxu0
  %v2342 = vadd.f32 %v2101, %v2341
  %v2343 = vpop.f32.mrf.mxu0
  %2344 = vdwg.mxu0
  %2345 = vmatprep.subr.mxu0 0.0
  %v2346 = vand.u32 %v160, 4294901760
  %v2347 = vsub.f32 %v160, %v2346
  %2348 = vmatpush1.msra.mxu0 %v2347
  %2349 = vmatprep.subr.mxu0 0.0
  %v2350 = vand.u32 %v159, 4294901760
  %v2351 = vsub.f32 %v159, %v2350
  %2352 = vmatpush1.msra.mxu0 %v2351
  %2353 = vmatprep.subr.mxu0 0.0
  %v2354 = vand.u32 %v158, 4294901760
  %v2355 = vsub.f32 %v158, %v2354
  %2356 = vmatpush1.msra.mxu0 %v2355
  %2357 = vmatprep.subr.mxu0 0.0
  %v2358 = vand.u32 %v157, 4294901760
  %v2359 = vsub.f32 %v157, %v2358
  %2360 = vmatpush1.msra.mxu0 %v2359
  %2361 = vmatprep.subr.mxu0 0.0
  %v2362 = vand.u32 %v156, 4294901760
  %v2363 = vsub.f32 %v156, %v2362
  %2364 = vmatpush1.msra.mxu0 %v2363
  %2365 = vmatprep.subr.mxu0 0.0
  %v2366 = vand.u32 %v155, 4294901760
  %v2367 = vsub.f32 %v155, %v2366
  %2368 = vmatpush1.msra.mxu0 %v2367
  %2369 = vmatprep.subr.mxu0 0.0
  %v2370 = vand.u32 %v154, 4294901760
  %v2371 = vsub.f32 %v154, %v2370
  %2372 = vmatpush1.msra.mxu0 %v2371
  %2373 = vmatprep.subr.mxu0 0.0
  %v2374 = vand.u32 %v153, 4294901760
  %v2375 = vsub.f32 %v153, %v2374
  %2376 = vmatpush1.msra.mxu0 %v2375
  %2377 = vmatprep.subr.mxu0 0.0
  %v2378 = vand.u32 %v152, 4294901760
  %v2379 = vsub.f32 %v152, %v2378
  %2380 = vmatpush1.msra.mxu0 %v2379
  %2381 = vmatprep.subr.mxu0 0.0
  %v2382 = vand.u32 %v151, 4294901760
  %v2383 = vsub.f32 %v151, %v2382
  %2384 = vmatpush1.msra.mxu0 %v2383
  %2385 = vmatprep.subr.mxu0 0.0
  %v2386 = vand.u32 %v150, 4294901760
  %v2387 = vsub.f32 %v150, %v2386
  %2388 = vmatpush1.msra.mxu0 %v2387
  %2389 = vmatprep.subr.mxu0 0.0
  %v2390 = vand.u32 %v149, 4294901760
  %v2391 = vsub.f32 %v149, %v2390
  %2392 = vmatpush1.msra.mxu0 %v2391
  %2393 = vmatprep.subr.mxu0 0.0
  %v2394 = vand.u32 %v148, 4294901760
  %v2395 = vsub.f32 %v148, %v2394
  %2396 = vmatpush1.msra.mxu0 %v2395
  %2397 = vmatprep.subr.mxu0 0.0
  %v2398 = vand.u32 %v147, 4294901760
  %v2399 = vsub.f32 %v147, %v2398
  %2400 = vmatpush1.msra.mxu0 %v2399
  %2401 = vmatprep.subr.mxu0 0.0
  %v2402 = vand.u32 %v146, 4294901760
  %v2403 = vsub.f32 %v146, %v2402
  %2404 = vmatpush1.msra.mxu0 %v2403
  %2405 = vmatprep.subr.mxu0 0.0
  %v2406 = vand.u32 %v145, 4294901760
  %v2407 = vsub.f32 %v145, %v2406
  %2408 = vmatpush1.msra.mxu0 %v2407
  %2409 = vmatprep.subr.mxu0 0.0
  %2410 = vmatpush2.msra.mxu0 0.0
  %2411 = vmatprep.subr.mxu0 0.0
  %2412 = vmatpush2.msra.mxu0 0.0
  %2413 = vmatprep.subr.mxu0 0.0
  %2414 = vmatpush2.msra.mxu0 0.0
  %2415 = vmatprep.subr.mxu0 0.0
  %2416 = vmatpush2.msra.mxu0 0.0
  %2417 = vmatprep.subr.mxu0 0.0
  %2418 = vmatpush2.msra.mxu0 0.0
  %2419 = vmatprep.subr.mxu0 0.0
  %2420 = vmatpush2.msra.mxu0 0.0
  %2421 = vmatprep.subr.mxu0 0.0
  %2422 = vmatpush2.msra.mxu0 0.0
  %2423 = vmatprep.subr.mxu0 0.0
  %2424 = vmatpush2.msra.mxu0 0.0
  %2425 = vmatprep.subr.mxu0 0.0
  %2426 = vmatpush2.msra.mxu0 0.0
  %2427 = vmatprep.subr.mxu0 0.0
  %2428 = vmatpush2.msra.mxu0 0.0
  %2429 = vmatprep.subr.mxu0 0.0
  %2430 = vmatpush2.msra.mxu0 0.0
  %2431 = vmatprep.subr.mxu0 0.0
  %2432 = vmatpush2.msra.mxu0 0.0
  %2433 = vmatprep.subr.mxu0 0.0
  %2434 = vmatpush2.msra.mxu0 0.0
  %2435 = vmatprep.subr.mxu0 0.0
  %2436 = vmatpush2.msra.mxu0 0.0
  %2437 = vmatprep.subr.mxu0 0.0
  %2438 = vmatpush2.msra.mxu0 0.0
  %2439 = vmatprep.subr.mxu0 0.0
  %2440 = vmatpush2.msra.mxu0 0.0
  %2441 = vmatprep.mubr.f32.mxu0 0.0
  %v2442 = vand.u32 %v67, 4294901760
  %v2443 = vsub.f32 %v67, %v2442
  %2444 = vmatmul.mubr.f32.gmra.mxu0 %v2443
  %v2445 = vpop.f32.mrf.mxu0
  %v2446 = vadd.f32 %v2252, %v2445
  %v2447 = vpop.f32.mrf.mxu0
  %2448 = vmatprep.mubr.f32.mxu0 0.0
  %v2449 = vand.u32 %v70, 4294901760
  %v2450 = vsub.f32 %v70, %v2449
  %2451 = vmatmul.mubr.f32.gmra.mxu0 %v2450
  %v2452 = vpop.f32.mrf.mxu0
  %v2453 = vadd.f32 %v2258, %v2452
  %v2454 = vpop.f32.mrf.mxu0
  %2455 = vmatprep.mubr.f32.mxu0 0.0
  %v2456 = vand.u32 %v73, 4294901760
  %v2457 = vsub.f32 %v73, %v2456
  %2458 = vmatmul.mubr.f32.gmra.mxu0 %v2457
  %v2459 = vpop.f32.mrf.mxu0
  %v2460 = vadd.f32 %v2264, %v2459
  %v2461 = vpop.f32.mrf.mxu0
  %2462 = vmatprep.mubr.f32.mxu0 0.0
  %v2463 = vand.u32 %v76, 4294901760
  %v2464 = vsub.f32 %v76, %v2463
  %2465 = vmatmul.mubr.f32.gmra.mxu0 %v2464
  %v2466 = vpop.f32.mrf.mxu0
  %v2467 = vadd.f32 %v2270, %v2466
  %v2468 = vpop.f32.mrf.mxu0
  %2469 = vmatprep.mubr.f32.mxu0 0.0
  %v2470 = vand.u32 %v79, 4294901760
  %v2471 = vsub.f32 %v79, %v2470
  %2472 = vmatmul.mubr.f32.gmra.mxu0 %v2471
  %v2473 = vpop.f32.mrf.mxu0
  %v2474 = vadd.f32 %v2276, %v2473
  %v2475 = vpop.f32.mrf.mxu0
  %2476 = vmatprep.mubr.f32.mxu0 0.0
  %v2477 = vand.u32 %v82, 4294901760
  %v2478 = vsub.f32 %v82, %v2477
  %2479 = vmatmul.mubr.f32.gmra.mxu0 %v2478
  %v2480 = vpop.f32.mrf.mxu0
  %v2481 = vadd.f32 %v2282, %v2480
  %v2482 = vpop.f32.mrf.mxu0
  %2483 = vmatprep.mubr.f32.mxu0 0.0
  %v2484 = vand.u32 %v85, 4294901760
  %v2485 = vsub.f32 %v85, %v2484
  %2486 = vmatmul.mubr.f32.gmra.mxu0 %v2485
  %v2487 = vpop.f32.mrf.mxu0
  %v2488 = vadd.f32 %v2288, %v2487
  %v2489 = vpop.f32.mrf.mxu0
  %2490 = vmatprep.mubr.f32.mxu0 0.0
  %v2491 = vand.u32 %v88, 4294901760
  %v2492 = vsub.f32 %v88, %v2491
  %2493 = vmatmul.mubr.f32.gmra.mxu0 %v2492
  %v2494 = vpop.f32.mrf.mxu0
  %v2495 = vadd.f32 %v2294, %v2494
  %v2496 = vpop.f32.mrf.mxu0
  %2497 = vmatprep.mubr.f32.mxu0 0.0
  %v2498 = vand.u32 %v91, 4294901760
  %v2499 = vsub.f32 %v91, %v2498
  %2500 = vmatmul.mubr.f32.gmra.mxu0 %v2499
  %v2501 = vpop.f32.mrf.mxu0
  %v2502 = vadd.f32 %v2300, %v2501
  %v2503 = vpop.f32.mrf.mxu0
  %2504 = vmatprep.mubr.f32.mxu0 0.0
  %v2505 = vand.u32 %v94, 4294901760
  %v2506 = vsub.f32 %v94, %v2505
  %2507 = vmatmul.mubr.f32.gmra.mxu0 %v2506
  %v2508 = vpop.f32.mrf.mxu0
  %v2509 = vadd.f32 %v2306, %v2508
  %v2510 = vpop.f32.mrf.mxu0
  %2511 = vmatprep.mubr.f32.mxu0 0.0
  %v2512 = vand.u32 %v97, 4294901760
  %v2513 = vsub.f32 %v97, %v2512
  %2514 = vmatmul.mubr.f32.gmra.mxu0 %v2513
  %v2515 = vpop.f32.mrf.mxu0
  %v2516 = vadd.f32 %v2312, %v2515
  %v2517 = vpop.f32.mrf.mxu0
  %2518 = vmatprep.mubr.f32.mxu0 0.0
  %v2519 = vand.u32 %v100, 4294901760
  %v2520 = vsub.f32 %v100, %v2519
  %2521 = vmatmul.mubr.f32.gmra.mxu0 %v2520
  %v2522 = vpop.f32.mrf.mxu0
  %v2523 = vadd.f32 %v2318, %v2522
  %v2524 = vpop.f32.mrf.mxu0
  %2525 = vmatprep.mubr.f32.mxu0 0.0
  %v2526 = vand.u32 %v103, 4294901760
  %v2527 = vsub.f32 %v103, %v2526
  %2528 = vmatmul.mubr.f32.gmra.mxu0 %v2527
  %v2529 = vpop.f32.mrf.mxu0
  %v2530 = vadd.f32 %v2324, %v2529
  %v2531 = vpop.f32.mrf.mxu0
  %2532 = vmatprep.mubr.f32.mxu0 0.0
  %v2533 = vand.u32 %v106, 4294901760
  %v2534 = vsub.f32 %v106, %v2533
  %2535 = vmatmul.mubr.f32.gmra.mxu0 %v2534
  %v2536 = vpop.f32.mrf.mxu0
  %v2537 = vadd.f32 %v2330, %v2536
  %v2538 = vpop.f32.mrf.mxu0
  %2539 = vmatprep.mubr.f32.mxu0 0.0
  %v2540 = vand.u32 %v109, 4294901760
  %v2541 = vsub.f32 %v109, %v2540
  %2542 = vmatmul.mubr.f32.gmra.mxu0 %v2541
  %v2543 = vpop.f32.mrf.mxu0
  %v2544 = vadd.f32 %v2336, %v2543
  %v2545 = vpop.f32.mrf.mxu0
  %2546 = vmatprep.mubr.f32.mxu0 0.0
  %v2547 = vand.u32 %v112, 4294901760
  %v2548 = vsub.f32 %v112, %v2547
  %2549 = vmatmul.mubr.f32.gmra.mxu0 %v2548
  %v2550 = vpop.f32.mrf.mxu0
  %v2551 = vadd.f32 %v2342, %v2550
  %v2552 = vpop.f32.mrf.mxu0
  %2553 = vdwg.mxu0
  %2554 = vmatprep.subr.mxu0 0.0
  %v2555 = vand.u32 %v160, 4294901760
  %2556 = vmatpush1.msra.mxu0 %v2555
  %2557 = vmatprep.subr.mxu0 0.0
  %v2558 = vand.u32 %v159, 4294901760
  %2559 = vmatpush1.msra.mxu0 %v2558
  %2560 = vmatprep.subr.mxu0 0.0
  %v2561 = vand.u32 %v158, 4294901760
  %2562 = vmatpush1.msra.mxu0 %v2561
  %2563 = vmatprep.subr.mxu0 0.0
  %v2564 = vand.u32 %v157, 4294901760
  %2565 = vmatpush1.msra.mxu0 %v2564
  %2566 = vmatprep.subr.mxu0 0.0
  %v2567 = vand.u32 %v156, 4294901760
  %2568 = vmatpush1.msra.mxu0 %v2567
  %2569 = vmatprep.subr.mxu0 0.0
  %v2570 = vand.u32 %v155, 4294901760
  %2571 = vmatpush1.msra.mxu0 %v2570
  %2572 = vmatprep.subr.mxu0 0.0
  %v2573 = vand.u32 %v154, 4294901760
  %2574 = vmatpush1.msra.mxu0 %v2573
  %2575 = vmatprep.subr.mxu0 0.0
  %v2576 = vand.u32 %v153, 4294901760
  %2577 = vmatpush1.msra.mxu0 %v2576
  %2578 = vmatprep.subr.mxu0 0.0
  %v2579 = vand.u32 %v152, 4294901760
  %2580 = vmatpush1.msra.mxu0 %v2579
  %2581 = vmatprep.subr.mxu0 0.0
  %v2582 = vand.u32 %v151, 4294901760
  %2583 = vmatpush1.msra.mxu0 %v2582
  %2584 = vmatprep.subr.mxu0 0.0
  %v2585 = vand.u32 %v150, 4294901760
  %2586 = vmatpush1.msra.mxu0 %v2585
  %2587 = vmatprep.subr.mxu0 0.0
  %v2588 = vand.u32 %v149, 4294901760
  %2589 = vmatpush1.msra.mxu0 %v2588
  %2590 = vmatprep.subr.mxu0 0.0
  %v2591 = vand.u32 %v148, 4294901760
  %2592 = vmatpush1.msra.mxu0 %v2591
  %2593 = vmatprep.subr.mxu0 0.0
  %v2594 = vand.u32 %v147, 4294901760
  %2595 = vmatpush1.msra.mxu0 %v2594
  %2596 = vmatprep.subr.mxu0 0.0
  %v2597 = vand.u32 %v146, 4294901760
  %2598 = vmatpush1.msra.mxu0 %v2597
  %2599 = vmatprep.subr.mxu0 0.0
  %v2600 = vand.u32 %v145, 4294901760
  %2601 = vmatpush1.msra.mxu0 %v2600
  %2602 = vmatprep.subr.mxu0 0.0
  %2603 = vmatpush2.msra.mxu0 0.0
  %2604 = vmatprep.subr.mxu0 0.0
  %2605 = vmatpush2.msra.mxu0 0.0
  %2606 = vmatprep.subr.mxu0 0.0
  %2607 = vmatpush2.msra.mxu0 0.0
  %2608 = vmatprep.subr.mxu0 0.0
  %2609 = vmatpush2.msra.mxu0 0.0
  %2610 = vmatprep.subr.mxu0 0.0
  %2611 = vmatpush2.msra.mxu0 0.0
  %2612 = vmatprep.subr.mxu0 0.0
  %2613 = vmatpush2.msra.mxu0 0.0
  %2614 = vmatprep.subr.mxu0 0.0
  %2615 = vmatpush2.msra.mxu0 0.0
  %2616 = vmatprep.subr.mxu0 0.0
  %2617 = vmatpush2.msra.mxu0 0.0
  %2618 = vmatprep.subr.mxu0 0.0
  %2619 = vmatpush2.msra.mxu0 0.0
  %2620 = vmatprep.subr.mxu0 0.0
  %2621 = vmatpush2.msra.mxu0 0.0
  %2622 = vmatprep.subr.mxu0 0.0
  %2623 = vmatpush2.msra.mxu0 0.0
  %2624 = vmatprep.subr.mxu0 0.0
  %2625 = vmatpush2.msra.mxu0 0.0
  %2626 = vmatprep.subr.mxu0 0.0
  %2627 = vmatpush2.msra.mxu0 0.0
  %2628 = vmatprep.subr.mxu0 0.0
  %2629 = vmatpush2.msra.mxu0 0.0
  %2630 = vmatprep.subr.mxu0 0.0
  %2631 = vmatpush2.msra.mxu0 0.0
  %2632 = vmatprep.subr.mxu0 0.0
  %2633 = vmatpush2.msra.mxu0 0.0
  %2634 = vmatprep.mubr.f32.mxu0 0.0
  %v2635 = vand.u32 %v67, 4294901760
  %v2636 = vsub.f32 %v67, %v2635
  %v2637 = vand.u32 %v2636, 4294901760
  %2638 = vmatmul.mubr.f32.gmra.mxu0 %v2637
  %v2639 = vpop.f32.mrf.mxu0
  %v2640 = vadd.f32 %v2446, %v2639
  %v2641 = vpop.f32.mrf.mxu0
  %2642 = vmatprep.mubr.f32.mxu0 0.0
  %v2643 = vand.u32 %v70, 4294901760
  %v2644 = vsub.f32 %v70, %v2643
  %v2645 = vand.u32 %v2644, 4294901760
  %2646 = vmatmul.mubr.f32.gmra.mxu0 %v2645
  %v2647 = vpop.f32.mrf.mxu0
  %v2648 = vadd.f32 %v2453, %v2647
  %v2649 = vpop.f32.mrf.mxu0
  %2650 = vmatprep.mubr.f32.mxu0 0.0
  %v2651 = vand.u32 %v73, 4294901760
  %v2652 = vsub.f32 %v73, %v2651
  %v2653 = vand.u32 %v2652, 4294901760
  %2654 = vmatmul.mubr.f32.gmra.mxu0 %v2653
  %v2655 = vpop.f32.mrf.mxu0
  %v2656 = vadd.f32 %v2460, %v2655
  %v2657 = vpop.f32.mrf.mxu0
  %2658 = vmatprep.mubr.f32.mxu0 0.0
  %v2659 = vand.u32 %v76, 4294901760
  %v2660 = vsub.f32 %v76, %v2659
  %v2661 = vand.u32 %v2660, 4294901760
  %2662 = vmatmul.mubr.f32.gmra.mxu0 %v2661
  %v2663 = vpop.f32.mrf.mxu0
  %v2664 = vadd.f32 %v2467, %v2663
  %v2665 = vpop.f32.mrf.mxu0
  %2666 = vmatprep.mubr.f32.mxu0 0.0
  %v2667 = vand.u32 %v79, 4294901760
  %v2668 = vsub.f32 %v79, %v2667
  %v2669 = vand.u32 %v2668, 4294901760
  %2670 = vmatmul.mubr.f32.gmra.mxu0 %v2669
  %v2671 = vpop.f32.mrf.mxu0
  %v2672 = vadd.f32 %v2474, %v2671
  %v2673 = vpop.f32.mrf.mxu0
  %2674 = vmatprep.mubr.f32.mxu0 0.0
  %v2675 = vand.u32 %v82, 4294901760
  %v2676 = vsub.f32 %v82, %v2675
  %v2677 = vand.u32 %v2676, 4294901760
  %2678 = vmatmul.mubr.f32.gmra.mxu0 %v2677
  %v2679 = vpop.f32.mrf.mxu0
  %v2680 = vadd.f32 %v2481, %v2679
  %v2681 = vpop.f32.mrf.mxu0
  %2682 = vmatprep.mubr.f32.mxu0 0.0
  %v2683 = vand.u32 %v85, 4294901760
  %v2684 = vsub.f32 %v85, %v2683
  %v2685 = vand.u32 %v2684, 4294901760
  %2686 = vmatmul.mubr.f32.gmra.mxu0 %v2685
  %v2687 = vpop.f32.mrf.mxu0
  %v2688 = vadd.f32 %v2488, %v2687
  %v2689 = vpop.f32.mrf.mxu0
  %2690 = vmatprep.mubr.f32.mxu0 0.0
  %v2691 = vand.u32 %v88, 4294901760
  %v2692 = vsub.f32 %v88, %v2691
  %v2693 = vand.u32 %v2692, 4294901760
  %2694 = vmatmul.mubr.f32.gmra.mxu0 %v2693
  %v2695 = vpop.f32.mrf.mxu0
  %v2696 = vadd.f32 %v2495, %v2695
  %v2697 = vpop.f32.mrf.mxu0
  %2698 = vmatprep.mubr.f32.mxu0 0.0
  %v2699 = vand.u32 %v91, 4294901760
  %v2700 = vsub.f32 %v91, %v2699
  %v2701 = vand.u32 %v2700, 4294901760
  %2702 = vmatmul.mubr.f32.gmra.mxu0 %v2701
  %v2703 = vpop.f32.mrf.mxu0
  %v2704 = vadd.f32 %v2502, %v2703
  %v2705 = vpop.f32.mrf.mxu0
  %2706 = vmatprep.mubr.f32.mxu0 0.0
  %v2707 = vand.u32 %v94, 4294901760
  %v2708 = vsub.f32 %v94, %v2707
  %v2709 = vand.u32 %v2708, 4294901760
  %2710 = vmatmul.mubr.f32.gmra.mxu0 %v2709
  %v2711 = vpop.f32.mrf.mxu0
  %v2712 = vadd.f32 %v2509, %v2711
  %v2713 = vpop.f32.mrf.mxu0
  %2714 = vmatprep.mubr.f32.mxu0 0.0
  %v2715 = vand.u32 %v97, 4294901760
  %v2716 = vsub.f32 %v97, %v2715
  %v2717 = vand.u32 %v2716, 4294901760
  %2718 = vmatmul.mubr.f32.gmra.mxu0 %v2717
  %v2719 = vpop.f32.mrf.mxu0
  %v2720 = vadd.f32 %v2516, %v2719
  %v2721 = vpop.f32.mrf.mxu0
  %2722 = vmatprep.mubr.f32.mxu0 0.0
  %v2723 = vand.u32 %v100, 4294901760
  %v2724 = vsub.f32 %v100, %v2723
  %v2725 = vand.u32 %v2724, 4294901760
  %2726 = vmatmul.mubr.f32.gmra.mxu0 %v2725
  %v2727 = vpop.f32.mrf.mxu0
  %v2728 = vadd.f32 %v2523, %v2727
  %v2729 = vpop.f32.mrf.mxu0
  %2730 = vmatprep.mubr.f32.mxu0 0.0
  %v2731 = vand.u32 %v103, 4294901760
  %v2732 = vsub.f32 %v103, %v2731
  %v2733 = vand.u32 %v2732, 4294901760
  %2734 = vmatmul.mubr.f32.gmra.mxu0 %v2733
  %v2735 = vpop.f32.mrf.mxu0
  %v2736 = vadd.f32 %v2530, %v2735
  %v2737 = vpop.f32.mrf.mxu0
  %2738 = vmatprep.mubr.f32.mxu0 0.0
  %v2739 = vand.u32 %v106, 4294901760
  %v2740 = vsub.f32 %v106, %v2739
  %v2741 = vand.u32 %v2740, 4294901760
  %2742 = vmatmul.mubr.f32.gmra.mxu0 %v2741
  %v2743 = vpop.f32.mrf.mxu0
  %v2744 = vadd.f32 %v2537, %v2743
  %v2745 = vpop.f32.mrf.mxu0
  %2746 = vmatprep.mubr.f32.mxu0 0.0
  %v2747 = vand.u32 %v109, 4294901760
  %v2748 = vsub.f32 %v109, %v2747
  %v2749 = vand.u32 %v2748, 4294901760
  %2750 = vmatmul.mubr.f32.gmra.mxu0 %v2749
  %v2751 = vpop.f32.mrf.mxu0
  %v2752 = vadd.f32 %v2544, %v2751
  %v2753 = vpop.f32.mrf.mxu0
  %2754 = vmatprep.mubr.f32.mxu0 0.0
  %v2755 = vand.u32 %v112, 4294901760
  %v2756 = vsub.f32 %v112, %v2755
  %v2757 = vand.u32 %v2756, 4294901760
  %2758 = vmatmul.mubr.f32.gmra.mxu0 %v2757
  %v2759 = vpop.f32.mrf.mxu0
  %v2760 = vadd.f32 %v2551, %v2759
  %v2761 = vpop.f32.mrf.mxu0
  %2762 = vdwg.mxu0
  %2763 = vmatprep.subr.mxu0 0.0
  %v2764 = vand.u32 %v160, 4294901760
  %v2765 = vsub.f32 %v160, %v2764
  %v2766 = vand.u32 %v2765, 4294901760
  %2767 = vmatpush1.msra.mxu0 %v2766
  %2768 = vmatprep.subr.mxu0 0.0
  %v2769 = vand.u32 %v159, 4294901760
  %v2770 = vsub.f32 %v159, %v2769
  %v2771 = vand.u32 %v2770, 4294901760
  %2772 = vmatpush1.msra.mxu0 %v2771
  %2773 = vmatprep.subr.mxu0 0.0
  %v2774 = vand.u32 %v158, 4294901760
  %v2775 = vsub.f32 %v158, %v2774
  %v2776 = vand.u32 %v2775, 4294901760
  %2777 = vmatpush1.msra.mxu0 %v2776
  %2778 = vmatprep.subr.mxu0 0.0
  %v2779 = vand.u32 %v157, 4294901760
  %v2780 = vsub.f32 %v157, %v2779
  %v2781 = vand.u32 %v2780, 4294901760
  %2782 = vmatpush1.msra.mxu0 %v2781
  %2783 = vmatprep.subr.mxu0 0.0
  %v2784 = vand.u32 %v156, 4294901760
  %v2785 = vsub.f32 %v156, %v2784
  %v2786 = vand.u32 %v2785, 4294901760
  %2787 = vmatpush1.msra.mxu0 %v2786
  %2788 = vmatprep.subr.mxu0 0.0
  %v2789 = vand.u32 %v155, 4294901760
  %v2790 = vsub.f32 %v155, %v2789
  %v2791 = vand.u32 %v2790, 4294901760
  %2792 = vmatpush1.msra.mxu0 %v2791
  %2793 = vmatprep.subr.mxu0 0.0
  %v2794 = vand.u32 %v154, 4294901760
  %v2795 = vsub.f32 %v154, %v2794
  %v2796 = vand.u32 %v2795, 4294901760
  %2797 = vmatpush1.msra.mxu0 %v2796
  %2798 = vmatprep.subr.mxu0 0.0
  %v2799 = vand.u32 %v153, 4294901760
  %v2800 = vsub.f32 %v153, %v2799
  %v2801 = vand.u32 %v2800, 4294901760
  %2802 = vmatpush1.msra.mxu0 %v2801
  %2803 = vmatprep.subr.mxu0 0.0
  %v2804 = vand.u32 %v152, 4294901760
  %v2805 = vsub.f32 %v152, %v2804
  %v2806 = vand.u32 %v2805, 4294901760
  %2807 = vmatpush1.msra.mxu0 %v2806
  %2808 = vmatprep.subr.mxu0 0.0
  %v2809 = vand.u32 %v151, 4294901760
  %v2810 = vsub.f32 %v151, %v2809
  %v2811 = vand.u32 %v2810, 4294901760
  %2812 = vmatpush1.msra.mxu0 %v2811
  %2813 = vmatprep.subr.mxu0 0.0
  %v2814 = vand.u32 %v150, 4294901760
  %v2815 = vsub.f32 %v150, %v2814
  %v2816 = vand.u32 %v2815, 4294901760
  %2817 = vmatpush1.msra.mxu0 %v2816
  %2818 = vmatprep.subr.mxu0 0.0
  %v2819 = vand.u32 %v149, 4294901760
  %v2820 = vsub.f32 %v149, %v2819
  %v2821 = vand.u32 %v2820, 4294901760
  %2822 = vmatpush1.msra.mxu0 %v2821
  %2823 = vmatprep.subr.mxu0 0.0
  %v2824 = vand.u32 %v148, 4294901760
  %v2825 = vsub.f32 %v148, %v2824
  %v2826 = vand.u32 %v2825, 4294901760
  %2827 = vmatpush1.msra.mxu0 %v2826
  %2828 = vmatprep.subr.mxu0 0.0
  %v2829 = vand.u32 %v147, 4294901760
  %v2830 = vsub.f32 %v147, %v2829
  %v2831 = vand.u32 %v2830, 4294901760
  %2832 = vmatpush1.msra.mxu0 %v2831
  %2833 = vmatprep.subr.mxu0 0.0
  %v2834 = vand.u32 %v146, 4294901760
  %v2835 = vsub.f32 %v146, %v2834
  %v2836 = vand.u32 %v2835, 4294901760
  %2837 = vmatpush1.msra.mxu0 %v2836
  %2838 = vmatprep.subr.mxu0 0.0
  %v2839 = vand.u32 %v145, 4294901760
  %v2840 = vsub.f32 %v145, %v2839
  %v2841 = vand.u32 %v2840, 4294901760
  %2842 = vmatpush1.msra.mxu0 %v2841
  %2843 = vmatprep.subr.mxu0 0.0
  %2844 = vmatpush2.msra.mxu0 0.0
  %2845 = vmatprep.subr.mxu0 0.0
  %2846 = vmatpush2.msra.mxu0 0.0
  %2847 = vmatprep.subr.mxu0 0.0
  %2848 = vmatpush2.msra.mxu0 0.0
  %2849 = vmatprep.subr.mxu0 0.0
  %2850 = vmatpush2.msra.mxu0 0.0
  %2851 = vmatprep.subr.mxu0 0.0
  %2852 = vmatpush2.msra.mxu0 0.0
  %2853 = vmatprep.subr.mxu0 0.0
  %2854 = vmatpush2.msra.mxu0 0.0
  %2855 = vmatprep.subr.mxu0 0.0
  %2856 = vmatpush2.msra.mxu0 0.0
  %2857 = vmatprep.subr.mxu0 0.0
  %2858 = vmatpush2.msra.mxu0 0.0
  %2859 = vmatprep.subr.mxu0 0.0
  %2860 = vmatpush2.msra.mxu0 0.0
  %2861 = vmatprep.subr.mxu0 0.0
  %2862 = vmatpush2.msra.mxu0 0.0
  %2863 = vmatprep.subr.mxu0 0.0
  %2864 = vmatpush2.msra.mxu0 0.0
  %2865 = vmatprep.subr.mxu0 0.0
  %2866 = vmatpush2.msra.mxu0 0.0
  %2867 = vmatprep.subr.mxu0 0.0
  %2868 = vmatpush2.msra.mxu0 0.0
  %2869 = vmatprep.subr.mxu0 0.0
  %2870 = vmatpush2.msra.mxu0 0.0
  %2871 = vmatprep.subr.mxu0 0.0
  %2872 = vmatpush2.msra.mxu0 0.0
  %2873 = vmatprep.subr.mxu0 0.0
  %2874 = vmatpush2.msra.mxu0 0.0
  %2875 = vmatprep.mubr.f32.mxu0 0.0
  %v2876 = vand.u32 %v67, 4294901760
  %2877 = vmatmul.mubr.f32.gmra.mxu0 %v2876
  %v2878 = vpop.f32.mrf.mxu0
  %v2879 = vadd.f32 %v2640, %v2878
  %v2880 = vpop.f32.mrf.mxu0
  %2881 = vmatprep.mubr.f32.mxu0 0.0
  %v2882 = vand.u32 %v70, 4294901760
  %2883 = vmatmul.mubr.f32.gmra.mxu0 %v2882
  %v2884 = vpop.f32.mrf.mxu0
  %v2885 = vadd.f32 %v2648, %v2884
  %v2886 = vpop.f32.mrf.mxu0
  %2887 = vmatprep.mubr.f32.mxu0 0.0
  %v2888 = vand.u32 %v73, 4294901760
  %2889 = vmatmul.mubr.f32.gmra.mxu0 %v2888
  %v2890 = vpop.f32.mrf.mxu0
  %v2891 = vadd.f32 %v2656, %v2890
  %v2892 = vpop.f32.mrf.mxu0
  %2893 = vmatprep.mubr.f32.mxu0 0.0
  %v2894 = vand.u32 %v76, 4294901760
  %2895 = vmatmul.mubr.f32.gmra.mxu0 %v2894
  %v2896 = vpop.f32.mrf.mxu0
  %v2897 = vadd.f32 %v2664, %v2896
  %v2898 = vpop.f32.mrf.mxu0
  %2899 = vmatprep.mubr.f32.mxu0 0.0
  %v2900 = vand.u32 %v79, 4294901760
  %2901 = vmatmul.mubr.f32.gmra.mxu0 %v2900
  %v2902 = vpop.f32.mrf.mxu0
  %v2903 = vadd.f32 %v2672, %v2902
  %v2904 = vpop.f32.mrf.mxu0
  %2905 = vmatprep.mubr.f32.mxu0 0.0
  %v2906 = vand.u32 %v82, 4294901760
  %2907 = vmatmul.mubr.f32.gmra.mxu0 %v2906
  %v2908 = vpop.f32.mrf.mxu0
  %v2909 = vadd.f32 %v2680, %v2908
  %v2910 = vpop.f32.mrf.mxu0
  %2911 = vmatprep.mubr.f32.mxu0 0.0
  %v2912 = vand.u32 %v85, 4294901760
  %2913 = vmatmul.mubr.f32.gmra.mxu0 %v2912
  %v2914 = vpop.f32.mrf.mxu0
  %v2915 = vadd.f32 %v2688, %v2914
  %v2916 = vpop.f32.mrf.mxu0
  %2917 = vmatprep.mubr.f32.mxu0 0.0
  %v2918 = vand.u32 %v88, 4294901760
  %2919 = vmatmul.mubr.f32.gmra.mxu0 %v2918
  %v2920 = vpop.f32.mrf.mxu0
  %v2921 = vadd.f32 %v2696, %v2920
  %v2922 = vpop.f32.mrf.mxu0
  %2923 = vmatprep.mubr.f32.mxu0 0.0
  %v2924 = vand.u32 %v91, 4294901760
  %2925 = vmatmul.mubr.f32.gmra.mxu0 %v2924
  %v2926 = vpop.f32.mrf.mxu0
  %v2927 = vadd.f32 %v2704, %v2926
  %v2928 = vpop.f32.mrf.mxu0
  %2929 = vmatprep.mubr.f32.mxu0 0.0
  %v2930 = vand.u32 %v94, 4294901760
  %2931 = vmatmul.mubr.f32.gmra.mxu0 %v2930
  %v2932 = vpop.f32.mrf.mxu0
  %v2933 = vadd.f32 %v2712, %v2932
  %v2934 = vpop.f32.mrf.mxu0
  %2935 = vmatprep.mubr.f32.mxu0 0.0
  %v2936 = vand.u32 %v97, 4294901760
  %2937 = vmatmul.mubr.f32.gmra.mxu0 %v2936
  %v2938 = vpop.f32.mrf.mxu0
  %v2939 = vadd.f32 %v2720, %v2938
  %v2940 = vpop.f32.mrf.mxu0
  %2941 = vmatprep.mubr.f32.mxu0 0.0
  %v2942 = vand.u32 %v100, 4294901760
  %2943 = vmatmul.mubr.f32.gmra.mxu0 %v2942
  %v2944 = vpop.f32.mrf.mxu0
  %v2945 = vadd.f32 %v2728, %v2944
  %v2946 = vpop.f32.mrf.mxu0
  %2947 = vmatprep.mubr.f32.mxu0 0.0
  %v2948 = vand.u32 %v103, 4294901760
  %2949 = vmatmul.mubr.f32.gmra.mxu0 %v2948
  %v2950 = vpop.f32.mrf.mxu0
  %v2951 = vadd.f32 %v2736, %v2950
  %v2952 = vpop.f32.mrf.mxu0
  %2953 = vmatprep.mubr.f32.mxu0 0.0
  %v2954 = vand.u32 %v106, 4294901760
  %2955 = vmatmul.mubr.f32.gmra.mxu0 %v2954
  %v2956 = vpop.f32.mrf.mxu0
  %v2957 = vadd.f32 %v2744, %v2956
  %v2958 = vpop.f32.mrf.mxu0
  %2959 = vmatprep.mubr.f32.mxu0 0.0
  %v2960 = vand.u32 %v109, 4294901760
  %2961 = vmatmul.mubr.f32.gmra.mxu0 %v2960
  %v2962 = vpop.f32.mrf.mxu0
  %v2963 = vadd.f32 %v2752, %v2962
  %v2964 = vpop.f32.mrf.mxu0
  %2965 = vmatprep.mubr.f32.mxu0 0.0
  %v2966 = vand.u32 %v112, 4294901760
  %2967 = vmatmul.mubr.f32.gmra.mxu0 %v2966
  %v2968 = vpop.f32.mrf.mxu0
  %v2969 = vadd.f32 %v2760, %v2968
  %v2970 = vpop.f32.mrf.mxu0
  %2971 = vdwg.mxu0
  %2972 = vmatprep.subr.mxu0 0.0
  %v2973 = vand.u32 %v160, 4294901760
  %2974 = vmatpush1.msra.mxu0 %v2973
  %2975 = vmatprep.subr.mxu0 0.0
  %v2976 = vand.u32 %v159, 4294901760
  %2977 = vmatpush1.msra.mxu0 %v2976
  %2978 = vmatprep.subr.mxu0 0.0
  %v2979 = vand.u32 %v158, 4294901760
  %2980 = vmatpush1.msra.mxu0 %v2979
  %2981 = vmatprep.subr.mxu0 0.0
  %v2982 = vand.u32 %v157, 4294901760
  %2983 = vmatpush1.msra.mxu0 %v2982
  %2984 = vmatprep.subr.mxu0 0.0
  %v2985 = vand.u32 %v156, 4294901760
  %2986 = vmatpush1.msra.mxu0 %v2985
  %2987 = vmatprep.subr.mxu0 0.0
  %v2988 = vand.u32 %v155, 4294901760
  %2989 = vmatpush1.msra.mxu0 %v2988
  %2990 = vmatprep.subr.mxu0 0.0
  %v2991 = vand.u32 %v154, 4294901760
  %2992 = vmatpush1.msra.mxu0 %v2991
  %2993 = vmatprep.subr.mxu0 0.0
  %v2994 = vand.u32 %v153, 4294901760
  %2995 = vmatpush1.msra.mxu0 %v2994
  %2996 = vmatprep.subr.mxu0 0.0
  %v2997 = vand.u32 %v152, 4294901760
  %2998 = vmatpush1.msra.mxu0 %v2997
  %2999 = vmatprep.subr.mxu0 0.0
  %v3000 = vand.u32 %v151, 4294901760
  %3001 = vmatpush1.msra.mxu0 %v3000
  %3002 = vmatprep.subr.mxu0 0.0
  %v3003 = vand.u32 %v150, 4294901760
  %3004 = vmatpush1.msra.mxu0 %v3003
  %3005 = vmatprep.subr.mxu0 0.0
  %v3006 = vand.u32 %v149, 4294901760
  %3007 = vmatpush1.msra.mxu0 %v3006
  %3008 = vmatprep.subr.mxu0 0.0
  %v3009 = vand.u32 %v148, 4294901760
  %3010 = vmatpush1.msra.mxu0 %v3009
  %3011 = vmatprep.subr.mxu0 0.0
  %v3012 = vand.u32 %v147, 4294901760
  %3013 = vmatpush1.msra.mxu0 %v3012
  %3014 = vmatprep.subr.mxu0 0.0
  %v3015 = vand.u32 %v146, 4294901760
  %3016 = vmatpush1.msra.mxu0 %v3015
  %3017 = vmatprep.subr.mxu0 0.0
  %v3018 = vand.u32 %v145, 4294901760
  %3019 = vmatpush1.msra.mxu0 %v3018
  %3020 = vmatprep.subr.mxu0 0.0
  %3021 = vmatpush2.msra.mxu0 0.0
  %3022 = vmatprep.subr.mxu0 0.0
  %3023 = vmatpush2.msra.mxu0 0.0
  %3024 = vmatprep.subr.mxu0 0.0
  %3025 = vmatpush2.msra.mxu0 0.0
  %3026 = vmatprep.subr.mxu0 0.0
  %3027 = vmatpush2.msra.mxu0 0.0
  %3028 = vmatprep.subr.mxu0 0.0
  %3029 = vmatpush2.msra.mxu0 0.0
  %3030 = vmatprep.subr.mxu0 0.0
  %3031 = vmatpush2.msra.mxu0 0.0
  %3032 = vmatprep.subr.mxu0 0.0
  %3033 = vmatpush2.msra.mxu0 0.0
  %3034 = vmatprep.subr.mxu0 0.0
  %3035 = vmatpush2.msra.mxu0 0.0
  %3036 = vmatprep.subr.mxu0 0.0
  %3037 = vmatpush2.msra.mxu0 0.0
  %3038 = vmatprep.subr.mxu0 0.0
  %3039 = vmatpush2.msra.mxu0 0.0
  %3040 = vmatprep.subr.mxu0 0.0
  %3041 = vmatpush2.msra.mxu0 0.0
  %3042 = vmatprep.subr.mxu0 0.0
  %3043 = vmatpush2.msra.mxu0 0.0
  %3044 = vmatprep.subr.mxu0 0.0
  %3045 = vmatpush2.msra.mxu0 0.0
  %3046 = vmatprep.subr.mxu0 0.0
  %3047 = vmatpush2.msra.mxu0 0.0
  %3048 = vmatprep.subr.mxu0 0.0
  %3049 = vmatpush2.msra.mxu0 0.0
  %3050 = vmatprep.subr.mxu0 0.0
  %3051 = vmatpush2.msra.mxu0 0.0
  %3052 = vmatprep.mubr.f32.mxu0 0.0
  %v3053 = vand.u32 %v67, 4294901760
  %3054 = vmatmul.mubr.f32.gmra.mxu0 %v3053
  %v3055 = vpop.f32.mrf.mxu0
  %v3056 = vadd.f32 %v2879, %v3055
  %v3057 = vpop.f32.mrf.mxu0
  %3058 = vmatprep.mubr.f32.mxu0 0.0
  %v3059 = vand.u32 %v70, 4294901760
  %3060 = vmatmul.mubr.f32.gmra.mxu0 %v3059
  %v3061 = vpop.f32.mrf.mxu0
  %v3062 = vadd.f32 %v2885, %v3061
  %v3063 = vpop.f32.mrf.mxu0
  %3064 = vmatprep.mubr.f32.mxu0 0.0
  %v3065 = vand.u32 %v73, 4294901760
  %3066 = vmatmul.mubr.f32.gmra.mxu0 %v3065
  %v3067 = vpop.f32.mrf.mxu0
  %v3068 = vadd.f32 %v2891, %v3067
  %v3069 = vpop.f32.mrf.mxu0
  %3070 = vmatprep.mubr.f32.mxu0 0.0
  %v3071 = vand.u32 %v76, 4294901760
  %3072 = vmatmul.mubr.f32.gmra.mxu0 %v3071
  %v3073 = vpop.f32.mrf.mxu0
  %v3074 = vadd.f32 %v2897, %v3073
  %v3075 = vpop.f32.mrf.mxu0
  %3076 = vmatprep.mubr.f32.mxu0 0.0
  %v3077 = vand.u32 %v79, 4294901760
  %3078 = vmatmul.mubr.f32.gmra.mxu0 %v3077
  %v3079 = vpop.f32.mrf.mxu0
  %v3080 = vadd.f32 %v2903, %v3079
  %v3081 = vpop.f32.mrf.mxu0
  %3082 = vmatprep.mubr.f32.mxu0 0.0
  %v3083 = vand.u32 %v82, 4294901760
  %3084 = vmatmul.mubr.f32.gmra.mxu0 %v3083
  %v3085 = vpop.f32.mrf.mxu0
  %v3086 = vadd.f32 %v2909, %v3085
  %v3087 = vpop.f32.mrf.mxu0
  %3088 = vmatprep.mubr.f32.mxu0 0.0
  %v3089 = vand.u32 %v85, 4294901760
  %3090 = vmatmul.mubr.f32.gmra.mxu0 %v3089
  %v3091 = vpop.f32.mrf.mxu0
  %v3092 = vadd.f32 %v2915, %v3091
  %v3093 = vpop.f32.mrf.mxu0
  %3094 = vmatprep.mubr.f32.mxu0 0.0
  %v3095 = vand.u32 %v88, 4294901760
  %3096 = vmatmul.mubr.f32.gmra.mxu0 %v3095
  %v3097 = vpop.f32.mrf.mxu0
  %v3098 = vadd.f32 %v2921, %v3097
  %v3099 = vpop.f32.mrf.mxu0
  %3100 = vmatprep.mubr.f32.mxu0 0.0
  %v3101 = vand.u32 %v91, 4294901760
  %3102 = vmatmul.mubr.f32.gmra.mxu0 %v3101
  %v3103 = vpop.f32.mrf.mxu0
  %v3104 = vadd.f32 %v2927, %v3103
  %v3105 = vpop.f32.mrf.mxu0
  %3106 = vmatprep.mubr.f32.mxu0 0.0
  %v3107 = vand.u32 %v94, 4294901760
  %3108 = vmatmul.mubr.f32.gmra.mxu0 %v3107
  %v3109 = vpop.f32.mrf.mxu0
  %v3110 = vadd.f32 %v2933, %v3109
  %v3111 = vpop.f32.mrf.mxu0
  %3112 = vmatprep.mubr.f32.mxu0 0.0
  %v3113 = vand.u32 %v97, 4294901760
  %3114 = vmatmul.mubr.f32.gmra.mxu0 %v3113
  %v3115 = vpop.f32.mrf.mxu0
  %v3116 = vadd.f32 %v2939, %v3115
  %v3117 = vpop.f32.mrf.mxu0
  %3118 = vmatprep.mubr.f32.mxu0 0.0
  %v3119 = vand.u32 %v100, 4294901760
  %3120 = vmatmul.mubr.f32.gmra.mxu0 %v3119
  %v3121 = vpop.f32.mrf.mxu0
  %v3122 = vadd.f32 %v2945, %v3121
  %v3123 = vpop.f32.mrf.mxu0
  %3124 = vmatprep.mubr.f32.mxu0 0.0
  %v3125 = vand.u32 %v103, 4294901760
  %3126 = vmatmul.mubr.f32.gmra.mxu0 %v3125
  %v3127 = vpop.f32.mrf.mxu0
  %v3128 = vadd.f32 %v2951, %v3127
  %v3129 = vpop.f32.mrf.mxu0
  %3130 = vmatprep.mubr.f32.mxu0 0.0
  %v3131 = vand.u32 %v106, 4294901760
  %3132 = vmatmul.mubr.f32.gmra.mxu0 %v3131
  %v3133 = vpop.f32.mrf.mxu0
  %v3134 = vadd.f32 %v2957, %v3133
  %v3135 = vpop.f32.mrf.mxu0
  %3136 = vmatprep.mubr.f32.mxu0 0.0
  %v3137 = vand.u32 %v109, 4294901760
  %3138 = vmatmul.mubr.f32.gmra.mxu0 %v3137
  %v3139 = vpop.f32.mrf.mxu0
  %v3140 = vadd.f32 %v2963, %v3139
  %v3141 = vpop.f32.mrf.mxu0
  %3142 = vmatprep.mubr.f32.mxu0 0.0
  %v3143 = vand.u32 %v112, 4294901760
  %3144 = vmatmul.mubr.f32.gmra.mxu0 %v3143
  %v3145 = vpop.f32.mrf.mxu0
  %v3146 = vadd.f32 %v2969, %v3145
  %v3147 = vpop.f32.mrf.mxu0
  %3148 = vdwg.mxu0
  %v3149 = vld [vmem:[%s2] sm:$0x1]
  %v3151 = vlaneseq
  %v3152 = vshrl.u32 %v3151, 7
  %v3153 = vsub.s32 0, %v3152
  %v3154 = vrot.slane %v3149, %v3153
  %v3156 = vmul.f32 %v3056, %v3154
  %v3157 = vmul.f32 %v3062, %v3154
  %v3158 = vmul.f32 %v3068, %v3154
  %v3159 = vmul.f32 %v3074, %v3154
  %v3160 = vmul.f32 %v3080, %v3154
  %v3161 = vmul.f32 %v3086, %v3154
  %v3162 = vmul.f32 %v3092, %v3154
  %v3163 = vmul.f32 %v3098, %v3154
  %v3164 = vmul.f32 %v3104, %v3154
  %v3165 = vmul.f32 %v3110, %v3154
  %v3166 = vmul.f32 %v3116, %v3154
  %v3167 = vmul.f32 %v3122, %v3154
  %v3168 = vmul.f32 %v3128, %v3154
  %v3169 = vmul.f32 %v3134, %v3154
  %v3170 = vmul.f32 %v3140, %v3154
  %v3171 = vmul.f32 %v3146, %v3154
  %v3172 = vld [vmem:[%s3] sm:$0x1]
  %v3174 = vlaneseq
  %v3175 = vshrl.u32 %v3174, 7
  %v3176 = vsub.s32 0, %v3175
  %v3177 = vrot.slane %v3172, %v3176
  %v3179 = vadd.f32 %v3156, %v3177
  %v3180 = vadd.f32 %v3157, %v3177
  %v3181 = vadd.f32 %v3158, %v3177
  %v3182 = vadd.f32 %v3159, %v3177
  %v3183 = vadd.f32 %v3160, %v3177
  %v3184 = vadd.f32 %v3161, %v3177
  %v3185 = vadd.f32 %v3162, %v3177
  %v3186 = vadd.f32 %v3163, %v3177
  %v3187 = vadd.f32 %v3164, %v3177
  %v3188 = vadd.f32 %v3165, %v3177
  %v3189 = vadd.f32 %v3166, %v3177
  %v3190 = vadd.f32 %v3167, %v3177
  %v3191 = vadd.f32 %v3168, %v3177
  %v3192 = vadd.f32 %v3169, %v3177
  %v3193 = vadd.f32 %v3170, %v3177
  %v3194 = vadd.f32 %v3171, %v3177
  %v3195 = vmax.f32 %v3179, 0.0
  %v3196 = vmax.f32 %v3180, 0.0
  %v3197 = vmax.f32 %v3181, 0.0
  %v3198 = vmax.f32 %v3182, 0.0
  %v3199 = vmax.f32 %v3183, 0.0
  %v3200 = vmax.f32 %v3184, 0.0
  %v3201 = vmax.f32 %v3185, 0.0
  %v3202 = vmax.f32 %v3186, 0.0
  %v3203 = vmax.f32 %v3187, 0.0
  %v3204 = vmax.f32 %v3188, 0.0
  %v3205 = vmax.f32 %v3189, 0.0
  %v3206 = vmax.f32 %v3190, 0.0
  %v3207 = vmax.f32 %v3191, 0.0
  %v3208 = vmax.f32 %v3192, 0.0
  %v3209 = vmax.f32 %v3193, 0.0
  %v3210 = vmax.f32 %v3194, 0.0
  %3211 = vst [vmem:[%s4] sm:$0xff] %v3195
  %3212 = vst [vmem:[%s4 + $0x8] sm:$0xff] %v3196
  %3213 = vst [vmem:[%s4 + $0x10] sm:$0xff] %v3197
  %3214 = vst [vmem:[%s4 + $0x18] sm:$0xff] %v3198
  %3215 = vst [vmem:[%s4 + $0x20] sm:$0xff] %v3199
  %3216 = vst [vmem:[%s4 + $0x28] sm:$0xff] %v3200
  %3217 = vst [vmem:[%s4 + $0x30] sm:$0xff] %v3201
  %3218 = vst [vmem:[%s4 + $0x38] sm:$0xff] %v3202
  %3219 = vst [vmem:[%s4 + $0x40] sm:$0xff] %v3203
  %3220 = vst [vmem:[%s4 + $0x48] sm:$0xff] %v3204
  %3221 = vst [vmem:[%s4 + $0x50] sm:$0xff] %v3205
  %3222 = vst [vmem:[%s4 + $0x58] sm:$0xff] %v3206
  %3223 = vst [vmem:[%s4 + $0x60] sm:$0xff] %v3207
  %3224 = vst [vmem:[%s4 + $0x68] sm:$0xff] %v3208
  %3225 = vst [vmem:[%s4 + $0x70] sm:$0xff] %v3209
  %3226 = vst [vmem:[%s4 + $0x78] sm:$0xff] %v3210
  // Predicated region
  $region18: #{_pallas_forward.8} parent=0 // pred_check
    _
  $region19: #{_pallas_forward.8} parent=0 // pred_check_branch
    %3228 = sbr.rel (0) target = $region21
  $region20: #{_pallas_forward.8} parent=0 // pred_region
    _
  $region21: #{_pallas_forward.8} parent=0 // pred_fallthru
    _
  // Predicated region
  $region22: #{_pallas_forward.8} parent=0 // pred_check
    _
  $region23: #{_pallas_forward.8} parent=0 // pred_check_branch
    %3230 = sbr.rel (0) target = $region25
  $region24: #{_pallas_forward.8} parent=0 // pred_region
    _
  $region25: #{_pallas_forward.8} parent=0 // pred_fallthru
    _

</llo_original>
